<compile_context>
chip_gen: v7x
topology: tpu7x:2x2x1
jax: 0.10.0
libtpu: 0.0.40
codegen_flags: <defaults>
</compile_context>

<pallas_src>
import functools

import jax
import jax.numpy as jnp
from jax import lax
from jax.experimental import pallas as pl
from jax.experimental.pallas import tpu as pltpu


_BN_EPS = 1e-5
_LRELU_SLOPE = 0.1
_LANES = 128
_VMEM_LIMIT = 32 * 1024 * 1024


def _round_up(x, m):
    return (x + m - 1) // m * m


def _leaky(a):
    return jnp.maximum(a, _LRELU_SLOPE * a)


def _cparams():
    return pltpu.CompilerParams(
        dimension_semantics=("parallel",),      # batch grid -> v7x megacore
        vmem_limit_bytes=_VMEM_LIMIT)


# --------------------------------------------------------------------------
# Kernels
# --------------------------------------------------------------------------

def _conv3x3_stats_kernel(has_ds, h, w, xp_ref, w_ref, *rest):
    """Stage-1 conv: 3x3 conv (stride 1, pad 1) of one spatially zero-padded
    NHWC sample, bf16 MXU matmuls with f32 accumulation, plus per-channel
    sum / sum-of-squares of the raw conv output (for two-pass BatchNorm).

    When `has_ds`, additionally computes the 1x1 downsample conv on the same
    input (interior of the padded tile) together with its BN statistics."""
    if has_ds:
        wd_ref, y_ref, s_ref, q_ref, r_ref, rs_ref, rq_ref = rest
    else:
        y_ref, s_ref, q_ref = rest

    cin = w_ref.shape[2]
    cp = w_ref.shape[3]

    xw = xp_ref[0]                                     # (h+2, w+2, cin) bf16
    acc = jnp.zeros((h * w, cp), jnp.float32)
    for dy in range(3):
        for dx in range(3):
            tap = xw[dy:dy + h, dx:dx + w, :].reshape(h * w, cin)
            acc += jnp.dot(tap, w_ref[dy, dx],
                           preferred_element_type=jnp.float32)

    y_ref[0] = acc.reshape(h, w, cp).astype(y_ref.dtype)
    s_ref[0] = jnp.sum(acc, axis=0, keepdims=True)
    q_ref[0] = jnp.sum(acc * acc, axis=0, keepdims=True)

    if has_ds:
        xin = xw[1:1 + h, 1:1 + w, :].reshape(h * w, cin)
        r = jnp.dot(xin, wd_ref[...], preferred_element_type=jnp.float32)
        r_ref[0] = r.reshape(h, w, cp).astype(r_ref.dtype)
        rs_ref[0] = jnp.sum(r, axis=0, keepdims=True)
        rq_ref[0] = jnp.sum(r * r, axis=0, keepdims=True)


def _bn_act_conv3x3_stats_kernel(h, w, yp_ref, sc_ref, bs_ref, w_ref,
                                 y_ref, s_ref, q_ref):
    """Stages 2/3: fused BatchNorm(scale/bias) + LeakyReLU of the PREVIOUS
    stage's raw conv output (spatially zero-padded, bf16), then this stage's
    3x3 conv + BN statistics.  The zero-pad border is forced back to exactly
    0 after the affine+activation so the conv sees reference zero padding."""
    cp = w_ref.shape[3]
    cin = w_ref.shape[2]

    sc = sc_ref[...].reshape(1, 1, -1)
    bs = bs_ref[...].reshape(1, 1, -1)
    a = yp_ref[0].astype(jnp.float32) * sc + bs        # f32 epilogue math
    a = _leaky(a)
    ri = lax.broadcasted_iota(jnp.int32, (h + 2, w + 2, 1), 0)
    ci = lax.broadcasted_iota(jnp.int32, (h + 2, w + 2, 1), 1)
    interior = (ri >= 1) & (ri <= h) & (ci >= 1) & (ci <= w)
    a = jnp.where(interior, a, 0.0).astype(jnp.bfloat16)

    acc = jnp.zeros((h * w, cp), jnp.float32)
    for dy in range(3):
        for dx in range(3):
            tap = a[dy:dy + h, dx:dx + w, :].reshape(h * w, cin)
            acc += jnp.dot(tap, w_ref[dy, dx],
                           preferred_element_type=jnp.float32)

    y_ref[0] = acc.reshape(h, w, cp).astype(y_ref.dtype)
    s_ref[0] = jnp.sum(acc, axis=0, keepdims=True)
    q_ref[0] = jnp.sum(acc * acc, axis=0, keepdims=True)


def _residual_finalize_kernel(has_ds, pool_s, h, w,
                              y_ref, sc_ref, bs_ref, r_ref, *rest):
    """bn3 (folded scale/bias) + residual add (identity, or downsample conv
    output with its own folded BN) + LeakyReLU, with the trailing
    MaxPool2d(pool_s) fused in."""
    idx = 0
    if has_ds:
        scd_ref, bsd_ref = rest[0], rest[1]
        idx = 2
    o_ref = rest[idx]
    tmp_ref = rest[idx + 1] if pool_s > 1 else None

    sc = sc_ref[...].reshape(1, 1, -1)
    bs = bs_ref[...].reshape(1, 1, -1)
    a = y_ref[0].astype(jnp.float32) * sc + bs
    if has_ds:
        scd = scd_ref[...].reshape(1, 1, -1)
        bsd = bsd_ref[...].reshape(1, 1, -1)
        a = a + (r_ref[0].astype(jnp.float32) * scd + bsd)
    else:
        a = a + r_ref[0].astype(jnp.float32)
    a = _leaky(a)

    if pool_s > 1:
        ho, wo = h // pool_s, w // pool_s
        cp = a.shape[-1]
        # Pool along H (leading dim): layout-free reshape + max.
        ah = a[:ho * pool_s].reshape(ho, pool_s, w, cp).max(axis=1)
        # Pool along W (sublane dim): strided reads from a VMEM scratch.
        tmp_ref[...] = ah
        p = tmp_ref[:, pl.ds(0, wo, stride=pool_s), :]
        for dx in range(1, pool_s):
            p = jnp.maximum(p, tmp_ref[:, pl.ds(dx, wo, stride=pool_s), :])
        o_ref[0] = p.astype(o_ref.dtype)
    else:
        o_ref[0] = a.astype(o_ref.dtype)


# --------------------------------------------------------------------------
# pallas_call wrappers
# --------------------------------------------------------------------------

def _stage1_call(xp, w1, wd, h, w, cp):
    n = xp.shape[0]
    cin = xp.shape[-1]
    has_ds = wd is not None

    in_specs = [
        pl.BlockSpec((1, h + 2, w + 2, cin), lambda i: (i, 0, 0, 0)),
        pl.BlockSpec((3, 3, cin, cp), lambda i: (0, 0, 0, 0)),   # resident
    ]
    args = [xp, w1]
    out_shape = [
        jax.ShapeDtypeStruct((n, h, w, cp), jnp.bfloat16),
        jax.ShapeDtypeStruct((n, 1, cp), jnp.float32),
        jax.ShapeDtypeStruct((n, 1, cp), jnp.float32),
    ]
    out_specs = [
        pl.BlockSpec((1, h, w, cp), lambda i: (i, 0, 0, 0)),
        pl.BlockSpec((1, 1, cp), lambda i: (i, 0, 0)),
        pl.BlockSpec((1, 1, cp), lambda i: (i, 0, 0)),
    ]
    if has_ds:
        in_specs.append(pl.BlockSpec((cin, cp), lambda i: (0, 0)))
        args.append(wd)
        out_shape += [
            jax.ShapeDtypeStruct((n, h, w, cp), jnp.bfloat16),
            jax.ShapeDtypeStruct((n, 1, cp), jnp.float32),
            jax.ShapeDtypeStruct((n, 1, cp), jnp.float32),
        ]
        out_specs += [
            pl.BlockSpec((1, h, w, cp), lambda i: (i, 0, 0, 0)),
            pl.BlockSpec((1, 1, cp), lambda i: (i, 0, 0)),
            pl.BlockSpec((1, 1, cp), lambda i: (i, 0, 0)),
        ]

    return pl.pallas_call(
        functools.partial(_conv3x3_stats_kernel, has_ds, h, w),
        grid=(n,),
        in_specs=in_specs,
        out_specs=tuple(out_specs),
        out_shape=tuple(out_shape),
        compiler_params=_cparams(),
    )(*args)


def _stage_mid_call(yp, sc, bs, wk, h, w, cp):
    n = yp.shape[0]
    return pl.pallas_call(
        functools.partial(_bn_act_conv3x3_stats_kernel, h, w),
        grid=(n,),
        in_specs=[
            pl.BlockSpec((1, h + 2, w + 2, cp), lambda i: (i, 0, 0, 0)),
            pl.BlockSpec((1, cp), lambda i: (0, 0)),
            pl.BlockSpec((1, cp), lambda i: (0, 0)),
            pl.BlockSpec((3, 3, cp, cp), lambda i: (0, 0, 0, 0)),   # resident
        ],
        out_specs=(
            pl.BlockSpec((1, h, w, cp), lambda i: (i, 0, 0, 0)),
            pl.BlockSpec((1, 1, cp), lambda i: (i, 0, 0)),
            pl.BlockSpec((1, 1, cp), lambda i: (i, 0, 0)),
        ),
        out_shape=(
            jax.ShapeDtypeStruct((n, h, w, cp), jnp.bfloat16),
            jax.ShapeDtypeStruct((n, 1, cp), jnp.float32),
            jax.ShapeDtypeStruct((n, 1, cp), jnp.float32),
        ),
        compiler_params=_cparams(),
    )(yp, sc, bs, wk)


def _finalize_call(y3, sc3, bs3, res, scd, bsd, h, w, cp, pool_s):
    n = y3.shape[0]
    has_ds = scd is not None
    ho = h // pool_s if pool_s > 1 else h
    wo = w // pool_s if pool_s > 1 else w

    in_specs = [
        pl.BlockSpec((1, h, w, cp), lambda i: (i, 0, 0, 0)),
        pl.BlockSpec((1, cp), lambda i: (0, 0)),
        pl.BlockSpec((1, cp), lambda i: (0, 0)),
        pl.BlockSpec((1, h, w, cp), lambda i: (i, 0, 0, 0)),
    ]
    args = [y3, sc3, bs3, res]
    if has_ds:
        in_specs += [pl.BlockSpec((1, cp), lambda i: (0, 0)),
                     pl.BlockSpec((1, cp), lambda i: (0, 0))]
        args += [scd, bsd]

    scratch = []
    if pool_s > 1:
        scratch = [pltpu.VMEM((ho, w, cp), jnp.float32)]

    return pl.pallas_call(
        functools.partial(_residual_finalize_kernel, has_ds, pool_s, h, w),
        grid=(n,),
        in_specs=in_specs,
        out_specs=pl.BlockSpec((1, ho, wo, cp), lambda i: (i, 0, 0, 0)),
        out_shape=jax.ShapeDtypeStruct((n, ho, wo, cp), jnp.float32),
        scratch_shapes=scratch,
        compiler_params=_cparams(),
    )(*args)


# --------------------------------------------------------------------------
# BN fold (tiny XLA reduce over per-sample partial stats)
# --------------------------------------------------------------------------

def _bn_fold(s_part, q_part, gamma, beta, count):
    s = jnp.sum(s_part[:, 0, :], axis=0)
    q = jnp.sum(q_part[:, 0, :], axis=0)
    mean = s / count
    var = jnp.maximum(q / count - mean * mean, 0.0)   # one-pass, f32
    scale = gamma * lax.rsqrt(var + _BN_EPS)
    bias = beta - mean * scale
    return scale.reshape(1, -1), bias.reshape(1, -1)


# --------------------------------------------------------------------------
# BasicBlock forward
# --------------------------------------------------------------------------

def basic_block_forward(x, p, *, stride=1, max_pool=True):
    """BasicBlock.forward (drop_rate = 0.0 path), NHWC f32 input."""
    n, h, w, cin = x.shape
    planes = p["conv1_w"].shape[-1]
    cp = max(_LANES, _round_up(planes, _LANES))       # lane-dense channels
    count = float(n * h * w)
    has_ds = "ds_w" in p

    def _pad_w(wk, cin_to, cout_to):
        kh, kw, ci, co = wk.shape
        return jnp.pad(wk, ((0, 0), (0, 0),
                            (0, cin_to - ci), (0, cout_to - co)))

    def _pad_c(v):
        return jnp.pad(v, (0, cp - v.shape[0]))

    w1 = _pad_w(p["conv1_w"], cin, cp).astype(jnp.bfloat16)
    w2 = _pad_w(p["conv2_w"], cp, cp).astype(jnp.bfloat16)
    w3 = _pad_w(p["conv3_w"], cp, cp).astype(jnp.bfloat16)
    g1, b1 = _pad_c(p["bn1_gamma"]), _pad_c(p["bn1_beta"])
    g2, b2 = _pad_c(p["bn2_gamma"]), _pad_c(p["bn2_beta"])
    g3, b3 = _pad_c(p["bn3_gamma"]), _pad_c(p["bn3_beta"])

    # ---- stage 1: conv1 (+ fused 1x1 downsample) + BN stats ----
    xp = jnp.pad(x, ((0, 0), (1, 1), (1, 1), (0, 0))).astype(jnp.bfloat16)
    wd = None
    if has_ds:
        wd = jnp.pad(p["ds_w"], ((0, 0), (0, cp - planes))).astype(jnp.bfloat16)
    outs = _stage1_call(xp, w1, wd, h, w, cp)
    if has_ds:
        y1, s1, q1, r_ds, rs, rq = outs
    else:
        y1, s1, q1 = outs
    sc1, bs1 = _bn_fold(s1, q1, g1, b1, count)

    # ---- stage 2: (bn1 + lrelu fused) + conv2 + BN stats ----
    y1p = jnp.pad(y1, ((0, 0), (1, 1), (1, 1), (0, 0)))
    y2, s2, q2 = _stage_mid_call(y1p, sc1, bs1, w2, h, w, cp)
    sc2, bs2 = _bn_fold(s2, q2, g2, b2, count)

    # ---- stage 3: (bn2 + lrelu fused) + conv3 + BN stats ----
    y2p = jnp.pad(y2, ((0, 0), (1, 1), (1, 1), (0, 0)))
    y3, s3, q3 = _stage_mid_call(y2p, sc2, bs2, w3, h, w, cp)
    sc3, bs3 = _bn_fold(s3, q3, g3, b3, count)

    # ---- finalize: bn3 + residual + lrelu + fused maxpool ----
    if has_ds:
        gd, bd = _pad_c(p["ds_gamma"]), _pad_c(p["ds_beta"])
        scd, bsd = _bn_fold(rs, rq, gd, bd, count)
        res = r_ds
    else:
        scd = bsd = None
        res = jnp.pad(x, ((0, 0), (0, 0), (0, 0),
                          (0, cp - cin))).astype(jnp.float32)

    pool_s = stride if (max_pool and stride > 1) else 1
    out = _finalize_call(y3, sc3, bs3, res, scd, bsd, h, w, cp, pool_s)

    # drop_rate defaults to 0.0 -> no dropout / DropBlock applied.
    return out[..., :planes]


# --------------------------------------------------------------------------
# Deterministic synthetic parameters (fresh-module BN: gamma=1, beta=0)
# --------------------------------------------------------------------------

def init_params(key, inplanes, planes, with_downsample):
    ks = jax.random.split(key, 4)
    p = dict(
        conv1_w=0.1 * jax.random.normal(ks[0], (3, 3, inplanes, planes), jnp.float32),
        conv2_w=0.1 * jax.random.normal(ks[1], (3, 3, planes, planes), jnp.float32),
        conv3_w=0.1 * jax.random.normal(ks[2], (3, 3, planes, planes), jnp.float32),
        bn1_gamma=jnp.ones((planes,), jnp.float32),
        bn1_beta=jnp.zeros((planes,), jnp.float32),
        bn2_gamma=jnp.ones((planes,), jnp.float32),
        bn2_beta=jnp.zeros((planes,), jnp.float32),
        bn3_gamma=jnp.ones((planes,), jnp.float32),
        bn3_beta=jnp.zeros((planes,), jnp.float32),
    )
    if with_downsample:
        # downsample = Conv2d(1x1, bias=False) + BatchNorm2d (standard usage)
        p["ds_w"] = 0.1 * jax.random.normal(ks[3], (inplanes, planes), jnp.float32)
        p["ds_gamma"] = jnp.ones((planes,), jnp.float32)
        p["ds_beta"] = jnp.zeros((planes,), jnp.float32)
    return p


# --------------------------------------------------------------------------

if __name__ == "__main__":
    key = jax.random.PRNGKey(0)
    kx, kp1, kp2 = jax.random.split(key, 3)

    n, h, w = 2, 16, 16
    inplanes, planes = 4, 64

    x = jax.random.normal(kx, (n, h, w, inplanes), jnp.float32)  # NHWC

    # Block 1: channel expansion with downsample residual, stride=2 max-pool.
    params_ds = init_params(kp1, inplanes, planes, with_downsample=True)
    fwd_ds = jax.jit(functools.partial(basic_block_forward, stride=2, max_pool=True))
    y1 = fwd_ds(x, params_ds)
    jax.block_until_ready(y1)
    assert y1.shape == (n, h // 2, w // 2, planes), y1.shape
    assert bool(jnp.all(jnp.isfinite(y1)))

    # Block 2: identity residual (inplanes == planes, downsample=None),
    # stride=1 so MaxPool2d(1) is the identity.
    params_id = init_params(kp2, planes, planes, with_downsample=False)
    fwd_id = jax.jit(functools.partial(basic_block_forward, stride=1, max_pool=True))
    y2 = fwd_id(y1, params_id)
    jax.block_until_ready(y2)
    assert y2.shape == (n, h // 2, w // 2, planes), y2.shape
    assert bool(jnp.all(jnp.isfinite(y2)))

    print("KERNEL_OK")
</pallas_src>

<mosaic_0001>
module attributes {stable_mosaic.version = 11 : i64} {
  func.func @_conv3x3_stats_kernel(%arg0: i32, %arg1: memref<1x18x18x4xbf16, #tpu.memory_space<vmem>>, %arg2: memref<3x3x4x128xbf16, #tpu.memory_space<vmem>>, %arg3: memref<4x128xbf16, #tpu.memory_space<vmem>>, %arg4: memref<1x16x16x128xbf16, #tpu.memory_space<vmem>>, %arg5: memref<1x1x128xf32, #tpu.memory_space<vmem>>, %arg6: memref<1x1x128xf32, #tpu.memory_space<vmem>>, %arg7: memref<1x16x16x128xbf16, #tpu.memory_space<vmem>>, %arg8: memref<1x1x128xf32, #tpu.memory_space<vmem>>, %arg9: memref<1x1x128xf32, #tpu.memory_space<vmem>>) attributes {dimension_semantics = [#tpu.dimension_semantics<parallel>], iteration_bounds = array<i64: 2>, scalar_prefetch = 0 : i64, scratch_operands = 0 : i64, tpu.core_type = #tpu.core_type<tc>, window_params = [{transform_indices = @transform_0, window_bounds = array<i64: 1, 18, 18, 4>}, {pipeline_mode = #tpu.pipeline_mode<synchronous>, transform_indices = @transform_1, window_bounds = array<i64: 3, 3, 4, 128>}, {pipeline_mode = #tpu.pipeline_mode<synchronous>, transform_indices = @transform_2, window_bounds = array<i64: 4, 128>}, {transform_indices = @transform_3, window_bounds = array<i64: 1, 16, 16, 128>}, {transform_indices = @transform_4, window_bounds = array<i64: 1, 1, 128>}, {transform_indices = @transform_5, window_bounds = array<i64: 1, 1, 128>}, {transform_indices = @transform_6, window_bounds = array<i64: 1, 16, 16, 128>}, {transform_indices = @transform_7, window_bounds = array<i64: 1, 1, 128>}, {transform_indices = @transform_8, window_bounds = array<i64: 1, 1, 128>}]} {
    %c0 = arith.constant 0 : index
    %c0_0 = arith.constant 0 : index
    %c0_1 = arith.constant 0 : index
    %c0_2 = arith.constant 0 : index
    %0 = vector.load %arg1[%c0, %c0_0, %c0_1, %c0_2] : memref<1x18x18x4xbf16, #tpu.memory_space<vmem>>, vector<1x18x18x4xbf16>
    %1 = vector.shape_cast %0 : vector<1x18x18x4xbf16> to vector<18x18x4xbf16>
    %cst = arith.constant 0.000000e+00 : f32
    %2 = vector.broadcast %cst : f32 to vector<256x128xf32>
    %3 = vector.extract_strided_slice %1 {offsets = [0, 0, 0], sizes = [16, 16, 4], strides = [1, 1, 1]} : vector<18x18x4xbf16> to vector<16x16x4xbf16>
    %4 = vector.shape_cast %3 : vector<16x16x4xbf16> to vector<256x4xbf16>
    %c0_3 = arith.constant 0 : index
    %c0_4 = arith.constant 0 : index
    %c0_5 = arith.constant 0 : index
    %c0_6 = arith.constant 0 : index
    %5 = vector.load %arg2[%c0_3, %c0_4, %c0_5, %c0_6] : memref<3x3x4x128xbf16, #tpu.memory_space<vmem>>, vector<1x1x4x128xbf16>
    %6 = vector.shape_cast %5 : vector<1x1x4x128xbf16> to vector<4x128xbf16>
    %cst_7 = arith.constant dense<0.000000e+00> : vector<256x128xf32>
    %7 = tpu.matmul %4, %6, %cst_7 {dimension_numbers = #tpu.dot_dimension_numbers<[1], [0], [0], [1], [0, 0, 1, 1], [], []>} : vector<256x4xbf16>, vector<4x128xbf16>, vector<256x128xf32> -> vector<256x128xf32>
    %8 = arith.addf %2, %7 : vector<256x128xf32>
    %9 = vector.extract_strided_slice %1 {offsets = [0, 1, 0], sizes = [16, 16, 4], strides = [1, 1, 1]} : vector<18x18x4xbf16> to vector<16x16x4xbf16>
    %10 = vector.shape_cast %9 : vector<16x16x4xbf16> to vector<256x4xbf16>
    %c0_8 = arith.constant 0 : index
    %c1 = arith.constant 1 : index
    %c0_9 = arith.constant 0 : index
    %c0_10 = arith.constant 0 : index
    %11 = vector.load %arg2[%c0_8, %c1, %c0_9, %c0_10] : memref<3x3x4x128xbf16, #tpu.memory_space<vmem>>, vector<1x1x4x128xbf16>
    %12 = vector.shape_cast %11 : vector<1x1x4x128xbf16> to vector<4x128xbf16>
    %cst_11 = arith.constant dense<0.000000e+00> : vector<256x128xf32>
    %13 = tpu.matmul %10, %12, %cst_11 {dimension_numbers = #tpu.dot_dimension_numbers<[1], [0], [0], [1], [0, 0, 1, 1], [], []>} : vector<256x4xbf16>, vector<4x128xbf16>, vector<256x128xf32> -> vector<256x128xf32>
    %14 = arith.addf %8, %13 : vector<256x128xf32>
    %15 = vector.extract_strided_slice %1 {offsets = [0, 2, 0], sizes = [16, 16, 4], strides = [1, 1, 1]} : vector<18x18x4xbf16> to vector<16x16x4xbf16>
    %16 = vector.shape_cast %15 : vector<16x16x4xbf16> to vector<256x4xbf16>
    %c0_12 = arith.constant 0 : index
    %c2 = arith.constant 2 : index
    %c0_13 = arith.constant 0 : index
    %c0_14 = arith.constant 0 : index
    %17 = vector.load %arg2[%c0_12, %c2, %c0_13, %c0_14] : memref<3x3x4x128xbf16, #tpu.memory_space<vmem>>, vector<1x1x4x128xbf16>
    %18 = vector.shape_cast %17 : vector<1x1x4x128xbf16> to vector<4x128xbf16>
    %cst_15 = arith.constant dense<0.000000e+00> : vector<256x128xf32>
    %19 = tpu.matmul %16, %18, %cst_15 {dimension_numbers = #tpu.dot_dimension_numbers<[1], [0], [0], [1], [0, 0, 1, 1], [], []>} : vector<256x4xbf16>, vector<4x128xbf16>, vector<256x128xf32> -> vector<256x128xf32>
    %20 = arith.addf %14, %19 : vector<256x128xf32>
    %21 = vector.extract_strided_slice %1 {offsets = [1, 0, 0], sizes = [16, 16, 4], strides = [1, 1, 1]} : vector<18x18x4xbf16> to vector<16x16x4xbf16>
    %22 = vector.shape_cast %21 : vector<16x16x4xbf16> to vector<256x4xbf16>
    %c1_16 = arith.constant 1 : index
    %c0_17 = arith.constant 0 : index
    %c0_18 = arith.constant 0 : index
    %c0_19 = arith.constant 0 : index
    %23 = vector.load %arg2[%c1_16, %c0_17, %c0_18, %c0_19] : memref<3x3x4x128xbf16, #tpu.memory_space<vmem>>, vector<1x1x4x128xbf16>
    %24 = vector.shape_cast %23 : vector<1x1x4x128xbf16> to vector<4x128xbf16>
    %cst_20 = arith.constant dense<0.000000e+00> : vector<256x128xf32>
    %25 = tpu.matmul %22, %24, %cst_20 {dimension_numbers = #tpu.dot_dimension_numbers<[1], [0], [0], [1], [0, 0, 1, 1], [], []>} : vector<256x4xbf16>, vector<4x128xbf16>, vector<256x128xf32> -> vector<256x128xf32>
    %26 = arith.addf %20, %25 : vector<256x128xf32>
    %27 = vector.extract_strided_slice %1 {offsets = [1, 1, 0], sizes = [16, 16, 4], strides = [1, 1, 1]} : vector<18x18x4xbf16> to vector<16x16x4xbf16>
    %28 = vector.shape_cast %27 : vector<16x16x4xbf16> to vector<256x4xbf16>
    %c1_21 = arith.constant 1 : index
    %c1_22 = arith.constant 1 : index
    %c0_23 = arith.constant 0 : index
    %c0_24 = arith.constant 0 : index
    %29 = vector.load %arg2[%c1_21, %c1_22, %c0_23, %c0_24] : memref<3x3x4x128xbf16, #tpu.memory_space<vmem>>, vector<1x1x4x128xbf16>
    %30 = vector.shape_cast %29 : vector<1x1x4x128xbf16> to vector<4x128xbf16>
    %cst_25 = arith.constant dense<0.000000e+00> : vector<256x128xf32>
    %31 = tpu.matmul %28, %30, %cst_25 {dimension_numbers = #tpu.dot_dimension_numbers<[1], [0], [0], [1], [0, 0, 1, 1], [], []>} : vector<256x4xbf16>, vector<4x128xbf16>, vector<256x128xf32> -> vector<256x128xf32>
    %32 = arith.addf %26, %31 : vector<256x128xf32>
    %33 = vector.extract_strided_slice %1 {offsets = [1, 2, 0], sizes = [16, 16, 4], strides = [1, 1, 1]} : vector<18x18x4xbf16> to vector<16x16x4xbf16>
    %34 = vector.shape_cast %33 : vector<16x16x4xbf16> to vector<256x4xbf16>
    %c1_26 = arith.constant 1 : index
    %c2_27 = arith.constant 2 : index
    %c0_28 = arith.constant 0 : index
    %c0_29 = arith.constant 0 : index
    %35 = vector.load %arg2[%c1_26, %c2_27, %c0_28, %c0_29] : memref<3x3x4x128xbf16, #tpu.memory_space<vmem>>, vector<1x1x4x128xbf16>
    %36 = vector.shape_cast %35 : vector<1x1x4x128xbf16> to vector<4x128xbf16>
    %cst_30 = arith.constant dense<0.000000e+00> : vector<256x128xf32>
    %37 = tpu.matmul %34, %36, %cst_30 {dimension_numbers = #tpu.dot_dimension_numbers<[1], [0], [0], [1], [0, 0, 1, 1], [], []>} : vector<256x4xbf16>, vector<4x128xbf16>, vector<256x128xf32> -> vector<256x128xf32>
    %38 = arith.addf %32, %37 : vector<256x128xf32>
    %39 = vector.extract_strided_slice %1 {offsets = [2, 0, 0], sizes = [16, 16, 4], strides = [1, 1, 1]} : vector<18x18x4xbf16> to vector<16x16x4xbf16>
    %40 = vector.shape_cast %39 : vector<16x16x4xbf16> to vector<256x4xbf16>
    %c2_31 = arith.constant 2 : index
    %c0_32 = arith.constant 0 : index
    %c0_33 = arith.constant 0 : index
    %c0_34 = arith.constant 0 : index
    %41 = vector.load %arg2[%c2_31, %c0_32, %c0_33, %c0_34] : memref<3x3x4x128xbf16, #tpu.memory_space<vmem>>, vector<1x1x4x128xbf16>
    %42 = vector.shape_cast %41 : vector<1x1x4x128xbf16> to vector<4x128xbf16>
    %cst_35 = arith.constant dense<0.000000e+00> : vector<256x128xf32>
    %43 = tpu.matmul %40, %42, %cst_35 {dimension_numbers = #tpu.dot_dimension_numbers<[1], [0], [0], [1], [0, 0, 1, 1], [], []>} : vector<256x4xbf16>, vector<4x128xbf16>, vector<256x128xf32> -> vector<256x128xf32>
    %44 = arith.addf %38, %43 : vector<256x128xf32>
    %45 = vector.extract_strided_slice %1 {offsets = [2, 1, 0], sizes = [16, 16, 4], strides = [1, 1, 1]} : vector<18x18x4xbf16> to vector<16x16x4xbf16>
    %46 = vector.shape_cast %45 : vector<16x16x4xbf16> to vector<256x4xbf16>
    %c2_36 = arith.constant 2 : index
    %c1_37 = arith.constant 1 : index
    %c0_38 = arith.constant 0 : index
    %c0_39 = arith.constant 0 : index
    %47 = vector.load %arg2[%c2_36, %c1_37, %c0_38, %c0_39] : memref<3x3x4x128xbf16, #tpu.memory_space<vmem>>, vector<1x1x4x128xbf16>
    %48 = vector.shape_cast %47 : vector<1x1x4x128xbf16> to vector<4x128xbf16>
    %cst_40 = arith.constant dense<0.000000e+00> : vector<256x128xf32>
    %49 = tpu.matmul %46, %48, %cst_40 {dimension_numbers = #tpu.dot_dimension_numbers<[1], [0], [0], [1], [0, 0, 1, 1], [], []>} : vector<256x4xbf16>, vector<4x128xbf16>, vector<256x128xf32> -> vector<256x128xf32>
    %50 = arith.addf %44, %49 : vector<256x128xf32>
    %51 = vector.extract_strided_slice %1 {offsets = [2, 2, 0], sizes = [16, 16, 4], strides = [1, 1, 1]} : vector<18x18x4xbf16> to vector<16x16x4xbf16>
    %52 = vector.shape_cast %51 : vector<16x16x4xbf16> to vector<256x4xbf16>
    %c2_41 = arith.constant 2 : index
    %c2_42 = arith.constant 2 : index
    %c0_43 = arith.constant 0 : index
    %c0_44 = arith.constant 0 : index
    %53 = vector.load %arg2[%c2_41, %c2_42, %c0_43, %c0_44] : memref<3x3x4x128xbf16, #tpu.memory_space<vmem>>, vector<1x1x4x128xbf16>
    %54 = vector.shape_cast %53 : vector<1x1x4x128xbf16> to vector<4x128xbf16>
    %cst_45 = arith.constant dense<0.000000e+00> : vector<256x128xf32>
    %55 = tpu.matmul %52, %54, %cst_45 {dimension_numbers = #tpu.dot_dimension_numbers<[1], [0], [0], [1], [0, 0, 1, 1], [], []>} : vector<256x4xbf16>, vector<4x128xbf16>, vector<256x128xf32> -> vector<256x128xf32>
    %56 = arith.addf %50, %55 : vector<256x128xf32>
    %57 = vector.shape_cast %56 : vector<256x128xf32> to vector<16x16x128xf32>
    %58 = arith.truncf %57 : vector<16x16x128xf32> to vector<16x16x128xbf16>
    %c0_46 = arith.constant 0 : index
    %c0_47 = arith.constant 0 : index
    %c0_48 = arith.constant 0 : index
    %c0_49 = arith.constant 0 : index
    %59 = vector.load %arg4[%c0_46, %c0_47, %c0_48, %c0_49] : memref<1x16x16x128xbf16, #tpu.memory_space<vmem>>, vector<1x16x16x128xbf16>
    %60 = vector.shape_cast %59 : vector<1x16x16x128xbf16> to vector<16x16x128xbf16>
    %61 = vector.shape_cast %58 : vector<16x16x128xbf16> to vector<1x16x16x128xbf16>
    tpu.vector_store %arg4[%c0_46, %c0_47, %c0_48, %c0_49], %61 {strides = array<i32>} : memref<1x16x16x128xbf16, #tpu.memory_space<vmem>>, vector<1x16x16x128xbf16>,
    %cst_50 = arith.constant dense<0.000000e+00> : vector<128xf32>
    %62 = vector.multi_reduction <add>, %56, %cst_50 [0] : vector<256x128xf32> to vector<128xf32>
    %63 = vector.shape_cast %62 : vector<128xf32> to vector<1x128xf32>
    %c0_51 = arith.constant 0 : index
    %c0_52 = arith.constant 0 : index
    %c0_53 = arith.constant 0 : index
    %64 = vector.load %arg5[%c0_51, %c0_52, %c0_53] : memref<1x1x128xf32, #tpu.memory_space<vmem>>, vector<1x1x128xf32>
    %65 = vector.shape_cast %64 : vector<1x1x128xf32> to vector<1x128xf32>
    %66 = vector.shape_cast %63 : vector<1x128xf32> to vector<1x1x128xf32>
    tpu.vector_store %arg5[%c0_51, %c0_52, %c0_53], %66 {strides = array<i32>} : memref<1x1x128xf32, #tpu.memory_space<vmem>>, vector<1x1x128xf32>,
    %67 = arith.mulf %56, %56 : vector<256x128xf32>
    %cst_54 = arith.constant dense<0.000000e+00> : vector<128xf32>
    %68 = vector.multi_reduction <add>, %67, %cst_54 [0] : vector<256x128xf32> to vector<128xf32>
    %69 = vector.shape_cast %68 : vector<128xf32> to vector<1x128xf32>
    %c0_55 = arith.constant 0 : index
    %c0_56 = arith.constant 0 : index
    %c0_57 = arith.constant 0 : index
    %70 = vector.load %arg6[%c0_55, %c0_56, %c0_57] : memref<1x1x128xf32, #tpu.memory_space<vmem>>, vector<1x1x128xf32>
    %71 = vector.shape_cast %70 : vector<1x1x128xf32> to vector<1x128xf32>
    %72 = vector.shape_cast %69 : vector<1x128xf32> to vector<1x1x128xf32>
    tpu.vector_store %arg6[%c0_55, %c0_56, %c0_57], %72 {strides = array<i32>} : memref<1x1x128xf32, #tpu.memory_space<vmem>>, vector<1x1x128xf32>,
    %73 = vector.extract_strided_slice %1 {offsets = [1, 1, 0], sizes = [16, 16, 4], strides = [1, 1, 1]} : vector<18x18x4xbf16> to vector<16x16x4xbf16>
    %74 = vector.shape_cast %73 : vector<16x16x4xbf16> to vector<256x4xbf16>
    %c0_58 = arith.constant 0 : index
    %c0_59 = arith.constant 0 : index
    %75 = vector.load %arg3[%c0_58, %c0_59] : memref<4x128xbf16, #tpu.memory_space<vmem>>, vector<4x128xbf16>
    %cst_60 = arith.constant dense<0.000000e+00> : vector<256x128xf32>
    %76 = tpu.matmul %74, %75, %cst_60 {dimension_numbers = #tpu.dot_dimension_numbers<[1], [0], [0], [1], [0, 0, 1, 1], [], []>} : vector<256x4xbf16>, vector<4x128xbf16>, vector<256x128xf32> -> vector<256x128xf32>
    %77 = vector.shape_cast %76 : vector<256x128xf32> to vector<16x16x128xf32>
    %78 = arith.truncf %77 : vector<16x16x128xf32> to vector<16x16x128xbf16>
    %c0_61 = arith.constant 0 : index
    %c0_62 = arith.constant 0 : index
    %c0_63 = arith.constant 0 : index
    %c0_64 = arith.constant 0 : index
    %79 = vector.load %arg7[%c0_61, %c0_62, %c0_63, %c0_64] : memref<1x16x16x128xbf16, #tpu.memory_space<vmem>>, vector<1x16x16x128xbf16>
    %80 = vector.shape_cast %79 : vector<1x16x16x128xbf16> to vector<16x16x128xbf16>
    %81 = vector.shape_cast %78 : vector<16x16x128xbf16> to vector<1x16x16x128xbf16>
    tpu.vector_store %arg7[%c0_61, %c0_62, %c0_63, %c0_64], %81 {strides = array<i32>} : memref<1x16x16x128xbf16, #tpu.memory_space<vmem>>, vector<1x16x16x128xbf16>,
    %cst_65 = arith.constant dense<0.000000e+00> : vector<128xf32>
    %82 = vector.multi_reduction <add>, %76, %cst_65 [0] : vector<256x128xf32> to vector<128xf32>
    %83 = vector.shape_cast %82 : vector<128xf32> to vector<1x128xf32>
    %c0_66 = arith.constant 0 : index
    %c0_67 = arith.constant 0 : index
    %c0_68 = arith.constant 0 : index
    %84 = vector.load %arg8[%c0_66, %c0_67, %c0_68] : memref<1x1x128xf32, #tpu.memory_space<vmem>>, vector<1x1x128xf32>
    %85 = vector.shape_cast %84 : vector<1x1x128xf32> to vector<1x128xf32>
    %86 = vector.shape_cast %83 : vector<1x128xf32> to vector<1x1x128xf32>
    tpu.vector_store %arg8[%c0_66, %c0_67, %c0_68], %86 {strides = array<i32>} : memref<1x1x128xf32, #tpu.memory_space<vmem>>, vector<1x1x128xf32>,
    %87 = arith.mulf %76, %76 : vector<256x128xf32>
    %cst_69 = arith.constant dense<0.000000e+00> : vector<128xf32>
    %88 = vector.multi_reduction <add>, %87, %cst_69 [0] : vector<256x128xf32> to vector<128xf32>
    %89 = vector.shape_cast %88 : vector<128xf32> to vector<1x128xf32>
    %c0_70 = arith.constant 0 : index
    %c0_71 = arith.constant 0 : index
    %c0_72 = arith.constant 0 : index
    %90 = vector.load %arg9[%c0_70, %c0_71, %c0_72] : memref<1x1x128xf32, #tpu.memory_space<vmem>>, vector<1x1x128xf32>
    %91 = vector.shape_cast %90 : vector<1x1x128xf32> to vector<1x128xf32>
    %92 = vector.shape_cast %89 : vector<1x128xf32> to vector<1x1x128xf32>
    tpu.vector_store %arg9[%c0_70, %c0_71, %c0_72], %92 {strides = array<i32>} : memref<1x1x128xf32, #tpu.memory_space<vmem>>, vector<1x1x128xf32>,
    return
  }
  func.func @transform_0(%arg0: i32) -> (i32, i32, i32, i32) {
    %c0_i32 = arith.constant 0 : i32
    %c0_i32_0 = arith.constant 0 : i32
    %c0_i32_1 = arith.constant 0 : i32
    %c0_i32_2 = arith.constant 0 : i32
    return %arg0, %c0_i32, %c0_i32_0, %c0_i32_1 : i32, i32, i32, i32
  }
  func.func @transform_1(%arg0: i32) -> (i32, i32, i32, i32) {
    %c0_i32 = arith.constant 0 : i32
    %c0_i32_0 = arith.constant 0 : i32
    %c0_i32_1 = arith.constant 0 : i32
    %c0_i32_2 = arith.constant 0 : i32
    %c0_i32_3 = arith.constant 0 : i32
    return %c0_i32, %c0_i32_0, %c0_i32_1, %c0_i32_2 : i32, i32, i32, i32
  }
  func.func @transform_2(%arg0: i32) -> (i32, i32) {
    %c0_i32 = arith.constant 0 : i32
    %c0_i32_0 = arith.constant 0 : i32
    %c0_i32_1 = arith.constant 0 : i32
    return %c0_i32, %c0_i32_0 : i32, i32
  }
  func.func @transform_3(%arg0: i32) -> (i32, i32, i32, i32) {
    %c0_i32 = arith.constant 0 : i32
    %c0_i32_0 = arith.constant 0 : i32
    %c0_i32_1 = arith.constant 0 : i32
    %c0_i32_2 = arith.constant 0 : i32
    return %arg0, %c0_i32, %c0_i32_0, %c0_i32_1 : i32, i32, i32, i32
  }
  func.func @transform_4(%arg0: i32) -> (i32, i32, i32) {
    %c0_i32 = arith.constant 0 : i32
    %c0_i32_0 = arith.constant 0 : i32
    %c0_i32_1 = arith.constant 0 : i32
    return %arg0, %c0_i32, %c0_i32_0 : i32, i32, i32
  }
  func.func @transform_5(%arg0: i32) -> (i32, i32, i32) {
    %c0_i32 = arith.constant 0 : i32
    %c0_i32_0 = arith.constant 0 : i32
    %c0_i32_1 = arith.constant 0 : i32
    return %arg0, %c0_i32, %c0_i32_0 : i32, i32, i32
  }
  func.func @transform_6(%arg0: i32) -> (i32, i32, i32, i32) {
    %c0_i32 = arith.constant 0 : i32
    %c0_i32_0 = arith.constant 0 : i32
    %c0_i32_1 = arith.constant 0 : i32
    %c0_i32_2 = arith.constant 0 : i32
    return %arg0, %c0_i32, %c0_i32_0, %c0_i32_1 : i32, i32, i32, i32
  }
  func.func @transform_7(%arg0: i32) -> (i32, i32, i32) {
    %c0_i32 = arith.constant 0 : i32
    %c0_i32_0 = arith.constant 0 : i32
    %c0_i32_1 = arith.constant 0 : i32
    return %arg0, %c0_i32, %c0_i32_0 : i32, i32, i32
  }
  func.func @transform_8(%arg0: i32) -> (i32, i32, i32) {
    %c0_i32 = arith.constant 0 : i32
    %c0_i32_0 = arith.constant 0 : i32
    %c0_i32_1 = arith.constant 0 : i32
    return %arg0, %c0_i32, %c0_i32_0 : i32, i32, i32
  }
}

module attributes {stable_mosaic.version = 11 : i64} {
  func.func @_bn_act_conv3x3_stats_kernel(%arg0: i32, %arg1: memref<1x18x18x128xbf16, #tpu.memory_space<vmem>>, %arg2: memref<1x128xf32, #tpu.memory_space<vmem>>, %arg3: memref<1x128xf32, #tpu.memory_space<vmem>>, %arg4: memref<3x3x128x128xbf16, #tpu.memory_space<vmem>>, %arg5: memref<1x16x16x128xbf16, #tpu.memory_space<vmem>>, %arg6: memref<1x1x128xf32, #tpu.memory_space<vmem>>, %arg7: memref<1x1x128xf32, #tpu.memory_space<vmem>>) attributes {dimension_semantics = [#tpu.dimension_semantics<parallel>], iteration_bounds = array<i64: 2>, scalar_prefetch = 0 : i64, scratch_operands = 0 : i64, tpu.core_type = #tpu.core_type<tc>, window_params = [{transform_indices = @transform_0, window_bounds = array<i64: 1, 18, 18, 128>}, {pipeline_mode = #tpu.pipeline_mode<synchronous>, transform_indices = @transform_1, window_bounds = array<i64: 1, 128>}, {pipeline_mode = #tpu.pipeline_mode<synchronous>, transform_indices = @transform_2, window_bounds = array<i64: 1, 128>}, {pipeline_mode = #tpu.pipeline_mode<synchronous>, transform_indices = @transform_3, window_bounds = array<i64: 3, 3, 128, 128>}, {transform_indices = @transform_4, window_bounds = array<i64: 1, 16, 16, 128>}, {transform_indices = @transform_5, window_bounds = array<i64: 1, 1, 128>}, {transform_indices = @transform_6, window_bounds = array<i64: 1, 1, 128>}]} {
    %c0 = arith.constant 0 : index
    %c0_0 = arith.constant 0 : index
    %0 = vector.load %arg2[%c0, %c0_0] : memref<1x128xf32, #tpu.memory_space<vmem>>, vector<1x128xf32>
    %1 = vector.shape_cast %0 : vector<1x128xf32> to vector<1x1x128xf32>
    %c0_1 = arith.constant 0 : index
    %c0_2 = arith.constant 0 : index
    %2 = vector.load %arg3[%c0_1, %c0_2] : memref<1x128xf32, #tpu.memory_space<vmem>>, vector<1x128xf32>
    %3 = vector.shape_cast %2 : vector<1x128xf32> to vector<1x1x128xf32>
    %c0_3 = arith.constant 0 : index
    %c0_4 = arith.constant 0 : index
    %c0_5 = arith.constant 0 : index
    %c0_6 = arith.constant 0 : index
    %4 = vector.load %arg1[%c0_3, %c0_4, %c0_5, %c0_6] : memref<1x18x18x128xbf16, #tpu.memory_space<vmem>>, vector<1x18x18x128xbf16>
    %5 = vector.shape_cast %4 : vector<1x18x18x128xbf16> to vector<18x18x128xbf16>
    %6 = arith.extf %5 : vector<18x18x128xbf16> to vector<18x18x128xf32>
    %7 = vector.broadcast %1 : vector<1x1x128xf32> to vector<18x18x128xf32>
    %8 = arith.mulf %6, %7 : vector<18x18x128xf32>
    %9 = vector.broadcast %3 : vector<1x1x128xf32> to vector<18x18x128xf32>
    %10 = arith.addf %8, %9 : vector<18x18x128xf32>
    %cst = arith.constant 1.000000e-01 : f32
    %11 = vector.broadcast %cst : f32 to vector<18x18x128xf32>
    %12 = arith.mulf %11, %10 : vector<18x18x128xf32>
    %13 = arith.maximumf %10, %12 : vector<18x18x128xf32>
    %14 = tpu.iota {dimensions = array<i32: 0>} : vector<18x18x1xi32>
    %15 = tpu.iota {dimensions = array<i32: 1>} : vector<18x18x1xi32>
    %c1_i32 = arith.constant 1 : i32
    %16 = vector.broadcast %c1_i32 : i32 to vector<18x18x1xi32>
    %17 = arith.cmpi sge, %14, %16 : vector<18x18x1xi32>
    %c16_i32 = arith.constant 16 : i32
    %18 = vector.broadcast %c16_i32 : i32 to vector<18x18x1xi32>
    %19 = arith.cmpi sle, %14, %18 : vector<18x18x1xi32>
    %20 = arith.andi %17, %19 : vector<18x18x1xi1>
    %c1_i32_7 = arith.constant 1 : i32
    %21 = vector.broadcast %c1_i32_7 : i32 to vector<18x18x1xi32>
    %22 = arith.cmpi sge, %15, %21 : vector<18x18x1xi32>
    %23 = arith.andi %20, %22 : vector<18x18x1xi1>
    %c16_i32_8 = arith.constant 16 : i32
    %24 = vector.broadcast %c16_i32_8 : i32 to vector<18x18x1xi32>
    %25 = arith.cmpi sle, %15, %24 : vector<18x18x1xi32>
    %26 = arith.andi %23, %25 : vector<18x18x1xi1>
    %cst_9 = arith.constant 0.000000e+00 : f32
    %27 = vector.shape_cast %26 : vector<18x18x1xi1> to vector<18x18x1xi1>
    %28 = vector.broadcast %27 : vector<18x18x1xi1> to vector<18x18x128xi1>
    %29 = vector.broadcast %cst_9 : f32 to vector<18x18x128xf32>
    %30 = arith.select %28, %13, %29 : vector<18x18x128xi1>, vector<18x18x128xf32>
    %31 = arith.truncf %30 : vector<18x18x128xf32> to vector<18x18x128xbf16>
    %cst_10 = arith.constant 0.000000e+00 : f32
    %32 = vector.broadcast %cst_10 : f32 to vector<256x128xf32>
    %33 = vector.extract_strided_slice %31 {offsets = [0, 0, 0], sizes = [16, 16, 128], strides = [1, 1, 1]} : vector<18x18x128xbf16> to vector<16x16x128xbf16>
    %34 = vector.shape_cast %33 : vector<16x16x128xbf16> to vector<256x128xbf16>
    %c0_11 = arith.constant 0 : index
    %c0_12 = arith.constant 0 : index
    %c0_13 = arith.constant 0 : index
    %c0_14 = arith.constant 0 : index
    %35 = vector.load %arg4[%c0_11, %c0_12, %c0_13, %c0_14] : memref<3x3x128x128xbf16, #tpu.memory_space<vmem>>, vector<1x1x128x128xbf16>
    %36 = vector.shape_cast %35 : vector<1x1x128x128xbf16> to vector<128x128xbf16>
    %cst_15 = arith.constant dense<0.000000e+00> : vector<256x128xf32>
    %37 = tpu.matmul %34, %36, %cst_15 {dimension_numbers = #tpu.dot_dimension_numbers<[1], [0], [0], [1], [0, 0, 1, 1], [], []>} : vector<256x128xbf16>, vector<128x128xbf16>, vector<256x128xf32> -> vector<256x128xf32>
    %38 = arith.addf %32, %37 : vector<256x128xf32>
    %39 = vector.extract_strided_slice %31 {offsets = [0, 1, 0], sizes = [16, 16, 128], strides = [1, 1, 1]} : vector<18x18x128xbf16> to vector<16x16x128xbf16>
    %40 = vector.shape_cast %39 : vector<16x16x128xbf16> to vector<256x128xbf16>
    %c0_16 = arith.constant 0 : index
    %c1 = arith.constant 1 : index
    %c0_17 = arith.constant 0 : index
    %c0_18 = arith.constant 0 : index
    %41 = vector.load %arg4[%c0_16, %c1, %c0_17, %c0_18] : memref<3x3x128x128xbf16, #tpu.memory_space<vmem>>, vector<1x1x128x128xbf16>
    %42 = vector.shape_cast %41 : vector<1x1x128x128xbf16> to vector<128x128xbf16>
    %cst_19 = arith.constant dense<0.000000e+00> : vector<256x128xf32>
    %43 = tpu.matmul %40, %42, %cst_19 {dimension_numbers = #tpu.dot_dimension_numbers<[1], [0], [0], [1], [0, 0, 1, 1], [], []>} : vector<256x128xbf16>, vector<128x128xbf16>, vector<256x128xf32> -> vector<256x128xf32>
    %44 = arith.addf %38, %43 : vector<256x128xf32>
    %45 = vector.extract_strided_slice %31 {offsets = [0, 2, 0], sizes = [16, 16, 128], strides = [1, 1, 1]} : vector<18x18x128xbf16> to vector<16x16x128xbf16>
    %46 = vector.shape_cast %45 : vector<16x16x128xbf16> to vector<256x128xbf16>
    %c0_20 = arith.constant 0 : index
    %c2 = arith.constant 2 : index
    %c0_21 = arith.constant 0 : index
    %c0_22 = arith.constant 0 : index
    %47 = vector.load %arg4[%c0_20, %c2, %c0_21, %c0_22] : memref<3x3x128x128xbf16, #tpu.memory_space<vmem>>, vector<1x1x128x128xbf16>
    %48 = vector.shape_cast %47 : vector<1x1x128x128xbf16> to vector<128x128xbf16>
    %cst_23 = arith.constant dense<0.000000e+00> : vector<256x128xf32>
    %49 = tpu.matmul %46, %48, %cst_23 {dimension_numbers = #tpu.dot_dimension_numbers<[1], [0], [0], [1], [0, 0, 1, 1], [], []>} : vector<256x128xbf16>, vector<128x128xbf16>, vector<256x128xf32> -> vector<256x128xf32>
    %50 = arith.addf %44, %49 : vector<256x128xf32>
    %51 = vector.extract_strided_slice %31 {offsets = [1, 0, 0], sizes = [16, 16, 128], strides = [1, 1, 1]} : vector<18x18x128xbf16> to vector<16x16x128xbf16>
    %52 = vector.shape_cast %51 : vector<16x16x128xbf16> to vector<256x128xbf16>
    %c1_24 = arith.constant 1 : index
    %c0_25 = arith.constant 0 : index
    %c0_26 = arith.constant 0 : index
    %c0_27 = arith.constant 0 : index
    %53 = vector.load %arg4[%c1_24, %c0_25, %c0_26, %c0_27] : memref<3x3x128x128xbf16, #tpu.memory_space<vmem>>, vector<1x1x128x128xbf16>
    %54 = vector.shape_cast %53 : vector<1x1x128x128xbf16> to vector<128x128xbf16>
    %cst_28 = arith.constant dense<0.000000e+00> : vector<256x128xf32>
    %55 = tpu.matmul %52, %54, %cst_28 {dimension_numbers = #tpu.dot_dimension_numbers<[1], [0], [0], [1], [0, 0, 1, 1], [], []>} : vector<256x128xbf16>, vector<128x128xbf16>, vector<256x128xf32> -> vector<256x128xf32>
    %56 = arith.addf %50, %55 : vector<256x128xf32>
    %57 = vector.extract_strided_slice %31 {offsets = [1, 1, 0], sizes = [16, 16, 128], strides = [1, 1, 1]} : vector<18x18x128xbf16> to vector<16x16x128xbf16>
    %58 = vector.shape_cast %57 : vector<16x16x128xbf16> to vector<256x128xbf16>
    %c1_29 = arith.constant 1 : index
    %c1_30 = arith.constant 1 : index
    %c0_31 = arith.constant 0 : index
    %c0_32 = arith.constant 0 : index
    %59 = vector.load %arg4[%c1_29, %c1_30, %c0_31, %c0_32] : memref<3x3x128x128xbf16, #tpu.memory_space<vmem>>, vector<1x1x128x128xbf16>
    %60 = vector.shape_cast %59 : vector<1x1x128x128xbf16> to vector<128x128xbf16>
    %cst_33 = arith.constant dense<0.000000e+00> : vector<256x128xf32>
    %61 = tpu.matmul %58, %60, %cst_33 {dimension_numbers = #tpu.dot_dimension_numbers<[1], [0], [0], [1], [0, 0, 1, 1], [], []>} : vector<256x128xbf16>, vector<128x128xbf16>, vector<256x128xf32> -> vector<256x128xf32>
    %62 = arith.addf %56, %61 : vector<256x128xf32>
    %63 = vector.extract_strided_slice %31 {offsets = [1, 2, 0], sizes = [16, 16, 128], strides = [1, 1, 1]} : vector<18x18x128xbf16> to vector<16x16x128xbf16>
    %64 = vector.shape_cast %63 : vector<16x16x128xbf16> to vector<256x128xbf16>
    %c1_34 = arith.constant 1 : index
    %c2_35 = arith.constant 2 : index
    %c0_36 = arith.constant 0 : index
    %c0_37 = arith.constant 0 : index
    %65 = vector.load %arg4[%c1_34, %c2_35, %c0_36, %c0_37] : memref<3x3x128x128xbf16, #tpu.memory_space<vmem>>, vector<1x1x128x128xbf16>
    %66 = vector.shape_cast %65 : vector<1x1x128x128xbf16> to vector<128x128xbf16>
    %cst_38 = arith.constant dense<0.000000e+00> : vector<256x128xf32>
    %67 = tpu.matmul %64, %66, %cst_38 {dimension_numbers = #tpu.dot_dimension_numbers<[1], [0], [0], [1], [0, 0, 1, 1], [], []>} : vector<256x128xbf16>, vector<128x128xbf16>, vector<256x128xf32> -> vector<256x128xf32>
    %68 = arith.addf %62, %67 : vector<256x128xf32>
    %69 = vector.extract_strided_slice %31 {offsets = [2, 0, 0], sizes = [16, 16, 128], strides = [1, 1, 1]} : vector<18x18x128xbf16> to vector<16x16x128xbf16>
    %70 = vector.shape_cast %69 : vector<16x16x128xbf16> to vector<256x128xbf16>
    %c2_39 = arith.constant 2 : index
    %c0_40 = arith.constant 0 : index
    %c0_41 = arith.constant 0 : index
    %c0_42 = arith.constant 0 : index
    %71 = vector.load %arg4[%c2_39, %c0_40, %c0_41, %c0_42] : memref<3x3x128x128xbf16, #tpu.memory_space<vmem>>, vector<1x1x128x128xbf16>
    %72 = vector.shape_cast %71 : vector<1x1x128x128xbf16> to vector<128x128xbf16>
    %cst_43 = arith.constant dense<0.000000e+00> : vector<256x128xf32>
    %73 = tpu.matmul %70, %72, %cst_43 {dimension_numbers = #tpu.dot_dimension_numbers<[1], [0], [0], [1], [0, 0, 1, 1], [], []>} : vector<256x128xbf16>, vector<128x128xbf16>, vector<256x128xf32> -> vector<256x128xf32>
    %74 = arith.addf %68, %73 : vector<256x128xf32>
    %75 = vector.extract_strided_slice %31 {offsets = [2, 1, 0], sizes = [16, 16, 128], strides = [1, 1, 1]} : vector<18x18x128xbf16> to vector<16x16x128xbf16>
    %76 = vector.shape_cast %75 : vector<16x16x128xbf16> to vector<256x128xbf16>
    %c2_44 = arith.constant 2 : index
    %c1_45 = arith.constant 1 : index
    %c0_46 = arith.constant 0 : index
    %c0_47 = arith.constant 0 : index
    %77 = vector.load %arg4[%c2_44, %c1_45, %c0_46, %c0_47] : memref<3x3x128x128xbf16, #tpu.memory_space<vmem>>, vector<1x1x128x128xbf16>
    %78 = vector.shape_cast %77 : vector<1x1x128x128xbf16> to vector<128x128xbf16>
    %cst_48 = arith.constant dense<0.000000e+00> : vector<256x128xf32>
    %79 = tpu.matmul %76, %78, %cst_48 {dimension_numbers = #tpu.dot_dimension_numbers<[1], [0], [0], [1], [0, 0, 1, 1], [], []>} : vector<256x128xbf16>, vector<128x128xbf16>, vector<256x128xf32> -> vector<256x128xf32>
    %80 = arith.addf %74, %79 : vector<256x128xf32>
    %81 = vector.extract_strided_slice %31 {offsets = [2, 2, 0], sizes = [16, 16, 128], strides = [1, 1, 1]} : vector<18x18x128xbf16> to vector<16x16x128xbf16>
    %82 = vector.shape_cast %81 : vector<16x16x128xbf16> to vector<256x128xbf16>
    %c2_49 = arith.constant 2 : index
    %c2_50 = arith.constant 2 : index
    %c0_51 = arith.constant 0 : index
    %c0_52 = arith.constant 0 : index
    %83 = vector.load %arg4[%c2_49, %c2_50, %c0_51, %c0_52] : memref<3x3x128x128xbf16, #tpu.memory_space<vmem>>, vector<1x1x128x128xbf16>
    %84 = vector.shape_cast %83 : vector<1x1x128x128xbf16> to vector<128x128xbf16>
    %cst_53 = arith.constant dense<0.000000e+00> : vector<256x128xf32>
    %85 = tpu.matmul %82, %84, %cst_53 {dimension_numbers = #tpu.dot_dimension_numbers<[1], [0], [0], [1], [0, 0, 1, 1], [], []>} : vector<256x128xbf16>, vector<128x128xbf16>, vector<256x128xf32> -> vector<256x128xf32>
    %86 = arith.addf %80, %85 : vector<256x128xf32>
    %87 = vector.shape_cast %86 : vector<256x128xf32> to vector<16x16x128xf32>
    %88 = arith.truncf %87 : vector<16x16x128xf32> to vector<16x16x128xbf16>
    %c0_54 = arith.constant 0 : index
    %c0_55 = arith.constant 0 : index
    %c0_56 = arith.constant 0 : index
    %c0_57 = arith.constant 0 : index
    %89 = vector.load %arg5[%c0_54, %c0_55, %c0_56, %c0_57] : memref<1x16x16x128xbf16, #tpu.memory_space<vmem>>, vector<1x16x16x128xbf16>
    %90 = vector.shape_cast %89 : vector<1x16x16x128xbf16> to vector<16x16x128xbf16>
    %91 = vector.shape_cast %88 : vector<16x16x128xbf16> to vector<1x16x16x128xbf16>
    tpu.vector_store %arg5[%c0_54, %c0_55, %c0_56, %c0_57], %91 {strides = array<i32>} : memref<1x16x16x128xbf16, #tpu.memory_space<vmem>>, vector<1x16x16x128xbf16>,
    %cst_58 = arith.constant dense<0.000000e+00> : vector<128xf32>
    %92 = vector.multi_reduction <add>, %86, %cst_58 [0] : vector<256x128xf32> to vector<128xf32>
    %93 = vector.shape_cast %92 : vector<128xf32> to vector<1x128xf32>
    %c0_59 = arith.constant 0 : index
    %c0_60 = arith.constant 0 : index
    %c0_61 = arith.constant 0 : index
    %94 = vector.load %arg6[%c0_59, %c0_60, %c0_61] : memref<1x1x128xf32, #tpu.memory_space<vmem>>, vector<1x1x128xf32>
    %95 = vector.shape_cast %94 : vector<1x1x128xf32> to vector<1x128xf32>
    %96 = vector.shape_cast %93 : vector<1x128xf32> to vector<1x1x128xf32>
    tpu.vector_store %arg6[%c0_59, %c0_60, %c0_61], %96 {strides = array<i32>} : memref<1x1x128xf32, #tpu.memory_space<vmem>>, vector<1x1x128xf32>,
    %97 = arith.mulf %86, %86 : vector<256x128xf32>
    %cst_62 = arith.constant dense<0.000000e+00> : vector<128xf32>
    %98 = vector.multi_reduction <add>, %97, %cst_62 [0] : vector<256x128xf32> to vector<128xf32>
    %99 = vector.shape_cast %98 : vector<128xf32> to vector<1x128xf32>
    %c0_63 = arith.constant 0 : index
    %c0_64 = arith.constant 0 : index
    %c0_65 = arith.constant 0 : index
    %100 = vector.load %arg7[%c0_63, %c0_64, %c0_65] : memref<1x1x128xf32, #tpu.memory_space<vmem>>, vector<1x1x128xf32>
    %101 = vector.shape_cast %100 : vector<1x1x128xf32> to vector<1x128xf32>
    %102 = vector.shape_cast %99 : vector<1x128xf32> to vector<1x1x128xf32>
    tpu.vector_store %arg7[%c0_63, %c0_64, %c0_65], %102 {strides = array<i32>} : memref<1x1x128xf32, #tpu.memory_space<vmem>>, vector<1x1x128xf32>,
    return
  }
  func.func @transform_0(%arg0: i32) -> (i32, i32, i32, i32) {
    %c0_i32 = arith.constant 0 : i32
    %c0_i32_0 = arith.constant 0 : i32
    %c0_i32_1 = arith.constant 0 : i32
    %c0_i32_2 = arith.constant 0 : i32
    return %arg0, %c0_i32, %c0_i32_0, %c0_i32_1 : i32, i32, i32, i32
  }
  func.func @transform_1(%arg0: i32) -> (i32, i32) {
    %c0_i32 = arith.constant 0 : i32
    %c0_i32_0 = arith.constant 0 : i32
    %c0_i32_1 = arith.constant 0 : i32
    return %c0_i32, %c0_i32_0 : i32, i32
  }
  func.func @transform_2(%arg0: i32) -> (i32, i32) {
    %c0_i32 = arith.constant 0 : i32
    %c0_i32_0 = arith.constant 0 : i32
    %c0_i32_1 = arith.constant 0 : i32
    return %c0_i32, %c0_i32_0 : i32, i32
  }
  func.func @transform_3(%arg0: i32) -> (i32, i32, i32, i32) {
    %c0_i32 = arith.constant 0 : i32
    %c0_i32_0 = arith.constant 0 : i32
    %c0_i32_1 = arith.constant 0 : i32
    %c0_i32_2 = arith.constant 0 : i32
    %c0_i32_3 = arith.constant 0 : i32
    return %c0_i32, %c0_i32_0, %c0_i32_1, %c0_i32_2 : i32, i32, i32, i32
  }
  func.func @transform_4(%arg0: i32) -> (i32, i32, i32, i32) {
    %c0_i32 = arith.constant 0 : i32
    %c0_i32_0 = arith.constant 0 : i32
    %c0_i32_1 = arith.constant 0 : i32
    %c0_i32_2 = arith.constant 0 : i32
    return %arg0, %c0_i32, %c0_i32_0, %c0_i32_1 : i32, i32, i32, i32
  }
  func.func @transform_5(%arg0: i32) -> (i32, i32, i32) {
    %c0_i32 = arith.constant 0 : i32
    %c0_i32_0 = arith.constant 0 : i32
    %c0_i32_1 = arith.constant 0 : i32
    return %arg0, %c0_i32, %c0_i32_0 : i32, i32, i32
  }
  func.func @transform_6(%arg0: i32) -> (i32, i32, i32) {
    %c0_i32 = arith.constant 0 : i32
    %c0_i32_0 = arith.constant 0 : i32
    %c0_i32_1 = arith.constant 0 : i32
    return %arg0, %c0_i32, %c0_i32_0 : i32, i32, i32
  }
}

module attributes {stable_mosaic.version = 11 : i64} {
  func.func @_residual_finalize_kernel(%arg0: i32, %arg1: memref<1x16x16x128xbf16, #tpu.memory_space<vmem>>, %arg2: memref<1x128xf32, #tpu.memory_space<vmem>>, %arg3: memref<1x128xf32, #tpu.memory_space<vmem>>, %arg4: memref<1x16x16x128xbf16, #tpu.memory_space<vmem>>, %arg5: memref<1x128xf32, #tpu.memory_space<vmem>>, %arg6: memref<1x128xf32, #tpu.memory_space<vmem>>, %arg7: memref<1x8x8x128xf32, #tpu.memory_space<vmem>>, %arg8: memref<8x16x128xf32, #tpu.memory_space<vmem>>) attributes {dimension_semantics = [#tpu.dimension_semantics<parallel>], iteration_bounds = array<i64: 2>, scalar_prefetch = 0 : i64, scratch_operands = 1 : i64, tpu.core_type = #tpu.core_type<tc>, window_params = [{transform_indices = @transform_0, window_bounds = array<i64: 1, 16, 16, 128>}, {pipeline_mode = #tpu.pipeline_mode<synchronous>, transform_indices = @transform_1, window_bounds = array<i64: 1, 128>}, {pipeline_mode = #tpu.pipeline_mode<synchronous>, transform_indices = @transform_2, window_bounds = array<i64: 1, 128>}, {transform_indices = @transform_3, window_bounds = array<i64: 1, 16, 16, 128>}, {pipeline_mode = #tpu.pipeline_mode<synchronous>, transform_indices = @transform_4, window_bounds = array<i64: 1, 128>}, {pipeline_mode = #tpu.pipeline_mode<synchronous>, transform_indices = @transform_5, window_bounds = array<i64: 1, 128>}, {transform_indices = @transform_6, window_bounds = array<i64: 1, 8, 8, 128>}]} {
    %c0 = arith.constant 0 : index
    %c0_0 = arith.constant 0 : index
    %0 = vector.load %arg2[%c0, %c0_0] : memref<1x128xf32, #tpu.memory_space<vmem>>, vector<1x128xf32>
    %1 = vector.shape_cast %0 : vector<1x128xf32> to vector<1x1x128xf32>
    %c0_1 = arith.constant 0 : index
    %c0_2 = arith.constant 0 : index
    %2 = vector.load %arg3[%c0_1, %c0_2] : memref<1x128xf32, #tpu.memory_space<vmem>>, vector<1x128xf32>
    %3 = vector.shape_cast %2 : vector<1x128xf32> to vector<1x1x128xf32>
    %c0_3 = arith.constant 0 : index
    %c0_4 = arith.constant 0 : index
    %c0_5 = arith.constant 0 : index
    %c0_6 = arith.constant 0 : index
    %4 = vector.load %arg1[%c0_3, %c0_4, %c0_5, %c0_6] : memref<1x16x16x128xbf16, #tpu.memory_space<vmem>>, vector<1x16x16x128xbf16>
    %5 = vector.shape_cast %4 : vector<1x16x16x128xbf16> to vector<16x16x128xbf16>
    %6 = arith.extf %5 : vector<16x16x128xbf16> to vector<16x16x128xf32>
    %7 = vector.broadcast %1 : vector<1x1x128xf32> to vector<16x16x128xf32>
    %8 = arith.mulf %6, %7 : vector<16x16x128xf32>
    %9 = vector.broadcast %3 : vector<1x1x128xf32> to vector<16x16x128xf32>
    %10 = arith.addf %8, %9 : vector<16x16x128xf32>
    %c0_7 = arith.constant 0 : index
    %c0_8 = arith.constant 0 : index
    %11 = vector.load %arg5[%c0_7, %c0_8] : memref<1x128xf32, #tpu.memory_space<vmem>>, vector<1x128xf32>
    %12 = vector.shape_cast %11 : vector<1x128xf32> to vector<1x1x128xf32>
    %c0_9 = arith.constant 0 : index
    %c0_10 = arith.constant 0 : index
    %13 = vector.load %arg6[%c0_9, %c0_10] : memref<1x128xf32, #tpu.memory_space<vmem>>, vector<1x128xf32>
    %14 = vector.shape_cast %13 : vector<1x128xf32> to vector<1x1x128xf32>
    %c0_11 = arith.constant 0 : index
    %c0_12 = arith.constant 0 : index
    %c0_13 = arith.constant 0 : index
    %c0_14 = arith.constant 0 : index
    %15 = vector.load %arg4[%c0_11, %c0_12, %c0_13, %c0_14] : memref<1x16x16x128xbf16, #tpu.memory_space<vmem>>, vector<1x16x16x128xbf16>
    %16 = vector.shape_cast %15 : vector<1x16x16x128xbf16> to vector<16x16x128xbf16>
    %17 = arith.extf %16 : vector<16x16x128xbf16> to vector<16x16x128xf32>
    %18 = vector.broadcast %12 : vector<1x1x128xf32> to vector<16x16x128xf32>
    %19 = arith.mulf %17, %18 : vector<16x16x128xf32>
    %20 = vector.broadcast %14 : vector<1x1x128xf32> to vector<16x16x128xf32>
    %21 = arith.addf %19, %20 : vector<16x16x128xf32>
    %22 = arith.addf %10, %21 : vector<16x16x128xf32>
    %cst = arith.constant 1.000000e-01 : f32
    %23 = vector.broadcast %cst : f32 to vector<16x16x128xf32>
    %24 = arith.mulf %23, %22 : vector<16x16x128xf32>
    %25 = arith.maximumf %22, %24 : vector<16x16x128xf32>
    %26 = vector.shape_cast %25 : vector<16x16x128xf32> to vector<8x2x16x128xf32>
    %cst_15 = arith.constant dense<0xFF800000> : vector<8x16x128xf32>
    %27 = vector.multi_reduction <maximumf>, %26, %cst_15 [1] : vector<8x2x16x128xf32> to vector<8x16x128xf32>
    %c0_16 = arith.constant 0 : index
    %c0_17 = arith.constant 0 : index
    %c0_18 = arith.constant 0 : index
    %28 = vector.load %arg8[%c0_16, %c0_17, %c0_18] : memref<8x16x128xf32, #tpu.memory_space<vmem>>, vector<8x16x128xf32>
    tpu.vector_store %arg8[%c0_16, %c0_17, %c0_18], %27 {strides = array<i32>} : memref<8x16x128xf32, #tpu.memory_space<vmem>>, vector<8x16x128xf32>,
    %c0_19 = arith.constant 0 : index
    %c0_20 = arith.constant 0 : index
    %c0_21 = arith.constant 0 : index
    %29 = tpu.strided_load %arg8[%c0_19, %c0_20, %c0_21] {strides = array<i32: 1, 2, 1>} : memref<8x16x128xf32, #tpu.memory_space<vmem>>, vector<8x8x128xf32>
    %c0_22 = arith.constant 0 : index
    %c1 = arith.constant 1 : index
    %c0_23 = arith.constant 0 : index
    %30 = tpu.strided_load %arg8[%c0_22, %c1, %c0_23] {strides = array<i32: 1, 2, 1>} : memref<8x16x128xf32, #tpu.memory_space<vmem>>, vector<8x8x128xf32>
    %31 = arith.maximumf %29, %30 : vector<8x8x128xf32>
    %c0_24 = arith.constant 0 : index
    %c0_25 = arith.constant 0 : index
    %c0_26 = arith.constant 0 : index
    %c0_27 = arith.constant 0 : index
    %32 = vector.load %arg7[%c0_24, %c0_25, %c0_26, %c0_27] : memref<1x8x8x128xf32, #tpu.memory_space<vmem>>, vector<1x8x8x128xf32>
    %33 = vector.shape_cast %32 : vector<1x8x8x128xf32> to vector<8x8x128xf32>
    %34 = vector.shape_cast %31 : vector<8x8x128xf32> to vector<1x8x8x128xf32>
    tpu.vector_store %arg7[%c0_24, %c0_25, %c0_26, %c0_27], %34 {strides = array<i32>} : memref<1x8x8x128xf32, #tpu.memory_space<vmem>>, vector<1x8x8x128xf32>,
    return
  }
  func.func @transform_0(%arg0: i32) -> (i32, i32, i32, i32) {
    %c0_i32 = arith.constant 0 : i32
    %c0_i32_0 = arith.constant 0 : i32
    %c0_i32_1 = arith.constant 0 : i32
    %c0_i32_2 = arith.constant 0 : i32
    return %arg0, %c0_i32, %c0_i32_0, %c0_i32_1 : i32, i32, i32, i32
  }
  func.func @transform_1(%arg0: i32) -> (i32, i32) {
    %c0_i32 = arith.constant 0 : i32
    %c0_i32_0 = arith.constant 0 : i32
    %c0_i32_1 = arith.constant 0 : i32
    return %c0_i32, %c0_i32_0 : i32, i32
  }
  func.func @transform_2(%arg0: i32) -> (i32, i32) {
    %c0_i32 = arith.constant 0 : i32
    %c0_i32_0 = arith.constant 0 : i32
    %c0_i32_1 = arith.constant 0 : i32
    return %c0_i32, %c0_i32_0 : i32, i32
  }
  func.func @transform_3(%arg0: i32) -> (i32, i32, i32, i32) {
    %c0_i32 = arith.constant 0 : i32
    %c0_i32_0 = arith.constant 0 : i32
    %c0_i32_1 = arith.constant 0 : i32
    %c0_i32_2 = arith.constant 0 : i32
    return %arg0, %c0_i32, %c0_i32_0, %c0_i32_1 : i32, i32, i32, i32
  }
  func.func @transform_4(%arg0: i32) -> (i32, i32) {
    %c0_i32 = arith.constant 0 : i32
    %c0_i32_0 = arith.constant 0 : i32
    %c0_i32_1 = arith.constant 0 : i32
    return %c0_i32, %c0_i32_0 : i32, i32
  }
  func.func @transform_5(%arg0: i32) -> (i32, i32) {
    %c0_i32 = arith.constant 0 : i32
    %c0_i32_0 = arith.constant 0 : i32
    %c0_i32_1 = arith.constant 0 : i32
    return %c0_i32, %c0_i32_0 : i32, i32
  }
  func.func @transform_6(%arg0: i32) -> (i32, i32, i32, i32) {
    %c0_i32 = arith.constant 0 : i32
    %c0_i32_0 = arith.constant 0 : i32
    %c0_i32_1 = arith.constant 0 : i32
    %c0_i32_2 = arith.constant 0 : i32
    return %arg0, %c0_i32, %c0_i32_0, %c0_i32_1 : i32, i32, i32, i32
  }
}

</mosaic_0001>

<llo_original>
// kernel: basic_block_forward.7
$region0: #{basic_block_forward.7}
  #allocation0 [shape = 'u32[]', space=smem, size = 0x4, offset = 0x4, fixed_abs, tag = 'smem constant byte address 0x4 - core index']
  #allocation1 [shape = 'u32[144,128]{1,0:T(1,128)}', space=vmem, size = 0x12000, scoped, tag = 'internal scratch']
  #allocation2 [shape = 'f32[8,16,128]{2,1,0:T(8,128)}', space=vmem, size = 0x10000, scoped, tag = 'scratch operand']
  %s0 = inlined_call_operand.vmem [shape: bf16[2,16,16,128], index: 0, kind: input, shape index: {}]
  %s1 = inlined_call_operand.vmem [shape: f32[1,128], index: 1, kind: input, shape index: {}]
  %s2 = inlined_call_operand.vmem [shape: f32[1,128], index: 2, kind: input, shape index: {}]
  %s3 = inlined_call_operand.vmem [shape: bf16[2,16,16,128], index: 3, kind: input, shape index: {}]
  %s4 = inlined_call_operand.vmem [shape: f32[1,128], index: 4, kind: input, shape index: {}]
  %s5 = inlined_call_operand.vmem [shape: f32[1,128], index: 5, kind: input, shape index: {}]
  %s6 = inlined_call_operand.hbm [shape: f32[2,8,8,128], index: 6, kind: output, shape index: {}]
  %s7 = sld [smem:[#allocation0]]
  $region57: #{basic_block_forward.7} parent=0
    _
  %s9 = ssub.s32 1, %s7
  %s10 = scalar_select 0, %s9, %s7
  $region1: #{basic_block_forward.7} parent=0
    #allocation3 [shape = 'u8[65536]{0}', space=vmem, size = 0x10000, scoped, tag = 'output window, operand 0']
    #allocation4 [shape = 's32[2]{0}', space=sflag, size = 0x8, scoped, tag = 'scoped memory for basic_block_forward.7']
    %11 = vsyncpa [#allocation4], 0
    %s12 = scalar_lea.sflag [#allocation4], 1
    %13 = vsyncpa %s12, 0
    loop: start=0, step=1, limit=4
    $region2: #{basic_block_forward.7} parent=1 // loop_pre_header
      _
    $region3: #{basic_block_forward.7} parent=1 // loop_header
      %s15 = sphi 0, %s19
      %p16 = scmp.ge.s32.totalorder %s15, 4
      %s25 = sphi 0, %s27
      %s28 = sphi 0, %s25
      %s29 = sphi 0, %s28
      %s45 = sphi 0, %s29
      %s49 = sphi 0, %s49
      %s51 = sphi 0, %s49
      %s52 = sphi 0, %s51
      %s66 = sphi 0, %s52
      %s70 = sphi 0, %s70
      %s72 = sphi 0, %s70
      %s73 = sphi 0, %s72
      %s87 = sphi 0, %s73
      %s93 = sphi 0, %s95
      %s96 = sphi 0, %s93
      %s97 = sphi 0, %s96
      %s113 = sphi 0, %s97
      %s117 = sphi 0, %s117
      %s119 = sphi 0, %s117
      %s120 = sphi 0, %s119
      %s134 = sphi 0, %s120
      %s138 = sphi 0, %s138
      %s140 = sphi 0, %s138
      %s141 = sphi 0, %s140
      %s155 = sphi 0, %s141
      %s161 = sphi 0, %s163
      %s164 = sphi 0, %s161
      %s165 = sphi 0, %s164
      %s181 = sphi 0, %s165
    $region4: #{basic_block_forward.7} parent=1 // loop_header_branch
      %18 = sbr.rel (%p16) target = $region8
    $region5: #{basic_block_forward.7} parent=1 // loop_body
      %s20 = ssub.s32 %s15, 1
      %s21 = ssub.s32 %s15, 2
      %s22 = sadd.s32 %s15, 1
      %s23 = ssub.s32 %s15, %s22
      %p24 = scmp.eq.s32.totalorder %s23, 0
      %s26 = sadd.s32 %s25, 1
      %s27 = scalar_select %p24, %s25, %s26
      %p30 = pneg %p24
      %p31 = scmp.eq.s32.totalorder %s15, 1
      %p32 = por %p30, %p31
      %p33 = scmp.ne.s32.totalorder %s25, %s28
      %p34 = scmp.eq.s32.totalorder %s15, 0
      %p35 = por %p33, %p34
      %p36 = scmp.ne.s32.totalorder %s25, %s28
      %p37 = scmp.eq.s32.totalorder %s20, 1
      %p38 = por %p36, %p37
      %p39 = scmp.ne.s32.totalorder %s28, %s29
      %p40 = scmp.eq.s32.totalorder %s20, 0
      %p41 = por %p39, %p40
      %p42 = scmp.ne.s32.totalorder %s28, %s29
      %p43 = scmp.eq.s32.totalorder %s21, 1
      %p44 = por %p42, %p43
      %p46 = scmp.ne.s32.totalorder %s29, %s45
      %p47 = scmp.eq.s32.totalorder %s21, 0
      %p48 = por %p46, %p47
      %s50 = sadd.s32 %s49, 1
      %p53 = scmp.eq.s32.totalorder %s15, 1
      %p54 = scmp.ne.s32.totalorder %s49, %s51
      %p55 = scmp.eq.s32.totalorder %s15, 0
      %p56 = por %p54, %p55
      %p57 = scmp.ne.s32.totalorder %s49, %s51
      %p58 = scmp.eq.s32.totalorder %s20, 1
      %p59 = por %p57, %p58
      %p60 = scmp.ne.s32.totalorder %s51, %s52
      %p61 = scmp.eq.s32.totalorder %s20, 0
      %p62 = por %p60, %p61
      %p63 = scmp.ne.s32.totalorder %s51, %s52
      %p64 = scmp.eq.s32.totalorder %s21, 1
      %p65 = por %p63, %p64
      %p67 = scmp.ne.s32.totalorder %s52, %s66
      %p68 = scmp.eq.s32.totalorder %s21, 0
      %p69 = por %p67, %p68
      %s71 = sadd.s32 %s70, 1
      %p74 = scmp.eq.s32.totalorder %s15, 1
      %p75 = scmp.ne.s32.totalorder %s70, %s72
      %p76 = scmp.eq.s32.totalorder %s15, 0
      %p77 = por %p75, %p76
      %p78 = scmp.ne.s32.totalorder %s70, %s72
      %p79 = scmp.eq.s32.totalorder %s20, 1
      %p80 = por %p78, %p79
      %p81 = scmp.ne.s32.totalorder %s72, %s73
      %p82 = scmp.eq.s32.totalorder %s20, 0
      %p83 = por %p81, %p82
      %p84 = scmp.ne.s32.totalorder %s72, %s73
      %p85 = scmp.eq.s32.totalorder %s21, 1
      %p86 = por %p84, %p85
      %p88 = scmp.ne.s32.totalorder %s73, %s87
      %p89 = scmp.eq.s32.totalorder %s21, 0
      %p90 = por %p88, %p89
      %s91 = ssub.s32 %s15, %s22
      %p92 = scmp.eq.s32.totalorder %s91, 0
      %s94 = sadd.s32 %s93, 1
      %s95 = scalar_select %p92, %s93, %s94
      %p98 = pneg %p92
      %p99 = scmp.eq.s32.totalorder %s15, 1
      %p100 = por %p98, %p99
      %p101 = scmp.ne.s32.totalorder %s93, %s96
      %p102 = scmp.eq.s32.totalorder %s15, 0
      %p103 = por %p101, %p102
      %p104 = scmp.ne.s32.totalorder %s93, %s96
      %p105 = scmp.eq.s32.totalorder %s20, 1
      %p106 = por %p104, %p105
      %p107 = scmp.ne.s32.totalorder %s96, %s97
      %p108 = scmp.eq.s32.totalorder %s20, 0
      %p109 = por %p107, %p108
      %p110 = scmp.ne.s32.totalorder %s96, %s97
      %p111 = scmp.eq.s32.totalorder %s21, 1
      %p112 = por %p110, %p111
      %p114 = scmp.ne.s32.totalorder %s97, %s113
      %p115 = scmp.eq.s32.totalorder %s21, 0
      %p116 = por %p114, %p115
      %s118 = sadd.s32 %s117, 1
      %p121 = scmp.eq.s32.totalorder %s15, 1
      %p122 = scmp.ne.s32.totalorder %s117, %s119
      %p123 = scmp.eq.s32.totalorder %s15, 0
      %p124 = por %p122, %p123
      %p125 = scmp.ne.s32.totalorder %s117, %s119
      %p126 = scmp.eq.s32.totalorder %s20, 1
      %p127 = por %p125, %p126
      %p128 = scmp.ne.s32.totalorder %s119, %s120
      %p129 = scmp.eq.s32.totalorder %s20, 0
      %p130 = por %p128, %p129
      %p131 = scmp.ne.s32.totalorder %s119, %s120
      %p132 = scmp.eq.s32.totalorder %s21, 1
      %p133 = por %p131, %p132
      %p135 = scmp.ne.s32.totalorder %s120, %s134
      %p136 = scmp.eq.s32.totalorder %s21, 0
      %p137 = por %p135, %p136
      %s139 = sadd.s32 %s138, 1
      %p142 = scmp.eq.s32.totalorder %s15, 1
      %p143 = scmp.ne.s32.totalorder %s138, %s140
      %p144 = scmp.eq.s32.totalorder %s15, 0
      %p145 = por %p143, %p144
      %p146 = scmp.ne.s32.totalorder %s138, %s140
      %p147 = scmp.eq.s32.totalorder %s20, 1
      %p148 = por %p146, %p147
      %p149 = scmp.ne.s32.totalorder %s140, %s141
      %p150 = scmp.eq.s32.totalorder %s20, 0
      %p151 = por %p149, %p150
      %p152 = scmp.ne.s32.totalorder %s140, %s141
      %p153 = scmp.eq.s32.totalorder %s21, 1
      %p154 = por %p152, %p153
      %p156 = scmp.ne.s32.totalorder %s141, %s155
      %p157 = scmp.eq.s32.totalorder %s21, 0
      %p158 = por %p156, %p157
      %s159 = ssub.s32 %s15, %s22
      %p160 = scmp.eq.s32.totalorder %s159, 0
      %s162 = sadd.s32 %s161, 1
      %s163 = scalar_select %p160, %s161, %s162
      %p166 = pneg %p160
      %p167 = scmp.eq.s32.totalorder %s15, 1
      %p168 = por %p166, %p167
      %p169 = scmp.ne.s32.totalorder %s161, %s164
      %p170 = scmp.eq.s32.totalorder %s15, 0
      %p171 = por %p169, %p170
      %p172 = scmp.ne.s32.totalorder %s161, %s164
      %p173 = scmp.eq.s32.totalorder %s20, 1
      %p174 = por %p172, %p173
      %p175 = scmp.ne.s32.totalorder %s164, %s165
      %p176 = scmp.eq.s32.totalorder %s20, 0
      %p177 = por %p175, %p176
      %p178 = scmp.ne.s32.totalorder %s164, %s165
      %p179 = scmp.eq.s32.totalorder %s21, 1
      %p180 = por %p178, %p179
      %p182 = scmp.ne.s32.totalorder %s165, %s181
      %p183 = scmp.eq.s32.totalorder %s21, 0
      %p184 = por %p182, %p183
      %p185 = scmp.le.s32.totalorder 1, %s15
      %p186 = scmp.lt.s32.totalorder %s15, 3
      %p187 = pnand %p185, %p186
      %p188 = pneg %p187
      // Predicated region
      $region9: #{basic_block_forward.7} parent=5 // pred_check
        _
      $region10: #{basic_block_forward.7} parent=5 // pred_check_branch
        %190 = sbr.rel (%p187) target = $region12
      $region11: #{basic_block_forward.7} parent=5 // pred_region
        %s191 = ssub.s32 %s15, 1
        // Predicated region
        $region13: #{basic_block_forward.7} parent=11 // pred_check
          %p192 = pneg %p62
        $region14: #{basic_block_forward.7} parent=11 // pred_check_branch
          %194 = sbr.rel (%p192) target = $region16
        $region15: #{basic_block_forward.7} parent=11 // pred_region
          _
        $region16: #{basic_block_forward.7} parent=11 // pred_fallthru
          _
        // Predicated region
        $region17: #{basic_block_forward.7} parent=11 // pred_check
          %p195 = pneg %p83
        $region18: #{basic_block_forward.7} parent=11 // pred_check_branch
          %197 = sbr.rel (%p195) target = $region20
        $region19: #{basic_block_forward.7} parent=11 // pred_region
          _
        $region20: #{basic_block_forward.7} parent=11 // pred_fallthru
          _
        // Predicated region
        $region21: #{basic_block_forward.7} parent=11 // pred_check
          %p198 = pneg %p130
        $region22: #{basic_block_forward.7} parent=11 // pred_check_branch
          %200 = sbr.rel (%p198) target = $region24
        $region23: #{basic_block_forward.7} parent=11 // pred_region
          _
        $region24: #{basic_block_forward.7} parent=11 // pred_fallthru
          _
        // Predicated region
        $region25: #{basic_block_forward.7} parent=11 // pred_check
          %p201 = pneg %p151
        $region26: #{basic_block_forward.7} parent=11 // pred_check_branch
          %203 = sbr.rel (%p201) target = $region28
        $region27: #{basic_block_forward.7} parent=11 // pred_region
          _
        $region28: #{basic_block_forward.7} parent=11 // pred_fallthru
          _
      $region12: #{basic_block_forward.7} parent=5 // pred_fallthru
        _
      %p204 = scmp.lt.s32.totalorder %s15, 2
      // Predicated region
      $region29: #{basic_block_forward.7} parent=5 // pred_check
        %p205 = pneg %p204
      $region30: #{basic_block_forward.7} parent=5 // pred_check_branch
        %207 = sbr.rel (%p205) target = $region32
      $region31: #{basic_block_forward.7} parent=5 // pred_region
        // Predicated region
        $region33: #{basic_block_forward.7} parent=31 // pred_check
          %p208 = pneg %p35
        $region34: #{basic_block_forward.7} parent=31 // pred_check_branch
          %210 = sbr.rel (%p208) target = $region36
        $region35: #{basic_block_forward.7} parent=31 // pred_region
          %p211 = scmp.lt.s32.totalorder %s15, 1
          %s212 = scalar_select %p211, %s15, 1
          %s213 = smul.addr %s212, 32
          %s214 = smul.addr %s213, 4
          %s215 = scalar_lea.vmem %s0, %s214
        $region36: #{basic_block_forward.7} parent=31 // pred_fallthru
          _
        // Predicated region
        $region37: #{basic_block_forward.7} parent=31 // pred_check
          %p216 = pneg %p103
        $region38: #{basic_block_forward.7} parent=31 // pred_check_branch
          %218 = sbr.rel (%p216) target = $region40
        $region39: #{basic_block_forward.7} parent=31 // pred_region
          %p219 = scmp.lt.s32.totalorder %s15, 1
          %s220 = scalar_select %p219, %s15, 1
          %s221 = smul.addr %s220, 32
          %s222 = smul.addr %s221, 4
          %s223 = scalar_lea.vmem %s3, %s222
        $region40: #{basic_block_forward.7} parent=31 // pred_fallthru
          _
      $region32: #{basic_block_forward.7} parent=5 // pred_fallthru
        _
      %p224 = scmp.le.s32.totalorder 1, %s15
      %p225 = scmp.lt.s32.totalorder %s15, 3
      %p226 = pnand %p224, %p225
      %p227 = pneg %p226
      // Predicated region
      $region41: #{basic_block_forward.7} parent=5 // pred_check
        _
      $region42: #{basic_block_forward.7} parent=5 // pred_check_branch
        %229 = sbr.rel (%p226) target = $region44
      $region43: #{basic_block_forward.7} parent=5 // pred_region
        %s230 = ssub.s32 %s15, 1
        %p231 = scmp.lt.s32.totalorder %s20, 1
        %s232 = scalar_select %p231, %s20, 1
        %s233 = smul.addr %s232, 32
        %s234 = smul.addr %s233, 4
        %s235 = scalar_lea.vmem %s0, %s234
        %p236 = pneg %p41
        %p237 = pneg %p38
        %p238 = pneg %p62
        %p239 = pneg %p59
        %p240 = pneg %p83
        %p241 = pneg %p80
        %p242 = scmp.lt.s32.totalorder %s20, 1
        %s243 = scalar_select %p242, %s20, 1
        %s244 = smul.addr %s243, 32
        %s245 = smul.addr %s244, 4
        %s246 = scalar_lea.vmem %s3, %s245
        %p247 = pneg %p109
        %p248 = pneg %p106
        %p249 = pneg %p130
        %p250 = pneg %p127
        %p251 = pneg %p151
        %p252 = pneg %p148
        %p253 = pneg %p177
        %p254 = pneg %p174
        %s255 = sand.u32 %s164, 1
        %s256 = scalar_lea.sflag [#allocation4], %s255
        %s257 = sand.u32 %s164, 1
        %s258 = smul.addr %s257, 64
        %s259 = scalar_lea.vmem [#allocation3], %s258
        %p260 = scmp.lt.s32.totalorder %s20, 1
        %s261 = scalar_select %p260, %s20, 1
        %s262 = smul.addr %s261, 32
        %s263 = smul.addr %s262, 4
        %s264 = scalar_lea.vmem %s0, %s263
        %p265 = scmp.lt.s32.totalorder %s20, 1
        %s266 = scalar_select %p265, %s20, 1
        %s267 = smul.addr %s266, 32
        %s268 = smul.addr %s267, 4
        %s269 = scalar_lea.vmem %s3, %s268
        %v270 = vld [vmem:[%s1] sm:$0x1]
        %v271 = vld [vmem:[%s2] sm:$0x1]
        %v272 = vld [vmem:[%s264] sm:$0xf]
        %v273 = vld [vmem:[%s264 + $0x4] sm:$0xf]
        %v274 = vld [vmem:[%s264 + $0x8] sm:$0xf]
        %v275 = vld [vmem:[%s264 + $0xc] sm:$0xf]
        %v276 = vld [vmem:[%s264 + $0x10] sm:$0xf]
        %v277 = vld [vmem:[%s264 + $0x14] sm:$0xf]
        %v278 = vld [vmem:[%s264 + $0x18] sm:$0xf]
        %v279 = vld [vmem:[%s264 + $0x1c] sm:$0xf]
        %v280 = vld [vmem:[%s264 + $0x20] sm:$0xf]
        %v281 = vld [vmem:[%s264 + $0x24] sm:$0xf]
        %v282 = vld [vmem:[%s264 + $0x28] sm:$0xf]
        %v283 = vld [vmem:[%s264 + $0x2c] sm:$0xf]
        %v284 = vld [vmem:[%s264 + $0x30] sm:$0xf]
        %v285 = vld [vmem:[%s264 + $0x34] sm:$0xf]
        %v286 = vld [vmem:[%s264 + $0x38] sm:$0xf]
        %v287 = vld [vmem:[%s264 + $0x3c] sm:$0xf]
        %v288 = vld [vmem:[%s264 + $0x40] sm:$0xf]
        %v289 = vld [vmem:[%s264 + $0x44] sm:$0xf]
        %v290 = vld [vmem:[%s264 + $0x48] sm:$0xf]
        %v291 = vld [vmem:[%s264 + $0x4c] sm:$0xf]
        %v292 = vld [vmem:[%s264 + $0x50] sm:$0xf]
        %v293 = vld [vmem:[%s264 + $0x54] sm:$0xf]
        %v294 = vld [vmem:[%s264 + $0x58] sm:$0xf]
        %v295 = vld [vmem:[%s264 + $0x5c] sm:$0xf]
        %v296 = vld [vmem:[%s264 + $0x60] sm:$0xf]
        %v297 = vld [vmem:[%s264 + $0x64] sm:$0xf]
        %v298 = vld [vmem:[%s264 + $0x68] sm:$0xf]
        %v299 = vld [vmem:[%s264 + $0x6c] sm:$0xf]
        %v300 = vld [vmem:[%s264 + $0x70] sm:$0xf]
        %v301 = vld [vmem:[%s264 + $0x74] sm:$0xf]
        %v302 = vld [vmem:[%s264 + $0x78] sm:$0xf]
        %v303 = vld [vmem:[%s264 + $0x7c] sm:$0xf]
        %v304 = vunpack.c.l.bf16 %v272
        %v305 = vunpack.c.l.bf16 %v273
        %v306 = vunpack.c.l.bf16 %v274
        %v307 = vunpack.c.l.bf16 %v275
        %v308 = vunpack.c.l.bf16 %v276
        %v309 = vunpack.c.l.bf16 %v277
        %v310 = vunpack.c.l.bf16 %v278
        %v311 = vunpack.c.l.bf16 %v279
        %v312 = vunpack.c.l.bf16 %v280
        %v313 = vunpack.c.l.bf16 %v281
        %v314 = vunpack.c.l.bf16 %v282
        %v315 = vunpack.c.l.bf16 %v283
        %v316 = vunpack.c.l.bf16 %v284
        %v317 = vunpack.c.l.bf16 %v285
        %v318 = vunpack.c.l.bf16 %v286
        %v319 = vunpack.c.l.bf16 %v287
        %v320 = vunpack.c.l.bf16 %v288
        %v321 = vunpack.c.l.bf16 %v289
        %v322 = vunpack.c.l.bf16 %v290
        %v323 = vunpack.c.l.bf16 %v291
        %v324 = vunpack.c.l.bf16 %v292
        %v325 = vunpack.c.l.bf16 %v293
        %v326 = vunpack.c.l.bf16 %v294
        %v327 = vunpack.c.l.bf16 %v295
        %v328 = vunpack.c.l.bf16 %v296
        %v329 = vunpack.c.l.bf16 %v297
        %v330 = vunpack.c.l.bf16 %v298
        %v331 = vunpack.c.l.bf16 %v299
        %v332 = vunpack.c.l.bf16 %v300
        %v333 = vunpack.c.l.bf16 %v301
        %v334 = vunpack.c.l.bf16 %v302
        %v335 = vunpack.c.l.bf16 %v303
        %v337 = vlaneseq
        %v338 = vshrl.u32 %v337, 7
        %v339 = vsub.s32 0, %v338
        %v340 = vrot.slane %v270, %v339
        %v342 = vmul.f32 %v304, %v340
        %v343 = vmul.f32 %v305, %v340
        %v344 = vmul.f32 %v306, %v340
        %v345 = vmul.f32 %v307, %v340
        %v346 = vmul.f32 %v308, %v340
        %v347 = vmul.f32 %v309, %v340
        %v348 = vmul.f32 %v310, %v340
        %v349 = vmul.f32 %v311, %v340
        %v350 = vmul.f32 %v312, %v340
        %v351 = vmul.f32 %v313, %v340
        %v352 = vmul.f32 %v314, %v340
        %v353 = vmul.f32 %v315, %v340
        %v354 = vmul.f32 %v316, %v340
        %v355 = vmul.f32 %v317, %v340
        %v356 = vmul.f32 %v318, %v340
        %v357 = vmul.f32 %v319, %v340
        %v358 = vmul.f32 %v320, %v340
        %v359 = vmul.f32 %v321, %v340
        %v360 = vmul.f32 %v322, %v340
        %v361 = vmul.f32 %v323, %v340
        %v362 = vmul.f32 %v324, %v340
        %v363 = vmul.f32 %v325, %v340
        %v364 = vmul.f32 %v326, %v340
        %v365 = vmul.f32 %v327, %v340
        %v366 = vmul.f32 %v328, %v340
        %v367 = vmul.f32 %v329, %v340
        %v368 = vmul.f32 %v330, %v340
        %v369 = vmul.f32 %v331, %v340
        %v370 = vmul.f32 %v332, %v340
        %v371 = vmul.f32 %v333, %v340
        %v372 = vmul.f32 %v334, %v340
        %v373 = vmul.f32 %v335, %v340
        %v375 = vlaneseq
        %v376 = vshrl.u32 %v375, 7
        %v377 = vsub.s32 0, %v376
        %v378 = vrot.slane %v271, %v377
        %v380 = vadd.f32 %v342, %v378
        %v381 = vadd.f32 %v343, %v378
        %v382 = vadd.f32 %v344, %v378
        %v383 = vadd.f32 %v345, %v378
        %v384 = vadd.f32 %v346, %v378
        %v385 = vadd.f32 %v347, %v378
        %v386 = vadd.f32 %v348, %v378
        %v387 = vadd.f32 %v349, %v378
        %v388 = vadd.f32 %v350, %v378
        %v389 = vadd.f32 %v351, %v378
        %v390 = vadd.f32 %v352, %v378
        %v391 = vadd.f32 %v353, %v378
        %v392 = vadd.f32 %v354, %v378
        %v393 = vadd.f32 %v355, %v378
        %v394 = vadd.f32 %v356, %v378
        %v395 = vadd.f32 %v357, %v378
        %v396 = vadd.f32 %v358, %v378
        %v397 = vadd.f32 %v359, %v378
        %v398 = vadd.f32 %v360, %v378
        %v399 = vadd.f32 %v361, %v378
        %v400 = vadd.f32 %v362, %v378
        %v401 = vadd.f32 %v363, %v378
        %v402 = vadd.f32 %v364, %v378
        %v403 = vadd.f32 %v365, %v378
        %v404 = vadd.f32 %v366, %v378
        %v405 = vadd.f32 %v367, %v378
        %v406 = vadd.f32 %v368, %v378
        %v407 = vadd.f32 %v369, %v378
        %v408 = vadd.f32 %v370, %v378
        %v409 = vadd.f32 %v371, %v378
        %v410 = vadd.f32 %v372, %v378
        %v411 = vadd.f32 %v373, %v378
        %v412 = vld [vmem:[%s4] sm:$0x1]
        %v413 = vld [vmem:[%s5] sm:$0x1]
        %v414 = vld [vmem:[%s269] sm:$0xf]
        %v415 = vld [vmem:[%s269 + $0x4] sm:$0xf]
        %v416 = vld [vmem:[%s269 + $0x8] sm:$0xf]
        %v417 = vld [vmem:[%s269 + $0xc] sm:$0xf]
        %v418 = vld [vmem:[%s269 + $0x10] sm:$0xf]
        %v419 = vld [vmem:[%s269 + $0x14] sm:$0xf]
        %v420 = vld [vmem:[%s269 + $0x18] sm:$0xf]
        %v421 = vld [vmem:[%s269 + $0x1c] sm:$0xf]
        %v422 = vld [vmem:[%s269 + $0x20] sm:$0xf]
        %v423 = vld [vmem:[%s269 + $0x24] sm:$0xf]
        %v424 = vld [vmem:[%s269 + $0x28] sm:$0xf]
        %v425 = vld [vmem:[%s269 + $0x2c] sm:$0xf]
        %v426 = vld [vmem:[%s269 + $0x30] sm:$0xf]
        %v427 = vld [vmem:[%s269 + $0x34] sm:$0xf]
        %v428 = vld [vmem:[%s269 + $0x38] sm:$0xf]
        %v429 = vld [vmem:[%s269 + $0x3c] sm:$0xf]
        %v430 = vld [vmem:[%s269 + $0x40] sm:$0xf]
        %v431 = vld [vmem:[%s269 + $0x44] sm:$0xf]
        %v432 = vld [vmem:[%s269 + $0x48] sm:$0xf]
        %v433 = vld [vmem:[%s269 + $0x4c] sm:$0xf]
        %v434 = vld [vmem:[%s269 + $0x50] sm:$0xf]
        %v435 = vld [vmem:[%s269 + $0x54] sm:$0xf]
        %v436 = vld [vmem:[%s269 + $0x58] sm:$0xf]
        %v437 = vld [vmem:[%s269 + $0x5c] sm:$0xf]
        %v438 = vld [vmem:[%s269 + $0x60] sm:$0xf]
        %v439 = vld [vmem:[%s269 + $0x64] sm:$0xf]
        %v440 = vld [vmem:[%s269 + $0x68] sm:$0xf]
        %v441 = vld [vmem:[%s269 + $0x6c] sm:$0xf]
        %v442 = vld [vmem:[%s269 + $0x70] sm:$0xf]
        %v443 = vld [vmem:[%s269 + $0x74] sm:$0xf]
        %v444 = vld [vmem:[%s269 + $0x78] sm:$0xf]
        %v445 = vld [vmem:[%s269 + $0x7c] sm:$0xf]
        %v446 = vunpack.c.l.bf16 %v414
        %v447 = vunpack.c.l.bf16 %v415
        %v448 = vunpack.c.l.bf16 %v416
        %v449 = vunpack.c.l.bf16 %v417
        %v450 = vunpack.c.l.bf16 %v418
        %v451 = vunpack.c.l.bf16 %v419
        %v452 = vunpack.c.l.bf16 %v420
        %v453 = vunpack.c.l.bf16 %v421
        %v454 = vunpack.c.l.bf16 %v422
        %v455 = vunpack.c.l.bf16 %v423
        %v456 = vunpack.c.l.bf16 %v424
        %v457 = vunpack.c.l.bf16 %v425
        %v458 = vunpack.c.l.bf16 %v426
        %v459 = vunpack.c.l.bf16 %v427
        %v460 = vunpack.c.l.bf16 %v428
        %v461 = vunpack.c.l.bf16 %v429
        %v462 = vunpack.c.l.bf16 %v430
        %v463 = vunpack.c.l.bf16 %v431
        %v464 = vunpack.c.l.bf16 %v432
        %v465 = vunpack.c.l.bf16 %v433
        %v466 = vunpack.c.l.bf16 %v434
        %v467 = vunpack.c.l.bf16 %v435
        %v468 = vunpack.c.l.bf16 %v436
        %v469 = vunpack.c.l.bf16 %v437
        %v470 = vunpack.c.l.bf16 %v438
        %v471 = vunpack.c.l.bf16 %v439
        %v472 = vunpack.c.l.bf16 %v440
        %v473 = vunpack.c.l.bf16 %v441
        %v474 = vunpack.c.l.bf16 %v442
        %v475 = vunpack.c.l.bf16 %v443
        %v476 = vunpack.c.l.bf16 %v444
        %v477 = vunpack.c.l.bf16 %v445
        %v479 = vlaneseq
        %v480 = vshrl.u32 %v479, 7
        %v481 = vsub.s32 0, %v480
        %v482 = vrot.slane %v412, %v481
        %v484 = vmul.f32 %v446, %v482
        %v485 = vmul.f32 %v447, %v482
        %v486 = vmul.f32 %v448, %v482
        %v487 = vmul.f32 %v449, %v482
        %v488 = vmul.f32 %v450, %v482
        %v489 = vmul.f32 %v451, %v482
        %v490 = vmul.f32 %v452, %v482
        %v491 = vmul.f32 %v453, %v482
        %v492 = vmul.f32 %v454, %v482
        %v493 = vmul.f32 %v455, %v482
        %v494 = vmul.f32 %v456, %v482
        %v495 = vmul.f32 %v457, %v482
        %v496 = vmul.f32 %v458, %v482
        %v497 = vmul.f32 %v459, %v482
        %v498 = vmul.f32 %v460, %v482
        %v499 = vmul.f32 %v461, %v482
        %v500 = vmul.f32 %v462, %v482
        %v501 = vmul.f32 %v463, %v482
        %v502 = vmul.f32 %v464, %v482
        %v503 = vmul.f32 %v465, %v482
        %v504 = vmul.f32 %v466, %v482
        %v505 = vmul.f32 %v467, %v482
        %v506 = vmul.f32 %v468, %v482
        %v507 = vmul.f32 %v469, %v482
        %v508 = vmul.f32 %v470, %v482
        %v509 = vmul.f32 %v471, %v482
        %v510 = vmul.f32 %v472, %v482
        %v511 = vmul.f32 %v473, %v482
        %v512 = vmul.f32 %v474, %v482
        %v513 = vmul.f32 %v475, %v482
        %v514 = vmul.f32 %v476, %v482
        %v515 = vmul.f32 %v477, %v482
        %v517 = vlaneseq
        %v518 = vshrl.u32 %v517, 7
        %v519 = vsub.s32 0, %v518
        %v520 = vrot.slane %v413, %v519
        %v522 = vadd.f32 %v484, %v520
        %v523 = vadd.f32 %v485, %v520
        %v524 = vadd.f32 %v486, %v520
        %v525 = vadd.f32 %v487, %v520
        %v526 = vadd.f32 %v488, %v520
        %v527 = vadd.f32 %v489, %v520
        %v528 = vadd.f32 %v490, %v520
        %v529 = vadd.f32 %v491, %v520
        %v530 = vadd.f32 %v492, %v520
        %v531 = vadd.f32 %v493, %v520
        %v532 = vadd.f32 %v494, %v520
        %v533 = vadd.f32 %v495, %v520
        %v534 = vadd.f32 %v496, %v520
        %v535 = vadd.f32 %v497, %v520
        %v536 = vadd.f32 %v498, %v520
        %v537 = vadd.f32 %v499, %v520
        %v538 = vadd.f32 %v500, %v520
        %v539 = vadd.f32 %v501, %v520
        %v540 = vadd.f32 %v502, %v520
        %v541 = vadd.f32 %v503, %v520
        %v542 = vadd.f32 %v504, %v520
        %v543 = vadd.f32 %v505, %v520
        %v544 = vadd.f32 %v506, %v520
        %v545 = vadd.f32 %v507, %v520
        %v546 = vadd.f32 %v508, %v520
        %v547 = vadd.f32 %v509, %v520
        %v548 = vadd.f32 %v510, %v520
        %v549 = vadd.f32 %v511, %v520
        %v550 = vadd.f32 %v512, %v520
        %v551 = vadd.f32 %v513, %v520
        %v552 = vadd.f32 %v514, %v520
        %v553 = vadd.f32 %v515, %v520
        %v554 = vadd.f32 %v380, %v522
        %v555 = vadd.f32 %v381, %v523
        %v556 = vadd.f32 %v382, %v524
        %v557 = vadd.f32 %v383, %v525
        %v558 = vadd.f32 %v384, %v526
        %v559 = vadd.f32 %v385, %v527
        %v560 = vadd.f32 %v386, %v528
        %v561 = vadd.f32 %v387, %v529
        %v562 = vadd.f32 %v388, %v530
        %v563 = vadd.f32 %v389, %v531
        %v564 = vadd.f32 %v390, %v532
        %v565 = vadd.f32 %v391, %v533
        %v566 = vadd.f32 %v392, %v534
        %v567 = vadd.f32 %v393, %v535
        %v568 = vadd.f32 %v394, %v536
        %v569 = vadd.f32 %v395, %v537
        %v570 = vadd.f32 %v396, %v538
        %v571 = vadd.f32 %v397, %v539
        %v572 = vadd.f32 %v398, %v540
        %v573 = vadd.f32 %v399, %v541
        %v574 = vadd.f32 %v400, %v542
        %v575 = vadd.f32 %v401, %v543
        %v576 = vadd.f32 %v402, %v544
        %v577 = vadd.f32 %v403, %v545
        %v578 = vadd.f32 %v404, %v546
        %v579 = vadd.f32 %v405, %v547
        %v580 = vadd.f32 %v406, %v548
        %v581 = vadd.f32 %v407, %v549
        %v582 = vadd.f32 %v408, %v550
        %v583 = vadd.f32 %v409, %v551
        %v584 = vadd.f32 %v410, %v552
        %v585 = vadd.f32 %v411, %v553
        %v586 = vmul.f32 %v554, 0.1
        %v587 = vmul.f32 %v555, 0.1
        %v588 = vmul.f32 %v556, 0.1
        %v589 = vmul.f32 %v557, 0.1
        %v590 = vmul.f32 %v558, 0.1
        %v591 = vmul.f32 %v559, 0.1
        %v592 = vmul.f32 %v560, 0.1
        %v593 = vmul.f32 %v561, 0.1
        %v594 = vmul.f32 %v562, 0.1
        %v595 = vmul.f32 %v563, 0.1
        %v596 = vmul.f32 %v564, 0.1
        %v597 = vmul.f32 %v565, 0.1
        %v598 = vmul.f32 %v566, 0.1
        %v599 = vmul.f32 %v567, 0.1
        %v600 = vmul.f32 %v568, 0.1
        %v601 = vmul.f32 %v569, 0.1
        %v602 = vmul.f32 %v570, 0.1
        %v603 = vmul.f32 %v571, 0.1
        %v604 = vmul.f32 %v572, 0.1
        %v605 = vmul.f32 %v573, 0.1
        %v606 = vmul.f32 %v574, 0.1
        %v607 = vmul.f32 %v575, 0.1
        %v608 = vmul.f32 %v576, 0.1
        %v609 = vmul.f32 %v577, 0.1
        %v610 = vmul.f32 %v578, 0.1
        %v611 = vmul.f32 %v579, 0.1
        %v612 = vmul.f32 %v580, 0.1
        %v613 = vmul.f32 %v581, 0.1
        %v614 = vmul.f32 %v582, 0.1
        %v615 = vmul.f32 %v583, 0.1
        %v616 = vmul.f32 %v584, 0.1
        %v617 = vmul.f32 %v585, 0.1
        %v618 = vmax.f32 %v554, %v586
        %v619 = vmax.f32 %v555, %v587
        %v620 = vmax.f32 %v556, %v588
        %v621 = vmax.f32 %v557, %v589
        %v622 = vmax.f32 %v558, %v590
        %v623 = vmax.f32 %v559, %v591
        %v624 = vmax.f32 %v560, %v592
        %v625 = vmax.f32 %v561, %v593
        %v626 = vmax.f32 %v562, %v594
        %v627 = vmax.f32 %v563, %v595
        %v628 = vmax.f32 %v564, %v596
        %v629 = vmax.f32 %v565, %v597
        %v630 = vmax.f32 %v566, %v598
        %v631 = vmax.f32 %v567, %v599
        %v632 = vmax.f32 %v568, %v600
        %v633 = vmax.f32 %v569, %v601
        %v634 = vmax.f32 %v570, %v602
        %v635 = vmax.f32 %v571, %v603
        %v636 = vmax.f32 %v572, %v604
        %v637 = vmax.f32 %v573, %v605
        %v638 = vmax.f32 %v574, %v606
        %v639 = vmax.f32 %v575, %v607
        %v640 = vmax.f32 %v576, %v608
        %v641 = vmax.f32 %v577, %v609
        %v642 = vmax.f32 %v578, %v610
        %v643 = vmax.f32 %v579, %v611
        %v644 = vmax.f32 %v580, %v612
        %v645 = vmax.f32 %v581, %v613
        %v646 = vmax.f32 %v582, %v614
        %v647 = vmax.f32 %v583, %v615
        %v648 = vmax.f32 %v584, %v616
        %v649 = vmax.f32 %v585, %v617
        %v650 = vmax.f32 %v618, %v620
        %v651 = vmax.f32 %v619, %v621
        %v652 = vmax.f32 %v622, %v624
        %v653 = vmax.f32 %v623, %v625
        %v654 = vmax.f32 %v626, %v628
        %v655 = vmax.f32 %v627, %v629
        %v656 = vmax.f32 %v630, %v632
        %v657 = vmax.f32 %v631, %v633
        %v658 = vmax.f32 %v634, %v636
        %v659 = vmax.f32 %v635, %v637
        %v660 = vmax.f32 %v638, %v640
        %v661 = vmax.f32 %v639, %v641
        %v662 = vmax.f32 %v642, %v644
        %v663 = vmax.f32 %v643, %v645
        %v664 = vmax.f32 %v646, %v648
        %v665 = vmax.f32 %v647, %v649
        %666 = vst [vmem:[#allocation2] sm:$0xff] %v650
        %667 = vst [vmem:[#allocation2 + $0x8] sm:$0xff] %v651
        %668 = vst [vmem:[#allocation2 + $0x10] sm:$0xff] %v652
        %669 = vst [vmem:[#allocation2 + $0x18] sm:$0xff] %v653
        %670 = vst [vmem:[#allocation2 + $0x20] sm:$0xff] %v654
        %671 = vst [vmem:[#allocation2 + $0x28] sm:$0xff] %v655
        %672 = vst [vmem:[#allocation2 + $0x30] sm:$0xff] %v656
        %673 = vst [vmem:[#allocation2 + $0x38] sm:$0xff] %v657
        %674 = vst [vmem:[#allocation2 + $0x40] sm:$0xff] %v658
        %675 = vst [vmem:[#allocation2 + $0x48] sm:$0xff] %v659
        %676 = vst [vmem:[#allocation2 + $0x50] sm:$0xff] %v660
        %677 = vst [vmem:[#allocation2 + $0x58] sm:$0xff] %v661
        %678 = vst [vmem:[#allocation2 + $0x60] sm:$0xff] %v662
        %679 = vst [vmem:[#allocation2 + $0x68] sm:$0xff] %v663
        %680 = vst [vmem:[#allocation2 + $0x70] sm:$0xff] %v664
        %681 = vst [vmem:[#allocation2 + $0x78] sm:$0xff] %v665
        %v682 = vld [vmem:[#allocation2] ss:$2 sm:$0xff]
        %s683 = scalar_lea.vmem [#allocation2], 16
        %v684 = vld [vmem:[%s683] ss:$2 sm:$0xff]
        %s685 = scalar_lea.vmem [#allocation2], 32
        %v686 = vld [vmem:[%s685] ss:$2 sm:$0xff]
        %s687 = scalar_lea.vmem [#allocation2], 48
        %v688 = vld [vmem:[%s687] ss:$2 sm:$0xff]
        %s689 = scalar_lea.vmem [#allocation2], 64
        %v690 = vld [vmem:[%s689] ss:$2 sm:$0xff]
        %s691 = scalar_lea.vmem [#allocation2], 80
        %v692 = vld [vmem:[%s691] ss:$2 sm:$0xff]
        %s693 = scalar_lea.vmem [#allocation2], 96
        %v694 = vld [vmem:[%s693] ss:$2 sm:$0xff]
        %s695 = scalar_lea.vmem [#allocation2], 112
        %v696 = vld [vmem:[%s695] ss:$2 sm:$0xff]
        %s697 = scalar_lea.vmem [#allocation2], 1
        %v698 = vld [vmem:[%s697] ss:$2 sm:$0xff]
        %s699 = scalar_lea.vmem [#allocation2], 17
        %v700 = vld [vmem:[%s699] ss:$2 sm:$0xff]
        %s701 = scalar_lea.vmem [#allocation2], 33
        %v702 = vld [vmem:[%s701] ss:$2 sm:$0xff]
        %s703 = scalar_lea.vmem [#allocation2], 49
        %v704 = vld [vmem:[%s703] ss:$2 sm:$0xff]
        %s705 = scalar_lea.vmem [#allocation2], 65
        %v706 = vld [vmem:[%s705] ss:$2 sm:$0xff]
        %s707 = scalar_lea.vmem [#allocation2], 81
        %v708 = vld [vmem:[%s707] ss:$2 sm:$0xff]
        %s709 = scalar_lea.vmem [#allocation2], 97
        %v710 = vld [vmem:[%s709] ss:$2 sm:$0xff]
        %s711 = scalar_lea.vmem [#allocation2], 113
        %v712 = vld [vmem:[%s711] ss:$2 sm:$0xff]
        %v713 = vmax.f32 %v682, %v698
        %v714 = vmax.f32 %v684, %v700
        %v715 = vmax.f32 %v686, %v702
        %v716 = vmax.f32 %v688, %v704
        %v717 = vmax.f32 %v690, %v706
        %v718 = vmax.f32 %v692, %v708
        %v719 = vmax.f32 %v694, %v710
        %v720 = vmax.f32 %v696, %v712
        %721 = vst [vmem:[%s259] sm:$0xff] %v713
        %722 = vst [vmem:[%s259 + $0x8] sm:$0xff] %v714
        %723 = vst [vmem:[%s259 + $0x10] sm:$0xff] %v715
        %724 = vst [vmem:[%s259 + $0x18] sm:$0xff] %v716
        %725 = vst [vmem:[%s259 + $0x20] sm:$0xff] %v717
        %726 = vst [vmem:[%s259 + $0x28] sm:$0xff] %v718
        %727 = vst [vmem:[%s259 + $0x30] sm:$0xff] %v719
        %728 = vst [vmem:[%s259 + $0x38] sm:$0xff] %v720
        %s729 = sand.u32 %s164, 1
        %s730 = scalar_lea.sflag [#allocation4], %s729
        %s731 = sand.u32 %s164, 1
        %s732 = smul.addr %s731, 64
        %s733 = scalar_lea.vmem [#allocation3], %s732
        // Predicated region
        $region45: #{basic_block_forward.7} parent=43 // pred_check
          %p734 = pneg %p174
        $region46: #{basic_block_forward.7} parent=43 // pred_check_branch
          %736 = sbr.rel (%p734) target = $region48
        $region47: #{basic_block_forward.7} parent=43 // pred_region
          %s738 = ssub.s32 1024, 1024
          %739 = vsyncadd %s730, %s738
          %s740 = smul.addr %s20, 8
          %s741 = smul.addr %s740, 128
          %s742 = scalar_lea.hbm %s6, %s741
          %s743 = sshll.u32 %s733, 4
          %s744 = int_to_ptr.vmem [resolvable:$true] %s743
          %749 = dma.vmem_to_hbm [thread:$0]  %s744, 1024, %s742, %s730, 128, 128, 8
        $region48: #{basic_block_forward.7} parent=43 // pred_fallthru
          _
      $region44: #{basic_block_forward.7} parent=5 // pred_fallthru
        _
      %p750 = scmp.le.s32.totalorder 2, %s15
      // Predicated region
      $region49: #{basic_block_forward.7} parent=5 // pred_check
        %p751 = pneg %p750
      $region50: #{basic_block_forward.7} parent=5 // pred_check_branch
        %753 = sbr.rel (%p751) target = $region52
      $region51: #{basic_block_forward.7} parent=5 // pred_region
        %s754 = ssub.s32 %s15, 2
        // Predicated region
        $region53: #{basic_block_forward.7} parent=51 // pred_check
          %p755 = pneg %p180
        $region54: #{basic_block_forward.7} parent=51 // pred_check_branch
          %757 = sbr.rel (%p755) target = $region56
        $region55: #{basic_block_forward.7} parent=51 // pred_region
          %s758 = sand.u32 %s165, 1
          %s759 = scalar_lea.sflag [#allocation4], %s758
          %s760 = sand.u32 %s165, 1
          %s761 = smul.addr %s760, 64
          %s762 = scalar_lea.vmem [#allocation3], %s761
          %763 = dma.done %s759, 1024
        $region56: #{basic_block_forward.7} parent=51 // pred_fallthru
          _
      $region52: #{basic_block_forward.7} parent=5 // pred_fallthru
        _
    $region6: #{basic_block_forward.7} parent=1 // loop_footer
      %s19 = sadd.s32 1, %s15
    $region7: #{basic_block_forward.7} parent=1 // loop_footer_branch
      %14 = sbr.rel target = $region3
    $region8: #{basic_block_forward.7} parent=1 // loop_exit
      _
    %764 = vsyncpa [#allocation4], 1
    %s765 = scalar_lea.sflag [#allocation4], 1
    %766 = vsyncpa %s765, 1

// kernel: basic_block_forward.4
$region0: #{basic_block_forward.4}
  #allocation0 [shape = 'u32[]', space=smem, size = 0x4, offset = 0x4, fixed_abs, tag = 'smem constant byte address 0x4 - core index']
  #allocation1 [shape = 'u32[144,128]{1,0:T(1,128)}', space=vmem, size = 0x12000, scoped, tag = 'internal scratch']
  %s0 = inlined_call_operand.vmem [shape: bf16[2,18,18,4], index: 0, kind: input, shape index: {}]
  %s1 = inlined_call_operand.vmem [shape: bf16[3,3,4,128], index: 1, kind: input, shape index: {}]
  %s2 = inlined_call_operand.vmem [shape: bf16[4,128], index: 2, kind: input, shape index: {}]
  %s3 = inlined_call_operand.vmem [shape: bf16[2,16,16,128], index: 3, kind: output, shape index: {0}]
  %s4 = inlined_call_operand.vmem [shape: f32[2,1,128], index: 4, kind: output, shape index: {1}]
  %s5 = inlined_call_operand.vmem [shape: f32[2,1,128], index: 5, kind: output, shape index: {2}]
  %s6 = inlined_call_operand.vmem [shape: bf16[2,16,16,128], index: 6, kind: output, shape index: {3}]
  %s7 = inlined_call_operand.vmem [shape: f32[2,1,128], index: 7, kind: output, shape index: {4}]
  %s8 = inlined_call_operand.vmem [shape: f32[2,1,128], index: 8, kind: output, shape index: {5}]
  %9 = xla_tuple %s3, %s4, %s5, %s6, %s7, %s8
  %s10 = sld [smem:[#allocation0]]
  $region85: #{basic_block_forward.4} parent=0
    _
  %s12 = ssub.s32 1, %s10
  %s13 = scalar_select 0, %s12, %s10
  loop: start=0, step=1, limit=4
  $region2: #{basic_block_forward.4} parent=0 // loop_pre_header
    _
  $region3: #{basic_block_forward.4} parent=0 // loop_header
    %s15 = sphi 0, %s19
    %p16 = scmp.ge.s32.totalorder %s15, 4
    %s25 = sphi 0, %s27
    %s28 = sphi 0, %s25
    %s29 = sphi 0, %s28
    %s45 = sphi 0, %s29
    %s49 = sphi 0, %s49
    %s51 = sphi 0, %s49
    %s52 = sphi 0, %s51
    %s66 = sphi 0, %s52
    %s70 = sphi 0, %s70
    %s72 = sphi 0, %s70
    %s73 = sphi 0, %s72
    %s87 = sphi 0, %s73
    %s93 = sphi 0, %s95
    %s96 = sphi 0, %s93
    %s97 = sphi 0, %s96
    %s113 = sphi 0, %s97
    %s119 = sphi 0, %s121
    %s122 = sphi 0, %s119
    %s123 = sphi 0, %s122
    %s139 = sphi 0, %s123
    %s145 = sphi 0, %s147
    %s148 = sphi 0, %s145
    %s149 = sphi 0, %s148
    %s165 = sphi 0, %s149
    %s171 = sphi 0, %s173
    %s174 = sphi 0, %s171
    %s175 = sphi 0, %s174
    %s191 = sphi 0, %s175
    %s197 = sphi 0, %s199
    %s200 = sphi 0, %s197
    %s201 = sphi 0, %s200
    %s217 = sphi 0, %s201
    %s223 = sphi 0, %s225
    %s226 = sphi 0, %s223
    %s227 = sphi 0, %s226
    %s243 = sphi 0, %s227
  $region4: #{basic_block_forward.4} parent=0 // loop_header_branch
    %18 = sbr.rel (%p16) target = $region8
  $region5: #{basic_block_forward.4} parent=0 // loop_body
    %s20 = ssub.s32 %s15, 1
    %s21 = ssub.s32 %s15, 2
    %s22 = sadd.s32 %s15, 1
    %s23 = ssub.s32 %s15, %s22
    %p24 = scmp.eq.s32.totalorder %s23, 0
    %s26 = sadd.s32 %s25, 1
    %s27 = scalar_select %p24, %s25, %s26
    %p30 = pneg %p24
    %p31 = scmp.eq.s32.totalorder %s15, 1
    %p32 = por %p30, %p31
    %p33 = scmp.ne.s32.totalorder %s25, %s28
    %p34 = scmp.eq.s32.totalorder %s15, 0
    %p35 = por %p33, %p34
    %p36 = scmp.ne.s32.totalorder %s25, %s28
    %p37 = scmp.eq.s32.totalorder %s20, 1
    %p38 = por %p36, %p37
    %p39 = scmp.ne.s32.totalorder %s28, %s29
    %p40 = scmp.eq.s32.totalorder %s20, 0
    %p41 = por %p39, %p40
    %p42 = scmp.ne.s32.totalorder %s28, %s29
    %p43 = scmp.eq.s32.totalorder %s21, 1
    %p44 = por %p42, %p43
    %p46 = scmp.ne.s32.totalorder %s29, %s45
    %p47 = scmp.eq.s32.totalorder %s21, 0
    %p48 = por %p46, %p47
    %s50 = sadd.s32 %s49, 1
    %p53 = scmp.eq.s32.totalorder %s15, 1
    %p54 = scmp.ne.s32.totalorder %s49, %s51
    %p55 = scmp.eq.s32.totalorder %s15, 0
    %p56 = por %p54, %p55
    %p57 = scmp.ne.s32.totalorder %s49, %s51
    %p58 = scmp.eq.s32.totalorder %s20, 1
    %p59 = por %p57, %p58
    %p60 = scmp.ne.s32.totalorder %s51, %s52
    %p61 = scmp.eq.s32.totalorder %s20, 0
    %p62 = por %p60, %p61
    %p63 = scmp.ne.s32.totalorder %s51, %s52
    %p64 = scmp.eq.s32.totalorder %s21, 1
    %p65 = por %p63, %p64
    %p67 = scmp.ne.s32.totalorder %s52, %s66
    %p68 = scmp.eq.s32.totalorder %s21, 0
    %p69 = por %p67, %p68
    %s71 = sadd.s32 %s70, 1
    %p74 = scmp.eq.s32.totalorder %s15, 1
    %p75 = scmp.ne.s32.totalorder %s70, %s72
    %p76 = scmp.eq.s32.totalorder %s15, 0
    %p77 = por %p75, %p76
    %p78 = scmp.ne.s32.totalorder %s70, %s72
    %p79 = scmp.eq.s32.totalorder %s20, 1
    %p80 = por %p78, %p79
    %p81 = scmp.ne.s32.totalorder %s72, %s73
    %p82 = scmp.eq.s32.totalorder %s20, 0
    %p83 = por %p81, %p82
    %p84 = scmp.ne.s32.totalorder %s72, %s73
    %p85 = scmp.eq.s32.totalorder %s21, 1
    %p86 = por %p84, %p85
    %p88 = scmp.ne.s32.totalorder %s73, %s87
    %p89 = scmp.eq.s32.totalorder %s21, 0
    %p90 = por %p88, %p89
    %s91 = ssub.s32 %s15, %s22
    %p92 = scmp.eq.s32.totalorder %s91, 0
    %s94 = sadd.s32 %s93, 1
    %s95 = scalar_select %p92, %s93, %s94
    %p98 = pneg %p92
    %p99 = scmp.eq.s32.totalorder %s15, 1
    %p100 = por %p98, %p99
    %p101 = scmp.ne.s32.totalorder %s93, %s96
    %p102 = scmp.eq.s32.totalorder %s15, 0
    %p103 = por %p101, %p102
    %p104 = scmp.ne.s32.totalorder %s93, %s96
    %p105 = scmp.eq.s32.totalorder %s20, 1
    %p106 = por %p104, %p105
    %p107 = scmp.ne.s32.totalorder %s96, %s97
    %p108 = scmp.eq.s32.totalorder %s20, 0
    %p109 = por %p107, %p108
    %p110 = scmp.ne.s32.totalorder %s96, %s97
    %p111 = scmp.eq.s32.totalorder %s21, 1
    %p112 = por %p110, %p111
    %p114 = scmp.ne.s32.totalorder %s97, %s113
    %p115 = scmp.eq.s32.totalorder %s21, 0
    %p116 = por %p114, %p115
    %s117 = ssub.s32 %s15, %s22
    %p118 = scmp.eq.s32.totalorder %s117, 0
    %s120 = sadd.s32 %s119, 1
    %s121 = scalar_select %p118, %s119, %s120
    %p124 = pneg %p118
    %p125 = scmp.eq.s32.totalorder %s15, 1
    %p126 = por %p124, %p125
    %p127 = scmp.ne.s32.totalorder %s119, %s122
    %p128 = scmp.eq.s32.totalorder %s15, 0
    %p129 = por %p127, %p128
    %p130 = scmp.ne.s32.totalorder %s119, %s122
    %p131 = scmp.eq.s32.totalorder %s20, 1
    %p132 = por %p130, %p131
    %p133 = scmp.ne.s32.totalorder %s122, %s123
    %p134 = scmp.eq.s32.totalorder %s20, 0
    %p135 = por %p133, %p134
    %p136 = scmp.ne.s32.totalorder %s122, %s123
    %p137 = scmp.eq.s32.totalorder %s21, 1
    %p138 = por %p136, %p137
    %p140 = scmp.ne.s32.totalorder %s123, %s139
    %p141 = scmp.eq.s32.totalorder %s21, 0
    %p142 = por %p140, %p141
    %s143 = ssub.s32 %s15, %s22
    %p144 = scmp.eq.s32.totalorder %s143, 0
    %s146 = sadd.s32 %s145, 1
    %s147 = scalar_select %p144, %s145, %s146
    %p150 = pneg %p144
    %p151 = scmp.eq.s32.totalorder %s15, 1
    %p152 = por %p150, %p151
    %p153 = scmp.ne.s32.totalorder %s145, %s148
    %p154 = scmp.eq.s32.totalorder %s15, 0
    %p155 = por %p153, %p154
    %p156 = scmp.ne.s32.totalorder %s145, %s148
    %p157 = scmp.eq.s32.totalorder %s20, 1
    %p158 = por %p156, %p157
    %p159 = scmp.ne.s32.totalorder %s148, %s149
    %p160 = scmp.eq.s32.totalorder %s20, 0
    %p161 = por %p159, %p160
    %p162 = scmp.ne.s32.totalorder %s148, %s149
    %p163 = scmp.eq.s32.totalorder %s21, 1
    %p164 = por %p162, %p163
    %p166 = scmp.ne.s32.totalorder %s149, %s165
    %p167 = scmp.eq.s32.totalorder %s21, 0
    %p168 = por %p166, %p167
    %s169 = ssub.s32 %s15, %s22
    %p170 = scmp.eq.s32.totalorder %s169, 0
    %s172 = sadd.s32 %s171, 1
    %s173 = scalar_select %p170, %s171, %s172
    %p176 = pneg %p170
    %p177 = scmp.eq.s32.totalorder %s15, 1
    %p178 = por %p176, %p177
    %p179 = scmp.ne.s32.totalorder %s171, %s174
    %p180 = scmp.eq.s32.totalorder %s15, 0
    %p181 = por %p179, %p180
    %p182 = scmp.ne.s32.totalorder %s171, %s174
    %p183 = scmp.eq.s32.totalorder %s20, 1
    %p184 = por %p182, %p183
    %p185 = scmp.ne.s32.totalorder %s174, %s175
    %p186 = scmp.eq.s32.totalorder %s20, 0
    %p187 = por %p185, %p186
    %p188 = scmp.ne.s32.totalorder %s174, %s175
    %p189 = scmp.eq.s32.totalorder %s21, 1
    %p190 = por %p188, %p189
    %p192 = scmp.ne.s32.totalorder %s175, %s191
    %p193 = scmp.eq.s32.totalorder %s21, 0
    %p194 = por %p192, %p193
    %s195 = ssub.s32 %s15, %s22
    %p196 = scmp.eq.s32.totalorder %s195, 0
    %s198 = sadd.s32 %s197, 1
    %s199 = scalar_select %p196, %s197, %s198
    %p202 = pneg %p196
    %p203 = scmp.eq.s32.totalorder %s15, 1
    %p204 = por %p202, %p203
    %p205 = scmp.ne.s32.totalorder %s197, %s200
    %p206 = scmp.eq.s32.totalorder %s15, 0
    %p207 = por %p205, %p206
    %p208 = scmp.ne.s32.totalorder %s197, %s200
    %p209 = scmp.eq.s32.totalorder %s20, 1
    %p210 = por %p208, %p209
    %p211 = scmp.ne.s32.totalorder %s200, %s201
    %p212 = scmp.eq.s32.totalorder %s20, 0
    %p213 = por %p211, %p212
    %p214 = scmp.ne.s32.totalorder %s200, %s201
    %p215 = scmp.eq.s32.totalorder %s21, 1
    %p216 = por %p214, %p215
    %p218 = scmp.ne.s32.totalorder %s201, %s217
    %p219 = scmp.eq.s32.totalorder %s21, 0
    %p220 = por %p218, %p219
    %s221 = ssub.s32 %s15, %s22
    %p222 = scmp.eq.s32.totalorder %s221, 0
    %s224 = sadd.s32 %s223, 1
    %s225 = scalar_select %p222, %s223, %s224
    %p228 = pneg %p222
    %p229 = scmp.eq.s32.totalorder %s15, 1
    %p230 = por %p228, %p229
    %p231 = scmp.ne.s32.totalorder %s223, %s226
    %p232 = scmp.eq.s32.totalorder %s15, 0
    %p233 = por %p231, %p232
    %p234 = scmp.ne.s32.totalorder %s223, %s226
    %p235 = scmp.eq.s32.totalorder %s20, 1
    %p236 = por %p234, %p235
    %p237 = scmp.ne.s32.totalorder %s226, %s227
    %p238 = scmp.eq.s32.totalorder %s20, 0
    %p239 = por %p237, %p238
    %p240 = scmp.ne.s32.totalorder %s226, %s227
    %p241 = scmp.eq.s32.totalorder %s21, 1
    %p242 = por %p240, %p241
    %p244 = scmp.ne.s32.totalorder %s227, %s243
    %p245 = scmp.eq.s32.totalorder %s21, 0
    %p246 = por %p244, %p245
    %p247 = scmp.le.s32.totalorder 1, %s15
    %p248 = scmp.lt.s32.totalorder %s15, 3
    %p249 = pnand %p247, %p248
    %p250 = pneg %p249
    // Predicated region
    $region9: #{basic_block_forward.4} parent=5 // pred_check
      _
    $region10: #{basic_block_forward.4} parent=5 // pred_check_branch
      %252 = sbr.rel (%p249) target = $region12
    $region11: #{basic_block_forward.4} parent=5 // pred_region
      %s253 = ssub.s32 %s15, 1
      // Predicated region
      $region13: #{basic_block_forward.4} parent=11 // pred_check
        %p254 = pneg %p62
      $region14: #{basic_block_forward.4} parent=11 // pred_check_branch
        %256 = sbr.rel (%p254) target = $region16
      $region15: #{basic_block_forward.4} parent=11 // pred_region
        _
      $region16: #{basic_block_forward.4} parent=11 // pred_fallthru
        _
      // Predicated region
      $region17: #{basic_block_forward.4} parent=11 // pred_check
        %p257 = pneg %p83
      $region18: #{basic_block_forward.4} parent=11 // pred_check_branch
        %259 = sbr.rel (%p257) target = $region20
      $region19: #{basic_block_forward.4} parent=11 // pred_region
        _
      $region20: #{basic_block_forward.4} parent=11 // pred_fallthru
        _
    $region12: #{basic_block_forward.4} parent=5 // pred_fallthru
      _
    %p260 = scmp.lt.s32.totalorder %s15, 2
    // Predicated region
    $region21: #{basic_block_forward.4} parent=5 // pred_check
      %p261 = pneg %p260
    $region22: #{basic_block_forward.4} parent=5 // pred_check_branch
      %263 = sbr.rel (%p261) target = $region24
    $region23: #{basic_block_forward.4} parent=5 // pred_region
      // Predicated region
      $region25: #{basic_block_forward.4} parent=23 // pred_check
        %p264 = pneg %p35
      $region26: #{basic_block_forward.4} parent=23 // pred_check_branch
        %266 = sbr.rel (%p264) target = $region28
      $region27: #{basic_block_forward.4} parent=23 // pred_region
        %p267 = scmp.lt.s32.totalorder %s15, 1
        %s268 = scalar_select %p267, %s15, 1
        %s269 = smul.addr %s268, 54
        %s270 = smul.addr %s269, 4
        %s271 = scalar_lea.vmem %s0, %s270
      $region28: #{basic_block_forward.4} parent=23 // pred_fallthru
        _
    $region24: #{basic_block_forward.4} parent=5 // pred_fallthru
      _
    %p272 = scmp.le.s32.totalorder 1, %s15
    %p273 = scmp.lt.s32.totalorder %s15, 3
    %p274 = pnand %p272, %p273
    %p275 = pneg %p274
    // Predicated region
    $region29: #{basic_block_forward.4} parent=5 // pred_check
      _
    $region30: #{basic_block_forward.4} parent=5 // pred_check_branch
      %277 = sbr.rel (%p274) target = $region32
    $region31: #{basic_block_forward.4} parent=5 // pred_region
      %s278 = ssub.s32 %s15, 1
      %p279 = scmp.lt.s32.totalorder %s20, 1
      %s280 = scalar_select %p279, %s20, 1
      %s281 = smul.addr %s280, 54
      %s282 = smul.addr %s281, 4
      %s283 = scalar_lea.vmem %s0, %s282
      %p284 = pneg %p41
      %p285 = pneg %p38
      %p286 = pneg %p62
      %p287 = pneg %p59
      %p288 = pneg %p83
      %p289 = pneg %p80
      %p290 = pneg %p109
      %p291 = pneg %p106
      %p292 = scmp.lt.s32.totalorder %s20, 1
      %s293 = scalar_select %p292, %s20, 1
      %s294 = smul.addr %s293, 32
      %s295 = smul.addr %s294, 4
      %s296 = scalar_lea.vmem %s3, %s295
      %p297 = pneg %p135
      %p298 = pneg %p132
      %p299 = scmp.lt.s32.totalorder %s20, 1
      %s300 = scalar_select %p299, %s20, 1
      %s301 = scalar_lea.vmem %s4, %s300
      %p302 = pneg %p161
      %p303 = pneg %p158
      %p304 = scmp.lt.s32.totalorder %s20, 1
      %s305 = scalar_select %p304, %s20, 1
      %s306 = scalar_lea.vmem %s5, %s305
      %p307 = pneg %p187
      %p308 = pneg %p184
      %p309 = scmp.lt.s32.totalorder %s20, 1
      %s310 = scalar_select %p309, %s20, 1
      %s311 = smul.addr %s310, 32
      %s312 = smul.addr %s311, 4
      %s313 = scalar_lea.vmem %s6, %s312
      %p314 = pneg %p213
      %p315 = pneg %p210
      %p316 = scmp.lt.s32.totalorder %s20, 1
      %s317 = scalar_select %p316, %s20, 1
      %s318 = scalar_lea.vmem %s7, %s317
      %p319 = pneg %p239
      %p320 = pneg %p236
      %p321 = scmp.lt.s32.totalorder %s20, 1
      %s322 = scalar_select %p321, %s20, 1
      %s323 = scalar_lea.vmem %s8, %s322
      %p324 = scmp.lt.s32.totalorder %s20, 1
      %s325 = scalar_select %p324, %s20, 1
      %s326 = smul.addr %s325, 54
      %s327 = smul.addr %s326, 4
      %s328 = scalar_lea.vmem %s0, %s327
      %p329 = scmp.lt.s32.totalorder %s20, 1
      %s330 = scalar_select %p329, %s20, 1
      %s331 = smul.addr %s330, 32
      %s332 = smul.addr %s331, 4
      %s333 = scalar_lea.vmem %s3, %s332
      %p334 = scmp.lt.s32.totalorder %s20, 1
      %s335 = scalar_select %p334, %s20, 1
      %s336 = scalar_lea.vmem %s4, %s335
      %p337 = scmp.lt.s32.totalorder %s20, 1
      %s338 = scalar_select %p337, %s20, 1
      %s339 = scalar_lea.vmem %s5, %s338
      %p340 = scmp.lt.s32.totalorder %s20, 1
      %s341 = scalar_select %p340, %s20, 1
      %s342 = smul.addr %s341, 32
      %s343 = smul.addr %s342, 4
      %s344 = scalar_lea.vmem %s6, %s343
      %p345 = scmp.lt.s32.totalorder %s20, 1
      %s346 = scalar_select %p345, %s20, 1
      %s347 = scalar_lea.vmem %s7, %s346
      %p348 = scmp.lt.s32.totalorder %s20, 1
      %s349 = scalar_select %p348, %s20, 1
      %s350 = scalar_lea.vmem %s8, %s349
      %v352 = vld [vmem:[%s328] sm:$0xf]
      %v353 = vld [vmem:[%s328 + $0x4] sm:$0xf]
      %v354 = vld [vmem:[%s328 + $0x8] sm:$0x1]
      %v355 = vld [vmem:[%s328 + $0xc] sm:$0xf]
      %v356 = vld [vmem:[%s328 + $0x10] sm:$0xf]
      %v357 = vld [vmem:[%s328 + $0x14] sm:$0x1]
      %v358 = vld [vmem:[%s328 + $0x18] sm:$0xf]
      %v359 = vld [vmem:[%s328 + $0x1c] sm:$0xf]
      %v360 = vld [vmem:[%s328 + $0x20] sm:$0x1]
      %v361 = vld [vmem:[%s328 + $0x24] sm:$0xf]
      %v362 = vld [vmem:[%s328 + $0x28] sm:$0xf]
      %v363 = vld [vmem:[%s328 + $0x2c] sm:$0x1]
      %v364 = vld [vmem:[%s328 + $0x30] sm:$0xf]
      %v365 = vld [vmem:[%s328 + $0x34] sm:$0xf]
      %v366 = vld [vmem:[%s328 + $0x38] sm:$0x1]
      %v367 = vld [vmem:[%s328 + $0x3c] sm:$0xf]
      %v368 = vld [vmem:[%s328 + $0x40] sm:$0xf]
      %v369 = vld [vmem:[%s328 + $0x44] sm:$0x1]
      %v370 = vld [vmem:[%s328 + $0x48] sm:$0xf]
      %v371 = vld [vmem:[%s328 + $0x4c] sm:$0xf]
      %v372 = vld [vmem:[%s328 + $0x50] sm:$0x1]
      %v373 = vld [vmem:[%s328 + $0x54] sm:$0xf]
      %v374 = vld [vmem:[%s328 + $0x58] sm:$0xf]
      %v375 = vld [vmem:[%s328 + $0x5c] sm:$0x1]
      %v376 = vld [vmem:[%s328 + $0x60] sm:$0xf]
      %v377 = vld [vmem:[%s328 + $0x64] sm:$0xf]
      %v378 = vld [vmem:[%s328 + $0x68] sm:$0x1]
      %v379 = vld [vmem:[%s328 + $0x6c] sm:$0xf]
      %v380 = vld [vmem:[%s328 + $0x70] sm:$0xf]
      %v381 = vld [vmem:[%s328 + $0x74] sm:$0x1]
      %v382 = vld [vmem:[%s328 + $0x78] sm:$0xf]
      %v383 = vld [vmem:[%s328 + $0x7c] sm:$0xf]
      %v384 = vld [vmem:[%s328 + $0x80] sm:$0x1]
      %v385 = vld [vmem:[%s328 + $0x84] sm:$0xf]
      %v386 = vld [vmem:[%s328 + $0x88] sm:$0xf]
      %v387 = vld [vmem:[%s328 + $0x8c] sm:$0x1]
      %v388 = vld [vmem:[%s328 + $0x90] sm:$0xf]
      %v389 = vld [vmem:[%s328 + $0x94] sm:$0xf]
      %v390 = vld [vmem:[%s328 + $0x98] sm:$0x1]
      %v391 = vld [vmem:[%s328 + $0x9c] sm:$0xf]
      %v392 = vld [vmem:[%s328 + $0xa0] sm:$0xf]
      %v393 = vld [vmem:[%s328 + $0xa4] sm:$0x1]
      %v394 = vld [vmem:[%s328 + $0xa8] sm:$0xf]
      %v395 = vld [vmem:[%s328 + $0xac] sm:$0xf]
      %v396 = vld [vmem:[%s328 + $0xb0] sm:$0x1]
      %v397 = vld [vmem:[%s328 + $0xb4] sm:$0xf]
      %v398 = vld [vmem:[%s328 + $0xb8] sm:$0xf]
      %v399 = vld [vmem:[%s328 + $0xbc] sm:$0x1]
      %v400 = vld [vmem:[%s328 + $0xc0] sm:$0xf]
      %v401 = vld [vmem:[%s328 + $0xc4] sm:$0xf]
      %v402 = vld [vmem:[%s328 + $0xc8] sm:$0x1]
      %v403 = vld [vmem:[%s328 + $0xcc] sm:$0xf]
      %v404 = vld [vmem:[%s328 + $0xd0] sm:$0xf]
      %v405 = vld [vmem:[%s328 + $0xd4] sm:$0x1]
      %v406 = vld [vmem:[%s1] sm:$0x3]
      %vm407 = vsmask.f32 3328
      %vm408 = vsmask.f32 7440
      %vm409 = vmor %vm407, %vm408
      %v411 = vshrl.u32 %v352, 16
      %v413 = vrot.slane %v411, 4
      %v414 = vshll.u32 %v352, 16
      %v416 = vrot.slane %v414, 5
      %v417 = vor.u32 %v413, %v416
      %v418 = vrot.slane %v417, 4
      %v420 = vshll.u32 %v353, 16
      %v422 = vrot.slane %v420, 5
      %v423 = vsel %vm409, %v418, %v422
      %v424 = vshrl.u32 %v353, 16
      %v426 = vrot.slane %v424, 4
      %v427 = vor.u32 %v426, %v422
      %v428 = vrot.slane %v427, 4
      %v430 = vshll.u32 %v354, 16
      %v432 = vrot.slane %v430, 5
      %v433 = vsel %vm409, %v428, %v432
      %v435 = vshrl.u32 %v355, 16
      %v437 = vrot.slane %v435, 4
      %v438 = vshll.u32 %v355, 16
      %v440 = vrot.slane %v438, 5
      %v441 = vor.u32 %v437, %v440
      %v442 = vrot.slane %v441, 4
      %v444 = vshll.u32 %v356, 16
      %v446 = vrot.slane %v444, 5
      %v447 = vsel %vm409, %v442, %v446
      %v448 = vshrl.u32 %v356, 16
      %v450 = vrot.slane %v448, 4
      %v451 = vor.u32 %v450, %v446
      %v452 = vrot.slane %v451, 4
      %v454 = vshll.u32 %v357, 16
      %v456 = vrot.slane %v454, 5
      %v457 = vsel %vm409, %v452, %v456
      %v459 = vshrl.u32 %v358, 16
      %v461 = vrot.slane %v459, 4
      %v462 = vshll.u32 %v358, 16
      %v464 = vrot.slane %v462, 5
      %v465 = vor.u32 %v461, %v464
      %v466 = vrot.slane %v465, 4
      %v468 = vshll.u32 %v359, 16
      %v470 = vrot.slane %v468, 5
      %v471 = vsel %vm409, %v466, %v470
      %v472 = vshrl.u32 %v359, 16
      %v474 = vrot.slane %v472, 4
      %v475 = vor.u32 %v474, %v470
      %v476 = vrot.slane %v475, 4
      %v478 = vshll.u32 %v360, 16
      %v480 = vrot.slane %v478, 5
      %v481 = vsel %vm409, %v476, %v480
      %v483 = vshrl.u32 %v361, 16
      %v485 = vrot.slane %v483, 4
      %v486 = vshll.u32 %v361, 16
      %v488 = vrot.slane %v486, 5
      %v489 = vor.u32 %v485, %v488
      %v490 = vrot.slane %v489, 4
      %v492 = vshll.u32 %v362, 16
      %v494 = vrot.slane %v492, 5
      %v495 = vsel %vm409, %v490, %v494
      %v496 = vshrl.u32 %v362, 16
      %v498 = vrot.slane %v496, 4
      %v499 = vor.u32 %v498, %v494
      %v500 = vrot.slane %v499, 4
      %v502 = vshll.u32 %v363, 16
      %v504 = vrot.slane %v502, 5
      %v505 = vsel %vm409, %v500, %v504
      %v507 = vshrl.u32 %v364, 16
      %v509 = vrot.slane %v507, 4
      %v510 = vshll.u32 %v364, 16
      %v512 = vrot.slane %v510, 5
      %v513 = vor.u32 %v509, %v512
      %v514 = vrot.slane %v513, 4
      %v516 = vshll.u32 %v365, 16
      %v518 = vrot.slane %v516, 5
      %v519 = vsel %vm409, %v514, %v518
      %v520 = vshrl.u32 %v365, 16
      %v522 = vrot.slane %v520, 4
      %v523 = vor.u32 %v522, %v518
      %v524 = vrot.slane %v523, 4
      %v526 = vshll.u32 %v366, 16
      %v528 = vrot.slane %v526, 5
      %v529 = vsel %vm409, %v524, %v528
      %v531 = vshrl.u32 %v367, 16
      %v533 = vrot.slane %v531, 4
      %v534 = vshll.u32 %v367, 16
      %v536 = vrot.slane %v534, 5
      %v537 = vor.u32 %v533, %v536
      %v538 = vrot.slane %v537, 4
      %v540 = vshll.u32 %v368, 16
      %v542 = vrot.slane %v540, 5
      %v543 = vsel %vm409, %v538, %v542
      %v544 = vshrl.u32 %v368, 16
      %v546 = vrot.slane %v544, 4
      %v547 = vor.u32 %v546, %v542
      %v548 = vrot.slane %v547, 4
      %v550 = vshll.u32 %v369, 16
      %v552 = vrot.slane %v550, 5
      %v553 = vsel %vm409, %v548, %v552
      %v555 = vshrl.u32 %v370, 16
      %v557 = vrot.slane %v555, 4
      %v558 = vshll.u32 %v370, 16
      %v560 = vrot.slane %v558, 5
      %v561 = vor.u32 %v557, %v560
      %v562 = vrot.slane %v561, 4
      %v564 = vshll.u32 %v371, 16
      %v566 = vrot.slane %v564, 5
      %v567 = vsel %vm409, %v562, %v566
      %v568 = vshrl.u32 %v371, 16
      %v570 = vrot.slane %v568, 4
      %v571 = vor.u32 %v570, %v566
      %v572 = vrot.slane %v571, 4
      %v574 = vshll.u32 %v372, 16
      %v576 = vrot.slane %v574, 5
      %v577 = vsel %vm409, %v572, %v576
      %v579 = vshrl.u32 %v373, 16
      %v581 = vrot.slane %v579, 4
      %v582 = vshll.u32 %v373, 16
      %v584 = vrot.slane %v582, 5
      %v585 = vor.u32 %v581, %v584
      %v586 = vrot.slane %v585, 4
      %v588 = vshll.u32 %v374, 16
      %v590 = vrot.slane %v588, 5
      %v591 = vsel %vm409, %v586, %v590
      %v592 = vshrl.u32 %v374, 16
      %v594 = vrot.slane %v592, 4
      %v595 = vor.u32 %v594, %v590
      %v596 = vrot.slane %v595, 4
      %v598 = vshll.u32 %v375, 16
      %v600 = vrot.slane %v598, 5
      %v601 = vsel %vm409, %v596, %v600
      %v603 = vshrl.u32 %v376, 16
      %v605 = vrot.slane %v603, 4
      %v606 = vshll.u32 %v376, 16
      %v608 = vrot.slane %v606, 5
      %v609 = vor.u32 %v605, %v608
      %v610 = vrot.slane %v609, 4
      %v612 = vshll.u32 %v377, 16
      %v614 = vrot.slane %v612, 5
      %v615 = vsel %vm409, %v610, %v614
      %v616 = vshrl.u32 %v377, 16
      %v618 = vrot.slane %v616, 4
      %v619 = vor.u32 %v618, %v614
      %v620 = vrot.slane %v619, 4
      %v622 = vshll.u32 %v378, 16
      %v624 = vrot.slane %v622, 5
      %v625 = vsel %vm409, %v620, %v624
      %v627 = vshrl.u32 %v379, 16
      %v629 = vrot.slane %v627, 4
      %v630 = vshll.u32 %v379, 16
      %v632 = vrot.slane %v630, 5
      %v633 = vor.u32 %v629, %v632
      %v634 = vrot.slane %v633, 4
      %v636 = vshll.u32 %v380, 16
      %v638 = vrot.slane %v636, 5
      %v639 = vsel %vm409, %v634, %v638
      %v640 = vshrl.u32 %v380, 16
      %v642 = vrot.slane %v640, 4
      %v643 = vor.u32 %v642, %v638
      %v644 = vrot.slane %v643, 4
      %v646 = vshll.u32 %v381, 16
      %v648 = vrot.slane %v646, 5
      %v649 = vsel %vm409, %v644, %v648
      %v651 = vshrl.u32 %v382, 16
      %v653 = vrot.slane %v651, 4
      %v654 = vshll.u32 %v382, 16
      %v656 = vrot.slane %v654, 5
      %v657 = vor.u32 %v653, %v656
      %v658 = vrot.slane %v657, 4
      %v660 = vshll.u32 %v383, 16
      %v662 = vrot.slane %v660, 5
      %v663 = vsel %vm409, %v658, %v662
      %v664 = vshrl.u32 %v383, 16
      %v666 = vrot.slane %v664, 4
      %v667 = vor.u32 %v666, %v662
      %v668 = vrot.slane %v667, 4
      %v670 = vshll.u32 %v384, 16
      %v672 = vrot.slane %v670, 5
      %v673 = vsel %vm409, %v668, %v672
      %v675 = vshrl.u32 %v385, 16
      %v677 = vrot.slane %v675, 4
      %v678 = vshll.u32 %v385, 16
      %v680 = vrot.slane %v678, 5
      %v681 = vor.u32 %v677, %v680
      %v682 = vrot.slane %v681, 4
      %v684 = vshll.u32 %v386, 16
      %v686 = vrot.slane %v684, 5
      %v687 = vsel %vm409, %v682, %v686
      %v688 = vshrl.u32 %v386, 16
      %v690 = vrot.slane %v688, 4
      %v691 = vor.u32 %v690, %v686
      %v692 = vrot.slane %v691, 4
      %v694 = vshll.u32 %v387, 16
      %v696 = vrot.slane %v694, 5
      %v697 = vsel %vm409, %v692, %v696
      %v699 = vshrl.u32 %v388, 16
      %v701 = vrot.slane %v699, 4
      %v702 = vshll.u32 %v388, 16
      %v704 = vrot.slane %v702, 5
      %v705 = vor.u32 %v701, %v704
      %v706 = vrot.slane %v705, 4
      %v708 = vshll.u32 %v389, 16
      %v710 = vrot.slane %v708, 5
      %v711 = vsel %vm409, %v706, %v710
      %v712 = vshrl.u32 %v389, 16
      %v714 = vrot.slane %v712, 4
      %v715 = vor.u32 %v714, %v710
      %v716 = vrot.slane %v715, 4
      %v718 = vshll.u32 %v390, 16
      %v720 = vrot.slane %v718, 5
      %v721 = vsel %vm409, %v716, %v720
      %v723 = vshrl.u32 %v391, 16
      %v725 = vrot.slane %v723, 4
      %v726 = vshll.u32 %v391, 16
      %v728 = vrot.slane %v726, 5
      %v729 = vor.u32 %v725, %v728
      %v730 = vrot.slane %v729, 4
      %v732 = vshll.u32 %v392, 16
      %v734 = vrot.slane %v732, 5
      %v735 = vsel %vm409, %v730, %v734
      %v736 = vshrl.u32 %v392, 16
      %v738 = vrot.slane %v736, 4
      %v739 = vor.u32 %v738, %v734
      %v740 = vrot.slane %v739, 4
      %v742 = vshll.u32 %v393, 16
      %v744 = vrot.slane %v742, 5
      %v745 = vsel %vm409, %v740, %v744
      %v747 = vshrl.u32 %v394, 16
      %v749 = vrot.slane %v747, 4
      %v750 = vshll.u32 %v394, 16
      %v752 = vrot.slane %v750, 5
      %v753 = vor.u32 %v749, %v752
      %v754 = vrot.slane %v753, 4
      %v756 = vshll.u32 %v395, 16
      %v758 = vrot.slane %v756, 5
      %v759 = vsel %vm409, %v754, %v758
      %v760 = vshrl.u32 %v395, 16
      %v762 = vrot.slane %v760, 4
      %v763 = vor.u32 %v762, %v758
      %v764 = vrot.slane %v763, 4
      %v766 = vshll.u32 %v396, 16
      %v768 = vrot.slane %v766, 5
      %v769 = vsel %vm409, %v764, %v768
      %v771 = vshrl.u32 %v397, 16
      %v773 = vrot.slane %v771, 4
      %v774 = vshll.u32 %v397, 16
      %v776 = vrot.slane %v774, 5
      %v777 = vor.u32 %v773, %v776
      %v778 = vrot.slane %v777, 4
      %v780 = vshll.u32 %v398, 16
      %v782 = vrot.slane %v780, 5
      %v783 = vsel %vm409, %v778, %v782
      %v784 = vshrl.u32 %v398, 16
      %v786 = vrot.slane %v784, 4
      %v787 = vor.u32 %v786, %v782
      %v788 = vrot.slane %v787, 4
      %v790 = vshll.u32 %v399, 16
      %v792 = vrot.slane %v790, 5
      %v793 = vsel %vm409, %v788, %v792
      %s794 = scalar_lea.vmem %s1, 2
      %v795 = vld [vmem:[%s794] sm:$0x3]
      %v796 = vunpack.c.l.b16 %v423
      %v797 = vunpack.c.l.b16 %v433
      %v798 = vunpack.c.l.b16 %v447
      %v799 = vunpack.c.l.b16 %v457
      %v800 = vunpack.c.l.b16 %v471
      %v801 = vunpack.c.l.b16 %v481
      %v802 = vunpack.c.l.b16 %v495
      %v803 = vunpack.c.l.b16 %v505
      %v804 = vunpack.c.l.b16 %v519
      %v805 = vunpack.c.l.b16 %v529
      %v806 = vunpack.c.l.b16 %v543
      %v807 = vunpack.c.l.b16 %v553
      %v808 = vunpack.c.l.b16 %v567
      %v809 = vunpack.c.l.b16 %v577
      %v810 = vunpack.c.l.b16 %v591
      %v811 = vunpack.c.l.b16 %v601
      %v812 = vunpack.c.l.b16 %v615
      %v813 = vunpack.c.l.b16 %v625
      %v814 = vunpack.c.l.b16 %v639
      %v815 = vunpack.c.l.b16 %v649
      %v816 = vunpack.c.l.b16 %v663
      %v817 = vunpack.c.l.b16 %v673
      %v818 = vunpack.c.l.b16 %v687
      %v819 = vunpack.c.l.b16 %v697
      %v820 = vunpack.c.l.b16 %v711
      %v821 = vunpack.c.l.b16 %v721
      %v822 = vunpack.c.l.b16 %v735
      %v823 = vunpack.c.l.b16 %v745
      %v824 = vunpack.c.l.b16 %v759
      %v825 = vunpack.c.l.b16 %v769
      %v826 = vunpack.c.l.b16 %v783
      %v827 = vunpack.c.l.b16 %v793
      %v828 = vpack.c.b16 %v797, %v796
      %v829 = vpack.c.b16 %v799, %v798
      %v830 = vpack.c.b16 %v801, %v800
      %v831 = vpack.c.b16 %v803, %v802
      %v832 = vpack.c.b16 %v805, %v804
      %v833 = vpack.c.b16 %v807, %v806
      %v834 = vpack.c.b16 %v809, %v808
      %v835 = vpack.c.b16 %v811, %v810
      %v836 = vpack.c.b16 %v813, %v812
      %v837 = vpack.c.b16 %v815, %v814
      %v838 = vpack.c.b16 %v817, %v816
      %v839 = vpack.c.b16 %v819, %v818
      %v840 = vpack.c.b16 %v821, %v820
      %v841 = vpack.c.b16 %v823, %v822
      %v842 = vpack.c.b16 %v825, %v824
      %v843 = vpack.c.b16 %v827, %v826
      %vm844 = vcmask 31744
      %v846 = vsel %vm844, %v828, 0
      %v849 = vsel %vm844, %v829, 0
      %v852 = vsel %vm844, %v830, 0
      %v855 = vsel %vm844, %v831, 0
      %v858 = vsel %vm844, %v832, 0
      %v861 = vsel %vm844, %v833, 0
      %v864 = vsel %vm844, %v834, 0
      %v867 = vsel %vm844, %v835, 0
      %v870 = vsel %vm844, %v836, 0
      %v873 = vsel %vm844, %v837, 0
      %v876 = vsel %vm844, %v838, 0
      %v879 = vsel %vm844, %v839, 0
      %v882 = vsel %vm844, %v840, 0
      %v885 = vsel %vm844, %v841, 0
      %v888 = vsel %vm844, %v842, 0
      %v891 = vsel %vm844, %v843, 0
      %vm893 = vcmask 1041408
      %v895 = vsel %vm893, %v795, 0
      %897 = vmatprep.subr.bf16.mxu0 0
      %898 = vmatpush1.bf16.msra.mxu0 %v895
      %899 = vmatprep.subr.bf16.mxu0 0
      %900 = vmatpush1.bf16.msra.mxu0 0
      %901 = vmatprep.subr.bf16.mxu0 0
      %902 = vmatpush1.bf16.msra.mxu0 0
      %903 = vmatprep.subr.bf16.mxu0 0
      %904 = vmatpush1.bf16.msra.mxu0 0
      %905 = vmatprep.subr.bf16.mxu0 0
      %906 = vmatpush1.bf16.msra.mxu0 0
      %907 = vmatprep.subr.bf16.mxu0 0
      %908 = vmatpush1.bf16.msra.mxu0 0
      %909 = vmatprep.subr.bf16.mxu0 0
      %910 = vmatpush1.bf16.msra.mxu0 0
      %911 = vmatprep.subr.bf16.mxu0 0
      %912 = vmatpush1.bf16.msra.mxu0 0
      %913 = vmatprep.subr.bf16.mxu0 0
      %914 = vmatpush1.bf16.msra.mxu0 0
      %915 = vmatprep.subr.bf16.mxu0 0
      %916 = vmatpush1.bf16.msra.mxu0 0
      %917 = vmatprep.subr.bf16.mxu0 0
      %918 = vmatpush1.bf16.msra.mxu0 0
      %919 = vmatprep.subr.bf16.mxu0 0
      %920 = vmatpush1.bf16.msra.mxu0 0
      %921 = vmatprep.subr.bf16.mxu0 0
      %922 = vmatpush1.bf16.msra.mxu0 0
      %923 = vmatprep.subr.bf16.mxu0 0
      %924 = vmatpush1.bf16.msra.mxu0 0
      %925 = vmatprep.subr.bf16.mxu0 0
      %926 = vmatpush1.bf16.msra.mxu0 0
      %927 = vmatprep.subr.bf16.mxu0 0
      %928 = vmatpush1.bf16.msra.mxu0 0
      %929 = vmatprep.mubr.bf16.mxu0 0
      %930 = vmatmul.mubr.bf16.gmra.mrb[0].mxu0 %v846
      %v931 = vpop.f32.mrb[0].mxu0
      %v932 = vadd.f32 0.0, %v931
      %v933 = vpop.f32.mrb[0].mxu0
      %v934 = vpop.f32.mrb[0].mxu0
      %v935 = vadd.f32 0.0, %v934
      %v936 = vpop.f32.mrb[0].mxu0
      %937 = vmatprep.mubr.bf16.mxu0 0
      %938 = vmatmul.mubr.bf16.gmra.mrb[0].mxu0 %v849
      %v939 = vpop.f32.mrb[0].mxu0
      %v940 = vadd.f32 0.0, %v939
      %v941 = vpop.f32.mrb[0].mxu0
      %v942 = vpop.f32.mrb[0].mxu0
      %v943 = vadd.f32 0.0, %v942
      %v944 = vpop.f32.mrb[0].mxu0
      %945 = vmatprep.mubr.bf16.mxu0 0
      %946 = vmatmul.mubr.bf16.gmra.mrb[0].mxu0 %v852
      %v947 = vpop.f32.mrb[0].mxu0
      %v948 = vadd.f32 0.0, %v947
      %v949 = vpop.f32.mrb[0].mxu0
      %v950 = vpop.f32.mrb[0].mxu0
      %v951 = vadd.f32 0.0, %v950
      %v952 = vpop.f32.mrb[0].mxu0
      %953 = vmatprep.mubr.bf16.mxu0 0
      %954 = vmatmul.mubr.bf16.gmra.mrb[0].mxu0 %v855
      %v955 = vpop.f32.mrb[0].mxu0
      %v956 = vadd.f32 0.0, %v955
      %v957 = vpop.f32.mrb[0].mxu0
      %v958 = vpop.f32.mrb[0].mxu0
      %v959 = vadd.f32 0.0, %v958
      %v960 = vpop.f32.mrb[0].mxu0
      %961 = vmatprep.mubr.bf16.mxu0 0
      %962 = vmatmul.mubr.bf16.gmra.mrb[0].mxu0 %v858
      %v963 = vpop.f32.mrb[0].mxu0
      %v964 = vadd.f32 0.0, %v963
      %v965 = vpop.f32.mrb[0].mxu0
      %v966 = vpop.f32.mrb[0].mxu0
      %v967 = vadd.f32 0.0, %v966
      %v968 = vpop.f32.mrb[0].mxu0
      %969 = vmatprep.mubr.bf16.mxu0 0
      %970 = vmatmul.mubr.bf16.gmra.mrb[0].mxu0 %v861
      %v971 = vpop.f32.mrb[0].mxu0
      %v972 = vadd.f32 0.0, %v971
      %v973 = vpop.f32.mrb[0].mxu0
      %v974 = vpop.f32.mrb[0].mxu0
      %v975 = vadd.f32 0.0, %v974
      %v976 = vpop.f32.mrb[0].mxu0
      %977 = vmatprep.mubr.bf16.mxu0 0
      %978 = vmatmul.mubr.bf16.gmra.mrb[0].mxu0 %v864
      %v979 = vpop.f32.mrb[0].mxu0
      %v980 = vadd.f32 0.0, %v979
      %v981 = vpop.f32.mrb[0].mxu0
      %v982 = vpop.f32.mrb[0].mxu0
      %v983 = vadd.f32 0.0, %v982
      %v984 = vpop.f32.mrb[0].mxu0
      %985 = vmatprep.mubr.bf16.mxu0 0
      %986 = vmatmul.mubr.bf16.gmra.mrb[0].mxu0 %v867
      %v987 = vpop.f32.mrb[0].mxu0
      %v988 = vadd.f32 0.0, %v987
      %v989 = vpop.f32.mrb[0].mxu0
      %v990 = vpop.f32.mrb[0].mxu0
      %v991 = vadd.f32 0.0, %v990
      %v992 = vpop.f32.mrb[0].mxu0
      %993 = vmatprep.mubr.bf16.mxu0 0
      %994 = vmatmul.mubr.bf16.gmra.mrb[0].mxu0 %v870
      %v995 = vpop.f32.mrb[0].mxu0
      %v996 = vadd.f32 0.0, %v995
      %v997 = vpop.f32.mrb[0].mxu0
      %v998 = vpop.f32.mrb[0].mxu0
      %v999 = vadd.f32 0.0, %v998
      %v1000 = vpop.f32.mrb[0].mxu0
      %1001 = vmatprep.mubr.bf16.mxu0 0
      %1002 = vmatmul.mubr.bf16.gmra.mrb[0].mxu0 %v873
      %v1003 = vpop.f32.mrb[0].mxu0
      %v1004 = vadd.f32 0.0, %v1003
      %v1005 = vpop.f32.mrb[0].mxu0
      %v1006 = vpop.f32.mrb[0].mxu0
      %v1007 = vadd.f32 0.0, %v1006
      %v1008 = vpop.f32.mrb[0].mxu0
      %1009 = vmatprep.mubr.bf16.mxu0 0
      %1010 = vmatmul.mubr.bf16.gmra.mrb[0].mxu0 %v876
      %v1011 = vpop.f32.mrb[0].mxu0
      %v1012 = vadd.f32 0.0, %v1011
      %v1013 = vpop.f32.mrb[0].mxu0
      %v1014 = vpop.f32.mrb[0].mxu0
      %v1015 = vadd.f32 0.0, %v1014
      %v1016 = vpop.f32.mrb[0].mxu0
      %1017 = vmatprep.mubr.bf16.mxu0 0
      %1018 = vmatmul.mubr.bf16.gmra.mrb[0].mxu0 %v879
      %v1019 = vpop.f32.mrb[0].mxu0
      %v1020 = vadd.f32 0.0, %v1019
      %v1021 = vpop.f32.mrb[0].mxu0
      %v1022 = vpop.f32.mrb[0].mxu0
      %v1023 = vadd.f32 0.0, %v1022
      %v1024 = vpop.f32.mrb[0].mxu0
      %1025 = vmatprep.mubr.bf16.mxu0 0
      %1026 = vmatmul.mubr.bf16.gmra.mrb[0].mxu0 %v882
      %v1027 = vpop.f32.mrb[0].mxu0
      %v1028 = vadd.f32 0.0, %v1027
      %v1029 = vpop.f32.mrb[0].mxu0
      %v1030 = vpop.f32.mrb[0].mxu0
      %v1031 = vadd.f32 0.0, %v1030
      %v1032 = vpop.f32.mrb[0].mxu0
      %1033 = vmatprep.mubr.bf16.mxu0 0
      %1034 = vmatmul.mubr.bf16.gmra.mrb[0].mxu0 %v885
      %v1035 = vpop.f32.mrb[0].mxu0
      %v1036 = vadd.f32 0.0, %v1035
      %v1037 = vpop.f32.mrb[0].mxu0
      %v1038 = vpop.f32.mrb[0].mxu0
      %v1039 = vadd.f32 0.0, %v1038
      %v1040 = vpop.f32.mrb[0].mxu0
      %1041 = vmatprep.mubr.bf16.mxu0 0
      %1042 = vmatmul.mubr.bf16.gmra.mrb[0].mxu0 %v888
      %v1043 = vpop.f32.mrb[0].mxu0
      %v1044 = vadd.f32 0.0, %v1043
      %v1045 = vpop.f32.mrb[0].mxu0
      %v1046 = vpop.f32.mrb[0].mxu0
      %v1047 = vadd.f32 0.0, %v1046
      %v1048 = vpop.f32.mrb[0].mxu0
      %1049 = vmatprep.mubr.bf16.mxu0 0
      %1050 = vmatmul.mubr.bf16.gmra.mrb[0].mxu0 %v891
      %v1051 = vpop.f32.mrb[0].mxu0
      %v1052 = vadd.f32 0.0, %v1051
      %v1053 = vpop.f32.mrb[0].mxu0
      %v1054 = vpop.f32.mrb[0].mxu0
      %v1055 = vadd.f32 0.0, %v1054
      %v1056 = vpop.f32.mrb[0].mxu0
      %1057 = vdwg.mxu0
      %v1090 = vunpack.c.l.b16 %v352
      %v1091 = vunpack.c.l.b16 %v353
      %v1092 = vunpack.c.l.b16 %v355
      %v1093 = vunpack.c.l.b16 %v356
      %v1094 = vunpack.c.l.b16 %v358
      %v1095 = vunpack.c.l.b16 %v359
      %v1096 = vunpack.c.l.b16 %v361
      %v1097 = vunpack.c.l.b16 %v362
      %v1098 = vunpack.c.l.b16 %v364
      %v1099 = vunpack.c.l.b16 %v365
      %v1100 = vunpack.c.l.b16 %v367
      %v1101 = vunpack.c.l.b16 %v368
      %v1102 = vunpack.c.l.b16 %v370
      %v1103 = vunpack.c.l.b16 %v371
      %v1104 = vunpack.c.l.b16 %v373
      %v1105 = vunpack.c.l.b16 %v374
      %v1106 = vunpack.c.l.b16 %v376
      %v1107 = vunpack.c.l.b16 %v377
      %v1108 = vunpack.c.l.b16 %v379
      %v1109 = vunpack.c.l.b16 %v380
      %v1110 = vunpack.c.l.b16 %v382
      %v1111 = vunpack.c.l.b16 %v383
      %v1112 = vunpack.c.l.b16 %v385
      %v1113 = vunpack.c.l.b16 %v386
      %v1114 = vunpack.c.l.b16 %v388
      %v1115 = vunpack.c.l.b16 %v389
      %v1116 = vunpack.c.l.b16 %v391
      %v1117 = vunpack.c.l.b16 %v392
      %v1118 = vunpack.c.l.b16 %v394
      %v1119 = vunpack.c.l.b16 %v395
      %v1120 = vunpack.c.l.b16 %v397
      %v1121 = vunpack.c.l.b16 %v398
      %v1122 = vpack.c.b16 %v1091, %v1090
      %v1123 = vpack.c.b16 %v1093, %v1092
      %v1124 = vpack.c.b16 %v1095, %v1094
      %v1125 = vpack.c.b16 %v1097, %v1096
      %v1126 = vpack.c.b16 %v1099, %v1098
      %v1127 = vpack.c.b16 %v1101, %v1100
      %v1128 = vpack.c.b16 %v1103, %v1102
      %v1129 = vpack.c.b16 %v1105, %v1104
      %v1130 = vpack.c.b16 %v1107, %v1106
      %v1131 = vpack.c.b16 %v1109, %v1108
      %v1132 = vpack.c.b16 %v1111, %v1110
      %v1133 = vpack.c.b16 %v1113, %v1112
      %v1134 = vpack.c.b16 %v1115, %v1114
      %v1135 = vpack.c.b16 %v1117, %v1116
      %v1136 = vpack.c.b16 %v1119, %v1118
      %v1137 = vpack.c.b16 %v1121, %v1120
      %v1139 = vsel %vm844, %v1122, 0
      %v1142 = vsel %vm844, %v1123, 0
      %v1145 = vsel %vm844, %v1124, 0
      %v1148 = vsel %vm844, %v1125, 0
      %v1151 = vsel %vm844, %v1126, 0
      %v1154 = vsel %vm844, %v1127, 0
      %v1157 = vsel %vm844, %v1128, 0
      %v1160 = vsel %vm844, %v1129, 0
      %v1163 = vsel %vm844, %v1130, 0
      %v1166 = vsel %vm844, %v1131, 0
      %v1169 = vsel %vm844, %v1132, 0
      %v1172 = vsel %vm844, %v1133, 0
      %v1175 = vsel %vm844, %v1134, 0
      %v1178 = vsel %vm844, %v1135, 0
      %v1181 = vsel %vm844, %v1136, 0
      %v1184 = vsel %vm844, %v1137, 0
      %v1187 = vsel %vm893, %v406, 0
      %1189 = vmatprep.subr.bf16.mxu0 0
      %1190 = vmatpush1.bf16.msra.mxu0 %v1187
      %1191 = vmatprep.subr.bf16.mxu0 0
      %1192 = vmatpush1.bf16.msra.mxu0 0
      %1193 = vmatprep.subr.bf16.mxu0 0
      %1194 = vmatpush1.bf16.msra.mxu0 0
      %1195 = vmatprep.subr.bf16.mxu0 0
      %1196 = vmatpush1.bf16.msra.mxu0 0
      %1197 = vmatprep.subr.bf16.mxu0 0
      %1198 = vmatpush1.bf16.msra.mxu0 0
      %1199 = vmatprep.subr.bf16.mxu0 0
      %1200 = vmatpush1.bf16.msra.mxu0 0
      %1201 = vmatprep.subr.bf16.mxu0 0
      %1202 = vmatpush1.bf16.msra.mxu0 0
      %1203 = vmatprep.subr.bf16.mxu0 0
      %1204 = vmatpush1.bf16.msra.mxu0 0
      %1205 = vmatprep.subr.bf16.mxu0 0
      %1206 = vmatpush1.bf16.msra.mxu0 0
      %1207 = vmatprep.subr.bf16.mxu0 0
      %1208 = vmatpush1.bf16.msra.mxu0 0
      %1209 = vmatprep.subr.bf16.mxu0 0
      %1210 = vmatpush1.bf16.msra.mxu0 0
      %1211 = vmatprep.subr.bf16.mxu0 0
      %1212 = vmatpush1.bf16.msra.mxu0 0
      %1213 = vmatprep.subr.bf16.mxu0 0
      %1214 = vmatpush1.bf16.msra.mxu0 0
      %1215 = vmatprep.subr.bf16.mxu0 0
      %1216 = vmatpush1.bf16.msra.mxu0 0
      %1217 = vmatprep.subr.bf16.mxu0 0
      %1218 = vmatpush1.bf16.msra.mxu0 0
      %1219 = vmatprep.subr.bf16.mxu0 0
      %1220 = vmatpush1.bf16.msra.mxu0 0
      %1221 = vmatprep.mubr.bf16.mxu0 0
      %1222 = vmatmul.mubr.bf16.gmra.mrb[0].mxu0 %v1139
      %v1223 = vpop.f32.mrb[0].mxu0
      %v1224 = vadd.f32 %v932, %v1223
      %v1225 = vpop.f32.mrb[0].mxu0
      %v1226 = vpop.f32.mrb[0].mxu0
      %v1227 = vadd.f32 %v935, %v1226
      %v1228 = vpop.f32.mrb[0].mxu0
      %1229 = vmatprep.mubr.bf16.mxu0 0
      %1230 = vmatmul.mubr.bf16.gmra.mrb[0].mxu0 %v1142
      %v1231 = vpop.f32.mrb[0].mxu0
      %v1232 = vadd.f32 %v940, %v1231
      %v1233 = vpop.f32.mrb[0].mxu0
      %v1234 = vpop.f32.mrb[0].mxu0
      %v1235 = vadd.f32 %v943, %v1234
      %v1236 = vpop.f32.mrb[0].mxu0
      %1237 = vmatprep.mubr.bf16.mxu0 0
      %1238 = vmatmul.mubr.bf16.gmra.mrb[0].mxu0 %v1145
      %v1239 = vpop.f32.mrb[0].mxu0
      %v1240 = vadd.f32 %v948, %v1239
      %v1241 = vpop.f32.mrb[0].mxu0
      %v1242 = vpop.f32.mrb[0].mxu0
      %v1243 = vadd.f32 %v951, %v1242
      %v1244 = vpop.f32.mrb[0].mxu0
      %1245 = vmatprep.mubr.bf16.mxu0 0
      %1246 = vmatmul.mubr.bf16.gmra.mrb[0].mxu0 %v1148
      %v1247 = vpop.f32.mrb[0].mxu0
      %v1248 = vadd.f32 %v956, %v1247
      %v1249 = vpop.f32.mrb[0].mxu0
      %v1250 = vpop.f32.mrb[0].mxu0
      %v1251 = vadd.f32 %v959, %v1250
      %v1252 = vpop.f32.mrb[0].mxu0
      %1253 = vmatprep.mubr.bf16.mxu0 0
      %1254 = vmatmul.mubr.bf16.gmra.mrb[0].mxu0 %v1151
      %v1255 = vpop.f32.mrb[0].mxu0
      %v1256 = vadd.f32 %v964, %v1255
      %v1257 = vpop.f32.mrb[0].mxu0
      %v1258 = vpop.f32.mrb[0].mxu0
      %v1259 = vadd.f32 %v967, %v1258
      %v1260 = vpop.f32.mrb[0].mxu0
      %1261 = vmatprep.mubr.bf16.mxu0 0
      %1262 = vmatmul.mubr.bf16.gmra.mrb[0].mxu0 %v1154
      %v1263 = vpop.f32.mrb[0].mxu0
      %v1264 = vadd.f32 %v972, %v1263
      %v1265 = vpop.f32.mrb[0].mxu0
      %v1266 = vpop.f32.mrb[0].mxu0
      %v1267 = vadd.f32 %v975, %v1266
      %v1268 = vpop.f32.mrb[0].mxu0
      %1269 = vmatprep.mubr.bf16.mxu0 0
      %1270 = vmatmul.mubr.bf16.gmra.mrb[0].mxu0 %v1157
      %v1271 = vpop.f32.mrb[0].mxu0
      %v1272 = vadd.f32 %v980, %v1271
      %v1273 = vpop.f32.mrb[0].mxu0
      %v1274 = vpop.f32.mrb[0].mxu0
      %v1275 = vadd.f32 %v983, %v1274
      %v1276 = vpop.f32.mrb[0].mxu0
      %1277 = vmatprep.mubr.bf16.mxu0 0
      %1278 = vmatmul.mubr.bf16.gmra.mrb[0].mxu0 %v1160
      %v1279 = vpop.f32.mrb[0].mxu0
      %v1280 = vadd.f32 %v988, %v1279
      %v1281 = vpop.f32.mrb[0].mxu0
      %v1282 = vpop.f32.mrb[0].mxu0
      %v1283 = vadd.f32 %v991, %v1282
      %v1284 = vpop.f32.mrb[0].mxu0
      %1285 = vmatprep.mubr.bf16.mxu0 0
      %1286 = vmatmul.mubr.bf16.gmra.mrb[0].mxu0 %v1163
      %v1287 = vpop.f32.mrb[0].mxu0
      %v1288 = vadd.f32 %v996, %v1287
      %v1289 = vpop.f32.mrb[0].mxu0
      %v1290 = vpop.f32.mrb[0].mxu0
      %v1291 = vadd.f32 %v999, %v1290
      %v1292 = vpop.f32.mrb[0].mxu0
      %1293 = vmatprep.mubr.bf16.mxu0 0
      %1294 = vmatmul.mubr.bf16.gmra.mrb[0].mxu0 %v1166
      %v1295 = vpop.f32.mrb[0].mxu0
      %v1296 = vadd.f32 %v1004, %v1295
      %v1297 = vpop.f32.mrb[0].mxu0
      %v1298 = vpop.f32.mrb[0].mxu0
      %v1299 = vadd.f32 %v1007, %v1298
      %v1300 = vpop.f32.mrb[0].mxu0
      %1301 = vmatprep.mubr.bf16.mxu0 0
      %1302 = vmatmul.mubr.bf16.gmra.mrb[0].mxu0 %v1169
      %v1303 = vpop.f32.mrb[0].mxu0
      %v1304 = vadd.f32 %v1012, %v1303
      %v1305 = vpop.f32.mrb[0].mxu0
      %v1306 = vpop.f32.mrb[0].mxu0
      %v1307 = vadd.f32 %v1015, %v1306
      %v1308 = vpop.f32.mrb[0].mxu0
      %1309 = vmatprep.mubr.bf16.mxu0 0
      %1310 = vmatmul.mubr.bf16.gmra.mrb[0].mxu0 %v1172
      %v1311 = vpop.f32.mrb[0].mxu0
      %v1312 = vadd.f32 %v1020, %v1311
      %v1313 = vpop.f32.mrb[0].mxu0
      %v1314 = vpop.f32.mrb[0].mxu0
      %v1315 = vadd.f32 %v1023, %v1314
      %v1316 = vpop.f32.mrb[0].mxu0
      %1317 = vmatprep.mubr.bf16.mxu0 0
      %1318 = vmatmul.mubr.bf16.gmra.mrb[0].mxu0 %v1175
      %v1319 = vpop.f32.mrb[0].mxu0
      %v1320 = vadd.f32 %v1028, %v1319
      %v1321 = vpop.f32.mrb[0].mxu0
      %v1322 = vpop.f32.mrb[0].mxu0
      %v1323 = vadd.f32 %v1031, %v1322
      %v1324 = vpop.f32.mrb[0].mxu0
      %1325 = vmatprep.mubr.bf16.mxu0 0
      %1326 = vmatmul.mubr.bf16.gmra.mrb[0].mxu0 %v1178
      %v1327 = vpop.f32.mrb[0].mxu0
      %v1328 = vadd.f32 %v1036, %v1327
      %v1329 = vpop.f32.mrb[0].mxu0
      %v1330 = vpop.f32.mrb[0].mxu0
      %v1331 = vadd.f32 %v1039, %v1330
      %v1332 = vpop.f32.mrb[0].mxu0
      %1333 = vmatprep.mubr.bf16.mxu0 0
      %1334 = vmatmul.mubr.bf16.gmra.mrb[0].mxu0 %v1181
      %v1335 = vpop.f32.mrb[0].mxu0
      %v1336 = vadd.f32 %v1044, %v1335
      %v1337 = vpop.f32.mrb[0].mxu0
      %v1338 = vpop.f32.mrb[0].mxu0
      %v1339 = vadd.f32 %v1047, %v1338
      %v1340 = vpop.f32.mrb[0].mxu0
      %1341 = vmatprep.mubr.bf16.mxu0 0
      %1342 = vmatmul.mubr.bf16.gmra.mrb[0].mxu0 %v1184
      %v1343 = vpop.f32.mrb[0].mxu0
      %v1344 = vadd.f32 %v1052, %v1343
      %v1345 = vpop.f32.mrb[0].mxu0
      %v1346 = vpop.f32.mrb[0].mxu0
      %v1347 = vadd.f32 %v1055, %v1346
      %v1348 = vpop.f32.mrb[0].mxu0
      %1349 = vdwg.mxu0
      %vm1366 = vcmask 1042432
      %vm1367 = vcmask 1046532
      %vm1368 = vmor %vm1366, %vm1367
      %v1369 = vrot.slane %v352, 5
      %v1370 = vrot.slane %v1369, 4
      %v1371 = vrot.slane %v353, 5
      %v1372 = vsel %vm1368, %v1370, %v1371
      %v1373 = vrot.slane %v1371, 4
      %v1374 = vrot.slane %v354, 5
      %v1375 = vsel %vm1368, %v1373, %v1374
      %v1376 = vrot.slane %v355, 5
      %v1377 = vrot.slane %v1376, 4
      %v1378 = vrot.slane %v356, 5
      %v1379 = vsel %vm1368, %v1377, %v1378
      %v1380 = vrot.slane %v1378, 4
      %v1381 = vrot.slane %v357, 5
      %v1382 = vsel %vm1368, %v1380, %v1381
      %v1383 = vrot.slane %v358, 5
      %v1384 = vrot.slane %v1383, 4
      %v1385 = vrot.slane %v359, 5
      %v1386 = vsel %vm1368, %v1384, %v1385
      %v1387 = vrot.slane %v1385, 4
      %v1388 = vrot.slane %v360, 5
      %v1389 = vsel %vm1368, %v1387, %v1388
      %v1390 = vrot.slane %v361, 5
      %v1391 = vrot.slane %v1390, 4
      %v1392 = vrot.slane %v362, 5
      %v1393 = vsel %vm1368, %v1391, %v1392
      %v1394 = vrot.slane %v1392, 4
      %v1395 = vrot.slane %v363, 5
      %v1396 = vsel %vm1368, %v1394, %v1395
      %v1397 = vrot.slane %v364, 5
      %v1398 = vrot.slane %v1397, 4
      %v1399 = vrot.slane %v365, 5
      %v1400 = vsel %vm1368, %v1398, %v1399
      %v1401 = vrot.slane %v1399, 4
      %v1402 = vrot.slane %v366, 5
      %v1403 = vsel %vm1368, %v1401, %v1402
      %v1404 = vrot.slane %v367, 5
      %v1405 = vrot.slane %v1404, 4
      %v1406 = vrot.slane %v368, 5
      %v1407 = vsel %vm1368, %v1405, %v1406
      %v1408 = vrot.slane %v1406, 4
      %v1409 = vrot.slane %v369, 5
      %v1410 = vsel %vm1368, %v1408, %v1409
      %v1411 = vrot.slane %v370, 5
      %v1412 = vrot.slane %v1411, 4
      %v1413 = vrot.slane %v371, 5
      %v1414 = vsel %vm1368, %v1412, %v1413
      %v1415 = vrot.slane %v1413, 4
      %v1416 = vrot.slane %v372, 5
      %v1417 = vsel %vm1368, %v1415, %v1416
      %v1418 = vrot.slane %v373, 5
      %v1419 = vrot.slane %v1418, 4
      %v1420 = vrot.slane %v374, 5
      %v1421 = vsel %vm1368, %v1419, %v1420
      %v1422 = vrot.slane %v1420, 4
      %v1423 = vrot.slane %v375, 5
      %v1424 = vsel %vm1368, %v1422, %v1423
      %v1425 = vrot.slane %v376, 5
      %v1426 = vrot.slane %v1425, 4
      %v1427 = vrot.slane %v377, 5
      %v1428 = vsel %vm1368, %v1426, %v1427
      %v1429 = vrot.slane %v1427, 4
      %v1430 = vrot.slane %v378, 5
      %v1431 = vsel %vm1368, %v1429, %v1430
      %v1432 = vrot.slane %v379, 5
      %v1433 = vrot.slane %v1432, 4
      %v1434 = vrot.slane %v380, 5
      %v1435 = vsel %vm1368, %v1433, %v1434
      %v1436 = vrot.slane %v1434, 4
      %v1437 = vrot.slane %v381, 5
      %v1438 = vsel %vm1368, %v1436, %v1437
      %v1439 = vrot.slane %v382, 5
      %v1440 = vrot.slane %v1439, 4
      %v1441 = vrot.slane %v383, 5
      %v1442 = vsel %vm1368, %v1440, %v1441
      %v1443 = vrot.slane %v1441, 4
      %v1444 = vrot.slane %v384, 5
      %v1445 = vsel %vm1368, %v1443, %v1444
      %v1446 = vrot.slane %v385, 5
      %v1447 = vrot.slane %v1446, 4
      %v1448 = vrot.slane %v386, 5
      %v1449 = vsel %vm1368, %v1447, %v1448
      %v1450 = vrot.slane %v1448, 4
      %v1451 = vrot.slane %v387, 5
      %v1452 = vsel %vm1368, %v1450, %v1451
      %v1453 = vrot.slane %v388, 5
      %v1454 = vrot.slane %v1453, 4
      %v1455 = vrot.slane %v389, 5
      %v1456 = vsel %vm1368, %v1454, %v1455
      %v1457 = vrot.slane %v1455, 4
      %v1458 = vrot.slane %v390, 5
      %v1459 = vsel %vm1368, %v1457, %v1458
      %v1460 = vrot.slane %v391, 5
      %v1461 = vrot.slane %v1460, 4
      %v1462 = vrot.slane %v392, 5
      %v1463 = vsel %vm1368, %v1461, %v1462
      %v1464 = vrot.slane %v1462, 4
      %v1465 = vrot.slane %v393, 5
      %v1466 = vsel %vm1368, %v1464, %v1465
      %v1467 = vrot.slane %v394, 5
      %v1468 = vrot.slane %v1467, 4
      %v1469 = vrot.slane %v395, 5
      %v1470 = vsel %vm1368, %v1468, %v1469
      %v1471 = vrot.slane %v1469, 4
      %v1472 = vrot.slane %v396, 5
      %v1473 = vsel %vm1368, %v1471, %v1472
      %v1474 = vrot.slane %v397, 5
      %v1475 = vrot.slane %v1474, 4
      %v1476 = vrot.slane %v398, 5
      %v1477 = vsel %vm1368, %v1475, %v1476
      %v1478 = vrot.slane %v1476, 4
      %v1479 = vrot.slane %v399, 5
      %v1480 = vsel %vm1368, %v1478, %v1479
      %s1481 = scalar_lea.vmem %s1, 4
      %v1482 = vld [vmem:[%s1481] sm:$0x3]
      %v1483 = vunpack.c.l.b16 %v1372
      %v1484 = vunpack.c.l.b16 %v1375
      %v1485 = vunpack.c.l.b16 %v1379
      %v1486 = vunpack.c.l.b16 %v1382
      %v1487 = vunpack.c.l.b16 %v1386
      %v1488 = vunpack.c.l.b16 %v1389
      %v1489 = vunpack.c.l.b16 %v1393
      %v1490 = vunpack.c.l.b16 %v1396
      %v1491 = vunpack.c.l.b16 %v1400
      %v1492 = vunpack.c.l.b16 %v1403
      %v1493 = vunpack.c.l.b16 %v1407
      %v1494 = vunpack.c.l.b16 %v1410
      %v1495 = vunpack.c.l.b16 %v1414
      %v1496 = vunpack.c.l.b16 %v1417
      %v1497 = vunpack.c.l.b16 %v1421
      %v1498 = vunpack.c.l.b16 %v1424
      %v1499 = vunpack.c.l.b16 %v1428
      %v1500 = vunpack.c.l.b16 %v1431
      %v1501 = vunpack.c.l.b16 %v1435
      %v1502 = vunpack.c.l.b16 %v1438
      %v1503 = vunpack.c.l.b16 %v1442
      %v1504 = vunpack.c.l.b16 %v1445
      %v1505 = vunpack.c.l.b16 %v1449
      %v1506 = vunpack.c.l.b16 %v1452
      %v1507 = vunpack.c.l.b16 %v1456
      %v1508 = vunpack.c.l.b16 %v1459
      %v1509 = vunpack.c.l.b16 %v1463
      %v1510 = vunpack.c.l.b16 %v1466
      %v1511 = vunpack.c.l.b16 %v1470
      %v1512 = vunpack.c.l.b16 %v1473
      %v1513 = vunpack.c.l.b16 %v1477
      %v1514 = vunpack.c.l.b16 %v1480
      %v1515 = vpack.c.b16 %v1484, %v1483
      %v1516 = vpack.c.b16 %v1486, %v1485
      %v1517 = vpack.c.b16 %v1488, %v1487
      %v1518 = vpack.c.b16 %v1490, %v1489
      %v1519 = vpack.c.b16 %v1492, %v1491
      %v1520 = vpack.c.b16 %v1494, %v1493
      %v1521 = vpack.c.b16 %v1496, %v1495
      %v1522 = vpack.c.b16 %v1498, %v1497
      %v1523 = vpack.c.b16 %v1500, %v1499
      %v1524 = vpack.c.b16 %v1502, %v1501
      %v1525 = vpack.c.b16 %v1504, %v1503
      %v1526 = vpack.c.b16 %v1506, %v1505
      %v1527 = vpack.c.b16 %v1508, %v1507
      %v1528 = vpack.c.b16 %v1510, %v1509
      %v1529 = vpack.c.b16 %v1512, %v1511
      %v1530 = vpack.c.b16 %v1514, %v1513
      %v1532 = vsel %vm844, %v1515, 0
      %v1535 = vsel %vm844, %v1516, 0
      %v1538 = vsel %vm844, %v1517, 0
      %v1541 = vsel %vm844, %v1518, 0
      %v1544 = vsel %vm844, %v1519, 0
      %v1547 = vsel %vm844, %v1520, 0
      %v1550 = vsel %vm844, %v1521, 0
      %v1553 = vsel %vm844, %v1522, 0
      %v1556 = vsel %vm844, %v1523, 0
      %v1559 = vsel %vm844, %v1524, 0
      %v1562 = vsel %vm844, %v1525, 0
      %v1565 = vsel %vm844, %v1526, 0
      %v1568 = vsel %vm844, %v1527, 0
      %v1571 = vsel %vm844, %v1528, 0
      %v1574 = vsel %vm844, %v1529, 0
      %v1577 = vsel %vm844, %v1530, 0
      %v1580 = vsel %vm893, %v1482, 0
      %1582 = vmatprep.subr.bf16.mxu0 0
      %1583 = vmatpush1.bf16.msra.mxu0 %v1580
      %1584 = vmatprep.subr.bf16.mxu0 0
      %1585 = vmatpush1.bf16.msra.mxu0 0
      %1586 = vmatprep.subr.bf16.mxu0 0
      %1587 = vmatpush1.bf16.msra.mxu0 0
      %1588 = vmatprep.subr.bf16.mxu0 0
      %1589 = vmatpush1.bf16.msra.mxu0 0
      %1590 = vmatprep.subr.bf16.mxu0 0
      %1591 = vmatpush1.bf16.msra.mxu0 0
      %1592 = vmatprep.subr.bf16.mxu0 0
      %1593 = vmatpush1.bf16.msra.mxu0 0
      %1594 = vmatprep.subr.bf16.mxu0 0
      %1595 = vmatpush1.bf16.msra.mxu0 0
      %1596 = vmatprep.subr.bf16.mxu0 0
      %1597 = vmatpush1.bf16.msra.mxu0 0
      %1598 = vmatprep.subr.bf16.mxu0 0
      %1599 = vmatpush1.bf16.msra.mxu0 0
      %1600 = vmatprep.subr.bf16.mxu0 0
      %1601 = vmatpush1.bf16.msra.mxu0 0
      %1602 = vmatprep.subr.bf16.mxu0 0
      %1603 = vmatpush1.bf16.msra.mxu0 0
      %1604 = vmatprep.subr.bf16.mxu0 0
      %1605 = vmatpush1.bf16.msra.mxu0 0
      %1606 = vmatprep.subr.bf16.mxu0 0
      %1607 = vmatpush1.bf16.msra.mxu0 0
      %1608 = vmatprep.subr.bf16.mxu0 0
      %1609 = vmatpush1.bf16.msra.mxu0 0
      %1610 = vmatprep.subr.bf16.mxu0 0
      %1611 = vmatpush1.bf16.msra.mxu0 0
      %1612 = vmatprep.subr.bf16.mxu0 0
      %1613 = vmatpush1.bf16.msra.mxu0 0
      %1614 = vmatprep.mubr.bf16.mxu0 0
      %1615 = vmatmul.mubr.bf16.gmra.mrb[0].mxu0 %v1532
      %v1616 = vpop.f32.mrb[0].mxu0
      %v1617 = vadd.f32 0.0, %v1616
      %v1618 = vpop.f32.mrb[0].mxu0
      %v1619 = vpop.f32.mrb[0].mxu0
      %v1620 = vadd.f32 0.0, %v1619
      %v1621 = vpop.f32.mrb[0].mxu0
      %1622 = vmatprep.mubr.bf16.mxu0 0
      %1623 = vmatmul.mubr.bf16.gmra.mrb[0].mxu0 %v1535
      %v1624 = vpop.f32.mrb[0].mxu0
      %v1625 = vadd.f32 0.0, %v1624
      %v1626 = vpop.f32.mrb[0].mxu0
      %v1627 = vpop.f32.mrb[0].mxu0
      %v1628 = vadd.f32 0.0, %v1627
      %v1629 = vpop.f32.mrb[0].mxu0
      %1630 = vmatprep.mubr.bf16.mxu0 0
      %1631 = vmatmul.mubr.bf16.gmra.mrb[0].mxu0 %v1538
      %v1632 = vpop.f32.mrb[0].mxu0
      %v1633 = vadd.f32 0.0, %v1632
      %v1634 = vpop.f32.mrb[0].mxu0
      %v1635 = vpop.f32.mrb[0].mxu0
      %v1636 = vadd.f32 0.0, %v1635
      %v1637 = vpop.f32.mrb[0].mxu0
      %1638 = vmatprep.mubr.bf16.mxu0 0
      %1639 = vmatmul.mubr.bf16.gmra.mrb[0].mxu0 %v1541
      %v1640 = vpop.f32.mrb[0].mxu0
      %v1641 = vadd.f32 0.0, %v1640
      %v1642 = vpop.f32.mrb[0].mxu0
      %v1643 = vpop.f32.mrb[0].mxu0
      %v1644 = vadd.f32 0.0, %v1643
      %v1645 = vpop.f32.mrb[0].mxu0
      %1646 = vmatprep.mubr.bf16.mxu0 0
      %1647 = vmatmul.mubr.bf16.gmra.mrb[0].mxu0 %v1544
      %v1648 = vpop.f32.mrb[0].mxu0
      %v1649 = vadd.f32 0.0, %v1648
      %v1650 = vpop.f32.mrb[0].mxu0
      %v1651 = vpop.f32.mrb[0].mxu0
      %v1652 = vadd.f32 0.0, %v1651
      %v1653 = vpop.f32.mrb[0].mxu0
      %1654 = vmatprep.mubr.bf16.mxu0 0
      %1655 = vmatmul.mubr.bf16.gmra.mrb[0].mxu0 %v1547
      %v1656 = vpop.f32.mrb[0].mxu0
      %v1657 = vadd.f32 0.0, %v1656
      %v1658 = vpop.f32.mrb[0].mxu0
      %v1659 = vpop.f32.mrb[0].mxu0
      %v1660 = vadd.f32 0.0, %v1659
      %v1661 = vpop.f32.mrb[0].mxu0
      %1662 = vmatprep.mubr.bf16.mxu0 0
      %1663 = vmatmul.mubr.bf16.gmra.mrb[0].mxu0 %v1550
      %v1664 = vpop.f32.mrb[0].mxu0
      %v1665 = vadd.f32 0.0, %v1664
      %v1666 = vpop.f32.mrb[0].mxu0
      %v1667 = vpop.f32.mrb[0].mxu0
      %v1668 = vadd.f32 0.0, %v1667
      %v1669 = vpop.f32.mrb[0].mxu0
      %1670 = vmatprep.mubr.bf16.mxu0 0
      %1671 = vmatmul.mubr.bf16.gmra.mrb[0].mxu0 %v1553
      %v1672 = vpop.f32.mrb[0].mxu0
      %v1673 = vadd.f32 0.0, %v1672
      %v1674 = vpop.f32.mrb[0].mxu0
      %v1675 = vpop.f32.mrb[0].mxu0
      %v1676 = vadd.f32 0.0, %v1675
      %v1677 = vpop.f32.mrb[0].mxu0
      %1678 = vmatprep.mubr.bf16.mxu0 0
      %1679 = vmatmul.mubr.bf16.gmra.mrb[0].mxu0 %v1556
      %v1680 = vpop.f32.mrb[0].mxu0
      %v1681 = vadd.f32 0.0, %v1680
      %v1682 = vpop.f32.mrb[0].mxu0
      %v1683 = vpop.f32.mrb[0].mxu0
      %v1684 = vadd.f32 0.0, %v1683
      %v1685 = vpop.f32.mrb[0].mxu0
      %1686 = vmatprep.mubr.bf16.mxu0 0
      %1687 = vmatmul.mubr.bf16.gmra.mrb[0].mxu0 %v1559
      %v1688 = vpop.f32.mrb[0].mxu0
      %v1689 = vadd.f32 0.0, %v1688
      %v1690 = vpop.f32.mrb[0].mxu0
      %v1691 = vpop.f32.mrb[0].mxu0
      %v1692 = vadd.f32 0.0, %v1691
      %v1693 = vpop.f32.mrb[0].mxu0
      %1694 = vmatprep.mubr.bf16.mxu0 0
      %1695 = vmatmul.mubr.bf16.gmra.mrb[0].mxu0 %v1562
      %v1696 = vpop.f32.mrb[0].mxu0
      %v1697 = vadd.f32 0.0, %v1696
      %v1698 = vpop.f32.mrb[0].mxu0
      %v1699 = vpop.f32.mrb[0].mxu0
      %v1700 = vadd.f32 0.0, %v1699
      %v1701 = vpop.f32.mrb[0].mxu0
      %1702 = vmatprep.mubr.bf16.mxu0 0
      %1703 = vmatmul.mubr.bf16.gmra.mrb[0].mxu0 %v1565
      %v1704 = vpop.f32.mrb[0].mxu0
      %v1705 = vadd.f32 0.0, %v1704
      %v1706 = vpop.f32.mrb[0].mxu0
      %v1707 = vpop.f32.mrb[0].mxu0
      %v1708 = vadd.f32 0.0, %v1707
      %v1709 = vpop.f32.mrb[0].mxu0
      %1710 = vmatprep.mubr.bf16.mxu0 0
      %1711 = vmatmul.mubr.bf16.gmra.mrb[0].mxu0 %v1568
      %v1712 = vpop.f32.mrb[0].mxu0
      %v1713 = vadd.f32 0.0, %v1712
      %v1714 = vpop.f32.mrb[0].mxu0
      %v1715 = vpop.f32.mrb[0].mxu0
      %v1716 = vadd.f32 0.0, %v1715
      %v1717 = vpop.f32.mrb[0].mxu0
      %1718 = vmatprep.mubr.bf16.mxu0 0
      %1719 = vmatmul.mubr.bf16.gmra.mrb[0].mxu0 %v1571
      %v1720 = vpop.f32.mrb[0].mxu0
      %v1721 = vadd.f32 0.0, %v1720
      %v1722 = vpop.f32.mrb[0].mxu0
      %v1723 = vpop.f32.mrb[0].mxu0
      %v1724 = vadd.f32 0.0, %v1723
      %v1725 = vpop.f32.mrb[0].mxu0
      %1726 = vmatprep.mubr.bf16.mxu0 0
      %1727 = vmatmul.mubr.bf16.gmra.mrb[0].mxu0 %v1574
      %v1728 = vpop.f32.mrb[0].mxu0
      %v1729 = vadd.f32 0.0, %v1728
      %v1730 = vpop.f32.mrb[0].mxu0
      %v1731 = vpop.f32.mrb[0].mxu0
      %v1732 = vadd.f32 0.0, %v1731
      %v1733 = vpop.f32.mrb[0].mxu0
      %1734 = vmatprep.mubr.bf16.mxu0 0
      %1735 = vmatmul.mubr.bf16.gmra.mrb[0].mxu0 %v1577
      %v1736 = vpop.f32.mrb[0].mxu0
      %v1737 = vadd.f32 0.0, %v1736
      %v1738 = vpop.f32.mrb[0].mxu0
      %v1739 = vpop.f32.mrb[0].mxu0
      %v1740 = vadd.f32 0.0, %v1739
      %v1741 = vpop.f32.mrb[0].mxu0
      %1742 = vdwg.mxu0
      %v1743 = vadd.f32 %v1224, %v1617
      %v1744 = vadd.f32 %v1227, %v1620
      %v1745 = vadd.f32 %v1232, %v1625
      %v1746 = vadd.f32 %v1235, %v1628
      %v1747 = vadd.f32 %v1240, %v1633
      %v1748 = vadd.f32 %v1243, %v1636
      %v1749 = vadd.f32 %v1248, %v1641
      %v1750 = vadd.f32 %v1251, %v1644
      %v1751 = vadd.f32 %v1256, %v1649
      %v1752 = vadd.f32 %v1259, %v1652
      %v1753 = vadd.f32 %v1264, %v1657
      %v1754 = vadd.f32 %v1267, %v1660
      %v1755 = vadd.f32 %v1272, %v1665
      %v1756 = vadd.f32 %v1275, %v1668
      %v1757 = vadd.f32 %v1280, %v1673
      %v1758 = vadd.f32 %v1283, %v1676
      %v1759 = vadd.f32 %v1288, %v1681
      %v1760 = vadd.f32 %v1291, %v1684
      %v1761 = vadd.f32 %v1296, %v1689
      %v1762 = vadd.f32 %v1299, %v1692
      %v1763 = vadd.f32 %v1304, %v1697
      %v1764 = vadd.f32 %v1307, %v1700
      %v1765 = vadd.f32 %v1312, %v1705
      %v1766 = vadd.f32 %v1315, %v1708
      %v1767 = vadd.f32 %v1320, %v1713
      %v1768 = vadd.f32 %v1323, %v1716
      %v1769 = vadd.f32 %v1328, %v1721
      %v1770 = vadd.f32 %v1331, %v1724
      %v1771 = vadd.f32 %v1336, %v1729
      %v1772 = vadd.f32 %v1339, %v1732
      %v1773 = vadd.f32 %v1344, %v1737
      %v1774 = vadd.f32 %v1347, %v1740
      %s1775 = scalar_lea.vmem %s1, 6
      %v1776 = vld [vmem:[%s1775] sm:$0x3]
      %v1779 = vunpack.c.l.b16 %v400
      %v1780 = vunpack.c.l.b16 %v401
      %v1781 = vpack.c.b16 %v1780, %v1779
      %v1783 = vsel %vm844, %v1781, 0
      %v1786 = vsel %vm893, %v1776, 0
      %1788 = vmatprep.subr.bf16.mxu0 0
      %1789 = vmatpush1.bf16.msra.mxu0 %v1786
      %1790 = vmatprep.subr.bf16.mxu0 0
      %1791 = vmatpush1.bf16.msra.mxu0 0
      %1792 = vmatprep.subr.bf16.mxu0 0
      %1793 = vmatpush1.bf16.msra.mxu0 0
      %1794 = vmatprep.subr.bf16.mxu0 0
      %1795 = vmatpush1.bf16.msra.mxu0 0
      %1796 = vmatprep.subr.bf16.mxu0 0
      %1797 = vmatpush1.bf16.msra.mxu0 0
      %1798 = vmatprep.subr.bf16.mxu0 0
      %1799 = vmatpush1.bf16.msra.mxu0 0
      %1800 = vmatprep.subr.bf16.mxu0 0
      %1801 = vmatpush1.bf16.msra.mxu0 0
      %1802 = vmatprep.subr.bf16.mxu0 0
      %1803 = vmatpush1.bf16.msra.mxu0 0
      %1804 = vmatprep.subr.bf16.mxu0 0
      %1805 = vmatpush1.bf16.msra.mxu0 0
      %1806 = vmatprep.subr.bf16.mxu0 0
      %1807 = vmatpush1.bf16.msra.mxu0 0
      %1808 = vmatprep.subr.bf16.mxu0 0
      %1809 = vmatpush1.bf16.msra.mxu0 0
      %1810 = vmatprep.subr.bf16.mxu0 0
      %1811 = vmatpush1.bf16.msra.mxu0 0
      %1812 = vmatprep.subr.bf16.mxu0 0
      %1813 = vmatpush1.bf16.msra.mxu0 0
      %1814 = vmatprep.subr.bf16.mxu0 0
      %1815 = vmatpush1.bf16.msra.mxu0 0
      %1816 = vmatprep.subr.bf16.mxu0 0
      %1817 = vmatpush1.bf16.msra.mxu0 0
      %1818 = vmatprep.subr.bf16.mxu0 0
      %1819 = vmatpush1.bf16.msra.mxu0 0
      %1820 = vmatprep.mubr.bf16.mxu0 0
      %1821 = vmatmul.mubr.bf16.gmra.mrb[0].mxu0 %v1142
      %v1822 = vpop.f32.mrb[0].mxu0
      %v1823 = vadd.f32 0.0, %v1822
      %v1824 = vpop.f32.mrb[0].mxu0
      %v1825 = vpop.f32.mrb[0].mxu0
      %v1826 = vadd.f32 0.0, %v1825
      %v1827 = vpop.f32.mrb[0].mxu0
      %1828 = vmatprep.mubr.bf16.mxu0 0
      %1829 = vmatmul.mubr.bf16.gmra.mrb[0].mxu0 %v1145
      %v1830 = vpop.f32.mrb[0].mxu0
      %v1831 = vadd.f32 0.0, %v1830
      %v1832 = vpop.f32.mrb[0].mxu0
      %v1833 = vpop.f32.mrb[0].mxu0
      %v1834 = vadd.f32 0.0, %v1833
      %v1835 = vpop.f32.mrb[0].mxu0
      %1836 = vmatprep.mubr.bf16.mxu0 0
      %1837 = vmatmul.mubr.bf16.gmra.mrb[0].mxu0 %v1148
      %v1838 = vpop.f32.mrb[0].mxu0
      %v1839 = vadd.f32 0.0, %v1838
      %v1840 = vpop.f32.mrb[0].mxu0
      %v1841 = vpop.f32.mrb[0].mxu0
      %v1842 = vadd.f32 0.0, %v1841
      %v1843 = vpop.f32.mrb[0].mxu0
      %1844 = vmatprep.mubr.bf16.mxu0 0
      %1845 = vmatmul.mubr.bf16.gmra.mrb[0].mxu0 %v1151
      %v1846 = vpop.f32.mrb[0].mxu0
      %v1847 = vadd.f32 0.0, %v1846
      %v1848 = vpop.f32.mrb[0].mxu0
      %v1849 = vpop.f32.mrb[0].mxu0
      %v1850 = vadd.f32 0.0, %v1849
      %v1851 = vpop.f32.mrb[0].mxu0
      %1852 = vmatprep.mubr.bf16.mxu0 0
      %1853 = vmatmul.mubr.bf16.gmra.mrb[0].mxu0 %v1154
      %v1854 = vpop.f32.mrb[0].mxu0
      %v1855 = vadd.f32 0.0, %v1854
      %v1856 = vpop.f32.mrb[0].mxu0
      %v1857 = vpop.f32.mrb[0].mxu0
      %v1858 = vadd.f32 0.0, %v1857
      %v1859 = vpop.f32.mrb[0].mxu0
      %1860 = vmatprep.mubr.bf16.mxu0 0
      %1861 = vmatmul.mubr.bf16.gmra.mrb[0].mxu0 %v1157
      %v1862 = vpop.f32.mrb[0].mxu0
      %v1863 = vadd.f32 0.0, %v1862
      %v1864 = vpop.f32.mrb[0].mxu0
      %v1865 = vpop.f32.mrb[0].mxu0
      %v1866 = vadd.f32 0.0, %v1865
      %v1867 = vpop.f32.mrb[0].mxu0
      %1868 = vmatprep.mubr.bf16.mxu0 0
      %1869 = vmatmul.mubr.bf16.gmra.mrb[0].mxu0 %v1160
      %v1870 = vpop.f32.mrb[0].mxu0
      %v1871 = vadd.f32 0.0, %v1870
      %v1872 = vpop.f32.mrb[0].mxu0
      %v1873 = vpop.f32.mrb[0].mxu0
      %v1874 = vadd.f32 0.0, %v1873
      %v1875 = vpop.f32.mrb[0].mxu0
      %1876 = vmatprep.mubr.bf16.mxu0 0
      %1877 = vmatmul.mubr.bf16.gmra.mrb[0].mxu0 %v1163
      %v1878 = vpop.f32.mrb[0].mxu0
      %v1879 = vadd.f32 0.0, %v1878
      %v1880 = vpop.f32.mrb[0].mxu0
      %v1881 = vpop.f32.mrb[0].mxu0
      %v1882 = vadd.f32 0.0, %v1881
      %v1883 = vpop.f32.mrb[0].mxu0
      %1884 = vmatprep.mubr.bf16.mxu0 0
      %1885 = vmatmul.mubr.bf16.gmra.mrb[0].mxu0 %v1166
      %v1886 = vpop.f32.mrb[0].mxu0
      %v1887 = vadd.f32 0.0, %v1886
      %v1888 = vpop.f32.mrb[0].mxu0
      %v1889 = vpop.f32.mrb[0].mxu0
      %v1890 = vadd.f32 0.0, %v1889
      %v1891 = vpop.f32.mrb[0].mxu0
      %1892 = vmatprep.mubr.bf16.mxu0 0
      %1893 = vmatmul.mubr.bf16.gmra.mrb[0].mxu0 %v1169
      %v1894 = vpop.f32.mrb[0].mxu0
      %v1895 = vadd.f32 0.0, %v1894
      %v1896 = vpop.f32.mrb[0].mxu0
      %v1897 = vpop.f32.mrb[0].mxu0
      %v1898 = vadd.f32 0.0, %v1897
      %v1899 = vpop.f32.mrb[0].mxu0
      %1900 = vmatprep.mubr.bf16.mxu0 0
      %1901 = vmatmul.mubr.bf16.gmra.mrb[0].mxu0 %v1172
      %v1902 = vpop.f32.mrb[0].mxu0
      %v1903 = vadd.f32 0.0, %v1902
      %v1904 = vpop.f32.mrb[0].mxu0
      %v1905 = vpop.f32.mrb[0].mxu0
      %v1906 = vadd.f32 0.0, %v1905
      %v1907 = vpop.f32.mrb[0].mxu0
      %1908 = vmatprep.mubr.bf16.mxu0 0
      %1909 = vmatmul.mubr.bf16.gmra.mrb[0].mxu0 %v1175
      %v1910 = vpop.f32.mrb[0].mxu0
      %v1911 = vadd.f32 0.0, %v1910
      %v1912 = vpop.f32.mrb[0].mxu0
      %v1913 = vpop.f32.mrb[0].mxu0
      %v1914 = vadd.f32 0.0, %v1913
      %v1915 = vpop.f32.mrb[0].mxu0
      %1916 = vmatprep.mubr.bf16.mxu0 0
      %1917 = vmatmul.mubr.bf16.gmra.mrb[0].mxu0 %v1178
      %v1918 = vpop.f32.mrb[0].mxu0
      %v1919 = vadd.f32 0.0, %v1918
      %v1920 = vpop.f32.mrb[0].mxu0
      %v1921 = vpop.f32.mrb[0].mxu0
      %v1922 = vadd.f32 0.0, %v1921
      %v1923 = vpop.f32.mrb[0].mxu0
      %1924 = vmatprep.mubr.bf16.mxu0 0
      %1925 = vmatmul.mubr.bf16.gmra.mrb[0].mxu0 %v1181
      %v1926 = vpop.f32.mrb[0].mxu0
      %v1927 = vadd.f32 0.0, %v1926
      %v1928 = vpop.f32.mrb[0].mxu0
      %v1929 = vpop.f32.mrb[0].mxu0
      %v1930 = vadd.f32 0.0, %v1929
      %v1931 = vpop.f32.mrb[0].mxu0
      %1932 = vmatprep.mubr.bf16.mxu0 0
      %1933 = vmatmul.mubr.bf16.gmra.mrb[0].mxu0 %v1184
      %v1934 = vpop.f32.mrb[0].mxu0
      %v1935 = vadd.f32 0.0, %v1934
      %v1936 = vpop.f32.mrb[0].mxu0
      %v1937 = vpop.f32.mrb[0].mxu0
      %v1938 = vadd.f32 0.0, %v1937
      %v1939 = vpop.f32.mrb[0].mxu0
      %1940 = vmatprep.mubr.bf16.mxu0 0
      %1941 = vmatmul.mubr.bf16.gmra.mrb[0].mxu0 %v1783
      %v1942 = vpop.f32.mrb[0].mxu0
      %v1943 = vadd.f32 0.0, %v1942
      %v1944 = vpop.f32.mrb[0].mxu0
      %v1945 = vpop.f32.mrb[0].mxu0
      %v1946 = vadd.f32 0.0, %v1945
      %v1947 = vpop.f32.mrb[0].mxu0
      %1948 = vdwg.mxu0
      %v1949 = vadd.f32 %v1743, %v1823
      %v1950 = vadd.f32 %v1744, %v1826
      %v1951 = vadd.f32 %v1745, %v1831
      %v1952 = vadd.f32 %v1746, %v1834
      %v1953 = vadd.f32 %v1747, %v1839
      %v1954 = vadd.f32 %v1748, %v1842
      %v1955 = vadd.f32 %v1749, %v1847
      %v1956 = vadd.f32 %v1750, %v1850
      %v1957 = vadd.f32 %v1751, %v1855
      %v1958 = vadd.f32 %v1752, %v1858
      %v1959 = vadd.f32 %v1753, %v1863
      %v1960 = vadd.f32 %v1754, %v1866
      %v1961 = vadd.f32 %v1755, %v1871
      %v1962 = vadd.f32 %v1756, %v1874
      %v1963 = vadd.f32 %v1757, %v1879
      %v1964 = vadd.f32 %v1758, %v1882
      %v1965 = vadd.f32 %v1759, %v1887
      %v1966 = vadd.f32 %v1760, %v1890
      %v1967 = vadd.f32 %v1761, %v1895
      %v1968 = vadd.f32 %v1762, %v1898
      %v1969 = vadd.f32 %v1763, %v1903
      %v1970 = vadd.f32 %v1764, %v1906
      %v1971 = vadd.f32 %v1765, %v1911
      %v1972 = vadd.f32 %v1766, %v1914
      %v1973 = vadd.f32 %v1767, %v1919
      %v1974 = vadd.f32 %v1768, %v1922
      %v1975 = vadd.f32 %v1769, %v1927
      %v1976 = vadd.f32 %v1770, %v1930
      %v1977 = vadd.f32 %v1771, %v1935
      %v1978 = vadd.f32 %v1772, %v1938
      %v1979 = vadd.f32 %v1773, %v1943
      %v1980 = vadd.f32 %v1774, %v1946
      %v1982 = vshrl.u32 %v400, 16
      %v1984 = vrot.slane %v1982, 4
      %v1985 = vshll.u32 %v400, 16
      %v1987 = vrot.slane %v1985, 5
      %v1988 = vor.u32 %v1984, %v1987
      %v1989 = vrot.slane %v1988, 4
      %v1991 = vshll.u32 %v401, 16
      %v1993 = vrot.slane %v1991, 5
      %v1994 = vsel %vm409, %v1989, %v1993
      %v1995 = vshrl.u32 %v401, 16
      %v1997 = vrot.slane %v1995, 4
      %v1998 = vor.u32 %v1997, %v1993
      %v1999 = vrot.slane %v1998, 4
      %v2001 = vshll.u32 %v402, 16
      %v2003 = vrot.slane %v2001, 5
      %v2004 = vsel %vm409, %v1999, %v2003
      %s2005 = scalar_lea.vmem %s1, 8
      %v2006 = vld [vmem:[%s2005] sm:$0x3]
      %v2007 = vunpack.c.l.b16 %v1994
      %v2008 = vunpack.c.l.b16 %v2004
      %v2009 = vpack.c.b16 %v2008, %v2007
      %v2011 = vsel %vm844, %v2009, 0
      %v2014 = vsel %vm893, %v2006, 0
      %2016 = vmatprep.subr.bf16.mxu0 0
      %2017 = vmatpush1.bf16.msra.mxu0 %v2014
      %2018 = vmatprep.subr.bf16.mxu0 0
      %2019 = vmatpush1.bf16.msra.mxu0 0
      %2020 = vmatprep.subr.bf16.mxu0 0
      %2021 = vmatpush1.bf16.msra.mxu0 0
      %2022 = vmatprep.subr.bf16.mxu0 0
      %2023 = vmatpush1.bf16.msra.mxu0 0
      %2024 = vmatprep.subr.bf16.mxu0 0
      %2025 = vmatpush1.bf16.msra.mxu0 0
      %2026 = vmatprep.subr.bf16.mxu0 0
      %2027 = vmatpush1.bf16.msra.mxu0 0
      %2028 = vmatprep.subr.bf16.mxu0 0
      %2029 = vmatpush1.bf16.msra.mxu0 0
      %2030 = vmatprep.subr.bf16.mxu0 0
      %2031 = vmatpush1.bf16.msra.mxu0 0
      %2032 = vmatprep.subr.bf16.mxu0 0
      %2033 = vmatpush1.bf16.msra.mxu0 0
      %2034 = vmatprep.subr.bf16.mxu0 0
      %2035 = vmatpush1.bf16.msra.mxu0 0
      %2036 = vmatprep.subr.bf16.mxu0 0
      %2037 = vmatpush1.bf16.msra.mxu0 0
      %2038 = vmatprep.subr.bf16.mxu0 0
      %2039 = vmatpush1.bf16.msra.mxu0 0
      %2040 = vmatprep.subr.bf16.mxu0 0
      %2041 = vmatpush1.bf16.msra.mxu0 0
      %2042 = vmatprep.subr.bf16.mxu0 0
      %2043 = vmatpush1.bf16.msra.mxu0 0
      %2044 = vmatprep.subr.bf16.mxu0 0
      %2045 = vmatpush1.bf16.msra.mxu0 0
      %2046 = vmatprep.subr.bf16.mxu0 0
      %2047 = vmatpush1.bf16.msra.mxu0 0
      %2048 = vmatprep.mubr.bf16.mxu0 0
      %2049 = vmatmul.mubr.bf16.gmra.mrb[0].mxu0 %v849
      %v2050 = vpop.f32.mrb[0].mxu0
      %v2051 = vadd.f32 0.0, %v2050
      %v2052 = vpop.f32.mrb[0].mxu0
      %v2053 = vpop.f32.mrb[0].mxu0
      %v2054 = vadd.f32 0.0, %v2053
      %v2055 = vpop.f32.mrb[0].mxu0
      %2056 = vmatprep.mubr.bf16.mxu0 0
      %2057 = vmatmul.mubr.bf16.gmra.mrb[0].mxu0 %v852
      %v2058 = vpop.f32.mrb[0].mxu0
      %v2059 = vadd.f32 0.0, %v2058
      %v2060 = vpop.f32.mrb[0].mxu0
      %v2061 = vpop.f32.mrb[0].mxu0
      %v2062 = vadd.f32 0.0, %v2061
      %v2063 = vpop.f32.mrb[0].mxu0
      %2064 = vmatprep.mubr.bf16.mxu0 0
      %2065 = vmatmul.mubr.bf16.gmra.mrb[0].mxu0 %v855
      %v2066 = vpop.f32.mrb[0].mxu0
      %v2067 = vadd.f32 0.0, %v2066
      %v2068 = vpop.f32.mrb[0].mxu0
      %v2069 = vpop.f32.mrb[0].mxu0
      %v2070 = vadd.f32 0.0, %v2069
      %v2071 = vpop.f32.mrb[0].mxu0
      %2072 = vmatprep.mubr.bf16.mxu0 0
      %2073 = vmatmul.mubr.bf16.gmra.mrb[0].mxu0 %v858
      %v2074 = vpop.f32.mrb[0].mxu0
      %v2075 = vadd.f32 0.0, %v2074
      %v2076 = vpop.f32.mrb[0].mxu0
      %v2077 = vpop.f32.mrb[0].mxu0
      %v2078 = vadd.f32 0.0, %v2077
      %v2079 = vpop.f32.mrb[0].mxu0
      %2080 = vmatprep.mubr.bf16.mxu0 0
      %2081 = vmatmul.mubr.bf16.gmra.mrb[0].mxu0 %v861
      %v2082 = vpop.f32.mrb[0].mxu0
      %v2083 = vadd.f32 0.0, %v2082
      %v2084 = vpop.f32.mrb[0].mxu0
      %v2085 = vpop.f32.mrb[0].mxu0
      %v2086 = vadd.f32 0.0, %v2085
      %v2087 = vpop.f32.mrb[0].mxu0
      %2088 = vmatprep.mubr.bf16.mxu0 0
      %2089 = vmatmul.mubr.bf16.gmra.mrb[0].mxu0 %v864
      %v2090 = vpop.f32.mrb[0].mxu0
      %v2091 = vadd.f32 0.0, %v2090
      %v2092 = vpop.f32.mrb[0].mxu0
      %v2093 = vpop.f32.mrb[0].mxu0
      %v2094 = vadd.f32 0.0, %v2093
      %v2095 = vpop.f32.mrb[0].mxu0
      %2096 = vmatprep.mubr.bf16.mxu0 0
      %2097 = vmatmul.mubr.bf16.gmra.mrb[0].mxu0 %v867
      %v2098 = vpop.f32.mrb[0].mxu0
      %v2099 = vadd.f32 0.0, %v2098
      %v2100 = vpop.f32.mrb[0].mxu0
      %v2101 = vpop.f32.mrb[0].mxu0
      %v2102 = vadd.f32 0.0, %v2101
      %v2103 = vpop.f32.mrb[0].mxu0
      %2104 = vmatprep.mubr.bf16.mxu0 0
      %2105 = vmatmul.mubr.bf16.gmra.mrb[0].mxu0 %v870
      %v2106 = vpop.f32.mrb[0].mxu0
      %v2107 = vadd.f32 0.0, %v2106
      %v2108 = vpop.f32.mrb[0].mxu0
      %v2109 = vpop.f32.mrb[0].mxu0
      %v2110 = vadd.f32 0.0, %v2109
      %v2111 = vpop.f32.mrb[0].mxu0
      %2112 = vmatprep.mubr.bf16.mxu0 0
      %2113 = vmatmul.mubr.bf16.gmra.mrb[0].mxu0 %v873
      %v2114 = vpop.f32.mrb[0].mxu0
      %v2115 = vadd.f32 0.0, %v2114
      %v2116 = vpop.f32.mrb[0].mxu0
      %v2117 = vpop.f32.mrb[0].mxu0
      %v2118 = vadd.f32 0.0, %v2117
      %v2119 = vpop.f32.mrb[0].mxu0
      %2120 = vmatprep.mubr.bf16.mxu0 0
      %2121 = vmatmul.mubr.bf16.gmra.mrb[0].mxu0 %v876
      %v2122 = vpop.f32.mrb[0].mxu0
      %v2123 = vadd.f32 0.0, %v2122
      %v2124 = vpop.f32.mrb[0].mxu0
      %v2125 = vpop.f32.mrb[0].mxu0
      %v2126 = vadd.f32 0.0, %v2125
      %v2127 = vpop.f32.mrb[0].mxu0
      %2128 = vmatprep.mubr.bf16.mxu0 0
      %2129 = vmatmul.mubr.bf16.gmra.mrb[0].mxu0 %v879
      %v2130 = vpop.f32.mrb[0].mxu0
      %v2131 = vadd.f32 0.0, %v2130
      %v2132 = vpop.f32.mrb[0].mxu0
      %v2133 = vpop.f32.mrb[0].mxu0
      %v2134 = vadd.f32 0.0, %v2133
      %v2135 = vpop.f32.mrb[0].mxu0
      %2136 = vmatprep.mubr.bf16.mxu0 0
      %2137 = vmatmul.mubr.bf16.gmra.mrb[0].mxu0 %v882
      %v2138 = vpop.f32.mrb[0].mxu0
      %v2139 = vadd.f32 0.0, %v2138
      %v2140 = vpop.f32.mrb[0].mxu0
      %v2141 = vpop.f32.mrb[0].mxu0
      %v2142 = vadd.f32 0.0, %v2141
      %v2143 = vpop.f32.mrb[0].mxu0
      %2144 = vmatprep.mubr.bf16.mxu0 0
      %2145 = vmatmul.mubr.bf16.gmra.mrb[0].mxu0 %v885
      %v2146 = vpop.f32.mrb[0].mxu0
      %v2147 = vadd.f32 0.0, %v2146
      %v2148 = vpop.f32.mrb[0].mxu0
      %v2149 = vpop.f32.mrb[0].mxu0
      %v2150 = vadd.f32 0.0, %v2149
      %v2151 = vpop.f32.mrb[0].mxu0
      %2152 = vmatprep.mubr.bf16.mxu0 0
      %2153 = vmatmul.mubr.bf16.gmra.mrb[0].mxu0 %v888
      %v2154 = vpop.f32.mrb[0].mxu0
      %v2155 = vadd.f32 0.0, %v2154
      %v2156 = vpop.f32.mrb[0].mxu0
      %v2157 = vpop.f32.mrb[0].mxu0
      %v2158 = vadd.f32 0.0, %v2157
      %v2159 = vpop.f32.mrb[0].mxu0
      %2160 = vmatprep.mubr.bf16.mxu0 0
      %2161 = vmatmul.mubr.bf16.gmra.mrb[0].mxu0 %v891
      %v2162 = vpop.f32.mrb[0].mxu0
      %v2163 = vadd.f32 0.0, %v2162
      %v2164 = vpop.f32.mrb[0].mxu0
      %v2165 = vpop.f32.mrb[0].mxu0
      %v2166 = vadd.f32 0.0, %v2165
      %v2167 = vpop.f32.mrb[0].mxu0
      %2168 = vmatprep.mubr.bf16.mxu0 0
      %2169 = vmatmul.mubr.bf16.gmra.mrb[0].mxu0 %v2011
      %v2170 = vpop.f32.mrb[0].mxu0
      %v2171 = vadd.f32 0.0, %v2170
      %v2172 = vpop.f32.mrb[0].mxu0
      %v2173 = vpop.f32.mrb[0].mxu0
      %v2174 = vadd.f32 0.0, %v2173
      %v2175 = vpop.f32.mrb[0].mxu0
      %2176 = vdwg.mxu0
      %v2177 = vadd.f32 %v1949, %v2051
      %v2178 = vadd.f32 %v1950, %v2054
      %v2179 = vadd.f32 %v1951, %v2059
      %v2180 = vadd.f32 %v1952, %v2062
      %v2181 = vadd.f32 %v1953, %v2067
      %v2182 = vadd.f32 %v1954, %v2070
      %v2183 = vadd.f32 %v1955, %v2075
      %v2184 = vadd.f32 %v1956, %v2078
      %v2185 = vadd.f32 %v1957, %v2083
      %v2186 = vadd.f32 %v1958, %v2086
      %v2187 = vadd.f32 %v1959, %v2091
      %v2188 = vadd.f32 %v1960, %v2094
      %v2189 = vadd.f32 %v1961, %v2099
      %v2190 = vadd.f32 %v1962, %v2102
      %v2191 = vadd.f32 %v1963, %v2107
      %v2192 = vadd.f32 %v1964, %v2110
      %v2193 = vadd.f32 %v1965, %v2115
      %v2194 = vadd.f32 %v1966, %v2118
      %v2195 = vadd.f32 %v1967, %v2123
      %v2196 = vadd.f32 %v1968, %v2126
      %v2197 = vadd.f32 %v1969, %v2131
      %v2198 = vadd.f32 %v1970, %v2134
      %v2199 = vadd.f32 %v1971, %v2139
      %v2200 = vadd.f32 %v1972, %v2142
      %v2201 = vadd.f32 %v1973, %v2147
      %v2202 = vadd.f32 %v1974, %v2150
      %v2203 = vadd.f32 %v1975, %v2155
      %v2204 = vadd.f32 %v1976, %v2158
      %v2205 = vadd.f32 %v1977, %v2163
      %v2206 = vadd.f32 %v1978, %v2166
      %v2207 = vadd.f32 %v1979, %v2171
      %v2208 = vadd.f32 %v1980, %v2174
      %v2210 = vrot.slane %v400, 5
      %v2211 = vrot.slane %v2210, 4
      %v2212 = vrot.slane %v401, 5
      %v2213 = vsel %vm1368, %v2211, %v2212
      %v2214 = vrot.slane %v2212, 4
      %v2215 = vrot.slane %v402, 5
      %v2216 = vsel %vm1368, %v2214, %v2215
      %s2217 = scalar_lea.vmem %s1, 10
      %v2218 = vld [vmem:[%s2217] sm:$0x3]
      %v2219 = vunpack.c.l.b16 %v2213
      %v2220 = vunpack.c.l.b16 %v2216
      %v2221 = vpack.c.b16 %v2220, %v2219
      %v2223 = vsel %vm844, %v2221, 0
      %v2226 = vsel %vm893, %v2218, 0
      %2228 = vmatprep.subr.bf16.mxu0 0
      %2229 = vmatpush1.bf16.msra.mxu0 %v2226
      %2230 = vmatprep.subr.bf16.mxu0 0
      %2231 = vmatpush1.bf16.msra.mxu0 0
      %2232 = vmatprep.subr.bf16.mxu0 0
      %2233 = vmatpush1.bf16.msra.mxu0 0
      %2234 = vmatprep.subr.bf16.mxu0 0
      %2235 = vmatpush1.bf16.msra.mxu0 0
      %2236 = vmatprep.subr.bf16.mxu0 0
      %2237 = vmatpush1.bf16.msra.mxu0 0
      %2238 = vmatprep.subr.bf16.mxu0 0
      %2239 = vmatpush1.bf16.msra.mxu0 0
      %2240 = vmatprep.subr.bf16.mxu0 0
      %2241 = vmatpush1.bf16.msra.mxu0 0
      %2242 = vmatprep.subr.bf16.mxu0 0
      %2243 = vmatpush1.bf16.msra.mxu0 0
      %2244 = vmatprep.subr.bf16.mxu0 0
      %2245 = vmatpush1.bf16.msra.mxu0 0
      %2246 = vmatprep.subr.bf16.mxu0 0
      %2247 = vmatpush1.bf16.msra.mxu0 0
      %2248 = vmatprep.subr.bf16.mxu0 0
      %2249 = vmatpush1.bf16.msra.mxu0 0
      %2250 = vmatprep.subr.bf16.mxu0 0
      %2251 = vmatpush1.bf16.msra.mxu0 0
      %2252 = vmatprep.subr.bf16.mxu0 0
      %2253 = vmatpush1.bf16.msra.mxu0 0
      %2254 = vmatprep.subr.bf16.mxu0 0
      %2255 = vmatpush1.bf16.msra.mxu0 0
      %2256 = vmatprep.subr.bf16.mxu0 0
      %2257 = vmatpush1.bf16.msra.mxu0 0
      %2258 = vmatprep.subr.bf16.mxu0 0
      %2259 = vmatpush1.bf16.msra.mxu0 0
      %2260 = vmatprep.mubr.bf16.mxu0 0
      %2261 = vmatmul.mubr.bf16.gmra.mrb[0].mxu0 %v1535
      %v2262 = vpop.f32.mrb[0].mxu0
      %v2263 = vadd.f32 0.0, %v2262
      %v2264 = vpop.f32.mrb[0].mxu0
      %v2265 = vpop.f32.mrb[0].mxu0
      %v2266 = vadd.f32 0.0, %v2265
      %v2267 = vpop.f32.mrb[0].mxu0
      %2268 = vmatprep.mubr.bf16.mxu0 0
      %2269 = vmatmul.mubr.bf16.gmra.mrb[0].mxu0 %v1538
      %v2270 = vpop.f32.mrb[0].mxu0
      %v2271 = vadd.f32 0.0, %v2270
      %v2272 = vpop.f32.mrb[0].mxu0
      %v2273 = vpop.f32.mrb[0].mxu0
      %v2274 = vadd.f32 0.0, %v2273
      %v2275 = vpop.f32.mrb[0].mxu0
      %2276 = vmatprep.mubr.bf16.mxu0 0
      %2277 = vmatmul.mubr.bf16.gmra.mrb[0].mxu0 %v1541
      %v2278 = vpop.f32.mrb[0].mxu0
      %v2279 = vadd.f32 0.0, %v2278
      %v2280 = vpop.f32.mrb[0].mxu0
      %v2281 = vpop.f32.mrb[0].mxu0
      %v2282 = vadd.f32 0.0, %v2281
      %v2283 = vpop.f32.mrb[0].mxu0
      %2284 = vmatprep.mubr.bf16.mxu0 0
      %2285 = vmatmul.mubr.bf16.gmra.mrb[0].mxu0 %v1544
      %v2286 = vpop.f32.mrb[0].mxu0
      %v2287 = vadd.f32 0.0, %v2286
      %v2288 = vpop.f32.mrb[0].mxu0
      %v2289 = vpop.f32.mrb[0].mxu0
      %v2290 = vadd.f32 0.0, %v2289
      %v2291 = vpop.f32.mrb[0].mxu0
      %2292 = vmatprep.mubr.bf16.mxu0 0
      %2293 = vmatmul.mubr.bf16.gmra.mrb[0].mxu0 %v1547
      %v2294 = vpop.f32.mrb[0].mxu0
      %v2295 = vadd.f32 0.0, %v2294
      %v2296 = vpop.f32.mrb[0].mxu0
      %v2297 = vpop.f32.mrb[0].mxu0
      %v2298 = vadd.f32 0.0, %v2297
      %v2299 = vpop.f32.mrb[0].mxu0
      %2300 = vmatprep.mubr.bf16.mxu0 0
      %2301 = vmatmul.mubr.bf16.gmra.mrb[0].mxu0 %v1550
      %v2302 = vpop.f32.mrb[0].mxu0
      %v2303 = vadd.f32 0.0, %v2302
      %v2304 = vpop.f32.mrb[0].mxu0
      %v2305 = vpop.f32.mrb[0].mxu0
      %v2306 = vadd.f32 0.0, %v2305
      %v2307 = vpop.f32.mrb[0].mxu0
      %2308 = vmatprep.mubr.bf16.mxu0 0
      %2309 = vmatmul.mubr.bf16.gmra.mrb[0].mxu0 %v1553
      %v2310 = vpop.f32.mrb[0].mxu0
      %v2311 = vadd.f32 0.0, %v2310
      %v2312 = vpop.f32.mrb[0].mxu0
      %v2313 = vpop.f32.mrb[0].mxu0
      %v2314 = vadd.f32 0.0, %v2313
      %v2315 = vpop.f32.mrb[0].mxu0
      %2316 = vmatprep.mubr.bf16.mxu0 0
      %2317 = vmatmul.mubr.bf16.gmra.mrb[0].mxu0 %v1556
      %v2318 = vpop.f32.mrb[0].mxu0
      %v2319 = vadd.f32 0.0, %v2318
      %v2320 = vpop.f32.mrb[0].mxu0
      %v2321 = vpop.f32.mrb[0].mxu0
      %v2322 = vadd.f32 0.0, %v2321
      %v2323 = vpop.f32.mrb[0].mxu0
      %2324 = vmatprep.mubr.bf16.mxu0 0
      %2325 = vmatmul.mubr.bf16.gmra.mrb[0].mxu0 %v1559
      %v2326 = vpop.f32.mrb[0].mxu0
      %v2327 = vadd.f32 0.0, %v2326
      %v2328 = vpop.f32.mrb[0].mxu0
      %v2329 = vpop.f32.mrb[0].mxu0
      %v2330 = vadd.f32 0.0, %v2329
      %v2331 = vpop.f32.mrb[0].mxu0
      %2332 = vmatprep.mubr.bf16.mxu0 0
      %2333 = vmatmul.mubr.bf16.gmra.mrb[0].mxu0 %v1562
      %v2334 = vpop.f32.mrb[0].mxu0
      %v2335 = vadd.f32 0.0, %v2334
      %v2336 = vpop.f32.mrb[0].mxu0
      %v2337 = vpop.f32.mrb[0].mxu0
      %v2338 = vadd.f32 0.0, %v2337
      %v2339 = vpop.f32.mrb[0].mxu0
      %2340 = vmatprep.mubr.bf16.mxu0 0
      %2341 = vmatmul.mubr.bf16.gmra.mrb[0].mxu0 %v1565
      %v2342 = vpop.f32.mrb[0].mxu0
      %v2343 = vadd.f32 0.0, %v2342
      %v2344 = vpop.f32.mrb[0].mxu0
      %v2345 = vpop.f32.mrb[0].mxu0
      %v2346 = vadd.f32 0.0, %v2345
      %v2347 = vpop.f32.mrb[0].mxu0
      %2348 = vmatprep.mubr.bf16.mxu0 0
      %2349 = vmatmul.mubr.bf16.gmra.mrb[0].mxu0 %v1568
      %v2350 = vpop.f32.mrb[0].mxu0
      %v2351 = vadd.f32 0.0, %v2350
      %v2352 = vpop.f32.mrb[0].mxu0
      %v2353 = vpop.f32.mrb[0].mxu0
      %v2354 = vadd.f32 0.0, %v2353
      %v2355 = vpop.f32.mrb[0].mxu0
      %2356 = vmatprep.mubr.bf16.mxu0 0
      %2357 = vmatmul.mubr.bf16.gmra.mrb[0].mxu0 %v1571
      %v2358 = vpop.f32.mrb[0].mxu0
      %v2359 = vadd.f32 0.0, %v2358
      %v2360 = vpop.f32.mrb[0].mxu0
      %v2361 = vpop.f32.mrb[0].mxu0
      %v2362 = vadd.f32 0.0, %v2361
      %v2363 = vpop.f32.mrb[0].mxu0
      %2364 = vmatprep.mubr.bf16.mxu0 0
      %2365 = vmatmul.mubr.bf16.gmra.mrb[0].mxu0 %v1574
      %v2366 = vpop.f32.mrb[0].mxu0
      %v2367 = vadd.f32 0.0, %v2366
      %v2368 = vpop.f32.mrb[0].mxu0
      %v2369 = vpop.f32.mrb[0].mxu0
      %v2370 = vadd.f32 0.0, %v2369
      %v2371 = vpop.f32.mrb[0].mxu0
      %2372 = vmatprep.mubr.bf16.mxu0 0
      %2373 = vmatmul.mubr.bf16.gmra.mrb[0].mxu0 %v1577
      %v2374 = vpop.f32.mrb[0].mxu0
      %v2375 = vadd.f32 0.0, %v2374
      %v2376 = vpop.f32.mrb[0].mxu0
      %v2377 = vpop.f32.mrb[0].mxu0
      %v2378 = vadd.f32 0.0, %v2377
      %v2379 = vpop.f32.mrb[0].mxu0
      %2380 = vmatprep.mubr.bf16.mxu0 0
      %2381 = vmatmul.mubr.bf16.gmra.mrb[0].mxu0 %v2223
      %v2382 = vpop.f32.mrb[0].mxu0
      %v2383 = vadd.f32 0.0, %v2382
      %v2384 = vpop.f32.mrb[0].mxu0
      %v2385 = vpop.f32.mrb[0].mxu0
      %v2386 = vadd.f32 0.0, %v2385
      %v2387 = vpop.f32.mrb[0].mxu0
      %2388 = vdwg.mxu0
      %v2389 = vadd.f32 %v2177, %v2263
      %v2390 = vadd.f32 %v2178, %v2266
      %v2391 = vadd.f32 %v2179, %v2271
      %v2392 = vadd.f32 %v2180, %v2274
      %v2393 = vadd.f32 %v2181, %v2279
      %v2394 = vadd.f32 %v2182, %v2282
      %v2395 = vadd.f32 %v2183, %v2287
      %v2396 = vadd.f32 %v2184, %v2290
      %v2397 = vadd.f32 %v2185, %v2295
      %v2398 = vadd.f32 %v2186, %v2298
      %v2399 = vadd.f32 %v2187, %v2303
      %v2400 = vadd.f32 %v2188, %v2306
      %v2401 = vadd.f32 %v2189, %v2311
      %v2402 = vadd.f32 %v2190, %v2314
      %v2403 = vadd.f32 %v2191, %v2319
      %v2404 = vadd.f32 %v2192, %v2322
      %v2405 = vadd.f32 %v2193, %v2327
      %v2406 = vadd.f32 %v2194, %v2330
      %v2407 = vadd.f32 %v2195, %v2335
      %v2408 = vadd.f32 %v2196, %v2338
      %v2409 = vadd.f32 %v2197, %v2343
      %v2410 = vadd.f32 %v2198, %v2346
      %v2411 = vadd.f32 %v2199, %v2351
      %v2412 = vadd.f32 %v2200, %v2354
      %v2413 = vadd.f32 %v2201, %v2359
      %v2414 = vadd.f32 %v2202, %v2362
      %v2415 = vadd.f32 %v2203, %v2367
      %v2416 = vadd.f32 %v2204, %v2370
      %v2417 = vadd.f32 %v2205, %v2375
      %v2418 = vadd.f32 %v2206, %v2378
      %v2419 = vadd.f32 %v2207, %v2383
      %v2420 = vadd.f32 %v2208, %v2386
      %s2421 = scalar_lea.vmem %s1, 12
      %v2422 = vld [vmem:[%s2421] sm:$0x3]
      %v2425 = vunpack.c.l.b16 %v403
      %v2426 = vunpack.c.l.b16 %v404
      %v2427 = vpack.c.b16 %v2426, %v2425
      %v2429 = vsel %vm844, %v2427, 0
      %v2432 = vsel %vm893, %v2422, 0
      %2434 = vmatprep.subr.bf16.mxu0 0
      %2435 = vmatpush1.bf16.msra.mxu0 %v2432
      %2436 = vmatprep.subr.bf16.mxu0 0
      %2437 = vmatpush1.bf16.msra.mxu0 0
      %2438 = vmatprep.subr.bf16.mxu0 0
      %2439 = vmatpush1.bf16.msra.mxu0 0
      %2440 = vmatprep.subr.bf16.mxu0 0
      %2441 = vmatpush1.bf16.msra.mxu0 0
      %2442 = vmatprep.subr.bf16.mxu0 0
      %2443 = vmatpush1.bf16.msra.mxu0 0
      %2444 = vmatprep.subr.bf16.mxu0 0
      %2445 = vmatpush1.bf16.msra.mxu0 0
      %2446 = vmatprep.subr.bf16.mxu0 0
      %2447 = vmatpush1.bf16.msra.mxu0 0
      %2448 = vmatprep.subr.bf16.mxu0 0
      %2449 = vmatpush1.bf16.msra.mxu0 0
      %2450 = vmatprep.subr.bf16.mxu0 0
      %2451 = vmatpush1.bf16.msra.mxu0 0
      %2452 = vmatprep.subr.bf16.mxu0 0
      %2453 = vmatpush1.bf16.msra.mxu0 0
      %2454 = vmatprep.subr.bf16.mxu0 0
      %2455 = vmatpush1.bf16.msra.mxu0 0
      %2456 = vmatprep.subr.bf16.mxu0 0
      %2457 = vmatpush1.bf16.msra.mxu0 0
      %2458 = vmatprep.subr.bf16.mxu0 0
      %2459 = vmatpush1.bf16.msra.mxu0 0
      %2460 = vmatprep.subr.bf16.mxu0 0
      %2461 = vmatpush1.bf16.msra.mxu0 0
      %2462 = vmatprep.subr.bf16.mxu0 0
      %2463 = vmatpush1.bf16.msra.mxu0 0
      %2464 = vmatprep.subr.bf16.mxu0 0
      %2465 = vmatpush1.bf16.msra.mxu0 0
      %2466 = vmatprep.mubr.bf16.mxu0 0
      %2467 = vmatmul.mubr.bf16.gmra.mrb[0].mxu0 %v1145
      %v2468 = vpop.f32.mrb[0].mxu0
      %v2469 = vadd.f32 0.0, %v2468
      %v2470 = vpop.f32.mrb[0].mxu0
      %v2471 = vpop.f32.mrb[0].mxu0
      %v2472 = vadd.f32 0.0, %v2471
      %v2473 = vpop.f32.mrb[0].mxu0
      %2474 = vmatprep.mubr.bf16.mxu0 0
      %2475 = vmatmul.mubr.bf16.gmra.mrb[0].mxu0 %v1148
      %v2476 = vpop.f32.mrb[0].mxu0
      %v2477 = vadd.f32 0.0, %v2476
      %v2478 = vpop.f32.mrb[0].mxu0
      %v2479 = vpop.f32.mrb[0].mxu0
      %v2480 = vadd.f32 0.0, %v2479
      %v2481 = vpop.f32.mrb[0].mxu0
      %2482 = vmatprep.mubr.bf16.mxu0 0
      %2483 = vmatmul.mubr.bf16.gmra.mrb[0].mxu0 %v1151
      %v2484 = vpop.f32.mrb[0].mxu0
      %v2485 = vadd.f32 0.0, %v2484
      %v2486 = vpop.f32.mrb[0].mxu0
      %v2487 = vpop.f32.mrb[0].mxu0
      %v2488 = vadd.f32 0.0, %v2487
      %v2489 = vpop.f32.mrb[0].mxu0
      %2490 = vmatprep.mubr.bf16.mxu0 0
      %2491 = vmatmul.mubr.bf16.gmra.mrb[0].mxu0 %v1154
      %v2492 = vpop.f32.mrb[0].mxu0
      %v2493 = vadd.f32 0.0, %v2492
      %v2494 = vpop.f32.mrb[0].mxu0
      %v2495 = vpop.f32.mrb[0].mxu0
      %v2496 = vadd.f32 0.0, %v2495
      %v2497 = vpop.f32.mrb[0].mxu0
      %2498 = vmatprep.mubr.bf16.mxu0 0
      %2499 = vmatmul.mubr.bf16.gmra.mrb[0].mxu0 %v1157
      %v2500 = vpop.f32.mrb[0].mxu0
      %v2501 = vadd.f32 0.0, %v2500
      %v2502 = vpop.f32.mrb[0].mxu0
      %v2503 = vpop.f32.mrb[0].mxu0
      %v2504 = vadd.f32 0.0, %v2503
      %v2505 = vpop.f32.mrb[0].mxu0
      %2506 = vmatprep.mubr.bf16.mxu0 0
      %2507 = vmatmul.mubr.bf16.gmra.mrb[0].mxu0 %v1160
      %v2508 = vpop.f32.mrb[0].mxu0
      %v2509 = vadd.f32 0.0, %v2508
      %v2510 = vpop.f32.mrb[0].mxu0
      %v2511 = vpop.f32.mrb[0].mxu0
      %v2512 = vadd.f32 0.0, %v2511
      %v2513 = vpop.f32.mrb[0].mxu0
      %2514 = vmatprep.mubr.bf16.mxu0 0
      %2515 = vmatmul.mubr.bf16.gmra.mrb[0].mxu0 %v1163
      %v2516 = vpop.f32.mrb[0].mxu0
      %v2517 = vadd.f32 0.0, %v2516
      %v2518 = vpop.f32.mrb[0].mxu0
      %v2519 = vpop.f32.mrb[0].mxu0
      %v2520 = vadd.f32 0.0, %v2519
      %v2521 = vpop.f32.mrb[0].mxu0
      %2522 = vmatprep.mubr.bf16.mxu0 0
      %2523 = vmatmul.mubr.bf16.gmra.mrb[0].mxu0 %v1166
      %v2524 = vpop.f32.mrb[0].mxu0
      %v2525 = vadd.f32 0.0, %v2524
      %v2526 = vpop.f32.mrb[0].mxu0
      %v2527 = vpop.f32.mrb[0].mxu0
      %v2528 = vadd.f32 0.0, %v2527
      %v2529 = vpop.f32.mrb[0].mxu0
      %2530 = vmatprep.mubr.bf16.mxu0 0
      %2531 = vmatmul.mubr.bf16.gmra.mrb[0].mxu0 %v1169
      %v2532 = vpop.f32.mrb[0].mxu0
      %v2533 = vadd.f32 0.0, %v2532
      %v2534 = vpop.f32.mrb[0].mxu0
      %v2535 = vpop.f32.mrb[0].mxu0
      %v2536 = vadd.f32 0.0, %v2535
      %v2537 = vpop.f32.mrb[0].mxu0
      %2538 = vmatprep.mubr.bf16.mxu0 0
      %2539 = vmatmul.mubr.bf16.gmra.mrb[0].mxu0 %v1172
      %v2540 = vpop.f32.mrb[0].mxu0
      %v2541 = vadd.f32 0.0, %v2540
      %v2542 = vpop.f32.mrb[0].mxu0
      %v2543 = vpop.f32.mrb[0].mxu0
      %v2544 = vadd.f32 0.0, %v2543
      %v2545 = vpop.f32.mrb[0].mxu0
      %2546 = vmatprep.mubr.bf16.mxu0 0
      %2547 = vmatmul.mubr.bf16.gmra.mrb[0].mxu0 %v1175
      %v2548 = vpop.f32.mrb[0].mxu0
      %v2549 = vadd.f32 0.0, %v2548
      %v2550 = vpop.f32.mrb[0].mxu0
      %v2551 = vpop.f32.mrb[0].mxu0
      %v2552 = vadd.f32 0.0, %v2551
      %v2553 = vpop.f32.mrb[0].mxu0
      %2554 = vmatprep.mubr.bf16.mxu0 0
      %2555 = vmatmul.mubr.bf16.gmra.mrb[0].mxu0 %v1178
      %v2556 = vpop.f32.mrb[0].mxu0
      %v2557 = vadd.f32 0.0, %v2556
      %v2558 = vpop.f32.mrb[0].mxu0
      %v2559 = vpop.f32.mrb[0].mxu0
      %v2560 = vadd.f32 0.0, %v2559
      %v2561 = vpop.f32.mrb[0].mxu0
      %2562 = vmatprep.mubr.bf16.mxu0 0
      %2563 = vmatmul.mubr.bf16.gmra.mrb[0].mxu0 %v1181
      %v2564 = vpop.f32.mrb[0].mxu0
      %v2565 = vadd.f32 0.0, %v2564
      %v2566 = vpop.f32.mrb[0].mxu0
      %v2567 = vpop.f32.mrb[0].mxu0
      %v2568 = vadd.f32 0.0, %v2567
      %v2569 = vpop.f32.mrb[0].mxu0
      %2570 = vmatprep.mubr.bf16.mxu0 0
      %2571 = vmatmul.mubr.bf16.gmra.mrb[0].mxu0 %v1184
      %v2572 = vpop.f32.mrb[0].mxu0
      %v2573 = vadd.f32 0.0, %v2572
      %v2574 = vpop.f32.mrb[0].mxu0
      %v2575 = vpop.f32.mrb[0].mxu0
      %v2576 = vadd.f32 0.0, %v2575
      %v2577 = vpop.f32.mrb[0].mxu0
      %2578 = vmatprep.mubr.bf16.mxu0 0
      %2579 = vmatmul.mubr.bf16.gmra.mrb[0].mxu0 %v1783
      %v2580 = vpop.f32.mrb[0].mxu0
      %v2581 = vadd.f32 0.0, %v2580
      %v2582 = vpop.f32.mrb[0].mxu0
      %v2583 = vpop.f32.mrb[0].mxu0
      %v2584 = vadd.f32 0.0, %v2583
      %v2585 = vpop.f32.mrb[0].mxu0
      %2586 = vmatprep.mubr.bf16.mxu0 0
      %2587 = vmatmul.mubr.bf16.gmra.mrb[0].mxu0 %v2429
      %v2588 = vpop.f32.mrb[0].mxu0
      %v2589 = vadd.f32 0.0, %v2588
      %v2590 = vpop.f32.mrb[0].mxu0
      %v2591 = vpop.f32.mrb[0].mxu0
      %v2592 = vadd.f32 0.0, %v2591
      %v2593 = vpop.f32.mrb[0].mxu0
      %2594 = vdwg.mxu0
      %v2595 = vadd.f32 %v2389, %v2469
      %v2596 = vadd.f32 %v2390, %v2472
      %v2597 = vadd.f32 %v2391, %v2477
      %v2598 = vadd.f32 %v2392, %v2480
      %v2599 = vadd.f32 %v2393, %v2485
      %v2600 = vadd.f32 %v2394, %v2488
      %v2601 = vadd.f32 %v2395, %v2493
      %v2602 = vadd.f32 %v2396, %v2496
      %v2603 = vadd.f32 %v2397, %v2501
      %v2604 = vadd.f32 %v2398, %v2504
      %v2605 = vadd.f32 %v2399, %v2509
      %v2606 = vadd.f32 %v2400, %v2512
      %v2607 = vadd.f32 %v2401, %v2517
      %v2608 = vadd.f32 %v2402, %v2520
      %v2609 = vadd.f32 %v2403, %v2525
      %v2610 = vadd.f32 %v2404, %v2528
      %v2611 = vadd.f32 %v2405, %v2533
      %v2612 = vadd.f32 %v2406, %v2536
      %v2613 = vadd.f32 %v2407, %v2541
      %v2614 = vadd.f32 %v2408, %v2544
      %v2615 = vadd.f32 %v2409, %v2549
      %v2616 = vadd.f32 %v2410, %v2552
      %v2617 = vadd.f32 %v2411, %v2557
      %v2618 = vadd.f32 %v2412, %v2560
      %v2619 = vadd.f32 %v2413, %v2565
      %v2620 = vadd.f32 %v2414, %v2568
      %v2621 = vadd.f32 %v2415, %v2573
      %v2622 = vadd.f32 %v2416, %v2576
      %v2623 = vadd.f32 %v2417, %v2581
      %v2624 = vadd.f32 %v2418, %v2584
      %v2625 = vadd.f32 %v2419, %v2589
      %v2626 = vadd.f32 %v2420, %v2592
      %v2628 = vshrl.u32 %v403, 16
      %v2630 = vrot.slane %v2628, 4
      %v2631 = vshll.u32 %v403, 16
      %v2633 = vrot.slane %v2631, 5
      %v2634 = vor.u32 %v2630, %v2633
      %v2635 = vrot.slane %v2634, 4
      %v2637 = vshll.u32 %v404, 16
      %v2639 = vrot.slane %v2637, 5
      %v2640 = vsel %vm409, %v2635, %v2639
      %v2641 = vshrl.u32 %v404, 16
      %v2643 = vrot.slane %v2641, 4
      %v2644 = vor.u32 %v2643, %v2639
      %v2645 = vrot.slane %v2644, 4
      %v2647 = vshll.u32 %v405, 16
      %v2649 = vrot.slane %v2647, 5
      %v2650 = vsel %vm409, %v2645, %v2649
      %s2651 = scalar_lea.vmem %s1, 14
      %v2652 = vld [vmem:[%s2651] sm:$0x3]
      %v2653 = vunpack.c.l.b16 %v2640
      %v2654 = vunpack.c.l.b16 %v2650
      %v2655 = vpack.c.b16 %v2654, %v2653
      %v2657 = vsel %vm844, %v2655, 0
      %v2660 = vsel %vm893, %v2652, 0
      %2662 = vmatprep.subr.bf16.mxu0 0
      %2663 = vmatpush1.bf16.msra.mxu0 %v2660
      %2664 = vmatprep.subr.bf16.mxu0 0
      %2665 = vmatpush1.bf16.msra.mxu0 0
      %2666 = vmatprep.subr.bf16.mxu0 0
      %2667 = vmatpush1.bf16.msra.mxu0 0
      %2668 = vmatprep.subr.bf16.mxu0 0
      %2669 = vmatpush1.bf16.msra.mxu0 0
      %2670 = vmatprep.subr.bf16.mxu0 0
      %2671 = vmatpush1.bf16.msra.mxu0 0
      %2672 = vmatprep.subr.bf16.mxu0 0
      %2673 = vmatpush1.bf16.msra.mxu0 0
      %2674 = vmatprep.subr.bf16.mxu0 0
      %2675 = vmatpush1.bf16.msra.mxu0 0
      %2676 = vmatprep.subr.bf16.mxu0 0
      %2677 = vmatpush1.bf16.msra.mxu0 0
      %2678 = vmatprep.subr.bf16.mxu0 0
      %2679 = vmatpush1.bf16.msra.mxu0 0
      %2680 = vmatprep.subr.bf16.mxu0 0
      %2681 = vmatpush1.bf16.msra.mxu0 0
      %2682 = vmatprep.subr.bf16.mxu0 0
      %2683 = vmatpush1.bf16.msra.mxu0 0
      %2684 = vmatprep.subr.bf16.mxu0 0
      %2685 = vmatpush1.bf16.msra.mxu0 0
      %2686 = vmatprep.subr.bf16.mxu0 0
      %2687 = vmatpush1.bf16.msra.mxu0 0
      %2688 = vmatprep.subr.bf16.mxu0 0
      %2689 = vmatpush1.bf16.msra.mxu0 0
      %2690 = vmatprep.subr.bf16.mxu0 0
      %2691 = vmatpush1.bf16.msra.mxu0 0
      %2692 = vmatprep.subr.bf16.mxu0 0
      %2693 = vmatpush1.bf16.msra.mxu0 0
      %2694 = vmatprep.mubr.bf16.mxu0 0
      %2695 = vmatmul.mubr.bf16.gmra.mrb[0].mxu0 %v852
      %v2696 = vpop.f32.mrb[0].mxu0
      %v2697 = vadd.f32 0.0, %v2696
      %v2698 = vpop.f32.mrb[0].mxu0
      %v2699 = vpop.f32.mrb[0].mxu0
      %v2700 = vadd.f32 0.0, %v2699
      %v2701 = vpop.f32.mrb[0].mxu0
      %2702 = vmatprep.mubr.bf16.mxu0 0
      %2703 = vmatmul.mubr.bf16.gmra.mrb[0].mxu0 %v855
      %v2704 = vpop.f32.mrb[0].mxu0
      %v2705 = vadd.f32 0.0, %v2704
      %v2706 = vpop.f32.mrb[0].mxu0
      %v2707 = vpop.f32.mrb[0].mxu0
      %v2708 = vadd.f32 0.0, %v2707
      %v2709 = vpop.f32.mrb[0].mxu0
      %2710 = vmatprep.mubr.bf16.mxu0 0
      %2711 = vmatmul.mubr.bf16.gmra.mrb[0].mxu0 %v858
      %v2712 = vpop.f32.mrb[0].mxu0
      %v2713 = vadd.f32 0.0, %v2712
      %v2714 = vpop.f32.mrb[0].mxu0
      %v2715 = vpop.f32.mrb[0].mxu0
      %v2716 = vadd.f32 0.0, %v2715
      %v2717 = vpop.f32.mrb[0].mxu0
      %2718 = vmatprep.mubr.bf16.mxu0 0
      %2719 = vmatmul.mubr.bf16.gmra.mrb[0].mxu0 %v861
      %v2720 = vpop.f32.mrb[0].mxu0
      %v2721 = vadd.f32 0.0, %v2720
      %v2722 = vpop.f32.mrb[0].mxu0
      %v2723 = vpop.f32.mrb[0].mxu0
      %v2724 = vadd.f32 0.0, %v2723
      %v2725 = vpop.f32.mrb[0].mxu0
      %2726 = vmatprep.mubr.bf16.mxu0 0
      %2727 = vmatmul.mubr.bf16.gmra.mrb[0].mxu0 %v864
      %v2728 = vpop.f32.mrb[0].mxu0
      %v2729 = vadd.f32 0.0, %v2728
      %v2730 = vpop.f32.mrb[0].mxu0
      %v2731 = vpop.f32.mrb[0].mxu0
      %v2732 = vadd.f32 0.0, %v2731
      %v2733 = vpop.f32.mrb[0].mxu0
      %2734 = vmatprep.mubr.bf16.mxu0 0
      %2735 = vmatmul.mubr.bf16.gmra.mrb[0].mxu0 %v867
      %v2736 = vpop.f32.mrb[0].mxu0
      %v2737 = vadd.f32 0.0, %v2736
      %v2738 = vpop.f32.mrb[0].mxu0
      %v2739 = vpop.f32.mrb[0].mxu0
      %v2740 = vadd.f32 0.0, %v2739
      %v2741 = vpop.f32.mrb[0].mxu0
      %2742 = vmatprep.mubr.bf16.mxu0 0
      %2743 = vmatmul.mubr.bf16.gmra.mrb[0].mxu0 %v870
      %v2744 = vpop.f32.mrb[0].mxu0
      %v2745 = vadd.f32 0.0, %v2744
      %v2746 = vpop.f32.mrb[0].mxu0
      %v2747 = vpop.f32.mrb[0].mxu0
      %v2748 = vadd.f32 0.0, %v2747
      %v2749 = vpop.f32.mrb[0].mxu0
      %2750 = vmatprep.mubr.bf16.mxu0 0
      %2751 = vmatmul.mubr.bf16.gmra.mrb[0].mxu0 %v873
      %v2752 = vpop.f32.mrb[0].mxu0
      %v2753 = vadd.f32 0.0, %v2752
      %v2754 = vpop.f32.mrb[0].mxu0
      %v2755 = vpop.f32.mrb[0].mxu0
      %v2756 = vadd.f32 0.0, %v2755
      %v2757 = vpop.f32.mrb[0].mxu0
      %2758 = vmatprep.mubr.bf16.mxu0 0
      %2759 = vmatmul.mubr.bf16.gmra.mrb[0].mxu0 %v876
      %v2760 = vpop.f32.mrb[0].mxu0
      %v2761 = vadd.f32 0.0, %v2760
      %v2762 = vpop.f32.mrb[0].mxu0
      %v2763 = vpop.f32.mrb[0].mxu0
      %v2764 = vadd.f32 0.0, %v2763
      %v2765 = vpop.f32.mrb[0].mxu0
      %2766 = vmatprep.mubr.bf16.mxu0 0
      %2767 = vmatmul.mubr.bf16.gmra.mrb[0].mxu0 %v879
      %v2768 = vpop.f32.mrb[0].mxu0
      %v2769 = vadd.f32 0.0, %v2768
      %v2770 = vpop.f32.mrb[0].mxu0
      %v2771 = vpop.f32.mrb[0].mxu0
      %v2772 = vadd.f32 0.0, %v2771
      %v2773 = vpop.f32.mrb[0].mxu0
      %2774 = vmatprep.mubr.bf16.mxu0 0
      %2775 = vmatmul.mubr.bf16.gmra.mrb[0].mxu0 %v882
      %v2776 = vpop.f32.mrb[0].mxu0
      %v2777 = vadd.f32 0.0, %v2776
      %v2778 = vpop.f32.mrb[0].mxu0
      %v2779 = vpop.f32.mrb[0].mxu0
      %v2780 = vadd.f32 0.0, %v2779
      %v2781 = vpop.f32.mrb[0].mxu0
      %2782 = vmatprep.mubr.bf16.mxu0 0
      %2783 = vmatmul.mubr.bf16.gmra.mrb[0].mxu0 %v885
      %v2784 = vpop.f32.mrb[0].mxu0
      %v2785 = vadd.f32 0.0, %v2784
      %v2786 = vpop.f32.mrb[0].mxu0
      %v2787 = vpop.f32.mrb[0].mxu0
      %v2788 = vadd.f32 0.0, %v2787
      %v2789 = vpop.f32.mrb[0].mxu0
      %2790 = vmatprep.mubr.bf16.mxu0 0
      %2791 = vmatmul.mubr.bf16.gmra.mrb[0].mxu0 %v888
      %v2792 = vpop.f32.mrb[0].mxu0
      %v2793 = vadd.f32 0.0, %v2792
      %v2794 = vpop.f32.mrb[0].mxu0
      %v2795 = vpop.f32.mrb[0].mxu0
      %v2796 = vadd.f32 0.0, %v2795
      %v2797 = vpop.f32.mrb[0].mxu0
      %2798 = vmatprep.mubr.bf16.mxu0 0
      %2799 = vmatmul.mubr.bf16.gmra.mrb[0].mxu0 %v891
      %v2800 = vpop.f32.mrb[0].mxu0
      %v2801 = vadd.f32 0.0, %v2800
      %v2802 = vpop.f32.mrb[0].mxu0
      %v2803 = vpop.f32.mrb[0].mxu0
      %v2804 = vadd.f32 0.0, %v2803
      %v2805 = vpop.f32.mrb[0].mxu0
      %2806 = vmatprep.mubr.bf16.mxu0 0
      %2807 = vmatmul.mubr.bf16.gmra.mrb[0].mxu0 %v2011
      %v2808 = vpop.f32.mrb[0].mxu0
      %v2809 = vadd.f32 0.0, %v2808
      %v2810 = vpop.f32.mrb[0].mxu0
      %v2811 = vpop.f32.mrb[0].mxu0
      %v2812 = vadd.f32 0.0, %v2811
      %v2813 = vpop.f32.mrb[0].mxu0
      %2814 = vmatprep.mubr.bf16.mxu0 0
      %2815 = vmatmul.mubr.bf16.gmra.mrb[0].mxu0 %v2657
      %v2816 = vpop.f32.mrb[0].mxu0
      %v2817 = vadd.f32 0.0, %v2816
      %v2818 = vpop.f32.mrb[0].mxu0
      %v2819 = vpop.f32.mrb[0].mxu0
      %v2820 = vadd.f32 0.0, %v2819
      %v2821 = vpop.f32.mrb[0].mxu0
      %2822 = vdwg.mxu0
      %v2823 = vadd.f32 %v2595, %v2697
      %v2824 = vadd.f32 %v2596, %v2700
      %v2825 = vadd.f32 %v2597, %v2705
      %v2826 = vadd.f32 %v2598, %v2708
      %v2827 = vadd.f32 %v2599, %v2713
      %v2828 = vadd.f32 %v2600, %v2716
      %v2829 = vadd.f32 %v2601, %v2721
      %v2830 = vadd.f32 %v2602, %v2724
      %v2831 = vadd.f32 %v2603, %v2729
      %v2832 = vadd.f32 %v2604, %v2732
      %v2833 = vadd.f32 %v2605, %v2737
      %v2834 = vadd.f32 %v2606, %v2740
      %v2835 = vadd.f32 %v2607, %v2745
      %v2836 = vadd.f32 %v2608, %v2748
      %v2837 = vadd.f32 %v2609, %v2753
      %v2838 = vadd.f32 %v2610, %v2756
      %v2839 = vadd.f32 %v2611, %v2761
      %v2840 = vadd.f32 %v2612, %v2764
      %v2841 = vadd.f32 %v2613, %v2769
      %v2842 = vadd.f32 %v2614, %v2772
      %v2843 = vadd.f32 %v2615, %v2777
      %v2844 = vadd.f32 %v2616, %v2780
      %v2845 = vadd.f32 %v2617, %v2785
      %v2846 = vadd.f32 %v2618, %v2788
      %v2847 = vadd.f32 %v2619, %v2793
      %v2848 = vadd.f32 %v2620, %v2796
      %v2849 = vadd.f32 %v2621, %v2801
      %v2850 = vadd.f32 %v2622, %v2804
      %v2851 = vadd.f32 %v2623, %v2809
      %v2852 = vadd.f32 %v2624, %v2812
      %v2853 = vadd.f32 %v2625, %v2817
      %v2854 = vadd.f32 %v2626, %v2820
      %v2856 = vrot.slane %v403, 5
      %v2857 = vrot.slane %v2856, 4
      %v2858 = vrot.slane %v404, 5
      %v2859 = vsel %vm1368, %v2857, %v2858
      %v2860 = vrot.slane %v2858, 4
      %v2861 = vrot.slane %v405, 5
      %v2862 = vsel %vm1368, %v2860, %v2861
      %s2863 = scalar_lea.vmem %s1, 16
      %v2864 = vld [vmem:[%s2863] sm:$0x3]
      %v2865 = vunpack.c.l.b16 %v2859
      %v2866 = vunpack.c.l.b16 %v2862
      %v2867 = vpack.c.b16 %v2866, %v2865
      %v2869 = vsel %vm844, %v2867, 0
      %v2872 = vsel %vm893, %v2864, 0
      %2874 = vmatprep.subr.bf16.mxu0 0
      %2875 = vmatpush1.bf16.msra.mxu0 %v2872
      %2876 = vmatprep.subr.bf16.mxu0 0
      %2877 = vmatpush1.bf16.msra.mxu0 0
      %2878 = vmatprep.subr.bf16.mxu0 0
      %2879 = vmatpush1.bf16.msra.mxu0 0
      %2880 = vmatprep.subr.bf16.mxu0 0
      %2881 = vmatpush1.bf16.msra.mxu0 0
      %2882 = vmatprep.subr.bf16.mxu0 0
      %2883 = vmatpush1.bf16.msra.mxu0 0
      %2884 = vmatprep.subr.bf16.mxu0 0
      %2885 = vmatpush1.bf16.msra.mxu0 0
      %2886 = vmatprep.subr.bf16.mxu0 0
      %2887 = vmatpush1.bf16.msra.mxu0 0
      %2888 = vmatprep.subr.bf16.mxu0 0
      %2889 = vmatpush1.bf16.msra.mxu0 0
      %2890 = vmatprep.subr.bf16.mxu0 0
      %2891 = vmatpush1.bf16.msra.mxu0 0
      %2892 = vmatprep.subr.bf16.mxu0 0
      %2893 = vmatpush1.bf16.msra.mxu0 0
      %2894 = vmatprep.subr.bf16.mxu0 0
      %2895 = vmatpush1.bf16.msra.mxu0 0
      %2896 = vmatprep.subr.bf16.mxu0 0
      %2897 = vmatpush1.bf16.msra.mxu0 0
      %2898 = vmatprep.subr.bf16.mxu0 0
      %2899 = vmatpush1.bf16.msra.mxu0 0
      %2900 = vmatprep.subr.bf16.mxu0 0
      %2901 = vmatpush1.bf16.msra.mxu0 0
      %2902 = vmatprep.subr.bf16.mxu0 0
      %2903 = vmatpush1.bf16.msra.mxu0 0
      %2904 = vmatprep.subr.bf16.mxu0 0
      %2905 = vmatpush1.bf16.msra.mxu0 0
      %2906 = vmatprep.mubr.bf16.mxu0 0
      %2907 = vmatmul.mubr.bf16.gmra.mrb[0].mxu0 %v1538
      %v2908 = vpop.f32.mrb[0].mxu0
      %v2909 = vadd.f32 0.0, %v2908
      %v2910 = vpop.f32.mrb[0].mxu0
      %v2911 = vpop.f32.mrb[0].mxu0
      %v2912 = vadd.f32 0.0, %v2911
      %v2913 = vpop.f32.mrb[0].mxu0
      %2914 = vmatprep.mubr.bf16.mxu0 0
      %2915 = vmatmul.mubr.bf16.gmra.mrb[0].mxu0 %v1541
      %v2916 = vpop.f32.mrb[0].mxu0
      %v2917 = vadd.f32 0.0, %v2916
      %v2918 = vpop.f32.mrb[0].mxu0
      %v2919 = vpop.f32.mrb[0].mxu0
      %v2920 = vadd.f32 0.0, %v2919
      %v2921 = vpop.f32.mrb[0].mxu0
      %2922 = vmatprep.mubr.bf16.mxu0 0
      %2923 = vmatmul.mubr.bf16.gmra.mrb[0].mxu0 %v1544
      %v2924 = vpop.f32.mrb[0].mxu0
      %v2925 = vadd.f32 0.0, %v2924
      %v2926 = vpop.f32.mrb[0].mxu0
      %v2927 = vpop.f32.mrb[0].mxu0
      %v2928 = vadd.f32 0.0, %v2927
      %v2929 = vpop.f32.mrb[0].mxu0
      %2930 = vmatprep.mubr.bf16.mxu0 0
      %2931 = vmatmul.mubr.bf16.gmra.mrb[0].mxu0 %v1547
      %v2932 = vpop.f32.mrb[0].mxu0
      %v2933 = vadd.f32 0.0, %v2932
      %v2934 = vpop.f32.mrb[0].mxu0
      %v2935 = vpop.f32.mrb[0].mxu0
      %v2936 = vadd.f32 0.0, %v2935
      %v2937 = vpop.f32.mrb[0].mxu0
      %2938 = vmatprep.mubr.bf16.mxu0 0
      %2939 = vmatmul.mubr.bf16.gmra.mrb[0].mxu0 %v1550
      %v2940 = vpop.f32.mrb[0].mxu0
      %v2941 = vadd.f32 0.0, %v2940
      %v2942 = vpop.f32.mrb[0].mxu0
      %v2943 = vpop.f32.mrb[0].mxu0
      %v2944 = vadd.f32 0.0, %v2943
      %v2945 = vpop.f32.mrb[0].mxu0
      %2946 = vmatprep.mubr.bf16.mxu0 0
      %2947 = vmatmul.mubr.bf16.gmra.mrb[0].mxu0 %v1553
      %v2948 = vpop.f32.mrb[0].mxu0
      %v2949 = vadd.f32 0.0, %v2948
      %v2950 = vpop.f32.mrb[0].mxu0
      %v2951 = vpop.f32.mrb[0].mxu0
      %v2952 = vadd.f32 0.0, %v2951
      %v2953 = vpop.f32.mrb[0].mxu0
      %2954 = vmatprep.mubr.bf16.mxu0 0
      %2955 = vmatmul.mubr.bf16.gmra.mrb[0].mxu0 %v1556
      %v2956 = vpop.f32.mrb[0].mxu0
      %v2957 = vadd.f32 0.0, %v2956
      %v2958 = vpop.f32.mrb[0].mxu0
      %v2959 = vpop.f32.mrb[0].mxu0
      %v2960 = vadd.f32 0.0, %v2959
      %v2961 = vpop.f32.mrb[0].mxu0
      %2962 = vmatprep.mubr.bf16.mxu0 0
      %2963 = vmatmul.mubr.bf16.gmra.mrb[0].mxu0 %v1559
      %v2964 = vpop.f32.mrb[0].mxu0
      %v2965 = vadd.f32 0.0, %v2964
      %v2966 = vpop.f32.mrb[0].mxu0
      %v2967 = vpop.f32.mrb[0].mxu0
      %v2968 = vadd.f32 0.0, %v2967
      %v2969 = vpop.f32.mrb[0].mxu0
      %2970 = vmatprep.mubr.bf16.mxu0 0
      %2971 = vmatmul.mubr.bf16.gmra.mrb[0].mxu0 %v1562
      %v2972 = vpop.f32.mrb[0].mxu0
      %v2973 = vadd.f32 0.0, %v2972
      %v2974 = vpop.f32.mrb[0].mxu0
      %v2975 = vpop.f32.mrb[0].mxu0
      %v2976 = vadd.f32 0.0, %v2975
      %v2977 = vpop.f32.mrb[0].mxu0
      %2978 = vmatprep.mubr.bf16.mxu0 0
      %2979 = vmatmul.mubr.bf16.gmra.mrb[0].mxu0 %v1565
      %v2980 = vpop.f32.mrb[0].mxu0
      %v2981 = vadd.f32 0.0, %v2980
      %v2982 = vpop.f32.mrb[0].mxu0
      %v2983 = vpop.f32.mrb[0].mxu0
      %v2984 = vadd.f32 0.0, %v2983
      %v2985 = vpop.f32.mrb[0].mxu0
      %2986 = vmatprep.mubr.bf16.mxu0 0
      %2987 = vmatmul.mubr.bf16.gmra.mrb[0].mxu0 %v1568
      %v2988 = vpop.f32.mrb[0].mxu0
      %v2989 = vadd.f32 0.0, %v2988
      %v2990 = vpop.f32.mrb[0].mxu0
      %v2991 = vpop.f32.mrb[0].mxu0
      %v2992 = vadd.f32 0.0, %v2991
      %v2993 = vpop.f32.mrb[0].mxu0
      %2994 = vmatprep.mubr.bf16.mxu0 0
      %2995 = vmatmul.mubr.bf16.gmra.mrb[0].mxu0 %v1571
      %v2996 = vpop.f32.mrb[0].mxu0
      %v2997 = vadd.f32 0.0, %v2996
      %v2998 = vpop.f32.mrb[0].mxu0
      %v2999 = vpop.f32.mrb[0].mxu0
      %v3000 = vadd.f32 0.0, %v2999
      %v3001 = vpop.f32.mrb[0].mxu0
      %3002 = vmatprep.mubr.bf16.mxu0 0
      %3003 = vmatmul.mubr.bf16.gmra.mrb[0].mxu0 %v1574
      %v3004 = vpop.f32.mrb[0].mxu0
      %v3005 = vadd.f32 0.0, %v3004
      %v3006 = vpop.f32.mrb[0].mxu0
      %v3007 = vpop.f32.mrb[0].mxu0
      %v3008 = vadd.f32 0.0, %v3007
      %v3009 = vpop.f32.mrb[0].mxu0
      %3010 = vmatprep.mubr.bf16.mxu0 0
      %3011 = vmatmul.mubr.bf16.gmra.mrb[0].mxu0 %v1577
      %v3012 = vpop.f32.mrb[0].mxu0
      %v3013 = vadd.f32 0.0, %v3012
      %v3014 = vpop.f32.mrb[0].mxu0
      %v3015 = vpop.f32.mrb[0].mxu0
      %v3016 = vadd.f32 0.0, %v3015
      %v3017 = vpop.f32.mrb[0].mxu0
      %3018 = vmatprep.mubr.bf16.mxu0 0
      %3019 = vmatmul.mubr.bf16.gmra.mrb[0].mxu0 %v2223
      %v3020 = vpop.f32.mrb[0].mxu0
      %v3021 = vadd.f32 0.0, %v3020
      %v3022 = vpop.f32.mrb[0].mxu0
      %v3023 = vpop.f32.mrb[0].mxu0
      %v3024 = vadd.f32 0.0, %v3023
      %v3025 = vpop.f32.mrb[0].mxu0
      %3026 = vmatprep.mubr.bf16.mxu0 0
      %3027 = vmatmul.mubr.bf16.gmra.mrb[0].mxu0 %v2869
      %v3028 = vpop.f32.mrb[0].mxu0
      %v3029 = vadd.f32 0.0, %v3028
      %v3030 = vpop.f32.mrb[0].mxu0
      %v3031 = vpop.f32.mrb[0].mxu0
      %v3032 = vadd.f32 0.0, %v3031
      %v3033 = vpop.f32.mrb[0].mxu0
      %3034 = vdwg.mxu0
      %v3035 = vadd.f32 %v2823, %v2909
      %v3036 = vadd.f32 %v2824, %v2912
      %v3037 = vadd.f32 %v2825, %v2917
      %v3038 = vadd.f32 %v2826, %v2920
      %v3039 = vadd.f32 %v2827, %v2925
      %v3040 = vadd.f32 %v2828, %v2928
      %v3041 = vadd.f32 %v2829, %v2933
      %v3042 = vadd.f32 %v2830, %v2936
      %v3043 = vadd.f32 %v2831, %v2941
      %v3044 = vadd.f32 %v2832, %v2944
      %v3045 = vadd.f32 %v2833, %v2949
      %v3046 = vadd.f32 %v2834, %v2952
      %v3047 = vadd.f32 %v2835, %v2957
      %v3048 = vadd.f32 %v2836, %v2960
      %v3049 = vadd.f32 %v2837, %v2965
      %v3050 = vadd.f32 %v2838, %v2968
      %v3051 = vadd.f32 %v2839, %v2973
      %v3052 = vadd.f32 %v2840, %v2976
      %v3053 = vadd.f32 %v2841, %v2981
      %v3054 = vadd.f32 %v2842, %v2984
      %v3055 = vadd.f32 %v2843, %v2989
      %v3056 = vadd.f32 %v2844, %v2992
      %v3057 = vadd.f32 %v2845, %v2997
      %v3058 = vadd.f32 %v2846, %v3000
      %v3059 = vadd.f32 %v2847, %v3005
      %v3060 = vadd.f32 %v2848, %v3008
      %v3061 = vadd.f32 %v2849, %v3013
      %v3062 = vadd.f32 %v2850, %v3016
      %v3063 = vadd.f32 %v2851, %v3021
      %v3064 = vadd.f32 %v2852, %v3024
      %v3065 = vadd.f32 %v2853, %v3029
      %v3066 = vadd.f32 %v2854, %v3032
      %v3067 = vpack.c.bf16 %v3036, %v3035
      %v3068 = vpack.c.bf16 %v3038, %v3037
      %v3069 = vpack.c.bf16 %v3040, %v3039
      %v3070 = vpack.c.bf16 %v3042, %v3041
      %v3071 = vpack.c.bf16 %v3044, %v3043
      %v3072 = vpack.c.bf16 %v3046, %v3045
      %v3073 = vpack.c.bf16 %v3048, %v3047
      %v3074 = vpack.c.bf16 %v3050, %v3049
      %v3075 = vpack.c.bf16 %v3052, %v3051
      %v3076 = vpack.c.bf16 %v3054, %v3053
      %v3077 = vpack.c.bf16 %v3056, %v3055
      %v3078 = vpack.c.bf16 %v3058, %v3057
      %v3079 = vpack.c.bf16 %v3060, %v3059
      %v3080 = vpack.c.bf16 %v3062, %v3061
      %v3081 = vpack.c.bf16 %v3064, %v3063
      %v3082 = vpack.c.bf16 %v3066, %v3065
      %v3099 = vunpack.c.l.b16 %v3067
      %v3100 = vunpack.c.h.b16 %v3067
      %v3101 = vunpack.c.l.b16 %v3068
      %v3102 = vunpack.c.h.b16 %v3068
      %v3103 = vunpack.c.l.b16 %v3069
      %v3104 = vunpack.c.h.b16 %v3069
      %v3105 = vunpack.c.l.b16 %v3070
      %v3106 = vunpack.c.h.b16 %v3070
      %v3107 = vunpack.c.l.b16 %v3071
      %v3108 = vunpack.c.h.b16 %v3071
      %v3109 = vunpack.c.l.b16 %v3072
      %v3110 = vunpack.c.h.b16 %v3072
      %v3111 = vunpack.c.l.b16 %v3073
      %v3112 = vunpack.c.h.b16 %v3073
      %v3113 = vunpack.c.l.b16 %v3074
      %v3114 = vunpack.c.h.b16 %v3074
      %v3115 = vunpack.c.l.b16 %v3075
      %v3116 = vunpack.c.h.b16 %v3075
      %v3117 = vunpack.c.l.b16 %v3076
      %v3118 = vunpack.c.h.b16 %v3076
      %v3119 = vunpack.c.l.b16 %v3077
      %v3120 = vunpack.c.h.b16 %v3077
      %v3121 = vunpack.c.l.b16 %v3078
      %v3122 = vunpack.c.h.b16 %v3078
      %v3123 = vunpack.c.l.b16 %v3079
      %v3124 = vunpack.c.h.b16 %v3079
      %v3125 = vunpack.c.l.b16 %v3080
      %v3126 = vunpack.c.h.b16 %v3080
      %v3127 = vunpack.c.l.b16 %v3081
      %v3128 = vunpack.c.h.b16 %v3081
      %v3129 = vunpack.c.l.b16 %v3082
      %v3130 = vunpack.c.h.b16 %v3082
      %v3131 = vpack.c.b16 %v3099, %v3099
      %v3132 = vpack.c.b16 %v3100, %v3100
      %v3133 = vpack.c.b16 %v3101, %v3101
      %v3134 = vpack.c.b16 %v3102, %v3102
      %v3135 = vpack.c.b16 %v3103, %v3103
      %v3136 = vpack.c.b16 %v3104, %v3104
      %v3137 = vpack.c.b16 %v3105, %v3105
      %v3138 = vpack.c.b16 %v3106, %v3106
      %v3139 = vpack.c.b16 %v3107, %v3107
      %v3140 = vpack.c.b16 %v3108, %v3108
      %v3141 = vpack.c.b16 %v3109, %v3109
      %v3142 = vpack.c.b16 %v3110, %v3110
      %v3143 = vpack.c.b16 %v3111, %v3111
      %v3144 = vpack.c.b16 %v3112, %v3112
      %v3145 = vpack.c.b16 %v3113, %v3113
      %v3146 = vpack.c.b16 %v3114, %v3114
      %v3147 = vpack.c.b16 %v3115, %v3115
      %v3148 = vpack.c.b16 %v3116, %v3116
      %v3149 = vpack.c.b16 %v3117, %v3117
      %v3150 = vpack.c.b16 %v3118, %v3118
      %v3151 = vpack.c.b16 %v3119, %v3119
      %v3152 = vpack.c.b16 %v3120, %v3120
      %v3153 = vpack.c.b16 %v3121, %v3121
      %v3154 = vpack.c.b16 %v3122, %v3122
      %v3155 = vpack.c.b16 %v3123, %v3123
      %v3156 = vpack.c.b16 %v3124, %v3124
      %v3157 = vpack.c.b16 %v3125, %v3125
      %v3158 = vpack.c.b16 %v3126, %v3126
      %v3159 = vpack.c.b16 %v3127, %v3127
      %v3160 = vpack.c.b16 %v3128, %v3128
      %v3161 = vpack.c.b16 %v3129, %v3129
      %v3162 = vpack.c.b16 %v3130, %v3130
      %3195 = vst [vmem:[%s333] sm:$0xf] %v3131
      %3196 = vst [vmem:[%s333 + $0x4] sm:$0xf] %v3132
      %3197 = vst [vmem:[%s333 + $0x8] sm:$0xf] %v3133
      %3198 = vst [vmem:[%s333 + $0xc] sm:$0xf] %v3134
      %3199 = vst [vmem:[%s333 + $0x10] sm:$0xf] %v3135
      %3200 = vst [vmem:[%s333 + $0x14] sm:$0xf] %v3136
      %3201 = vst [vmem:[%s333 + $0x18] sm:$0xf] %v3137
      %3202 = vst [vmem:[%s333 + $0x1c] sm:$0xf] %v3138
      %3203 = vst [vmem:[%s333 + $0x20] sm:$0xf] %v3139
      %3204 = vst [vmem:[%s333 + $0x24] sm:$0xf] %v3140
      %3205 = vst [vmem:[%s333 + $0x28] sm:$0xf] %v3141
      %3206 = vst [vmem:[%s333 + $0x2c] sm:$0xf] %v3142
      %3207 = vst [vmem:[%s333 + $0x30] sm:$0xf] %v3143
      %3208 = vst [vmem:[%s333 + $0x34] sm:$0xf] %v3144
      %3209 = vst [vmem:[%s333 + $0x38] sm:$0xf] %v3145
      %3210 = vst [vmem:[%s333 + $0x3c] sm:$0xf] %v3146
      %3211 = vst [vmem:[%s333 + $0x40] sm:$0xf] %v3147
      %3212 = vst [vmem:[%s333 + $0x44] sm:$0xf] %v3148
      %3213 = vst [vmem:[%s333 + $0x48] sm:$0xf] %v3149
      %3214 = vst [vmem:[%s333 + $0x4c] sm:$0xf] %v3150
      %3215 = vst [vmem:[%s333 + $0x50] sm:$0xf] %v3151
      %3216 = vst [vmem:[%s333 + $0x54] sm:$0xf] %v3152
      %3217 = vst [vmem:[%s333 + $0x58] sm:$0xf] %v3153
      %3218 = vst [vmem:[%s333 + $0x5c] sm:$0xf] %v3154
      %3219 = vst [vmem:[%s333 + $0x60] sm:$0xf] %v3155
      %3220 = vst [vmem:[%s333 + $0x64] sm:$0xf] %v3156
      %3221 = vst [vmem:[%s333 + $0x68] sm:$0xf] %v3157
      %3222 = vst [vmem:[%s333 + $0x6c] sm:$0xf] %v3158
      %3223 = vst [vmem:[%s333 + $0x70] sm:$0xf] %v3159
      %3224 = vst [vmem:[%s333 + $0x74] sm:$0xf] %v3160
      %3225 = vst [vmem:[%s333 + $0x78] sm:$0xf] %v3161
      %3226 = vst [vmem:[%s333 + $0x7c] sm:$0xf] %v3162
      %v3227 = vadd.f32 %v3035, %v3036
      %v3228 = vadd.f32 %v3227, %v3037
      %v3229 = vadd.f32 %v3228, %v3038
      %v3230 = vadd.f32 %v3229, %v3039
      %v3231 = vadd.f32 %v3230, %v3040
      %v3232 = vadd.f32 %v3231, %v3041
      %v3233 = vadd.f32 %v3232, %v3042
      %v3234 = vadd.f32 %v3233, %v3043
      %v3235 = vadd.f32 %v3234, %v3044
      %v3236 = vadd.f32 %v3235, %v3045
      %v3237 = vadd.f32 %v3236, %v3046
      %v3238 = vadd.f32 %v3237, %v3047
      %v3239 = vadd.f32 %v3238, %v3048
      %v3240 = vadd.f32 %v3239, %v3049
      %v3241 = vadd.f32 %v3240, %v3050
      %v3242 = vadd.f32 %v3241, %v3051
      %v3243 = vadd.f32 %v3242, %v3052
      %v3244 = vadd.f32 %v3243, %v3053
      %v3245 = vadd.f32 %v3244, %v3054
      %v3246 = vadd.f32 %v3245, %v3055
      %v3247 = vadd.f32 %v3246, %v3056
      %v3248 = vadd.f32 %v3247, %v3057
      %v3249 = vadd.f32 %v3248, %v3058
      %v3250 = vadd.f32 %v3249, %v3059
      %v3251 = vadd.f32 %v3250, %v3060
      %v3252 = vadd.f32 %v3251, %v3061
      %v3253 = vadd.f32 %v3252, %v3062
      %v3254 = vadd.f32 %v3253, %v3063
      %v3255 = vadd.f32 %v3254, %v3064
      %v3256 = vadd.f32 %v3255, %v3065
      %v3257 = vadd.f32 %v3256, %v3066
      %v3258 = vrot.slane %v3257, 4
      %v3259 = vadd.f32 %v3257, %v3258
      %v3260 = vrot.slane %v3259, 2
      %v3261 = vadd.f32 %v3259, %v3260
      %v3262 = vrot.slane %v3261, 1
      %v3263 = vadd.f32 %v3261, %v3262
      %3264 = vst [vmem:[%s336] sm:$0x1] %v3263
      %v3265 = vmul.f32 %v3035, %v3035
      %v3266 = vmul.f32 %v3036, %v3036
      %v3267 = vmul.f32 %v3037, %v3037
      %v3268 = vmul.f32 %v3038, %v3038
      %v3269 = vmul.f32 %v3039, %v3039
      %v3270 = vmul.f32 %v3040, %v3040
      %v3271 = vmul.f32 %v3041, %v3041
      %v3272 = vmul.f32 %v3042, %v3042
      %v3273 = vmul.f32 %v3043, %v3043
      %v3274 = vmul.f32 %v3044, %v3044
      %v3275 = vmul.f32 %v3045, %v3045
      %v3276 = vmul.f32 %v3046, %v3046
      %v3277 = vmul.f32 %v3047, %v3047
      %v3278 = vmul.f32 %v3048, %v3048
      %v3279 = vmul.f32 %v3049, %v3049
      %v3280 = vmul.f32 %v3050, %v3050
      %v3281 = vmul.f32 %v3051, %v3051
      %v3282 = vmul.f32 %v3052, %v3052
      %v3283 = vmul.f32 %v3053, %v3053
      %v3284 = vmul.f32 %v3054, %v3054
      %v3285 = vmul.f32 %v3055, %v3055
      %v3286 = vmul.f32 %v3056, %v3056
      %v3287 = vmul.f32 %v3057, %v3057
      %v3288 = vmul.f32 %v3058, %v3058
      %v3289 = vmul.f32 %v3059, %v3059
      %v3290 = vmul.f32 %v3060, %v3060
      %v3291 = vmul.f32 %v3061, %v3061
      %v3292 = vmul.f32 %v3062, %v3062
      %v3293 = vmul.f32 %v3063, %v3063
      %v3294 = vmul.f32 %v3064, %v3064
      %v3295 = vmul.f32 %v3065, %v3065
      %v3296 = vmul.f32 %v3066, %v3066
      %v3297 = vadd.f32 %v3265, %v3266
      %v3298 = vadd.f32 %v3297, %v3267
      %v3299 = vadd.f32 %v3298, %v3268
      %v3300 = vadd.f32 %v3299, %v3269
      %v3301 = vadd.f32 %v3300, %v3270
      %v3302 = vadd.f32 %v3301, %v3271
      %v3303 = vadd.f32 %v3302, %v3272
      %v3304 = vadd.f32 %v3303, %v3273
      %v3305 = vadd.f32 %v3304, %v3274
      %v3306 = vadd.f32 %v3305, %v3275
      %v3307 = vadd.f32 %v3306, %v3276
      %v3308 = vadd.f32 %v3307, %v3277
      %v3309 = vadd.f32 %v3308, %v3278
      %v3310 = vadd.f32 %v3309, %v3279
      %v3311 = vadd.f32 %v3310, %v3280
      %v3312 = vadd.f32 %v3311, %v3281
      %v3313 = vadd.f32 %v3312, %v3282
      %v3314 = vadd.f32 %v3313, %v3283
      %v3315 = vadd.f32 %v3314, %v3284
      %v3316 = vadd.f32 %v3315, %v3285
      %v3317 = vadd.f32 %v3316, %v3286
      %v3318 = vadd.f32 %v3317, %v3287
      %v3319 = vadd.f32 %v3318, %v3288
      %v3320 = vadd.f32 %v3319, %v3289
      %v3321 = vadd.f32 %v3320, %v3290
      %v3322 = vadd.f32 %v3321, %v3291
      %v3323 = vadd.f32 %v3322, %v3292
      %v3324 = vadd.f32 %v3323, %v3293
      %v3325 = vadd.f32 %v3324, %v3294
      %v3326 = vadd.f32 %v3325, %v3295
      %v3327 = vadd.f32 %v3326, %v3296
      %v3328 = vrot.slane %v3327, 4
      %v3329 = vadd.f32 %v3327, %v3328
      %v3330 = vrot.slane %v3329, 2
      %v3331 = vadd.f32 %v3329, %v3330
      %v3332 = vrot.slane %v3331, 1
      %v3333 = vadd.f32 %v3331, %v3332
      %3334 = vst [vmem:[%s339] sm:$0x1] %v3333
      %v3335 = vld [vmem:[%s2] sm:$0x3]
      %v3337 = vsel %vm893, %v3335, 0
      %3339 = vmatprep.subr.bf16.mxu0 0
      %3340 = vmatpush1.bf16.msra.mxu0 %v3337
      %3341 = vmatprep.subr.bf16.mxu0 0
      %3342 = vmatpush1.bf16.msra.mxu0 0
      %3343 = vmatprep.subr.bf16.mxu0 0
      %3344 = vmatpush1.bf16.msra.mxu0 0
      %3345 = vmatprep.subr.bf16.mxu0 0
      %3346 = vmatpush1.bf16.msra.mxu0 0
      %3347 = vmatprep.subr.bf16.mxu0 0
      %3348 = vmatpush1.bf16.msra.mxu0 0
      %3349 = vmatprep.subr.bf16.mxu0 0
      %3350 = vmatpush1.bf16.msra.mxu0 0
      %3351 = vmatprep.subr.bf16.mxu0 0
      %3352 = vmatpush1.bf16.msra.mxu0 0
      %3353 = vmatprep.subr.bf16.mxu0 0
      %3354 = vmatpush1.bf16.msra.mxu0 0
      %3355 = vmatprep.subr.bf16.mxu0 0
      %3356 = vmatpush1.bf16.msra.mxu0 0
      %3357 = vmatprep.subr.bf16.mxu0 0
      %3358 = vmatpush1.bf16.msra.mxu0 0
      %3359 = vmatprep.subr.bf16.mxu0 0
      %3360 = vmatpush1.bf16.msra.mxu0 0
      %3361 = vmatprep.subr.bf16.mxu0 0
      %3362 = vmatpush1.bf16.msra.mxu0 0
      %3363 = vmatprep.subr.bf16.mxu0 0
      %3364 = vmatpush1.bf16.msra.mxu0 0
      %3365 = vmatprep.subr.bf16.mxu0 0
      %3366 = vmatpush1.bf16.msra.mxu0 0
      %3367 = vmatprep.subr.bf16.mxu0 0
      %3368 = vmatpush1.bf16.msra.mxu0 0
      %3369 = vmatprep.subr.bf16.mxu0 0
      %3370 = vmatpush1.bf16.msra.mxu0 0
      %3371 = vmatprep.mubr.bf16.mxu0 0
      %3372 = vmatmul.mubr.bf16.gmra.mrb[0].mxu0 %v849
      %v3373 = vpop.f32.mrb[0].mxu0
      %v3374 = vadd.f32 0.0, %v3373
      %v3375 = vpop.f32.mrb[0].mxu0
      %v3376 = vpop.f32.mrb[0].mxu0
      %v3377 = vadd.f32 0.0, %v3376
      %v3378 = vpop.f32.mrb[0].mxu0
      %3379 = vmatprep.mubr.bf16.mxu0 0
      %3380 = vmatmul.mubr.bf16.gmra.mrb[0].mxu0 %v852
      %v3381 = vpop.f32.mrb[0].mxu0
      %v3382 = vadd.f32 0.0, %v3381
      %v3383 = vpop.f32.mrb[0].mxu0
      %v3384 = vpop.f32.mrb[0].mxu0
      %v3385 = vadd.f32 0.0, %v3384
      %v3386 = vpop.f32.mrb[0].mxu0
      %3387 = vmatprep.mubr.bf16.mxu0 0
      %3388 = vmatmul.mubr.bf16.gmra.mrb[0].mxu0 %v855
      %v3389 = vpop.f32.mrb[0].mxu0
      %v3390 = vadd.f32 0.0, %v3389
      %v3391 = vpop.f32.mrb[0].mxu0
      %v3392 = vpop.f32.mrb[0].mxu0
      %v3393 = vadd.f32 0.0, %v3392
      %v3394 = vpop.f32.mrb[0].mxu0
      %3395 = vmatprep.mubr.bf16.mxu0 0
      %3396 = vmatmul.mubr.bf16.gmra.mrb[0].mxu0 %v858
      %v3397 = vpop.f32.mrb[0].mxu0
      %v3398 = vadd.f32 0.0, %v3397
      %v3399 = vpop.f32.mrb[0].mxu0
      %v3400 = vpop.f32.mrb[0].mxu0
      %v3401 = vadd.f32 0.0, %v3400
      %v3402 = vpop.f32.mrb[0].mxu0
      %3403 = vmatprep.mubr.bf16.mxu0 0
      %3404 = vmatmul.mubr.bf16.gmra.mrb[0].mxu0 %v861
      %v3405 = vpop.f32.mrb[0].mxu0
      %v3406 = vadd.f32 0.0, %v3405
      %v3407 = vpop.f32.mrb[0].mxu0
      %v3408 = vpop.f32.mrb[0].mxu0
      %v3409 = vadd.f32 0.0, %v3408
      %v3410 = vpop.f32.mrb[0].mxu0
      %3411 = vmatprep.mubr.bf16.mxu0 0
      %3412 = vmatmul.mubr.bf16.gmra.mrb[0].mxu0 %v864
      %v3413 = vpop.f32.mrb[0].mxu0
      %v3414 = vadd.f32 0.0, %v3413
      %v3415 = vpop.f32.mrb[0].mxu0
      %v3416 = vpop.f32.mrb[0].mxu0
      %v3417 = vadd.f32 0.0, %v3416
      %v3418 = vpop.f32.mrb[0].mxu0
      %3419 = vmatprep.mubr.bf16.mxu0 0
      %3420 = vmatmul.mubr.bf16.gmra.mrb[0].mxu0 %v867
      %v3421 = vpop.f32.mrb[0].mxu0
      %v3422 = vadd.f32 0.0, %v3421
      %v3423 = vpop.f32.mrb[0].mxu0
      %v3424 = vpop.f32.mrb[0].mxu0
      %v3425 = vadd.f32 0.0, %v3424
      %v3426 = vpop.f32.mrb[0].mxu0
      %3427 = vmatprep.mubr.bf16.mxu0 0
      %3428 = vmatmul.mubr.bf16.gmra.mrb[0].mxu0 %v870
      %v3429 = vpop.f32.mrb[0].mxu0
      %v3430 = vadd.f32 0.0, %v3429
      %v3431 = vpop.f32.mrb[0].mxu0
      %v3432 = vpop.f32.mrb[0].mxu0
      %v3433 = vadd.f32 0.0, %v3432
      %v3434 = vpop.f32.mrb[0].mxu0
      %3435 = vmatprep.mubr.bf16.mxu0 0
      %3436 = vmatmul.mubr.bf16.gmra.mrb[0].mxu0 %v873
      %v3437 = vpop.f32.mrb[0].mxu0
      %v3438 = vadd.f32 0.0, %v3437
      %v3439 = vpop.f32.mrb[0].mxu0
      %v3440 = vpop.f32.mrb[0].mxu0
      %v3441 = vadd.f32 0.0, %v3440
      %v3442 = vpop.f32.mrb[0].mxu0
      %3443 = vmatprep.mubr.bf16.mxu0 0
      %3444 = vmatmul.mubr.bf16.gmra.mrb[0].mxu0 %v876
      %v3445 = vpop.f32.mrb[0].mxu0
      %v3446 = vadd.f32 0.0, %v3445
      %v3447 = vpop.f32.mrb[0].mxu0
      %v3448 = vpop.f32.mrb[0].mxu0
      %v3449 = vadd.f32 0.0, %v3448
      %v3450 = vpop.f32.mrb[0].mxu0
      %3451 = vmatprep.mubr.bf16.mxu0 0
      %3452 = vmatmul.mubr.bf16.gmra.mrb[0].mxu0 %v879
      %v3453 = vpop.f32.mrb[0].mxu0
      %v3454 = vadd.f32 0.0, %v3453
      %v3455 = vpop.f32.mrb[0].mxu0
      %v3456 = vpop.f32.mrb[0].mxu0
      %v3457 = vadd.f32 0.0, %v3456
      %v3458 = vpop.f32.mrb[0].mxu0
      %3459 = vmatprep.mubr.bf16.mxu0 0
      %3460 = vmatmul.mubr.bf16.gmra.mrb[0].mxu0 %v882
      %v3461 = vpop.f32.mrb[0].mxu0
      %v3462 = vadd.f32 0.0, %v3461
      %v3463 = vpop.f32.mrb[0].mxu0
      %v3464 = vpop.f32.mrb[0].mxu0
      %v3465 = vadd.f32 0.0, %v3464
      %v3466 = vpop.f32.mrb[0].mxu0
      %3467 = vmatprep.mubr.bf16.mxu0 0
      %3468 = vmatmul.mubr.bf16.gmra.mrb[0].mxu0 %v885
      %v3469 = vpop.f32.mrb[0].mxu0
      %v3470 = vadd.f32 0.0, %v3469
      %v3471 = vpop.f32.mrb[0].mxu0
      %v3472 = vpop.f32.mrb[0].mxu0
      %v3473 = vadd.f32 0.0, %v3472
      %v3474 = vpop.f32.mrb[0].mxu0
      %3475 = vmatprep.mubr.bf16.mxu0 0
      %3476 = vmatmul.mubr.bf16.gmra.mrb[0].mxu0 %v888
      %v3477 = vpop.f32.mrb[0].mxu0
      %v3478 = vadd.f32 0.0, %v3477
      %v3479 = vpop.f32.mrb[0].mxu0
      %v3480 = vpop.f32.mrb[0].mxu0
      %v3481 = vadd.f32 0.0, %v3480
      %v3482 = vpop.f32.mrb[0].mxu0
      %3483 = vmatprep.mubr.bf16.mxu0 0
      %3484 = vmatmul.mubr.bf16.gmra.mrb[0].mxu0 %v891
      %v3485 = vpop.f32.mrb[0].mxu0
      %v3486 = vadd.f32 0.0, %v3485
      %v3487 = vpop.f32.mrb[0].mxu0
      %v3488 = vpop.f32.mrb[0].mxu0
      %v3489 = vadd.f32 0.0, %v3488
      %v3490 = vpop.f32.mrb[0].mxu0
      %3491 = vmatprep.mubr.bf16.mxu0 0
      %3492 = vmatmul.mubr.bf16.gmra.mrb[0].mxu0 %v2011
      %v3493 = vpop.f32.mrb[0].mxu0
      %v3494 = vadd.f32 0.0, %v3493
      %v3495 = vpop.f32.mrb[0].mxu0
      %v3496 = vpop.f32.mrb[0].mxu0
      %v3497 = vadd.f32 0.0, %v3496
      %v3498 = vpop.f32.mrb[0].mxu0
      %3499 = vdwg.mxu0
      %v3500 = vpack.c.bf16 %v3377, %v3374
      %v3501 = vpack.c.bf16 %v3385, %v3382
      %v3502 = vpack.c.bf16 %v3393, %v3390
      %v3503 = vpack.c.bf16 %v3401, %v3398
      %v3504 = vpack.c.bf16 %v3409, %v3406
      %v3505 = vpack.c.bf16 %v3417, %v3414
      %v3506 = vpack.c.bf16 %v3425, %v3422
      %v3507 = vpack.c.bf16 %v3433, %v3430
      %v3508 = vpack.c.bf16 %v3441, %v3438
      %v3509 = vpack.c.bf16 %v3449, %v3446
      %v3510 = vpack.c.bf16 %v3457, %v3454
      %v3511 = vpack.c.bf16 %v3465, %v3462
      %v3512 = vpack.c.bf16 %v3473, %v3470
      %v3513 = vpack.c.bf16 %v3481, %v3478
      %v3514 = vpack.c.bf16 %v3489, %v3486
      %v3515 = vpack.c.bf16 %v3497, %v3494
      %v3532 = vunpack.c.l.b16 %v3500
      %v3533 = vunpack.c.h.b16 %v3500
      %v3534 = vunpack.c.l.b16 %v3501
      %v3535 = vunpack.c.h.b16 %v3501
      %v3536 = vunpack.c.l.b16 %v3502
      %v3537 = vunpack.c.h.b16 %v3502
      %v3538 = vunpack.c.l.b16 %v3503
      %v3539 = vunpack.c.h.b16 %v3503
      %v3540 = vunpack.c.l.b16 %v3504
      %v3541 = vunpack.c.h.b16 %v3504
      %v3542 = vunpack.c.l.b16 %v3505
      %v3543 = vunpack.c.h.b16 %v3505
      %v3544 = vunpack.c.l.b16 %v3506
      %v3545 = vunpack.c.h.b16 %v3506
      %v3546 = vunpack.c.l.b16 %v3507
      %v3547 = vunpack.c.h.b16 %v3507
      %v3548 = vunpack.c.l.b16 %v3508
      %v3549 = vunpack.c.h.b16 %v3508
      %v3550 = vunpack.c.l.b16 %v3509
      %v3551 = vunpack.c.h.b16 %v3509
      %v3552 = vunpack.c.l.b16 %v3510
      %v3553 = vunpack.c.h.b16 %v3510
      %v3554 = vunpack.c.l.b16 %v3511
      %v3555 = vunpack.c.h.b16 %v3511
      %v3556 = vunpack.c.l.b16 %v3512
      %v3557 = vunpack.c.h.b16 %v3512
      %v3558 = vunpack.c.l.b16 %v3513
      %v3559 = vunpack.c.h.b16 %v3513
      %v3560 = vunpack.c.l.b16 %v3514
      %v3561 = vunpack.c.h.b16 %v3514
      %v3562 = vunpack.c.l.b16 %v3515
      %v3563 = vunpack.c.h.b16 %v3515
      %v3564 = vpack.c.b16 %v3532, %v3532
      %v3565 = vpack.c.b16 %v3533, %v3533
      %v3566 = vpack.c.b16 %v3534, %v3534
      %v3567 = vpack.c.b16 %v3535, %v3535
      %v3568 = vpack.c.b16 %v3536, %v3536
      %v3569 = vpack.c.b16 %v3537, %v3537
      %v3570 = vpack.c.b16 %v3538, %v3538
      %v3571 = vpack.c.b16 %v3539, %v3539
      %v3572 = vpack.c.b16 %v3540, %v3540
      %v3573 = vpack.c.b16 %v3541, %v3541
      %v3574 = vpack.c.b16 %v3542, %v3542
      %v3575 = vpack.c.b16 %v3543, %v3543
      %v3576 = vpack.c.b16 %v3544, %v3544
      %v3577 = vpack.c.b16 %v3545, %v3545
      %v3578 = vpack.c.b16 %v3546, %v3546
      %v3579 = vpack.c.b16 %v3547, %v3547
      %v3580 = vpack.c.b16 %v3548, %v3548
      %v3581 = vpack.c.b16 %v3549, %v3549
      %v3582 = vpack.c.b16 %v3550, %v3550
      %v3583 = vpack.c.b16 %v3551, %v3551
      %v3584 = vpack.c.b16 %v3552, %v3552
      %v3585 = vpack.c.b16 %v3553, %v3553
      %v3586 = vpack.c.b16 %v3554, %v3554
      %v3587 = vpack.c.b16 %v3555, %v3555
      %v3588 = vpack.c.b16 %v3556, %v3556
      %v3589 = vpack.c.b16 %v3557, %v3557
      %v3590 = vpack.c.b16 %v3558, %v3558
      %v3591 = vpack.c.b16 %v3559, %v3559
      %v3592 = vpack.c.b16 %v3560, %v3560
      %v3593 = vpack.c.b16 %v3561, %v3561
      %v3594 = vpack.c.b16 %v3562, %v3562
      %v3595 = vpack.c.b16 %v3563, %v3563
      %3628 = vst [vmem:[%s344] sm:$0xf] %v3564
      %3629 = vst [vmem:[%s344 + $0x4] sm:$0xf] %v3565
      %3630 = vst [vmem:[%s344 + $0x8] sm:$0xf] %v3566
      %3631 = vst [vmem:[%s344 + $0xc] sm:$0xf] %v3567
      %3632 = vst [vmem:[%s344 + $0x10] sm:$0xf] %v3568
      %3633 = vst [vmem:[%s344 + $0x14] sm:$0xf] %v3569
      %3634 = vst [vmem:[%s344 + $0x18] sm:$0xf] %v3570
      %3635 = vst [vmem:[%s344 + $0x1c] sm:$0xf] %v3571
      %3636 = vst [vmem:[%s344 + $0x20] sm:$0xf] %v3572
      %3637 = vst [vmem:[%s344 + $0x24] sm:$0xf] %v3573
      %3638 = vst [vmem:[%s344 + $0x28] sm:$0xf] %v3574
      %3639 = vst [vmem:[%s344 + $0x2c] sm:$0xf] %v3575
      %3640 = vst [vmem:[%s344 + $0x30] sm:$0xf] %v3576
      %3641 = vst [vmem:[%s344 + $0x34] sm:$0xf] %v3577
      %3642 = vst [vmem:[%s344 + $0x38] sm:$0xf] %v3578
      %3643 = vst [vmem:[%s344 + $0x3c] sm:$0xf] %v3579
      %3644 = vst [vmem:[%s344 + $0x40] sm:$0xf] %v3580
      %3645 = vst [vmem:[%s344 + $0x44] sm:$0xf] %v3581
      %3646 = vst [vmem:[%s344 + $0x48] sm:$0xf] %v3582
      %3647 = vst [vmem:[%s344 + $0x4c] sm:$0xf] %v3583
      %3648 = vst [vmem:[%s344 + $0x50] sm:$0xf] %v3584
      %3649 = vst [vmem:[%s344 + $0x54] sm:$0xf] %v3585
      %3650 = vst [vmem:[%s344 + $0x58] sm:$0xf] %v3586
      %3651 = vst [vmem:[%s344 + $0x5c] sm:$0xf] %v3587
      %3652 = vst [vmem:[%s344 + $0x60] sm:$0xf] %v3588
      %3653 = vst [vmem:[%s344 + $0x64] sm:$0xf] %v3589
      %3654 = vst [vmem:[%s344 + $0x68] sm:$0xf] %v3590
      %3655 = vst [vmem:[%s344 + $0x6c] sm:$0xf] %v3591
      %3656 = vst [vmem:[%s344 + $0x70] sm:$0xf] %v3592
      %3657 = vst [vmem:[%s344 + $0x74] sm:$0xf] %v3593
      %3658 = vst [vmem:[%s344 + $0x78] sm:$0xf] %v3594
      %3659 = vst [vmem:[%s344 + $0x7c] sm:$0xf] %v3595
      %v3660 = vadd.f32 %v3374, %v3377
      %v3661 = vadd.f32 %v3660, %v3382
      %v3662 = vadd.f32 %v3661, %v3385
      %v3663 = vadd.f32 %v3662, %v3390
      %v3664 = vadd.f32 %v3663, %v3393
      %v3665 = vadd.f32 %v3664, %v3398
      %v3666 = vadd.f32 %v3665, %v3401
      %v3667 = vadd.f32 %v3666, %v3406
      %v3668 = vadd.f32 %v3667, %v3409
      %v3669 = vadd.f32 %v3668, %v3414
      %v3670 = vadd.f32 %v3669, %v3417
      %v3671 = vadd.f32 %v3670, %v3422
      %v3672 = vadd.f32 %v3671, %v3425
      %v3673 = vadd.f32 %v3672, %v3430
      %v3674 = vadd.f32 %v3673, %v3433
      %v3675 = vadd.f32 %v3674, %v3438
      %v3676 = vadd.f32 %v3675, %v3441
      %v3677 = vadd.f32 %v3676, %v3446
      %v3678 = vadd.f32 %v3677, %v3449
      %v3679 = vadd.f32 %v3678, %v3454
      %v3680 = vadd.f32 %v3679, %v3457
      %v3681 = vadd.f32 %v3680, %v3462
      %v3682 = vadd.f32 %v3681, %v3465
      %v3683 = vadd.f32 %v3682, %v3470
      %v3684 = vadd.f32 %v3683, %v3473
      %v3685 = vadd.f32 %v3684, %v3478
      %v3686 = vadd.f32 %v3685, %v3481
      %v3687 = vadd.f32 %v3686, %v3486
      %v3688 = vadd.f32 %v3687, %v3489
      %v3689 = vadd.f32 %v3688, %v3494
      %v3690 = vadd.f32 %v3689, %v3497
      %v3691 = vrot.slane %v3690, 4
      %v3692 = vadd.f32 %v3690, %v3691
      %v3693 = vrot.slane %v3692, 2
      %v3694 = vadd.f32 %v3692, %v3693
      %v3695 = vrot.slane %v3694, 1
      %v3696 = vadd.f32 %v3694, %v3695
      %3697 = vst [vmem:[%s347] sm:$0x1] %v3696
      %v3698 = vmul.f32 %v3374, %v3374
      %v3699 = vmul.f32 %v3377, %v3377
      %v3700 = vmul.f32 %v3382, %v3382
      %v3701 = vmul.f32 %v3385, %v3385
      %v3702 = vmul.f32 %v3390, %v3390
      %v3703 = vmul.f32 %v3393, %v3393
      %v3704 = vmul.f32 %v3398, %v3398
      %v3705 = vmul.f32 %v3401, %v3401
      %v3706 = vmul.f32 %v3406, %v3406
      %v3707 = vmul.f32 %v3409, %v3409
      %v3708 = vmul.f32 %v3414, %v3414
      %v3709 = vmul.f32 %v3417, %v3417
      %v3710 = vmul.f32 %v3422, %v3422
      %v3711 = vmul.f32 %v3425, %v3425
      %v3712 = vmul.f32 %v3430, %v3430
      %v3713 = vmul.f32 %v3433, %v3433
      %v3714 = vmul.f32 %v3438, %v3438
      %v3715 = vmul.f32 %v3441, %v3441
      %v3716 = vmul.f32 %v3446, %v3446
      %v3717 = vmul.f32 %v3449, %v3449
      %v3718 = vmul.f32 %v3454, %v3454
      %v3719 = vmul.f32 %v3457, %v3457
      %v3720 = vmul.f32 %v3462, %v3462
      %v3721 = vmul.f32 %v3465, %v3465
      %v3722 = vmul.f32 %v3470, %v3470
      %v3723 = vmul.f32 %v3473, %v3473
      %v3724 = vmul.f32 %v3478, %v3478
      %v3725 = vmul.f32 %v3481, %v3481
      %v3726 = vmul.f32 %v3486, %v3486
      %v3727 = vmul.f32 %v3489, %v3489
      %v3728 = vmul.f32 %v3494, %v3494
      %v3729 = vmul.f32 %v3497, %v3497
      %v3730 = vadd.f32 %v3698, %v3699
      %v3731 = vadd.f32 %v3730, %v3700
      %v3732 = vadd.f32 %v3731, %v3701
      %v3733 = vadd.f32 %v3732, %v3702
      %v3734 = vadd.f32 %v3733, %v3703
      %v3735 = vadd.f32 %v3734, %v3704
      %v3736 = vadd.f32 %v3735, %v3705
      %v3737 = vadd.f32 %v3736, %v3706
      %v3738 = vadd.f32 %v3737, %v3707
      %v3739 = vadd.f32 %v3738, %v3708
      %v3740 = vadd.f32 %v3739, %v3709
      %v3741 = vadd.f32 %v3740, %v3710
      %v3742 = vadd.f32 %v3741, %v3711
      %v3743 = vadd.f32 %v3742, %v3712
      %v3744 = vadd.f32 %v3743, %v3713
      %v3745 = vadd.f32 %v3744, %v3714
      %v3746 = vadd.f32 %v3745, %v3715
      %v3747 = vadd.f32 %v3746, %v3716
      %v3748 = vadd.f32 %v3747, %v3717
      %v3749 = vadd.f32 %v3748, %v3718
      %v3750 = vadd.f32 %v3749, %v3719
      %v3751 = vadd.f32 %v3750, %v3720
      %v3752 = vadd.f32 %v3751, %v3721
      %v3753 = vadd.f32 %v3752, %v3722
      %v3754 = vadd.f32 %v3753, %v3723
      %v3755 = vadd.f32 %v3754, %v3724
      %v3756 = vadd.f32 %v3755, %v3725
      %v3757 = vadd.f32 %v3756, %v3726
      %v3758 = vadd.f32 %v3757, %v3727
      %v3759 = vadd.f32 %v3758, %v3728
      %v3760 = vadd.f32 %v3759, %v3729
      %v3761 = vrot.slane %v3760, 4
      %v3762 = vadd.f32 %v3760, %v3761
      %v3763 = vrot.slane %v3762, 2
      %v3764 = vadd.f32 %v3762, %v3763
      %v3765 = vrot.slane %v3764, 1
      %v3766 = vadd.f32 %v3764, %v3765
      %3767 = vst [vmem:[%s350] sm:$0x1] %v3766
      %p3768 = scmp.lt.s32.totalorder %s20, 1
      %s3769 = scalar_select %p3768, %s20, 1
      %s3770 = smul.addr %s3769, 32
      %s3771 = smul.addr %s3770, 4
      %s3772 = scalar_lea.vmem %s3, %s3771
      %p3773 = scmp.lt.s32.totalorder %s20, 1
      %s3774 = scalar_select %p3773, %s20, 1
      %s3775 = scalar_lea.vmem %s4, %s3774
      %p3776 = scmp.lt.s32.totalorder %s20, 1
      %s3777 = scalar_select %p3776, %s20, 1
      %s3778 = scalar_lea.vmem %s5, %s3777
      %p3779 = scmp.lt.s32.totalorder %s20, 1
      %s3780 = scalar_select %p3779, %s20, 1
      %s3781 = smul.addr %s3780, 32
      %s3782 = smul.addr %s3781, 4
      %s3783 = scalar_lea.vmem %s6, %s3782
      %p3784 = scmp.lt.s32.totalorder %s20, 1
      %s3785 = scalar_select %p3784, %s20, 1
      %s3786 = scalar_lea.vmem %s7, %s3785
      %p3787 = scmp.lt.s32.totalorder %s20, 1
      %s3788 = scalar_select %p3787, %s20, 1
      %s3789 = scalar_lea.vmem %s8, %s3788
      // Predicated region
      $region33: #{basic_block_forward.4} parent=31 // pred_check
        %p3790 = pneg %p106
      $region34: #{basic_block_forward.4} parent=31 // pred_check_branch
        %3792 = sbr.rel (%p3790) target = $region36
      $region35: #{basic_block_forward.4} parent=31 // pred_region
        _
      $region36: #{basic_block_forward.4} parent=31 // pred_fallthru
        _
      // Predicated region
      $region37: #{basic_block_forward.4} parent=31 // pred_check
        %p3793 = pneg %p132
      $region38: #{basic_block_forward.4} parent=31 // pred_check_branch
        %3795 = sbr.rel (%p3793) target = $region40
      $region39: #{basic_block_forward.4} parent=31 // pred_region
        _
      $region40: #{basic_block_forward.4} parent=31 // pred_fallthru
        _
      // Predicated region
      $region41: #{basic_block_forward.4} parent=31 // pred_check
        %p3796 = pneg %p158
      $region42: #{basic_block_forward.4} parent=31 // pred_check_branch
        %3798 = sbr.rel (%p3796) target = $region44
      $region43: #{basic_block_forward.4} parent=31 // pred_region
        _
      $region44: #{basic_block_forward.4} parent=31 // pred_fallthru
        _
      // Predicated region
      $region45: #{basic_block_forward.4} parent=31 // pred_check
        %p3799 = pneg %p184
      $region46: #{basic_block_forward.4} parent=31 // pred_check_branch
        %3801 = sbr.rel (%p3799) target = $region48
      $region47: #{basic_block_forward.4} parent=31 // pred_region
        _
      $region48: #{basic_block_forward.4} parent=31 // pred_fallthru
        _
      // Predicated region
      $region49: #{basic_block_forward.4} parent=31 // pred_check
        %p3802 = pneg %p210
      $region50: #{basic_block_forward.4} parent=31 // pred_check_branch
        %3804 = sbr.rel (%p3802) target = $region52
      $region51: #{basic_block_forward.4} parent=31 // pred_region
        _
      $region52: #{basic_block_forward.4} parent=31 // pred_fallthru
        _
      // Predicated region
      $region53: #{basic_block_forward.4} parent=31 // pred_check
        %p3805 = pneg %p236
      $region54: #{basic_block_forward.4} parent=31 // pred_check_branch
        %3807 = sbr.rel (%p3805) target = $region56
      $region55: #{basic_block_forward.4} parent=31 // pred_region
        _
      $region56: #{basic_block_forward.4} parent=31 // pred_fallthru
        _
    $region32: #{basic_block_forward.4} parent=5 // pred_fallthru
      _
    %p3808 = scmp.le.s32.totalorder 2, %s15
    // Predicated region
    $region57: #{basic_block_forward.4} parent=5 // pred_check
      %p3809 = pneg %p3808
    $region58: #{basic_block_forward.4} parent=5 // pred_check_branch
      %3811 = sbr.rel (%p3809) target = $region60
    $region59: #{basic_block_forward.4} parent=5 // pred_region
      %s3812 = ssub.s32 %s15, 2
      // Predicated region
      $region61: #{basic_block_forward.4} parent=59 // pred_check
        %p3813 = pneg %p112
      $region62: #{basic_block_forward.4} parent=59 // pred_check_branch
        %3815 = sbr.rel (%p3813) target = $region64
      $region63: #{basic_block_forward.4} parent=59 // pred_region
        %p3816 = scmp.lt.s32.totalorder %s21, 1
        %s3817 = scalar_select %p3816, %s21, 1
        %s3818 = smul.addr %s3817, 32
        %s3819 = smul.addr %s3818, 4
        %s3820 = scalar_lea.vmem %s3, %s3819
      $region64: #{basic_block_forward.4} parent=59 // pred_fallthru
        _
      // Predicated region
      $region65: #{basic_block_forward.4} parent=59 // pred_check
        %p3821 = pneg %p138
      $region66: #{basic_block_forward.4} parent=59 // pred_check_branch
        %3823 = sbr.rel (%p3821) target = $region68
      $region67: #{basic_block_forward.4} parent=59 // pred_region
        %p3824 = scmp.lt.s32.totalorder %s21, 1
        %s3825 = scalar_select %p3824, %s21, 1
        %s3826 = scalar_lea.vmem %s4, %s3825
      $region68: #{basic_block_forward.4} parent=59 // pred_fallthru
        _
      // Predicated region
      $region69: #{basic_block_forward.4} parent=59 // pred_check
        %p3827 = pneg %p164
      $region70: #{basic_block_forward.4} parent=59 // pred_check_branch
        %3829 = sbr.rel (%p3827) target = $region72
      $region71: #{basic_block_forward.4} parent=59 // pred_region
        %p3830 = scmp.lt.s32.totalorder %s21, 1
        %s3831 = scalar_select %p3830, %s21, 1
        %s3832 = scalar_lea.vmem %s5, %s3831
      $region72: #{basic_block_forward.4} parent=59 // pred_fallthru
        _
      // Predicated region
      $region73: #{basic_block_forward.4} parent=59 // pred_check
        %p3833 = pneg %p190
      $region74: #{basic_block_forward.4} parent=59 // pred_check_branch
        %3835 = sbr.rel (%p3833) target = $region76
      $region75: #{basic_block_forward.4} parent=59 // pred_region
        %p3836 = scmp.lt.s32.totalorder %s21, 1
        %s3837 = scalar_select %p3836, %s21, 1
        %s3838 = smul.addr %s3837, 32
        %s3839 = smul.addr %s3838, 4
        %s3840 = scalar_lea.vmem %s6, %s3839
      $region76: #{basic_block_forward.4} parent=59 // pred_fallthru
        _
      // Predicated region
      $region77: #{basic_block_forward.4} parent=59 // pred_check
        %p3841 = pneg %p216
      $region78: #{basic_block_forward.4} parent=59 // pred_check_branch
        %3843 = sbr.rel (%p3841) target = $region80
      $region79: #{basic_block_forward.4} parent=59 // pred_region
        %p3844 = scmp.lt.s32.totalorder %s21, 1
        %s3845 = scalar_select %p3844, %s21, 1
        %s3846 = scalar_lea.vmem %s7, %s3845
      $region80: #{basic_block_forward.4} parent=59 // pred_fallthru
        _
      // Predicated region
      $region81: #{basic_block_forward.4} parent=59 // pred_check
        %p3847 = pneg %p242
      $region82: #{basic_block_forward.4} parent=59 // pred_check_branch
        %3849 = sbr.rel (%p3847) target = $region84
      $region83: #{basic_block_forward.4} parent=59 // pred_region
        %p3850 = scmp.lt.s32.totalorder %s21, 1
        %s3851 = scalar_select %p3850, %s21, 1
        %s3852 = scalar_lea.vmem %s8, %s3851
      $region84: #{basic_block_forward.4} parent=59 // pred_fallthru
        _
    $region60: #{basic_block_forward.4} parent=5 // pred_fallthru
      _
  $region6: #{basic_block_forward.4} parent=0 // loop_footer
    %s19 = sadd.s32 1, %s15
  $region7: #{basic_block_forward.4} parent=0 // loop_footer_branch
    %14 = sbr.rel target = $region3
  $region8: #{basic_block_forward.4} parent=0 // loop_exit
    _

// kernel: basic_block_forward.5
$region0: #{basic_block_forward.5}
  #allocation0 [shape = 'u32[]', space=smem, size = 0x4, offset = 0x4, fixed_abs, tag = 'smem constant byte address 0x4 - core index']
  #allocation1 [shape = 'u32[144,128]{1,0:T(1,128)}', space=vmem, size = 0x12000, scoped, tag = 'internal scratch']
  %s0 = inlined_call_operand.vmem [shape: bf16[2,18,18,128], index: 0, kind: input, shape index: {}]
  %s1 = inlined_call_operand.vmem [shape: f32[1,128], index: 1, kind: input, shape index: {}]
  %s2 = inlined_call_operand.vmem [shape: f32[1,128], index: 2, kind: input, shape index: {}]
  %s3 = inlined_call_operand.vmem [shape: bf16[3,3,128,128], index: 3, kind: input, shape index: {}]
  %s4 = inlined_call_operand.vmem [shape: bf16[2,16,16,128], index: 4, kind: output, shape index: {0}]
  %s5 = inlined_call_operand.vmem [shape: f32[2,1,128], index: 5, kind: output, shape index: {1}]
  %s6 = inlined_call_operand.vmem [shape: f32[2,1,128], index: 6, kind: output, shape index: {2}]
  %7 = xla_tuple %s4, %s5, %s6
  %s8 = sld [smem:[#allocation0]]
  $region65: #{basic_block_forward.5} parent=0
    _
  %s10 = ssub.s32 1, %s8
  %s11 = scalar_select 0, %s10, %s8
  loop: start=0, step=1, limit=4
  $region2: #{basic_block_forward.5} parent=0 // loop_pre_header
    _
  $region3: #{basic_block_forward.5} parent=0 // loop_header
    %s13 = sphi 0, %s17
    %p14 = scmp.ge.s32.totalorder %s13, 4
    %s23 = sphi 0, %s25
    %s26 = sphi 0, %s23
    %s27 = sphi 0, %s26
    %s43 = sphi 0, %s27
    %s47 = sphi 0, %s47
    %s49 = sphi 0, %s47
    %s50 = sphi 0, %s49
    %s64 = sphi 0, %s50
    %s68 = sphi 0, %s68
    %s70 = sphi 0, %s68
    %s71 = sphi 0, %s70
    %s85 = sphi 0, %s71
    %s89 = sphi 0, %s89
    %s91 = sphi 0, %s89
    %s92 = sphi 0, %s91
    %s106 = sphi 0, %s92
    %s112 = sphi 0, %s114
    %s115 = sphi 0, %s112
    %s116 = sphi 0, %s115
    %s132 = sphi 0, %s116
    %s138 = sphi 0, %s140
    %s141 = sphi 0, %s138
    %s142 = sphi 0, %s141
    %s158 = sphi 0, %s142
    %s164 = sphi 0, %s166
    %s167 = sphi 0, %s164
    %s168 = sphi 0, %s167
    %s184 = sphi 0, %s168
  $region4: #{basic_block_forward.5} parent=0 // loop_header_branch
    %16 = sbr.rel (%p14) target = $region8
  $region5: #{basic_block_forward.5} parent=0 // loop_body
    %s18 = ssub.s32 %s13, 1
    %s19 = ssub.s32 %s13, 2
    %s20 = sadd.s32 %s13, 1
    %s21 = ssub.s32 %s13, %s20
    %p22 = scmp.eq.s32.totalorder %s21, 0
    %s24 = sadd.s32 %s23, 1
    %s25 = scalar_select %p22, %s23, %s24
    %p28 = pneg %p22
    %p29 = scmp.eq.s32.totalorder %s13, 1
    %p30 = por %p28, %p29
    %p31 = scmp.ne.s32.totalorder %s23, %s26
    %p32 = scmp.eq.s32.totalorder %s13, 0
    %p33 = por %p31, %p32
    %p34 = scmp.ne.s32.totalorder %s23, %s26
    %p35 = scmp.eq.s32.totalorder %s18, 1
    %p36 = por %p34, %p35
    %p37 = scmp.ne.s32.totalorder %s26, %s27
    %p38 = scmp.eq.s32.totalorder %s18, 0
    %p39 = por %p37, %p38
    %p40 = scmp.ne.s32.totalorder %s26, %s27
    %p41 = scmp.eq.s32.totalorder %s19, 1
    %p42 = por %p40, %p41
    %p44 = scmp.ne.s32.totalorder %s27, %s43
    %p45 = scmp.eq.s32.totalorder %s19, 0
    %p46 = por %p44, %p45
    %s48 = sadd.s32 %s47, 1
    %p51 = scmp.eq.s32.totalorder %s13, 1
    %p52 = scmp.ne.s32.totalorder %s47, %s49
    %p53 = scmp.eq.s32.totalorder %s13, 0
    %p54 = por %p52, %p53
    %p55 = scmp.ne.s32.totalorder %s47, %s49
    %p56 = scmp.eq.s32.totalorder %s18, 1
    %p57 = por %p55, %p56
    %p58 = scmp.ne.s32.totalorder %s49, %s50
    %p59 = scmp.eq.s32.totalorder %s18, 0
    %p60 = por %p58, %p59
    %p61 = scmp.ne.s32.totalorder %s49, %s50
    %p62 = scmp.eq.s32.totalorder %s19, 1
    %p63 = por %p61, %p62
    %p65 = scmp.ne.s32.totalorder %s50, %s64
    %p66 = scmp.eq.s32.totalorder %s19, 0
    %p67 = por %p65, %p66
    %s69 = sadd.s32 %s68, 1
    %p72 = scmp.eq.s32.totalorder %s13, 1
    %p73 = scmp.ne.s32.totalorder %s68, %s70
    %p74 = scmp.eq.s32.totalorder %s13, 0
    %p75 = por %p73, %p74
    %p76 = scmp.ne.s32.totalorder %s68, %s70
    %p77 = scmp.eq.s32.totalorder %s18, 1
    %p78 = por %p76, %p77
    %p79 = scmp.ne.s32.totalorder %s70, %s71
    %p80 = scmp.eq.s32.totalorder %s18, 0
    %p81 = por %p79, %p80
    %p82 = scmp.ne.s32.totalorder %s70, %s71
    %p83 = scmp.eq.s32.totalorder %s19, 1
    %p84 = por %p82, %p83
    %p86 = scmp.ne.s32.totalorder %s71, %s85
    %p87 = scmp.eq.s32.totalorder %s19, 0
    %p88 = por %p86, %p87
    %s90 = sadd.s32 %s89, 1
    %p93 = scmp.eq.s32.totalorder %s13, 1
    %p94 = scmp.ne.s32.totalorder %s89, %s91
    %p95 = scmp.eq.s32.totalorder %s13, 0
    %p96 = por %p94, %p95
    %p97 = scmp.ne.s32.totalorder %s89, %s91
    %p98 = scmp.eq.s32.totalorder %s18, 1
    %p99 = por %p97, %p98
    %p100 = scmp.ne.s32.totalorder %s91, %s92
    %p101 = scmp.eq.s32.totalorder %s18, 0
    %p102 = por %p100, %p101
    %p103 = scmp.ne.s32.totalorder %s91, %s92
    %p104 = scmp.eq.s32.totalorder %s19, 1
    %p105 = por %p103, %p104
    %p107 = scmp.ne.s32.totalorder %s92, %s106
    %p108 = scmp.eq.s32.totalorder %s19, 0
    %p109 = por %p107, %p108
    %s110 = ssub.s32 %s13, %s20
    %p111 = scmp.eq.s32.totalorder %s110, 0
    %s113 = sadd.s32 %s112, 1
    %s114 = scalar_select %p111, %s112, %s113
    %p117 = pneg %p111
    %p118 = scmp.eq.s32.totalorder %s13, 1
    %p119 = por %p117, %p118
    %p120 = scmp.ne.s32.totalorder %s112, %s115
    %p121 = scmp.eq.s32.totalorder %s13, 0
    %p122 = por %p120, %p121
    %p123 = scmp.ne.s32.totalorder %s112, %s115
    %p124 = scmp.eq.s32.totalorder %s18, 1
    %p125 = por %p123, %p124
    %p126 = scmp.ne.s32.totalorder %s115, %s116
    %p127 = scmp.eq.s32.totalorder %s18, 0
    %p128 = por %p126, %p127
    %p129 = scmp.ne.s32.totalorder %s115, %s116
    %p130 = scmp.eq.s32.totalorder %s19, 1
    %p131 = por %p129, %p130
    %p133 = scmp.ne.s32.totalorder %s116, %s132
    %p134 = scmp.eq.s32.totalorder %s19, 0
    %p135 = por %p133, %p134
    %s136 = ssub.s32 %s13, %s20
    %p137 = scmp.eq.s32.totalorder %s136, 0
    %s139 = sadd.s32 %s138, 1
    %s140 = scalar_select %p137, %s138, %s139
    %p143 = pneg %p137
    %p144 = scmp.eq.s32.totalorder %s13, 1
    %p145 = por %p143, %p144
    %p146 = scmp.ne.s32.totalorder %s138, %s141
    %p147 = scmp.eq.s32.totalorder %s13, 0
    %p148 = por %p146, %p147
    %p149 = scmp.ne.s32.totalorder %s138, %s141
    %p150 = scmp.eq.s32.totalorder %s18, 1
    %p151 = por %p149, %p150
    %p152 = scmp.ne.s32.totalorder %s141, %s142
    %p153 = scmp.eq.s32.totalorder %s18, 0
    %p154 = por %p152, %p153
    %p155 = scmp.ne.s32.totalorder %s141, %s142
    %p156 = scmp.eq.s32.totalorder %s19, 1
    %p157 = por %p155, %p156
    %p159 = scmp.ne.s32.totalorder %s142, %s158
    %p160 = scmp.eq.s32.totalorder %s19, 0
    %p161 = por %p159, %p160
    %s162 = ssub.s32 %s13, %s20
    %p163 = scmp.eq.s32.totalorder %s162, 0
    %s165 = sadd.s32 %s164, 1
    %s166 = scalar_select %p163, %s164, %s165
    %p169 = pneg %p163
    %p170 = scmp.eq.s32.totalorder %s13, 1
    %p171 = por %p169, %p170
    %p172 = scmp.ne.s32.totalorder %s164, %s167
    %p173 = scmp.eq.s32.totalorder %s13, 0
    %p174 = por %p172, %p173
    %p175 = scmp.ne.s32.totalorder %s164, %s167
    %p176 = scmp.eq.s32.totalorder %s18, 1
    %p177 = por %p175, %p176
    %p178 = scmp.ne.s32.totalorder %s167, %s168
    %p179 = scmp.eq.s32.totalorder %s18, 0
    %p180 = por %p178, %p179
    %p181 = scmp.ne.s32.totalorder %s167, %s168
    %p182 = scmp.eq.s32.totalorder %s19, 1
    %p183 = por %p181, %p182
    %p185 = scmp.ne.s32.totalorder %s168, %s184
    %p186 = scmp.eq.s32.totalorder %s19, 0
    %p187 = por %p185, %p186
    %p188 = scmp.le.s32.totalorder 1, %s13
    %p189 = scmp.lt.s32.totalorder %s13, 3
    %p190 = pnand %p188, %p189
    %p191 = pneg %p190
    // Predicated region
    $region9: #{basic_block_forward.5} parent=5 // pred_check
      _
    $region10: #{basic_block_forward.5} parent=5 // pred_check_branch
      %193 = sbr.rel (%p190) target = $region12
    $region11: #{basic_block_forward.5} parent=5 // pred_region
      %s194 = ssub.s32 %s13, 1
      // Predicated region
      $region13: #{basic_block_forward.5} parent=11 // pred_check
        %p195 = pneg %p60
      $region14: #{basic_block_forward.5} parent=11 // pred_check_branch
        %197 = sbr.rel (%p195) target = $region16
      $region15: #{basic_block_forward.5} parent=11 // pred_region
        _
      $region16: #{basic_block_forward.5} parent=11 // pred_fallthru
        _
      // Predicated region
      $region17: #{basic_block_forward.5} parent=11 // pred_check
        %p198 = pneg %p81
      $region18: #{basic_block_forward.5} parent=11 // pred_check_branch
        %200 = sbr.rel (%p198) target = $region20
      $region19: #{basic_block_forward.5} parent=11 // pred_region
        _
      $region20: #{basic_block_forward.5} parent=11 // pred_fallthru
        _
      // Predicated region
      $region21: #{basic_block_forward.5} parent=11 // pred_check
        %p201 = pneg %p102
      $region22: #{basic_block_forward.5} parent=11 // pred_check_branch
        %203 = sbr.rel (%p201) target = $region24
      $region23: #{basic_block_forward.5} parent=11 // pred_region
        _
      $region24: #{basic_block_forward.5} parent=11 // pred_fallthru
        _
    $region12: #{basic_block_forward.5} parent=5 // pred_fallthru
      _
    %p204 = scmp.lt.s32.totalorder %s13, 2
    // Predicated region
    $region25: #{basic_block_forward.5} parent=5 // pred_check
      %p205 = pneg %p204
    $region26: #{basic_block_forward.5} parent=5 // pred_check_branch
      %207 = sbr.rel (%p205) target = $region28
    $region27: #{basic_block_forward.5} parent=5 // pred_region
      // Predicated region
      $region29: #{basic_block_forward.5} parent=27 // pred_check
        %p208 = pneg %p33
      $region30: #{basic_block_forward.5} parent=27 // pred_check_branch
        %210 = sbr.rel (%p208) target = $region32
      $region31: #{basic_block_forward.5} parent=27 // pred_region
        %p211 = scmp.lt.s32.totalorder %s13, 1
        %s212 = scalar_select %p211, %s13, 1
        %s213 = smul.addr %s212, 54
        %s214 = smul.addr %s213, 4
        %s215 = scalar_lea.vmem %s0, %s214
      $region32: #{basic_block_forward.5} parent=27 // pred_fallthru
        _
    $region28: #{basic_block_forward.5} parent=5 // pred_fallthru
      _
    %p216 = scmp.le.s32.totalorder 1, %s13
    %p217 = scmp.lt.s32.totalorder %s13, 3
    %p218 = pnand %p216, %p217
    %p219 = pneg %p218
    // Predicated region
    $region33: #{basic_block_forward.5} parent=5 // pred_check
      _
    $region34: #{basic_block_forward.5} parent=5 // pred_check_branch
      %221 = sbr.rel (%p218) target = $region36
    $region35: #{basic_block_forward.5} parent=5 // pred_region
      %s222 = ssub.s32 %s13, 1
      %p223 = scmp.lt.s32.totalorder %s18, 1
      %s224 = scalar_select %p223, %s18, 1
      %s225 = smul.addr %s224, 54
      %s226 = smul.addr %s225, 4
      %s227 = scalar_lea.vmem %s0, %s226
      %p228 = pneg %p39
      %p229 = pneg %p36
      %p230 = pneg %p60
      %p231 = pneg %p57
      %p232 = pneg %p81
      %p233 = pneg %p78
      %p234 = pneg %p102
      %p235 = pneg %p99
      %p236 = pneg %p128
      %p237 = pneg %p125
      %p238 = scmp.lt.s32.totalorder %s18, 1
      %s239 = scalar_select %p238, %s18, 1
      %s240 = smul.addr %s239, 32
      %s241 = smul.addr %s240, 4
      %s242 = scalar_lea.vmem %s4, %s241
      %p243 = pneg %p154
      %p244 = pneg %p151
      %p245 = scmp.lt.s32.totalorder %s18, 1
      %s246 = scalar_select %p245, %s18, 1
      %s247 = scalar_lea.vmem %s5, %s246
      %p248 = pneg %p180
      %p249 = pneg %p177
      %p250 = scmp.lt.s32.totalorder %s18, 1
      %s251 = scalar_select %p250, %s18, 1
      %s252 = scalar_lea.vmem %s6, %s251
      %p253 = scmp.lt.s32.totalorder %s18, 1
      %s254 = scalar_select %p253, %s18, 1
      %s255 = smul.addr %s254, 54
      %s256 = smul.addr %s255, 4
      %s257 = scalar_lea.vmem %s0, %s256
      %p258 = scmp.lt.s32.totalorder %s18, 1
      %s259 = scalar_select %p258, %s18, 1
      %s260 = smul.addr %s259, 32
      %s261 = smul.addr %s260, 4
      %s262 = scalar_lea.vmem %s4, %s261
      %p263 = scmp.lt.s32.totalorder %s18, 1
      %s264 = scalar_select %p263, %s18, 1
      %s265 = scalar_lea.vmem %s5, %s264
      %p266 = scmp.lt.s32.totalorder %s18, 1
      %s267 = scalar_select %p266, %s18, 1
      %s268 = scalar_lea.vmem %s6, %s267
      %v270 = vld [vmem:[%s1] sm:$0x1]
      %v271 = vld [vmem:[%s2] sm:$0x1]
      %v272 = vld [vmem:[%s257] sm:$0xf]
      %v273 = vld [vmem:[%s257 + $0x4] sm:$0xf]
      %v274 = vld [vmem:[%s257 + $0x8] sm:$0x1]
      %v275 = vld [vmem:[%s257 + $0xc] sm:$0xf]
      %v276 = vld [vmem:[%s257 + $0x10] sm:$0xf]
      %v277 = vld [vmem:[%s257 + $0x14] sm:$0x1]
      %v278 = vld [vmem:[%s257 + $0x18] sm:$0xf]
      %v279 = vld [vmem:[%s257 + $0x1c] sm:$0xf]
      %v280 = vld [vmem:[%s257 + $0x20] sm:$0x1]
      %v281 = vld [vmem:[%s257 + $0x24] sm:$0xf]
      %v282 = vld [vmem:[%s257 + $0x28] sm:$0xf]
      %v283 = vld [vmem:[%s257 + $0x2c] sm:$0x1]
      %v284 = vld [vmem:[%s257 + $0x30] sm:$0xf]
      %v285 = vld [vmem:[%s257 + $0x34] sm:$0xf]
      %v286 = vld [vmem:[%s257 + $0x38] sm:$0x1]
      %v287 = vld [vmem:[%s257 + $0x3c] sm:$0xf]
      %v288 = vld [vmem:[%s257 + $0x40] sm:$0xf]
      %v289 = vld [vmem:[%s257 + $0x44] sm:$0x1]
      %v290 = vld [vmem:[%s257 + $0x48] sm:$0xf]
      %v291 = vld [vmem:[%s257 + $0x4c] sm:$0xf]
      %v292 = vld [vmem:[%s257 + $0x50] sm:$0x1]
      %v293 = vld [vmem:[%s257 + $0x54] sm:$0xf]
      %v294 = vld [vmem:[%s257 + $0x58] sm:$0xf]
      %v295 = vld [vmem:[%s257 + $0x5c] sm:$0x1]
      %v296 = vld [vmem:[%s257 + $0x60] sm:$0xf]
      %v297 = vld [vmem:[%s257 + $0x64] sm:$0xf]
      %v298 = vld [vmem:[%s257 + $0x68] sm:$0x1]
      %v299 = vld [vmem:[%s257 + $0x6c] sm:$0xf]
      %v300 = vld [vmem:[%s257 + $0x70] sm:$0xf]
      %v301 = vld [vmem:[%s257 + $0x74] sm:$0x1]
      %v302 = vld [vmem:[%s257 + $0x78] sm:$0xf]
      %v303 = vld [vmem:[%s257 + $0x7c] sm:$0xf]
      %v304 = vld [vmem:[%s257 + $0x80] sm:$0x1]
      %v305 = vld [vmem:[%s257 + $0x84] sm:$0xf]
      %v306 = vld [vmem:[%s257 + $0x88] sm:$0xf]
      %v307 = vld [vmem:[%s257 + $0x8c] sm:$0x1]
      %v308 = vld [vmem:[%s257 + $0x90] sm:$0xf]
      %v309 = vld [vmem:[%s257 + $0x94] sm:$0xf]
      %v310 = vld [vmem:[%s257 + $0x98] sm:$0x1]
      %v311 = vld [vmem:[%s257 + $0x9c] sm:$0xf]
      %v312 = vld [vmem:[%s257 + $0xa0] sm:$0xf]
      %v313 = vld [vmem:[%s257 + $0xa4] sm:$0x1]
      %v314 = vld [vmem:[%s257 + $0xa8] sm:$0xf]
      %v315 = vld [vmem:[%s257 + $0xac] sm:$0xf]
      %v316 = vld [vmem:[%s257 + $0xb0] sm:$0x1]
      %v317 = vld [vmem:[%s257 + $0xb4] sm:$0xf]
      %v318 = vld [vmem:[%s257 + $0xb8] sm:$0xf]
      %v319 = vld [vmem:[%s257 + $0xbc] sm:$0x1]
      %v320 = vld [vmem:[%s257 + $0xc0] sm:$0xf]
      %v321 = vld [vmem:[%s257 + $0xc4] sm:$0xf]
      %v322 = vld [vmem:[%s257 + $0xc8] sm:$0x1]
      %v323 = vld [vmem:[%s257 + $0xcc] sm:$0xf]
      %v324 = vld [vmem:[%s257 + $0xd0] sm:$0xf]
      %v325 = vld [vmem:[%s257 + $0xd4] sm:$0x1]
      %v326 = vunpack.c.l.bf16 %v272
      %v327 = vunpack.c.l.bf16 %v273
      %v328 = vunpack.c.l.bf16 %v274
      %v329 = vunpack.c.l.bf16 %v275
      %v330 = vunpack.c.l.bf16 %v276
      %v331 = vunpack.c.l.bf16 %v277
      %v332 = vunpack.c.l.bf16 %v278
      %v333 = vunpack.c.l.bf16 %v279
      %v334 = vunpack.c.l.bf16 %v280
      %v335 = vunpack.c.l.bf16 %v281
      %v336 = vunpack.c.l.bf16 %v282
      %v337 = vunpack.c.l.bf16 %v283
      %v338 = vunpack.c.l.bf16 %v284
      %v339 = vunpack.c.l.bf16 %v285
      %v340 = vunpack.c.l.bf16 %v286
      %v341 = vunpack.c.l.bf16 %v287
      %v342 = vunpack.c.l.bf16 %v288
      %v343 = vunpack.c.l.bf16 %v289
      %v344 = vunpack.c.l.bf16 %v290
      %v345 = vunpack.c.l.bf16 %v291
      %v346 = vunpack.c.l.bf16 %v292
      %v347 = vunpack.c.l.bf16 %v293
      %v348 = vunpack.c.l.bf16 %v294
      %v349 = vunpack.c.l.bf16 %v295
      %v350 = vunpack.c.l.bf16 %v296
      %v351 = vunpack.c.l.bf16 %v297
      %v352 = vunpack.c.l.bf16 %v298
      %v353 = vunpack.c.l.bf16 %v299
      %v354 = vunpack.c.l.bf16 %v300
      %v355 = vunpack.c.l.bf16 %v301
      %v356 = vunpack.c.l.bf16 %v302
      %v357 = vunpack.c.l.bf16 %v303
      %v358 = vunpack.c.l.bf16 %v304
      %v359 = vunpack.c.l.bf16 %v305
      %v360 = vunpack.c.l.bf16 %v306
      %v361 = vunpack.c.l.bf16 %v307
      %v362 = vunpack.c.l.bf16 %v308
      %v363 = vunpack.c.l.bf16 %v309
      %v364 = vunpack.c.l.bf16 %v310
      %v365 = vunpack.c.l.bf16 %v311
      %v366 = vunpack.c.l.bf16 %v312
      %v367 = vunpack.c.l.bf16 %v313
      %v368 = vunpack.c.l.bf16 %v314
      %v369 = vunpack.c.l.bf16 %v315
      %v370 = vunpack.c.l.bf16 %v316
      %v371 = vunpack.c.l.bf16 %v317
      %v372 = vunpack.c.l.bf16 %v318
      %v373 = vunpack.c.l.bf16 %v319
      %v374 = vunpack.c.l.bf16 %v320
      %v375 = vunpack.c.l.bf16 %v321
      %v376 = vunpack.c.l.bf16 %v322
      %v377 = vunpack.c.l.bf16 %v323
      %v378 = vunpack.c.l.bf16 %v324
      %v379 = vunpack.c.l.bf16 %v325
      %v381 = vlaneseq
      %v382 = vshrl.u32 %v381, 7
      %v383 = vsub.s32 0, %v382
      %v384 = vrot.slane %v270, %v383
      %v386 = vmul.f32 %v326, %v384
      %v387 = vmul.f32 %v327, %v384
      %v388 = vmul.f32 %v328, %v384
      %v389 = vmul.f32 %v329, %v384
      %v390 = vmul.f32 %v330, %v384
      %v391 = vmul.f32 %v331, %v384
      %v392 = vmul.f32 %v332, %v384
      %v393 = vmul.f32 %v333, %v384
      %v394 = vmul.f32 %v334, %v384
      %v395 = vmul.f32 %v335, %v384
      %v396 = vmul.f32 %v336, %v384
      %v397 = vmul.f32 %v337, %v384
      %v398 = vmul.f32 %v338, %v384
      %v399 = vmul.f32 %v339, %v384
      %v400 = vmul.f32 %v340, %v384
      %v401 = vmul.f32 %v341, %v384
      %v402 = vmul.f32 %v342, %v384
      %v403 = vmul.f32 %v343, %v384
      %v404 = vmul.f32 %v344, %v384
      %v405 = vmul.f32 %v345, %v384
      %v406 = vmul.f32 %v346, %v384
      %v407 = vmul.f32 %v347, %v384
      %v408 = vmul.f32 %v348, %v384
      %v409 = vmul.f32 %v349, %v384
      %v410 = vmul.f32 %v350, %v384
      %v411 = vmul.f32 %v351, %v384
      %v412 = vmul.f32 %v352, %v384
      %v413 = vmul.f32 %v353, %v384
      %v414 = vmul.f32 %v354, %v384
      %v415 = vmul.f32 %v355, %v384
      %v416 = vmul.f32 %v356, %v384
      %v417 = vmul.f32 %v357, %v384
      %v418 = vmul.f32 %v358, %v384
      %v419 = vmul.f32 %v359, %v384
      %v420 = vmul.f32 %v360, %v384
      %v421 = vmul.f32 %v361, %v384
      %v422 = vmul.f32 %v362, %v384
      %v423 = vmul.f32 %v363, %v384
      %v424 = vmul.f32 %v364, %v384
      %v425 = vmul.f32 %v365, %v384
      %v426 = vmul.f32 %v366, %v384
      %v427 = vmul.f32 %v367, %v384
      %v428 = vmul.f32 %v368, %v384
      %v429 = vmul.f32 %v369, %v384
      %v430 = vmul.f32 %v370, %v384
      %v431 = vmul.f32 %v371, %v384
      %v432 = vmul.f32 %v372, %v384
      %v433 = vmul.f32 %v373, %v384
      %v434 = vmul.f32 %v374, %v384
      %v435 = vmul.f32 %v375, %v384
      %v436 = vmul.f32 %v376, %v384
      %v437 = vmul.f32 %v377, %v384
      %v438 = vmul.f32 %v378, %v384
      %v439 = vmul.f32 %v379, %v384
      %v441 = vlaneseq
      %v442 = vshrl.u32 %v441, 7
      %v443 = vsub.s32 0, %v442
      %v444 = vrot.slane %v271, %v443
      %v446 = vadd.f32 %v386, %v444
      %v447 = vadd.f32 %v387, %v444
      %v448 = vadd.f32 %v388, %v444
      %v449 = vadd.f32 %v389, %v444
      %v450 = vadd.f32 %v390, %v444
      %v451 = vadd.f32 %v391, %v444
      %v452 = vadd.f32 %v392, %v444
      %v453 = vadd.f32 %v393, %v444
      %v454 = vadd.f32 %v394, %v444
      %v455 = vadd.f32 %v395, %v444
      %v456 = vadd.f32 %v396, %v444
      %v457 = vadd.f32 %v397, %v444
      %v458 = vadd.f32 %v398, %v444
      %v459 = vadd.f32 %v399, %v444
      %v460 = vadd.f32 %v400, %v444
      %v461 = vadd.f32 %v401, %v444
      %v462 = vadd.f32 %v402, %v444
      %v463 = vadd.f32 %v403, %v444
      %v464 = vadd.f32 %v404, %v444
      %v465 = vadd.f32 %v405, %v444
      %v466 = vadd.f32 %v406, %v444
      %v467 = vadd.f32 %v407, %v444
      %v468 = vadd.f32 %v408, %v444
      %v469 = vadd.f32 %v409, %v444
      %v470 = vadd.f32 %v410, %v444
      %v471 = vadd.f32 %v411, %v444
      %v472 = vadd.f32 %v412, %v444
      %v473 = vadd.f32 %v413, %v444
      %v474 = vadd.f32 %v414, %v444
      %v475 = vadd.f32 %v415, %v444
      %v476 = vadd.f32 %v416, %v444
      %v477 = vadd.f32 %v417, %v444
      %v478 = vadd.f32 %v418, %v444
      %v479 = vadd.f32 %v419, %v444
      %v480 = vadd.f32 %v420, %v444
      %v481 = vadd.f32 %v421, %v444
      %v482 = vadd.f32 %v422, %v444
      %v483 = vadd.f32 %v423, %v444
      %v484 = vadd.f32 %v424, %v444
      %v485 = vadd.f32 %v425, %v444
      %v486 = vadd.f32 %v426, %v444
      %v487 = vadd.f32 %v427, %v444
      %v488 = vadd.f32 %v428, %v444
      %v489 = vadd.f32 %v429, %v444
      %v490 = vadd.f32 %v430, %v444
      %v491 = vadd.f32 %v431, %v444
      %v492 = vadd.f32 %v432, %v444
      %v493 = vadd.f32 %v433, %v444
      %v494 = vadd.f32 %v434, %v444
      %v495 = vadd.f32 %v435, %v444
      %v496 = vadd.f32 %v436, %v444
      %v497 = vadd.f32 %v437, %v444
      %v498 = vadd.f32 %v438, %v444
      %v499 = vadd.f32 %v439, %v444
      %v500 = vmul.f32 %v446, 0.1
      %v501 = vmul.f32 %v447, 0.1
      %v502 = vmul.f32 %v448, 0.1
      %v503 = vmul.f32 %v449, 0.1
      %v504 = vmul.f32 %v450, 0.1
      %v505 = vmul.f32 %v451, 0.1
      %v506 = vmul.f32 %v452, 0.1
      %v507 = vmul.f32 %v453, 0.1
      %v508 = vmul.f32 %v454, 0.1
      %v509 = vmul.f32 %v455, 0.1
      %v510 = vmul.f32 %v456, 0.1
      %v511 = vmul.f32 %v457, 0.1
      %v512 = vmul.f32 %v458, 0.1
      %v513 = vmul.f32 %v459, 0.1
      %v514 = vmul.f32 %v460, 0.1
      %v515 = vmul.f32 %v461, 0.1
      %v516 = vmul.f32 %v462, 0.1
      %v517 = vmul.f32 %v463, 0.1
      %v518 = vmul.f32 %v464, 0.1
      %v519 = vmul.f32 %v465, 0.1
      %v520 = vmul.f32 %v466, 0.1
      %v521 = vmul.f32 %v467, 0.1
      %v522 = vmul.f32 %v468, 0.1
      %v523 = vmul.f32 %v469, 0.1
      %v524 = vmul.f32 %v470, 0.1
      %v525 = vmul.f32 %v471, 0.1
      %v526 = vmul.f32 %v472, 0.1
      %v527 = vmul.f32 %v473, 0.1
      %v528 = vmul.f32 %v474, 0.1
      %v529 = vmul.f32 %v475, 0.1
      %v530 = vmul.f32 %v476, 0.1
      %v531 = vmul.f32 %v477, 0.1
      %v532 = vmul.f32 %v478, 0.1
      %v533 = vmul.f32 %v479, 0.1
      %v534 = vmul.f32 %v480, 0.1
      %v535 = vmul.f32 %v481, 0.1
      %v536 = vmul.f32 %v482, 0.1
      %v537 = vmul.f32 %v483, 0.1
      %v538 = vmul.f32 %v484, 0.1
      %v539 = vmul.f32 %v485, 0.1
      %v540 = vmul.f32 %v486, 0.1
      %v541 = vmul.f32 %v487, 0.1
      %v542 = vmul.f32 %v488, 0.1
      %v543 = vmul.f32 %v489, 0.1
      %v544 = vmul.f32 %v490, 0.1
      %v545 = vmul.f32 %v491, 0.1
      %v546 = vmul.f32 %v492, 0.1
      %v547 = vmul.f32 %v493, 0.1
      %v548 = vmul.f32 %v494, 0.1
      %v549 = vmul.f32 %v495, 0.1
      %v550 = vmul.f32 %v496, 0.1
      %v551 = vmul.f32 %v497, 0.1
      %v552 = vmul.f32 %v498, 0.1
      %v553 = vmul.f32 %v499, 0.1
      %v554 = vmax.f32 %v446, %v500
      %v555 = vmax.f32 %v447, %v501
      %v556 = vmax.f32 %v448, %v502
      %v557 = vmax.f32 %v449, %v503
      %v558 = vmax.f32 %v450, %v504
      %v559 = vmax.f32 %v451, %v505
      %v560 = vmax.f32 %v452, %v506
      %v561 = vmax.f32 %v453, %v507
      %v562 = vmax.f32 %v454, %v508
      %v563 = vmax.f32 %v455, %v509
      %v564 = vmax.f32 %v456, %v510
      %v565 = vmax.f32 %v457, %v511
      %v566 = vmax.f32 %v458, %v512
      %v567 = vmax.f32 %v459, %v513
      %v568 = vmax.f32 %v460, %v514
      %v569 = vmax.f32 %v461, %v515
      %v570 = vmax.f32 %v462, %v516
      %v571 = vmax.f32 %v463, %v517
      %v572 = vmax.f32 %v464, %v518
      %v573 = vmax.f32 %v465, %v519
      %v574 = vmax.f32 %v466, %v520
      %v575 = vmax.f32 %v467, %v521
      %v576 = vmax.f32 %v468, %v522
      %v577 = vmax.f32 %v469, %v523
      %v578 = vmax.f32 %v470, %v524
      %v579 = vmax.f32 %v471, %v525
      %v580 = vmax.f32 %v472, %v526
      %v581 = vmax.f32 %v473, %v527
      %v582 = vmax.f32 %v474, %v528
      %v583 = vmax.f32 %v475, %v529
      %v584 = vmax.f32 %v476, %v530
      %v585 = vmax.f32 %v477, %v531
      %v586 = vmax.f32 %v478, %v532
      %v587 = vmax.f32 %v479, %v533
      %v588 = vmax.f32 %v480, %v534
      %v589 = vmax.f32 %v481, %v535
      %v590 = vmax.f32 %v482, %v536
      %v591 = vmax.f32 %v483, %v537
      %v592 = vmax.f32 %v484, %v538
      %v593 = vmax.f32 %v485, %v539
      %v594 = vmax.f32 %v486, %v540
      %v595 = vmax.f32 %v487, %v541
      %v596 = vmax.f32 %v488, %v542
      %v597 = vmax.f32 %v489, %v543
      %v598 = vmax.f32 %v490, %v544
      %v599 = vmax.f32 %v491, %v545
      %v600 = vmax.f32 %v492, %v546
      %v601 = vmax.f32 %v493, %v547
      %v602 = vmax.f32 %v494, %v548
      %v603 = vmax.f32 %v495, %v549
      %v604 = vmax.f32 %v496, %v550
      %v605 = vmax.f32 %v497, %v551
      %v606 = vmax.f32 %v498, %v552
      %v607 = vmax.f32 %v499, %v553
      %v608 = vlaneseq
      %v609 = vshrl.u32 %v608, 7
      %v610 = vadd.s32 %v609, 8
      %v611 = vadd.s32 %v609, 16
      %vm612 = vcmp.ge.s32.totalorder %v609, 1
      %vm613 = vcmp.ge.s32.totalorder %v610, 1
      %vm614 = vcmp.ge.s32.totalorder %v611, 1
      %vm615 = vmand 0, %vm612
      %vm616 = vmand 0, %vm613
      %vm617 = vmand 0, %vm614
      %vm618 = vmand 1, %vm612
      %vm619 = vmand 1, %vm613
      %vm620 = vmand 1, %vm614
      %vm621 = vcmp.le.s32.totalorder %v609, 16
      %vm622 = vcmp.le.s32.totalorder %v610, 16
      %vm623 = vcmp.le.s32.totalorder %v611, 16
      %vm624 = vmand %vm615, %vm621
      %vm625 = vmand %vm616, %vm622
      %vm626 = vmand %vm617, %vm623
      %vm627 = vmand %vm618, %vm621
      %vm628 = vmand %vm619, %vm622
      %vm629 = vmand %vm620, %vm623
      %v630 = vsel %vm624, 1, 0
      %v631 = vsel %vm625, 1, 0
      %v632 = vsel %vm626, 1, 0
      %v633 = vsel %vm627, 1, 0
      %v634 = vsel %vm628, 1, 0
      %v635 = vsel %vm629, 1, 0
      %vm636 = vcmp.eq.s32.totalorder %v630, 1
      %vm637 = vcmp.eq.s32.totalorder %v631, 1
      %vm638 = vcmp.eq.s32.totalorder %v632, 1
      %vm639 = vcmp.eq.s32.totalorder %v633, 1
      %vm640 = vcmp.eq.s32.totalorder %v634, 1
      %vm641 = vcmp.eq.s32.totalorder %v635, 1
      %v642 = vsel %vm636, %v554, 0.0
      %v643 = vsel %vm637, %v555, 0.0
      %v644 = vsel %vm638, %v556, 0.0
      %v645 = vsel %vm639, %v557, 0.0
      %v646 = vsel %vm640, %v558, 0.0
      %v647 = vsel %vm641, %v559, 0.0
      %v648 = vsel %vm639, %v560, 0.0
      %v649 = vsel %vm640, %v561, 0.0
      %v650 = vsel %vm641, %v562, 0.0
      %v651 = vsel %vm639, %v563, 0.0
      %v652 = vsel %vm640, %v564, 0.0
      %v653 = vsel %vm641, %v565, 0.0
      %v654 = vsel %vm639, %v566, 0.0
      %v655 = vsel %vm640, %v567, 0.0
      %v656 = vsel %vm641, %v568, 0.0
      %v657 = vsel %vm639, %v569, 0.0
      %v658 = vsel %vm640, %v570, 0.0
      %v659 = vsel %vm641, %v571, 0.0
      %v660 = vsel %vm639, %v572, 0.0
      %v661 = vsel %vm640, %v573, 0.0
      %v662 = vsel %vm641, %v574, 0.0
      %v663 = vsel %vm639, %v575, 0.0
      %v664 = vsel %vm640, %v576, 0.0
      %v665 = vsel %vm641, %v577, 0.0
      %v666 = vsel %vm639, %v578, 0.0
      %v667 = vsel %vm640, %v579, 0.0
      %v668 = vsel %vm641, %v580, 0.0
      %v669 = vsel %vm639, %v581, 0.0
      %v670 = vsel %vm640, %v582, 0.0
      %v671 = vsel %vm641, %v583, 0.0
      %v672 = vsel %vm639, %v584, 0.0
      %v673 = vsel %vm640, %v585, 0.0
      %v674 = vsel %vm641, %v586, 0.0
      %v675 = vsel %vm639, %v587, 0.0
      %v676 = vsel %vm640, %v588, 0.0
      %v677 = vsel %vm641, %v589, 0.0
      %v678 = vsel %vm639, %v590, 0.0
      %v679 = vsel %vm640, %v591, 0.0
      %v680 = vsel %vm641, %v592, 0.0
      %v681 = vsel %vm639, %v593, 0.0
      %v682 = vsel %vm640, %v594, 0.0
      %v683 = vsel %vm641, %v595, 0.0
      %v684 = vsel %vm639, %v596, 0.0
      %v685 = vsel %vm640, %v597, 0.0
      %v686 = vsel %vm641, %v598, 0.0
      %v687 = vsel %vm639, %v599, 0.0
      %v688 = vsel %vm640, %v600, 0.0
      %v689 = vsel %vm641, %v601, 0.0
      %v690 = vsel %vm639, %v602, 0.0
      %v691 = vsel %vm640, %v603, 0.0
      %v692 = vsel %vm641, %v604, 0.0
      %v693 = vsel %vm636, %v605, 0.0
      %v694 = vsel %vm637, %v606, 0.0
      %v695 = vsel %vm638, %v607, 0.0
      %v696 = vpack.c.bf16 %v643, %v642
      %v697 = vpack.c.bf16 %v644, %v644
      %v698 = vpack.c.bf16 %v646, %v645
      %v699 = vpack.c.bf16 %v647, %v647
      %v700 = vpack.c.bf16 %v649, %v648
      %v701 = vpack.c.bf16 %v650, %v650
      %v702 = vpack.c.bf16 %v652, %v651
      %v703 = vpack.c.bf16 %v653, %v653
      %v704 = vpack.c.bf16 %v655, %v654
      %v705 = vpack.c.bf16 %v656, %v656
      %v706 = vpack.c.bf16 %v658, %v657
      %v707 = vpack.c.bf16 %v659, %v659
      %v708 = vpack.c.bf16 %v661, %v660
      %v709 = vpack.c.bf16 %v662, %v662
      %v710 = vpack.c.bf16 %v664, %v663
      %v711 = vpack.c.bf16 %v665, %v665
      %v712 = vpack.c.bf16 %v667, %v666
      %v713 = vpack.c.bf16 %v668, %v668
      %v714 = vpack.c.bf16 %v670, %v669
      %v715 = vpack.c.bf16 %v671, %v671
      %v716 = vpack.c.bf16 %v673, %v672
      %v717 = vpack.c.bf16 %v674, %v674
      %v718 = vpack.c.bf16 %v676, %v675
      %v719 = vpack.c.bf16 %v677, %v677
      %v720 = vpack.c.bf16 %v679, %v678
      %v721 = vpack.c.bf16 %v680, %v680
      %v722 = vpack.c.bf16 %v682, %v681
      %v723 = vpack.c.bf16 %v683, %v683
      %v724 = vpack.c.bf16 %v685, %v684
      %v725 = vpack.c.bf16 %v686, %v686
      %v726 = vpack.c.bf16 %v688, %v687
      %v727 = vpack.c.bf16 %v689, %v689
      %v728 = vpack.c.bf16 %v691, %v690
      %v729 = vpack.c.bf16 %v692, %v692
      %v730 = vpack.c.bf16 %v694, %v693
      %v731 = vpack.c.bf16 %v695, %v695
      %v732 = vld [vmem:[%s3] sm:$0xf]
      %v733 = vld [vmem:[%s3 + $0x4] sm:$0xf]
      %v734 = vld [vmem:[%s3 + $0x8] sm:$0xf]
      %v735 = vld [vmem:[%s3 + $0xc] sm:$0xf]
      %v736 = vld [vmem:[%s3 + $0x10] sm:$0xf]
      %v737 = vld [vmem:[%s3 + $0x14] sm:$0xf]
      %v738 = vld [vmem:[%s3 + $0x18] sm:$0xf]
      %v739 = vld [vmem:[%s3 + $0x1c] sm:$0xf]
      %v740 = vld [vmem:[%s3 + $0x20] sm:$0xf]
      %v741 = vld [vmem:[%s3 + $0x24] sm:$0xf]
      %v742 = vld [vmem:[%s3 + $0x28] sm:$0xf]
      %v743 = vld [vmem:[%s3 + $0x2c] sm:$0xf]
      %v744 = vld [vmem:[%s3 + $0x30] sm:$0xf]
      %v745 = vld [vmem:[%s3 + $0x34] sm:$0xf]
      %v746 = vld [vmem:[%s3 + $0x38] sm:$0xf]
      %v747 = vld [vmem:[%s3 + $0x3c] sm:$0xf]
      %vm748 = vsmask.f32 7424
      %v750 = vshrl.u32 %v696, 16
      %v752 = vshll.u32 %v696, 16
      %v754 = vrot.slane %v752, 1
      %v755 = vor.u32 %v750, %v754
      %v757 = vshll.u32 %v697, 16
      %v759 = vrot.slane %v757, 1
      %v760 = vsel %vm748, %v755, %v759
      %v762 = vshrl.u32 %v698, 16
      %v764 = vshll.u32 %v698, 16
      %v766 = vrot.slane %v764, 1
      %v767 = vor.u32 %v762, %v766
      %v769 = vshll.u32 %v699, 16
      %v771 = vrot.slane %v769, 1
      %v772 = vsel %vm748, %v767, %v771
      %v774 = vshrl.u32 %v700, 16
      %v776 = vshll.u32 %v700, 16
      %v778 = vrot.slane %v776, 1
      %v779 = vor.u32 %v774, %v778
      %v781 = vshll.u32 %v701, 16
      %v783 = vrot.slane %v781, 1
      %v784 = vsel %vm748, %v779, %v783
      %v786 = vshrl.u32 %v702, 16
      %v788 = vshll.u32 %v702, 16
      %v790 = vrot.slane %v788, 1
      %v791 = vor.u32 %v786, %v790
      %v793 = vshll.u32 %v703, 16
      %v795 = vrot.slane %v793, 1
      %v796 = vsel %vm748, %v791, %v795
      %v798 = vshrl.u32 %v704, 16
      %v800 = vshll.u32 %v704, 16
      %v802 = vrot.slane %v800, 1
      %v803 = vor.u32 %v798, %v802
      %v805 = vshll.u32 %v705, 16
      %v807 = vrot.slane %v805, 1
      %v808 = vsel %vm748, %v803, %v807
      %v810 = vshrl.u32 %v706, 16
      %v812 = vshll.u32 %v706, 16
      %v814 = vrot.slane %v812, 1
      %v815 = vor.u32 %v810, %v814
      %v817 = vshll.u32 %v707, 16
      %v819 = vrot.slane %v817, 1
      %v820 = vsel %vm748, %v815, %v819
      %v822 = vshrl.u32 %v708, 16
      %v824 = vshll.u32 %v708, 16
      %v826 = vrot.slane %v824, 1
      %v827 = vor.u32 %v822, %v826
      %v829 = vshll.u32 %v709, 16
      %v831 = vrot.slane %v829, 1
      %v832 = vsel %vm748, %v827, %v831
      %v834 = vshrl.u32 %v710, 16
      %v836 = vshll.u32 %v710, 16
      %v838 = vrot.slane %v836, 1
      %v839 = vor.u32 %v834, %v838
      %v841 = vshll.u32 %v711, 16
      %v843 = vrot.slane %v841, 1
      %v844 = vsel %vm748, %v839, %v843
      %v846 = vshrl.u32 %v712, 16
      %v848 = vshll.u32 %v712, 16
      %v850 = vrot.slane %v848, 1
      %v851 = vor.u32 %v846, %v850
      %v853 = vshll.u32 %v713, 16
      %v855 = vrot.slane %v853, 1
      %v856 = vsel %vm748, %v851, %v855
      %v858 = vshrl.u32 %v714, 16
      %v860 = vshll.u32 %v714, 16
      %v862 = vrot.slane %v860, 1
      %v863 = vor.u32 %v858, %v862
      %v865 = vshll.u32 %v715, 16
      %v867 = vrot.slane %v865, 1
      %v868 = vsel %vm748, %v863, %v867
      %v870 = vshrl.u32 %v716, 16
      %v872 = vshll.u32 %v716, 16
      %v874 = vrot.slane %v872, 1
      %v875 = vor.u32 %v870, %v874
      %v877 = vshll.u32 %v717, 16
      %v879 = vrot.slane %v877, 1
      %v880 = vsel %vm748, %v875, %v879
      %v882 = vshrl.u32 %v718, 16
      %v884 = vshll.u32 %v718, 16
      %v886 = vrot.slane %v884, 1
      %v887 = vor.u32 %v882, %v886
      %v889 = vshll.u32 %v719, 16
      %v891 = vrot.slane %v889, 1
      %v892 = vsel %vm748, %v887, %v891
      %v894 = vshrl.u32 %v720, 16
      %v896 = vshll.u32 %v720, 16
      %v898 = vrot.slane %v896, 1
      %v899 = vor.u32 %v894, %v898
      %v901 = vshll.u32 %v721, 16
      %v903 = vrot.slane %v901, 1
      %v904 = vsel %vm748, %v899, %v903
      %v906 = vshrl.u32 %v722, 16
      %v908 = vshll.u32 %v722, 16
      %v910 = vrot.slane %v908, 1
      %v911 = vor.u32 %v906, %v910
      %v913 = vshll.u32 %v723, 16
      %v915 = vrot.slane %v913, 1
      %v916 = vsel %vm748, %v911, %v915
      %v918 = vshrl.u32 %v724, 16
      %v920 = vshll.u32 %v724, 16
      %v922 = vrot.slane %v920, 1
      %v923 = vor.u32 %v918, %v922
      %v925 = vshll.u32 %v725, 16
      %v927 = vrot.slane %v925, 1
      %v928 = vsel %vm748, %v923, %v927
      %v930 = vshrl.u32 %v726, 16
      %v932 = vshll.u32 %v726, 16
      %v934 = vrot.slane %v932, 1
      %v935 = vor.u32 %v930, %v934
      %v937 = vshll.u32 %v727, 16
      %v939 = vrot.slane %v937, 1
      %v940 = vsel %vm748, %v935, %v939
      %s957 = scalar_lea.vmem %s3, 64
      %v958 = vld [vmem:[%s957] sm:$0xf]
      %v959 = vld [vmem:[%s957 + $0x4] sm:$0xf]
      %v960 = vld [vmem:[%s957 + $0x8] sm:$0xf]
      %v961 = vld [vmem:[%s957 + $0xc] sm:$0xf]
      %v962 = vld [vmem:[%s957 + $0x10] sm:$0xf]
      %v963 = vld [vmem:[%s957 + $0x14] sm:$0xf]
      %v964 = vld [vmem:[%s957 + $0x18] sm:$0xf]
      %v965 = vld [vmem:[%s957 + $0x1c] sm:$0xf]
      %v966 = vld [vmem:[%s957 + $0x20] sm:$0xf]
      %v967 = vld [vmem:[%s957 + $0x24] sm:$0xf]
      %v968 = vld [vmem:[%s957 + $0x28] sm:$0xf]
      %v969 = vld [vmem:[%s957 + $0x2c] sm:$0xf]
      %v970 = vld [vmem:[%s957 + $0x30] sm:$0xf]
      %v971 = vld [vmem:[%s957 + $0x34] sm:$0xf]
      %v972 = vld [vmem:[%s957 + $0x38] sm:$0xf]
      %v973 = vld [vmem:[%s957 + $0x3c] sm:$0xf]
      %v990 = vunpack.c.l.b16 %v958
      %v991 = vunpack.c.l.b16 %v959
      %v992 = vunpack.c.l.b16 %v960
      %v993 = vunpack.c.l.b16 %v961
      %v994 = vunpack.c.l.b16 %v962
      %v995 = vunpack.c.l.b16 %v963
      %v996 = vunpack.c.l.b16 %v964
      %v997 = vunpack.c.l.b16 %v965
      %v998 = vunpack.c.l.b16 %v966
      %v999 = vunpack.c.l.b16 %v967
      %v1000 = vunpack.c.l.b16 %v968
      %v1001 = vunpack.c.l.b16 %v969
      %v1002 = vunpack.c.l.b16 %v970
      %v1003 = vunpack.c.l.b16 %v971
      %v1004 = vunpack.c.l.b16 %v972
      %v1005 = vunpack.c.l.b16 %v973
      %v1006 = vpack.c.b16 %v991, %v990
      %v1007 = vpack.c.b16 %v993, %v992
      %v1008 = vpack.c.b16 %v995, %v994
      %v1009 = vpack.c.b16 %v997, %v996
      %v1010 = vpack.c.b16 %v999, %v998
      %v1011 = vpack.c.b16 %v1001, %v1000
      %v1012 = vpack.c.b16 %v1003, %v1002
      %v1013 = vpack.c.b16 %v1005, %v1004
      %1022 = vmatprep.subr.bf16.mxu0 0
      %1023 = vmatpush1.bf16.msra.mxu0 %v1006
      %1024 = vmatprep.subr.bf16.mxu0 0
      %1025 = vmatpush1.bf16.msra.mxu0 %v1007
      %1026 = vmatprep.subr.bf16.mxu0 0
      %1027 = vmatpush1.bf16.msra.mxu0 %v1008
      %1028 = vmatprep.subr.bf16.mxu0 0
      %1029 = vmatpush1.bf16.msra.mxu0 %v1009
      %1030 = vmatprep.subr.bf16.mxu0 0
      %1031 = vmatpush1.bf16.msra.mxu0 %v1010
      %1032 = vmatprep.subr.bf16.mxu0 0
      %1033 = vmatpush1.bf16.msra.mxu0 %v1011
      %1034 = vmatprep.subr.bf16.mxu0 0
      %1035 = vmatpush1.bf16.msra.mxu0 %v1012
      %1036 = vmatprep.subr.bf16.mxu0 0
      %1037 = vmatpush1.bf16.msra.mxu0 %v1013
      %1038 = vmatprep.subr.bf16.mxu0 0
      %1039 = vmatpush1.bf16.msra.mxu0 0
      %1040 = vmatprep.subr.bf16.mxu0 0
      %1041 = vmatpush1.bf16.msra.mxu0 0
      %1042 = vmatprep.subr.bf16.mxu0 0
      %1043 = vmatpush1.bf16.msra.mxu0 0
      %1044 = vmatprep.subr.bf16.mxu0 0
      %1045 = vmatpush1.bf16.msra.mxu0 0
      %1046 = vmatprep.subr.bf16.mxu0 0
      %1047 = vmatpush1.bf16.msra.mxu0 0
      %1048 = vmatprep.subr.bf16.mxu0 0
      %1049 = vmatpush1.bf16.msra.mxu0 0
      %1050 = vmatprep.subr.bf16.mxu0 0
      %1051 = vmatpush1.bf16.msra.mxu0 0
      %1052 = vmatprep.subr.bf16.mxu0 0
      %1053 = vmatpush1.bf16.msra.mxu0 0
      %1054 = vmatprep.mubr.bf16.mxu0 0
      %1055 = vmatmul.mubr.bf16.gmra.mrb[0].mxu0 %v760
      %v1056 = vpop.f32.mrb[0].mxu0
      %v1057 = vadd.f32 0.0, %v1056
      %v1058 = vpop.f32.mrb[0].mxu0
      %v1059 = vpop.f32.mrb[0].mxu0
      %v1060 = vadd.f32 0.0, %v1059
      %v1061 = vpop.f32.mrb[0].mxu0
      %1062 = vmatprep.mubr.bf16.mxu0 0
      %1063 = vmatmul.mubr.bf16.gmra.mrb[0].mxu0 %v772
      %v1064 = vpop.f32.mrb[0].mxu0
      %v1065 = vadd.f32 0.0, %v1064
      %v1066 = vpop.f32.mrb[0].mxu0
      %v1067 = vpop.f32.mrb[0].mxu0
      %v1068 = vadd.f32 0.0, %v1067
      %v1069 = vpop.f32.mrb[0].mxu0
      %1070 = vmatprep.mubr.bf16.mxu0 0
      %1071 = vmatmul.mubr.bf16.gmra.mrb[0].mxu0 %v784
      %v1072 = vpop.f32.mrb[0].mxu0
      %v1073 = vadd.f32 0.0, %v1072
      %v1074 = vpop.f32.mrb[0].mxu0
      %v1075 = vpop.f32.mrb[0].mxu0
      %v1076 = vadd.f32 0.0, %v1075
      %v1077 = vpop.f32.mrb[0].mxu0
      %1078 = vmatprep.mubr.bf16.mxu0 0
      %1079 = vmatmul.mubr.bf16.gmra.mrb[0].mxu0 %v796
      %v1080 = vpop.f32.mrb[0].mxu0
      %v1081 = vadd.f32 0.0, %v1080
      %v1082 = vpop.f32.mrb[0].mxu0
      %v1083 = vpop.f32.mrb[0].mxu0
      %v1084 = vadd.f32 0.0, %v1083
      %v1085 = vpop.f32.mrb[0].mxu0
      %1086 = vmatprep.mubr.bf16.mxu0 0
      %1087 = vmatmul.mubr.bf16.gmra.mrb[0].mxu0 %v808
      %v1088 = vpop.f32.mrb[0].mxu0
      %v1089 = vadd.f32 0.0, %v1088
      %v1090 = vpop.f32.mrb[0].mxu0
      %v1091 = vpop.f32.mrb[0].mxu0
      %v1092 = vadd.f32 0.0, %v1091
      %v1093 = vpop.f32.mrb[0].mxu0
      %1094 = vmatprep.mubr.bf16.mxu0 0
      %1095 = vmatmul.mubr.bf16.gmra.mrb[0].mxu0 %v820
      %v1096 = vpop.f32.mrb[0].mxu0
      %v1097 = vadd.f32 0.0, %v1096
      %v1098 = vpop.f32.mrb[0].mxu0
      %v1099 = vpop.f32.mrb[0].mxu0
      %v1100 = vadd.f32 0.0, %v1099
      %v1101 = vpop.f32.mrb[0].mxu0
      %1102 = vmatprep.mubr.bf16.mxu0 0
      %1103 = vmatmul.mubr.bf16.gmra.mrb[0].mxu0 %v832
      %v1104 = vpop.f32.mrb[0].mxu0
      %v1105 = vadd.f32 0.0, %v1104
      %v1106 = vpop.f32.mrb[0].mxu0
      %v1107 = vpop.f32.mrb[0].mxu0
      %v1108 = vadd.f32 0.0, %v1107
      %v1109 = vpop.f32.mrb[0].mxu0
      %1110 = vmatprep.mubr.bf16.mxu0 0
      %1111 = vmatmul.mubr.bf16.gmra.mrb[0].mxu0 %v844
      %v1112 = vpop.f32.mrb[0].mxu0
      %v1113 = vadd.f32 0.0, %v1112
      %v1114 = vpop.f32.mrb[0].mxu0
      %v1115 = vpop.f32.mrb[0].mxu0
      %v1116 = vadd.f32 0.0, %v1115
      %v1117 = vpop.f32.mrb[0].mxu0
      %1118 = vmatprep.mubr.bf16.mxu0 0
      %1119 = vmatmul.mubr.bf16.gmra.mrb[0].mxu0 %v856
      %v1120 = vpop.f32.mrb[0].mxu0
      %v1121 = vadd.f32 0.0, %v1120
      %v1122 = vpop.f32.mrb[0].mxu0
      %v1123 = vpop.f32.mrb[0].mxu0
      %v1124 = vadd.f32 0.0, %v1123
      %v1125 = vpop.f32.mrb[0].mxu0
      %1126 = vmatprep.mubr.bf16.mxu0 0
      %1127 = vmatmul.mubr.bf16.gmra.mrb[0].mxu0 %v868
      %v1128 = vpop.f32.mrb[0].mxu0
      %v1129 = vadd.f32 0.0, %v1128
      %v1130 = vpop.f32.mrb[0].mxu0
      %v1131 = vpop.f32.mrb[0].mxu0
      %v1132 = vadd.f32 0.0, %v1131
      %v1133 = vpop.f32.mrb[0].mxu0
      %1134 = vmatprep.mubr.bf16.mxu0 0
      %1135 = vmatmul.mubr.bf16.gmra.mrb[0].mxu0 %v880
      %v1136 = vpop.f32.mrb[0].mxu0
      %v1137 = vadd.f32 0.0, %v1136
      %v1138 = vpop.f32.mrb[0].mxu0
      %v1139 = vpop.f32.mrb[0].mxu0
      %v1140 = vadd.f32 0.0, %v1139
      %v1141 = vpop.f32.mrb[0].mxu0
      %1142 = vmatprep.mubr.bf16.mxu0 0
      %1143 = vmatmul.mubr.bf16.gmra.mrb[0].mxu0 %v892
      %v1144 = vpop.f32.mrb[0].mxu0
      %v1145 = vadd.f32 0.0, %v1144
      %v1146 = vpop.f32.mrb[0].mxu0
      %v1147 = vpop.f32.mrb[0].mxu0
      %v1148 = vadd.f32 0.0, %v1147
      %v1149 = vpop.f32.mrb[0].mxu0
      %1150 = vmatprep.mubr.bf16.mxu0 0
      %1151 = vmatmul.mubr.bf16.gmra.mrb[0].mxu0 %v904
      %v1152 = vpop.f32.mrb[0].mxu0
      %v1153 = vadd.f32 0.0, %v1152
      %v1154 = vpop.f32.mrb[0].mxu0
      %v1155 = vpop.f32.mrb[0].mxu0
      %v1156 = vadd.f32 0.0, %v1155
      %v1157 = vpop.f32.mrb[0].mxu0
      %1158 = vmatprep.mubr.bf16.mxu0 0
      %1159 = vmatmul.mubr.bf16.gmra.mrb[0].mxu0 %v916
      %v1160 = vpop.f32.mrb[0].mxu0
      %v1161 = vadd.f32 0.0, %v1160
      %v1162 = vpop.f32.mrb[0].mxu0
      %v1163 = vpop.f32.mrb[0].mxu0
      %v1164 = vadd.f32 0.0, %v1163
      %v1165 = vpop.f32.mrb[0].mxu0
      %1166 = vmatprep.mubr.bf16.mxu0 0
      %1167 = vmatmul.mubr.bf16.gmra.mrb[0].mxu0 %v928
      %v1168 = vpop.f32.mrb[0].mxu0
      %v1169 = vadd.f32 0.0, %v1168
      %v1170 = vpop.f32.mrb[0].mxu0
      %v1171 = vpop.f32.mrb[0].mxu0
      %v1172 = vadd.f32 0.0, %v1171
      %v1173 = vpop.f32.mrb[0].mxu0
      %1174 = vmatprep.mubr.bf16.mxu0 0
      %1175 = vmatmul.mubr.bf16.gmra.mrb[0].mxu0 %v940
      %v1176 = vpop.f32.mrb[0].mxu0
      %v1177 = vadd.f32 0.0, %v1176
      %v1178 = vpop.f32.mrb[0].mxu0
      %v1179 = vpop.f32.mrb[0].mxu0
      %v1180 = vadd.f32 0.0, %v1179
      %v1181 = vpop.f32.mrb[0].mxu0
      %1182 = vdwg.mxu0
      %v1199 = vunpack.c.l.b16 %v732
      %v1200 = vunpack.c.l.b16 %v733
      %v1201 = vunpack.c.l.b16 %v734
      %v1202 = vunpack.c.l.b16 %v735
      %v1203 = vunpack.c.l.b16 %v736
      %v1204 = vunpack.c.l.b16 %v737
      %v1205 = vunpack.c.l.b16 %v738
      %v1206 = vunpack.c.l.b16 %v739
      %v1207 = vunpack.c.l.b16 %v740
      %v1208 = vunpack.c.l.b16 %v741
      %v1209 = vunpack.c.l.b16 %v742
      %v1210 = vunpack.c.l.b16 %v743
      %v1211 = vunpack.c.l.b16 %v744
      %v1212 = vunpack.c.l.b16 %v745
      %v1213 = vunpack.c.l.b16 %v746
      %v1214 = vunpack.c.l.b16 %v747
      %v1215 = vpack.c.b16 %v1200, %v1199
      %v1216 = vpack.c.b16 %v1202, %v1201
      %v1217 = vpack.c.b16 %v1204, %v1203
      %v1218 = vpack.c.b16 %v1206, %v1205
      %v1219 = vpack.c.b16 %v1208, %v1207
      %v1220 = vpack.c.b16 %v1210, %v1209
      %v1221 = vpack.c.b16 %v1212, %v1211
      %v1222 = vpack.c.b16 %v1214, %v1213
      %1231 = vmatprep.subr.bf16.mxu0 0
      %1232 = vmatpush1.bf16.msra.mxu0 %v1215
      %1233 = vmatprep.subr.bf16.mxu0 0
      %1234 = vmatpush1.bf16.msra.mxu0 %v1216
      %1235 = vmatprep.subr.bf16.mxu0 0
      %1236 = vmatpush1.bf16.msra.mxu0 %v1217
      %1237 = vmatprep.subr.bf16.mxu0 0
      %1238 = vmatpush1.bf16.msra.mxu0 %v1218
      %1239 = vmatprep.subr.bf16.mxu0 0
      %1240 = vmatpush1.bf16.msra.mxu0 %v1219
      %1241 = vmatprep.subr.bf16.mxu0 0
      %1242 = vmatpush1.bf16.msra.mxu0 %v1220
      %1243 = vmatprep.subr.bf16.mxu0 0
      %1244 = vmatpush1.bf16.msra.mxu0 %v1221
      %1245 = vmatprep.subr.bf16.mxu0 0
      %1246 = vmatpush1.bf16.msra.mxu0 %v1222
      %1247 = vmatprep.subr.bf16.mxu0 0
      %1248 = vmatpush1.bf16.msra.mxu0 0
      %1249 = vmatprep.subr.bf16.mxu0 0
      %1250 = vmatpush1.bf16.msra.mxu0 0
      %1251 = vmatprep.subr.bf16.mxu0 0
      %1252 = vmatpush1.bf16.msra.mxu0 0
      %1253 = vmatprep.subr.bf16.mxu0 0
      %1254 = vmatpush1.bf16.msra.mxu0 0
      %1255 = vmatprep.subr.bf16.mxu0 0
      %1256 = vmatpush1.bf16.msra.mxu0 0
      %1257 = vmatprep.subr.bf16.mxu0 0
      %1258 = vmatpush1.bf16.msra.mxu0 0
      %1259 = vmatprep.subr.bf16.mxu0 0
      %1260 = vmatpush1.bf16.msra.mxu0 0
      %1261 = vmatprep.subr.bf16.mxu0 0
      %1262 = vmatpush1.bf16.msra.mxu0 0
      %1263 = vmatprep.mubr.bf16.mxu0 0
      %1264 = vmatmul.mubr.bf16.gmra.mrb[0].mxu0 %v696
      %v1265 = vpop.f32.mrb[0].mxu0
      %v1266 = vadd.f32 %v1057, %v1265
      %v1267 = vpop.f32.mrb[0].mxu0
      %v1268 = vpop.f32.mrb[0].mxu0
      %v1269 = vadd.f32 %v1060, %v1268
      %v1270 = vpop.f32.mrb[0].mxu0
      %1271 = vmatprep.mubr.bf16.mxu0 0
      %1272 = vmatmul.mubr.bf16.gmra.mrb[0].mxu0 %v698
      %v1273 = vpop.f32.mrb[0].mxu0
      %v1274 = vadd.f32 %v1065, %v1273
      %v1275 = vpop.f32.mrb[0].mxu0
      %v1276 = vpop.f32.mrb[0].mxu0
      %v1277 = vadd.f32 %v1068, %v1276
      %v1278 = vpop.f32.mrb[0].mxu0
      %1279 = vmatprep.mubr.bf16.mxu0 0
      %1280 = vmatmul.mubr.bf16.gmra.mrb[0].mxu0 %v700
      %v1281 = vpop.f32.mrb[0].mxu0
      %v1282 = vadd.f32 %v1073, %v1281
      %v1283 = vpop.f32.mrb[0].mxu0
      %v1284 = vpop.f32.mrb[0].mxu0
      %v1285 = vadd.f32 %v1076, %v1284
      %v1286 = vpop.f32.mrb[0].mxu0
      %1287 = vmatprep.mubr.bf16.mxu0 0
      %1288 = vmatmul.mubr.bf16.gmra.mrb[0].mxu0 %v702
      %v1289 = vpop.f32.mrb[0].mxu0
      %v1290 = vadd.f32 %v1081, %v1289
      %v1291 = vpop.f32.mrb[0].mxu0
      %v1292 = vpop.f32.mrb[0].mxu0
      %v1293 = vadd.f32 %v1084, %v1292
      %v1294 = vpop.f32.mrb[0].mxu0
      %1295 = vmatprep.mubr.bf16.mxu0 0
      %1296 = vmatmul.mubr.bf16.gmra.mrb[0].mxu0 %v704
      %v1297 = vpop.f32.mrb[0].mxu0
      %v1298 = vadd.f32 %v1089, %v1297
      %v1299 = vpop.f32.mrb[0].mxu0
      %v1300 = vpop.f32.mrb[0].mxu0
      %v1301 = vadd.f32 %v1092, %v1300
      %v1302 = vpop.f32.mrb[0].mxu0
      %1303 = vmatprep.mubr.bf16.mxu0 0
      %1304 = vmatmul.mubr.bf16.gmra.mrb[0].mxu0 %v706
      %v1305 = vpop.f32.mrb[0].mxu0
      %v1306 = vadd.f32 %v1097, %v1305
      %v1307 = vpop.f32.mrb[0].mxu0
      %v1308 = vpop.f32.mrb[0].mxu0
      %v1309 = vadd.f32 %v1100, %v1308
      %v1310 = vpop.f32.mrb[0].mxu0
      %1311 = vmatprep.mubr.bf16.mxu0 0
      %1312 = vmatmul.mubr.bf16.gmra.mrb[0].mxu0 %v708
      %v1313 = vpop.f32.mrb[0].mxu0
      %v1314 = vadd.f32 %v1105, %v1313
      %v1315 = vpop.f32.mrb[0].mxu0
      %v1316 = vpop.f32.mrb[0].mxu0
      %v1317 = vadd.f32 %v1108, %v1316
      %v1318 = vpop.f32.mrb[0].mxu0
      %1319 = vmatprep.mubr.bf16.mxu0 0
      %1320 = vmatmul.mubr.bf16.gmra.mrb[0].mxu0 %v710
      %v1321 = vpop.f32.mrb[0].mxu0
      %v1322 = vadd.f32 %v1113, %v1321
      %v1323 = vpop.f32.mrb[0].mxu0
      %v1324 = vpop.f32.mrb[0].mxu0
      %v1325 = vadd.f32 %v1116, %v1324
      %v1326 = vpop.f32.mrb[0].mxu0
      %1327 = vmatprep.mubr.bf16.mxu0 0
      %1328 = vmatmul.mubr.bf16.gmra.mrb[0].mxu0 %v712
      %v1329 = vpop.f32.mrb[0].mxu0
      %v1330 = vadd.f32 %v1121, %v1329
      %v1331 = vpop.f32.mrb[0].mxu0
      %v1332 = vpop.f32.mrb[0].mxu0
      %v1333 = vadd.f32 %v1124, %v1332
      %v1334 = vpop.f32.mrb[0].mxu0
      %1335 = vmatprep.mubr.bf16.mxu0 0
      %1336 = vmatmul.mubr.bf16.gmra.mrb[0].mxu0 %v714
      %v1337 = vpop.f32.mrb[0].mxu0
      %v1338 = vadd.f32 %v1129, %v1337
      %v1339 = vpop.f32.mrb[0].mxu0
      %v1340 = vpop.f32.mrb[0].mxu0
      %v1341 = vadd.f32 %v1132, %v1340
      %v1342 = vpop.f32.mrb[0].mxu0
      %1343 = vmatprep.mubr.bf16.mxu0 0
      %1344 = vmatmul.mubr.bf16.gmra.mrb[0].mxu0 %v716
      %v1345 = vpop.f32.mrb[0].mxu0
      %v1346 = vadd.f32 %v1137, %v1345
      %v1347 = vpop.f32.mrb[0].mxu0
      %v1348 = vpop.f32.mrb[0].mxu0
      %v1349 = vadd.f32 %v1140, %v1348
      %v1350 = vpop.f32.mrb[0].mxu0
      %1351 = vmatprep.mubr.bf16.mxu0 0
      %1352 = vmatmul.mubr.bf16.gmra.mrb[0].mxu0 %v718
      %v1353 = vpop.f32.mrb[0].mxu0
      %v1354 = vadd.f32 %v1145, %v1353
      %v1355 = vpop.f32.mrb[0].mxu0
      %v1356 = vpop.f32.mrb[0].mxu0
      %v1357 = vadd.f32 %v1148, %v1356
      %v1358 = vpop.f32.mrb[0].mxu0
      %1359 = vmatprep.mubr.bf16.mxu0 0
      %1360 = vmatmul.mubr.bf16.gmra.mrb[0].mxu0 %v720
      %v1361 = vpop.f32.mrb[0].mxu0
      %v1362 = vadd.f32 %v1153, %v1361
      %v1363 = vpop.f32.mrb[0].mxu0
      %v1364 = vpop.f32.mrb[0].mxu0
      %v1365 = vadd.f32 %v1156, %v1364
      %v1366 = vpop.f32.mrb[0].mxu0
      %1367 = vmatprep.mubr.bf16.mxu0 0
      %1368 = vmatmul.mubr.bf16.gmra.mrb[0].mxu0 %v722
      %v1369 = vpop.f32.mrb[0].mxu0
      %v1370 = vadd.f32 %v1161, %v1369
      %v1371 = vpop.f32.mrb[0].mxu0
      %v1372 = vpop.f32.mrb[0].mxu0
      %v1373 = vadd.f32 %v1164, %v1372
      %v1374 = vpop.f32.mrb[0].mxu0
      %1375 = vmatprep.mubr.bf16.mxu0 0
      %1376 = vmatmul.mubr.bf16.gmra.mrb[0].mxu0 %v724
      %v1377 = vpop.f32.mrb[0].mxu0
      %v1378 = vadd.f32 %v1169, %v1377
      %v1379 = vpop.f32.mrb[0].mxu0
      %v1380 = vpop.f32.mrb[0].mxu0
      %v1381 = vadd.f32 %v1172, %v1380
      %v1382 = vpop.f32.mrb[0].mxu0
      %1383 = vmatprep.mubr.bf16.mxu0 0
      %1384 = vmatmul.mubr.bf16.gmra.mrb[0].mxu0 %v726
      %v1385 = vpop.f32.mrb[0].mxu0
      %v1386 = vadd.f32 %v1177, %v1385
      %v1387 = vpop.f32.mrb[0].mxu0
      %v1388 = vpop.f32.mrb[0].mxu0
      %v1389 = vadd.f32 %v1180, %v1388
      %v1390 = vpop.f32.mrb[0].mxu0
      %1391 = vdwg.mxu0
      %vm1424 = vcmask 1046528
      %v1425 = vrot.slane %v696, 1
      %v1426 = vrot.slane %v697, 1
      %v1427 = vsel %vm1424, %v1425, %v1426
      %v1428 = vrot.slane %v698, 1
      %v1429 = vrot.slane %v699, 1
      %v1430 = vsel %vm1424, %v1428, %v1429
      %v1431 = vrot.slane %v700, 1
      %v1432 = vrot.slane %v701, 1
      %v1433 = vsel %vm1424, %v1431, %v1432
      %v1434 = vrot.slane %v702, 1
      %v1435 = vrot.slane %v703, 1
      %v1436 = vsel %vm1424, %v1434, %v1435
      %v1437 = vrot.slane %v704, 1
      %v1438 = vrot.slane %v705, 1
      %v1439 = vsel %vm1424, %v1437, %v1438
      %v1440 = vrot.slane %v706, 1
      %v1441 = vrot.slane %v707, 1
      %v1442 = vsel %vm1424, %v1440, %v1441
      %v1443 = vrot.slane %v708, 1
      %v1444 = vrot.slane %v709, 1
      %v1445 = vsel %vm1424, %v1443, %v1444
      %v1446 = vrot.slane %v710, 1
      %v1447 = vrot.slane %v711, 1
      %v1448 = vsel %vm1424, %v1446, %v1447
      %v1449 = vrot.slane %v712, 1
      %v1450 = vrot.slane %v713, 1
      %v1451 = vsel %vm1424, %v1449, %v1450
      %v1452 = vrot.slane %v714, 1
      %v1453 = vrot.slane %v715, 1
      %v1454 = vsel %vm1424, %v1452, %v1453
      %v1455 = vrot.slane %v716, 1
      %v1456 = vrot.slane %v717, 1
      %v1457 = vsel %vm1424, %v1455, %v1456
      %v1458 = vrot.slane %v718, 1
      %v1459 = vrot.slane %v719, 1
      %v1460 = vsel %vm1424, %v1458, %v1459
      %v1461 = vrot.slane %v720, 1
      %v1462 = vrot.slane %v721, 1
      %v1463 = vsel %vm1424, %v1461, %v1462
      %v1464 = vrot.slane %v722, 1
      %v1465 = vrot.slane %v723, 1
      %v1466 = vsel %vm1424, %v1464, %v1465
      %v1467 = vrot.slane %v724, 1
      %v1468 = vrot.slane %v725, 1
      %v1469 = vsel %vm1424, %v1467, %v1468
      %v1470 = vrot.slane %v726, 1
      %v1471 = vrot.slane %v727, 1
      %v1472 = vsel %vm1424, %v1470, %v1471
      %s1489 = scalar_lea.vmem %s3, 128
      %v1490 = vld [vmem:[%s1489] sm:$0xf]
      %v1491 = vld [vmem:[%s1489 + $0x4] sm:$0xf]
      %v1492 = vld [vmem:[%s1489 + $0x8] sm:$0xf]
      %v1493 = vld [vmem:[%s1489 + $0xc] sm:$0xf]
      %v1494 = vld [vmem:[%s1489 + $0x10] sm:$0xf]
      %v1495 = vld [vmem:[%s1489 + $0x14] sm:$0xf]
      %v1496 = vld [vmem:[%s1489 + $0x18] sm:$0xf]
      %v1497 = vld [vmem:[%s1489 + $0x1c] sm:$0xf]
      %v1498 = vld [vmem:[%s1489 + $0x20] sm:$0xf]
      %v1499 = vld [vmem:[%s1489 + $0x24] sm:$0xf]
      %v1500 = vld [vmem:[%s1489 + $0x28] sm:$0xf]
      %v1501 = vld [vmem:[%s1489 + $0x2c] sm:$0xf]
      %v1502 = vld [vmem:[%s1489 + $0x30] sm:$0xf]
      %v1503 = vld [vmem:[%s1489 + $0x34] sm:$0xf]
      %v1504 = vld [vmem:[%s1489 + $0x38] sm:$0xf]
      %v1505 = vld [vmem:[%s1489 + $0x3c] sm:$0xf]
      %v1522 = vunpack.c.l.b16 %v1490
      %v1523 = vunpack.c.l.b16 %v1491
      %v1524 = vunpack.c.l.b16 %v1492
      %v1525 = vunpack.c.l.b16 %v1493
      %v1526 = vunpack.c.l.b16 %v1494
      %v1527 = vunpack.c.l.b16 %v1495
      %v1528 = vunpack.c.l.b16 %v1496
      %v1529 = vunpack.c.l.b16 %v1497
      %v1530 = vunpack.c.l.b16 %v1498
      %v1531 = vunpack.c.l.b16 %v1499
      %v1532 = vunpack.c.l.b16 %v1500
      %v1533 = vunpack.c.l.b16 %v1501
      %v1534 = vunpack.c.l.b16 %v1502
      %v1535 = vunpack.c.l.b16 %v1503
      %v1536 = vunpack.c.l.b16 %v1504
      %v1537 = vunpack.c.l.b16 %v1505
      %v1538 = vpack.c.b16 %v1523, %v1522
      %v1539 = vpack.c.b16 %v1525, %v1524
      %v1540 = vpack.c.b16 %v1527, %v1526
      %v1541 = vpack.c.b16 %v1529, %v1528
      %v1542 = vpack.c.b16 %v1531, %v1530
      %v1543 = vpack.c.b16 %v1533, %v1532
      %v1544 = vpack.c.b16 %v1535, %v1534
      %v1545 = vpack.c.b16 %v1537, %v1536
      %1554 = vmatprep.subr.bf16.mxu0 0
      %1555 = vmatpush1.bf16.msra.mxu0 %v1538
      %1556 = vmatprep.subr.bf16.mxu0 0
      %1557 = vmatpush1.bf16.msra.mxu0 %v1539
      %1558 = vmatprep.subr.bf16.mxu0 0
      %1559 = vmatpush1.bf16.msra.mxu0 %v1540
      %1560 = vmatprep.subr.bf16.mxu0 0
      %1561 = vmatpush1.bf16.msra.mxu0 %v1541
      %1562 = vmatprep.subr.bf16.mxu0 0
      %1563 = vmatpush1.bf16.msra.mxu0 %v1542
      %1564 = vmatprep.subr.bf16.mxu0 0
      %1565 = vmatpush1.bf16.msra.mxu0 %v1543
      %1566 = vmatprep.subr.bf16.mxu0 0
      %1567 = vmatpush1.bf16.msra.mxu0 %v1544
      %1568 = vmatprep.subr.bf16.mxu0 0
      %1569 = vmatpush1.bf16.msra.mxu0 %v1545
      %1570 = vmatprep.subr.bf16.mxu0 0
      %1571 = vmatpush1.bf16.msra.mxu0 0
      %1572 = vmatprep.subr.bf16.mxu0 0
      %1573 = vmatpush1.bf16.msra.mxu0 0
      %1574 = vmatprep.subr.bf16.mxu0 0
      %1575 = vmatpush1.bf16.msra.mxu0 0
      %1576 = vmatprep.subr.bf16.mxu0 0
      %1577 = vmatpush1.bf16.msra.mxu0 0
      %1578 = vmatprep.subr.bf16.mxu0 0
      %1579 = vmatpush1.bf16.msra.mxu0 0
      %1580 = vmatprep.subr.bf16.mxu0 0
      %1581 = vmatpush1.bf16.msra.mxu0 0
      %1582 = vmatprep.subr.bf16.mxu0 0
      %1583 = vmatpush1.bf16.msra.mxu0 0
      %1584 = vmatprep.subr.bf16.mxu0 0
      %1585 = vmatpush1.bf16.msra.mxu0 0
      %1586 = vmatprep.mubr.bf16.mxu0 0
      %1587 = vmatmul.mubr.bf16.gmra.mrb[0].mxu0 %v1427
      %v1588 = vpop.f32.mrb[0].mxu0
      %v1589 = vadd.f32 0.0, %v1588
      %v1590 = vpop.f32.mrb[0].mxu0
      %v1591 = vpop.f32.mrb[0].mxu0
      %v1592 = vadd.f32 0.0, %v1591
      %v1593 = vpop.f32.mrb[0].mxu0
      %1594 = vmatprep.mubr.bf16.mxu0 0
      %1595 = vmatmul.mubr.bf16.gmra.mrb[0].mxu0 %v1430
      %v1596 = vpop.f32.mrb[0].mxu0
      %v1597 = vadd.f32 0.0, %v1596
      %v1598 = vpop.f32.mrb[0].mxu0
      %v1599 = vpop.f32.mrb[0].mxu0
      %v1600 = vadd.f32 0.0, %v1599
      %v1601 = vpop.f32.mrb[0].mxu0
      %1602 = vmatprep.mubr.bf16.mxu0 0
      %1603 = vmatmul.mubr.bf16.gmra.mrb[0].mxu0 %v1433
      %v1604 = vpop.f32.mrb[0].mxu0
      %v1605 = vadd.f32 0.0, %v1604
      %v1606 = vpop.f32.mrb[0].mxu0
      %v1607 = vpop.f32.mrb[0].mxu0
      %v1608 = vadd.f32 0.0, %v1607
      %v1609 = vpop.f32.mrb[0].mxu0
      %1610 = vmatprep.mubr.bf16.mxu0 0
      %1611 = vmatmul.mubr.bf16.gmra.mrb[0].mxu0 %v1436
      %v1612 = vpop.f32.mrb[0].mxu0
      %v1613 = vadd.f32 0.0, %v1612
      %v1614 = vpop.f32.mrb[0].mxu0
      %v1615 = vpop.f32.mrb[0].mxu0
      %v1616 = vadd.f32 0.0, %v1615
      %v1617 = vpop.f32.mrb[0].mxu0
      %1618 = vmatprep.mubr.bf16.mxu0 0
      %1619 = vmatmul.mubr.bf16.gmra.mrb[0].mxu0 %v1439
      %v1620 = vpop.f32.mrb[0].mxu0
      %v1621 = vadd.f32 0.0, %v1620
      %v1622 = vpop.f32.mrb[0].mxu0
      %v1623 = vpop.f32.mrb[0].mxu0
      %v1624 = vadd.f32 0.0, %v1623
      %v1625 = vpop.f32.mrb[0].mxu0
      %1626 = vmatprep.mubr.bf16.mxu0 0
      %1627 = vmatmul.mubr.bf16.gmra.mrb[0].mxu0 %v1442
      %v1628 = vpop.f32.mrb[0].mxu0
      %v1629 = vadd.f32 0.0, %v1628
      %v1630 = vpop.f32.mrb[0].mxu0
      %v1631 = vpop.f32.mrb[0].mxu0
      %v1632 = vadd.f32 0.0, %v1631
      %v1633 = vpop.f32.mrb[0].mxu0
      %1634 = vmatprep.mubr.bf16.mxu0 0
      %1635 = vmatmul.mubr.bf16.gmra.mrb[0].mxu0 %v1445
      %v1636 = vpop.f32.mrb[0].mxu0
      %v1637 = vadd.f32 0.0, %v1636
      %v1638 = vpop.f32.mrb[0].mxu0
      %v1639 = vpop.f32.mrb[0].mxu0
      %v1640 = vadd.f32 0.0, %v1639
      %v1641 = vpop.f32.mrb[0].mxu0
      %1642 = vmatprep.mubr.bf16.mxu0 0
      %1643 = vmatmul.mubr.bf16.gmra.mrb[0].mxu0 %v1448
      %v1644 = vpop.f32.mrb[0].mxu0
      %v1645 = vadd.f32 0.0, %v1644
      %v1646 = vpop.f32.mrb[0].mxu0
      %v1647 = vpop.f32.mrb[0].mxu0
      %v1648 = vadd.f32 0.0, %v1647
      %v1649 = vpop.f32.mrb[0].mxu0
      %1650 = vmatprep.mubr.bf16.mxu0 0
      %1651 = vmatmul.mubr.bf16.gmra.mrb[0].mxu0 %v1451
      %v1652 = vpop.f32.mrb[0].mxu0
      %v1653 = vadd.f32 0.0, %v1652
      %v1654 = vpop.f32.mrb[0].mxu0
      %v1655 = vpop.f32.mrb[0].mxu0
      %v1656 = vadd.f32 0.0, %v1655
      %v1657 = vpop.f32.mrb[0].mxu0
      %1658 = vmatprep.mubr.bf16.mxu0 0
      %1659 = vmatmul.mubr.bf16.gmra.mrb[0].mxu0 %v1454
      %v1660 = vpop.f32.mrb[0].mxu0
      %v1661 = vadd.f32 0.0, %v1660
      %v1662 = vpop.f32.mrb[0].mxu0
      %v1663 = vpop.f32.mrb[0].mxu0
      %v1664 = vadd.f32 0.0, %v1663
      %v1665 = vpop.f32.mrb[0].mxu0
      %1666 = vmatprep.mubr.bf16.mxu0 0
      %1667 = vmatmul.mubr.bf16.gmra.mrb[0].mxu0 %v1457
      %v1668 = vpop.f32.mrb[0].mxu0
      %v1669 = vadd.f32 0.0, %v1668
      %v1670 = vpop.f32.mrb[0].mxu0
      %v1671 = vpop.f32.mrb[0].mxu0
      %v1672 = vadd.f32 0.0, %v1671
      %v1673 = vpop.f32.mrb[0].mxu0
      %1674 = vmatprep.mubr.bf16.mxu0 0
      %1675 = vmatmul.mubr.bf16.gmra.mrb[0].mxu0 %v1460
      %v1676 = vpop.f32.mrb[0].mxu0
      %v1677 = vadd.f32 0.0, %v1676
      %v1678 = vpop.f32.mrb[0].mxu0
      %v1679 = vpop.f32.mrb[0].mxu0
      %v1680 = vadd.f32 0.0, %v1679
      %v1681 = vpop.f32.mrb[0].mxu0
      %1682 = vmatprep.mubr.bf16.mxu0 0
      %1683 = vmatmul.mubr.bf16.gmra.mrb[0].mxu0 %v1463
      %v1684 = vpop.f32.mrb[0].mxu0
      %v1685 = vadd.f32 0.0, %v1684
      %v1686 = vpop.f32.mrb[0].mxu0
      %v1687 = vpop.f32.mrb[0].mxu0
      %v1688 = vadd.f32 0.0, %v1687
      %v1689 = vpop.f32.mrb[0].mxu0
      %1690 = vmatprep.mubr.bf16.mxu0 0
      %1691 = vmatmul.mubr.bf16.gmra.mrb[0].mxu0 %v1466
      %v1692 = vpop.f32.mrb[0].mxu0
      %v1693 = vadd.f32 0.0, %v1692
      %v1694 = vpop.f32.mrb[0].mxu0
      %v1695 = vpop.f32.mrb[0].mxu0
      %v1696 = vadd.f32 0.0, %v1695
      %v1697 = vpop.f32.mrb[0].mxu0
      %1698 = vmatprep.mubr.bf16.mxu0 0
      %1699 = vmatmul.mubr.bf16.gmra.mrb[0].mxu0 %v1469
      %v1700 = vpop.f32.mrb[0].mxu0
      %v1701 = vadd.f32 0.0, %v1700
      %v1702 = vpop.f32.mrb[0].mxu0
      %v1703 = vpop.f32.mrb[0].mxu0
      %v1704 = vadd.f32 0.0, %v1703
      %v1705 = vpop.f32.mrb[0].mxu0
      %1706 = vmatprep.mubr.bf16.mxu0 0
      %1707 = vmatmul.mubr.bf16.gmra.mrb[0].mxu0 %v1472
      %v1708 = vpop.f32.mrb[0].mxu0
      %v1709 = vadd.f32 0.0, %v1708
      %v1710 = vpop.f32.mrb[0].mxu0
      %v1711 = vpop.f32.mrb[0].mxu0
      %v1712 = vadd.f32 0.0, %v1711
      %v1713 = vpop.f32.mrb[0].mxu0
      %1714 = vdwg.mxu0
      %v1715 = vadd.f32 %v1266, %v1589
      %v1716 = vadd.f32 %v1269, %v1592
      %v1717 = vadd.f32 %v1274, %v1597
      %v1718 = vadd.f32 %v1277, %v1600
      %v1719 = vadd.f32 %v1282, %v1605
      %v1720 = vadd.f32 %v1285, %v1608
      %v1721 = vadd.f32 %v1290, %v1613
      %v1722 = vadd.f32 %v1293, %v1616
      %v1723 = vadd.f32 %v1298, %v1621
      %v1724 = vadd.f32 %v1301, %v1624
      %v1725 = vadd.f32 %v1306, %v1629
      %v1726 = vadd.f32 %v1309, %v1632
      %v1727 = vadd.f32 %v1314, %v1637
      %v1728 = vadd.f32 %v1317, %v1640
      %v1729 = vadd.f32 %v1322, %v1645
      %v1730 = vadd.f32 %v1325, %v1648
      %v1731 = vadd.f32 %v1330, %v1653
      %v1732 = vadd.f32 %v1333, %v1656
      %v1733 = vadd.f32 %v1338, %v1661
      %v1734 = vadd.f32 %v1341, %v1664
      %v1735 = vadd.f32 %v1346, %v1669
      %v1736 = vadd.f32 %v1349, %v1672
      %v1737 = vadd.f32 %v1354, %v1677
      %v1738 = vadd.f32 %v1357, %v1680
      %v1739 = vadd.f32 %v1362, %v1685
      %v1740 = vadd.f32 %v1365, %v1688
      %v1741 = vadd.f32 %v1370, %v1693
      %v1742 = vadd.f32 %v1373, %v1696
      %v1743 = vadd.f32 %v1378, %v1701
      %v1744 = vadd.f32 %v1381, %v1704
      %v1745 = vadd.f32 %v1386, %v1709
      %v1746 = vadd.f32 %v1389, %v1712
      %s1747 = scalar_lea.vmem %s3, 192
      %v1748 = vld [vmem:[%s1747] sm:$0xf]
      %v1749 = vld [vmem:[%s1747 + $0x4] sm:$0xf]
      %v1750 = vld [vmem:[%s1747 + $0x8] sm:$0xf]
      %v1751 = vld [vmem:[%s1747 + $0xc] sm:$0xf]
      %v1752 = vld [vmem:[%s1747 + $0x10] sm:$0xf]
      %v1753 = vld [vmem:[%s1747 + $0x14] sm:$0xf]
      %v1754 = vld [vmem:[%s1747 + $0x18] sm:$0xf]
      %v1755 = vld [vmem:[%s1747 + $0x1c] sm:$0xf]
      %v1756 = vld [vmem:[%s1747 + $0x20] sm:$0xf]
      %v1757 = vld [vmem:[%s1747 + $0x24] sm:$0xf]
      %v1758 = vld [vmem:[%s1747 + $0x28] sm:$0xf]
      %v1759 = vld [vmem:[%s1747 + $0x2c] sm:$0xf]
      %v1760 = vld [vmem:[%s1747 + $0x30] sm:$0xf]
      %v1761 = vld [vmem:[%s1747 + $0x34] sm:$0xf]
      %v1762 = vld [vmem:[%s1747 + $0x38] sm:$0xf]
      %v1763 = vld [vmem:[%s1747 + $0x3c] sm:$0xf]
      %v1780 = vunpack.c.l.b16 %v1748
      %v1781 = vunpack.c.l.b16 %v1749
      %v1782 = vunpack.c.l.b16 %v1750
      %v1783 = vunpack.c.l.b16 %v1751
      %v1784 = vunpack.c.l.b16 %v1752
      %v1785 = vunpack.c.l.b16 %v1753
      %v1786 = vunpack.c.l.b16 %v1754
      %v1787 = vunpack.c.l.b16 %v1755
      %v1788 = vunpack.c.l.b16 %v1756
      %v1789 = vunpack.c.l.b16 %v1757
      %v1790 = vunpack.c.l.b16 %v1758
      %v1791 = vunpack.c.l.b16 %v1759
      %v1792 = vunpack.c.l.b16 %v1760
      %v1793 = vunpack.c.l.b16 %v1761
      %v1794 = vunpack.c.l.b16 %v1762
      %v1795 = vunpack.c.l.b16 %v1763
      %v1796 = vpack.c.b16 %v1781, %v1780
      %v1797 = vpack.c.b16 %v1783, %v1782
      %v1798 = vpack.c.b16 %v1785, %v1784
      %v1799 = vpack.c.b16 %v1787, %v1786
      %v1800 = vpack.c.b16 %v1789, %v1788
      %v1801 = vpack.c.b16 %v1791, %v1790
      %v1802 = vpack.c.b16 %v1793, %v1792
      %v1803 = vpack.c.b16 %v1795, %v1794
      %1812 = vmatprep.subr.bf16.mxu0 0
      %1813 = vmatpush1.bf16.msra.mxu0 %v1796
      %1814 = vmatprep.subr.bf16.mxu0 0
      %1815 = vmatpush1.bf16.msra.mxu0 %v1797
      %1816 = vmatprep.subr.bf16.mxu0 0
      %1817 = vmatpush1.bf16.msra.mxu0 %v1798
      %1818 = vmatprep.subr.bf16.mxu0 0
      %1819 = vmatpush1.bf16.msra.mxu0 %v1799
      %1820 = vmatprep.subr.bf16.mxu0 0
      %1821 = vmatpush1.bf16.msra.mxu0 %v1800
      %1822 = vmatprep.subr.bf16.mxu0 0
      %1823 = vmatpush1.bf16.msra.mxu0 %v1801
      %1824 = vmatprep.subr.bf16.mxu0 0
      %1825 = vmatpush1.bf16.msra.mxu0 %v1802
      %1826 = vmatprep.subr.bf16.mxu0 0
      %1827 = vmatpush1.bf16.msra.mxu0 %v1803
      %1828 = vmatprep.subr.bf16.mxu0 0
      %1829 = vmatpush1.bf16.msra.mxu0 0
      %1830 = vmatprep.subr.bf16.mxu0 0
      %1831 = vmatpush1.bf16.msra.mxu0 0
      %1832 = vmatprep.subr.bf16.mxu0 0
      %1833 = vmatpush1.bf16.msra.mxu0 0
      %1834 = vmatprep.subr.bf16.mxu0 0
      %1835 = vmatpush1.bf16.msra.mxu0 0
      %1836 = vmatprep.subr.bf16.mxu0 0
      %1837 = vmatpush1.bf16.msra.mxu0 0
      %1838 = vmatprep.subr.bf16.mxu0 0
      %1839 = vmatpush1.bf16.msra.mxu0 0
      %1840 = vmatprep.subr.bf16.mxu0 0
      %1841 = vmatpush1.bf16.msra.mxu0 0
      %1842 = vmatprep.subr.bf16.mxu0 0
      %1843 = vmatpush1.bf16.msra.mxu0 0
      %1844 = vmatprep.mubr.bf16.mxu0 0
      %1845 = vmatmul.mubr.bf16.gmra.mrb[0].mxu0 %v698
      %v1846 = vpop.f32.mrb[0].mxu0
      %v1847 = vadd.f32 0.0, %v1846
      %v1848 = vpop.f32.mrb[0].mxu0
      %v1849 = vpop.f32.mrb[0].mxu0
      %v1850 = vadd.f32 0.0, %v1849
      %v1851 = vpop.f32.mrb[0].mxu0
      %1852 = vmatprep.mubr.bf16.mxu0 0
      %1853 = vmatmul.mubr.bf16.gmra.mrb[0].mxu0 %v700
      %v1854 = vpop.f32.mrb[0].mxu0
      %v1855 = vadd.f32 0.0, %v1854
      %v1856 = vpop.f32.mrb[0].mxu0
      %v1857 = vpop.f32.mrb[0].mxu0
      %v1858 = vadd.f32 0.0, %v1857
      %v1859 = vpop.f32.mrb[0].mxu0
      %1860 = vmatprep.mubr.bf16.mxu0 0
      %1861 = vmatmul.mubr.bf16.gmra.mrb[0].mxu0 %v702
      %v1862 = vpop.f32.mrb[0].mxu0
      %v1863 = vadd.f32 0.0, %v1862
      %v1864 = vpop.f32.mrb[0].mxu0
      %v1865 = vpop.f32.mrb[0].mxu0
      %v1866 = vadd.f32 0.0, %v1865
      %v1867 = vpop.f32.mrb[0].mxu0
      %1868 = vmatprep.mubr.bf16.mxu0 0
      %1869 = vmatmul.mubr.bf16.gmra.mrb[0].mxu0 %v704
      %v1870 = vpop.f32.mrb[0].mxu0
      %v1871 = vadd.f32 0.0, %v1870
      %v1872 = vpop.f32.mrb[0].mxu0
      %v1873 = vpop.f32.mrb[0].mxu0
      %v1874 = vadd.f32 0.0, %v1873
      %v1875 = vpop.f32.mrb[0].mxu0
      %1876 = vmatprep.mubr.bf16.mxu0 0
      %1877 = vmatmul.mubr.bf16.gmra.mrb[0].mxu0 %v706
      %v1878 = vpop.f32.mrb[0].mxu0
      %v1879 = vadd.f32 0.0, %v1878
      %v1880 = vpop.f32.mrb[0].mxu0
      %v1881 = vpop.f32.mrb[0].mxu0
      %v1882 = vadd.f32 0.0, %v1881
      %v1883 = vpop.f32.mrb[0].mxu0
      %1884 = vmatprep.mubr.bf16.mxu0 0
      %1885 = vmatmul.mubr.bf16.gmra.mrb[0].mxu0 %v708
      %v1886 = vpop.f32.mrb[0].mxu0
      %v1887 = vadd.f32 0.0, %v1886
      %v1888 = vpop.f32.mrb[0].mxu0
      %v1889 = vpop.f32.mrb[0].mxu0
      %v1890 = vadd.f32 0.0, %v1889
      %v1891 = vpop.f32.mrb[0].mxu0
      %1892 = vmatprep.mubr.bf16.mxu0 0
      %1893 = vmatmul.mubr.bf16.gmra.mrb[0].mxu0 %v710
      %v1894 = vpop.f32.mrb[0].mxu0
      %v1895 = vadd.f32 0.0, %v1894
      %v1896 = vpop.f32.mrb[0].mxu0
      %v1897 = vpop.f32.mrb[0].mxu0
      %v1898 = vadd.f32 0.0, %v1897
      %v1899 = vpop.f32.mrb[0].mxu0
      %1900 = vmatprep.mubr.bf16.mxu0 0
      %1901 = vmatmul.mubr.bf16.gmra.mrb[0].mxu0 %v712
      %v1902 = vpop.f32.mrb[0].mxu0
      %v1903 = vadd.f32 0.0, %v1902
      %v1904 = vpop.f32.mrb[0].mxu0
      %v1905 = vpop.f32.mrb[0].mxu0
      %v1906 = vadd.f32 0.0, %v1905
      %v1907 = vpop.f32.mrb[0].mxu0
      %1908 = vmatprep.mubr.bf16.mxu0 0
      %1909 = vmatmul.mubr.bf16.gmra.mrb[0].mxu0 %v714
      %v1910 = vpop.f32.mrb[0].mxu0
      %v1911 = vadd.f32 0.0, %v1910
      %v1912 = vpop.f32.mrb[0].mxu0
      %v1913 = vpop.f32.mrb[0].mxu0
      %v1914 = vadd.f32 0.0, %v1913
      %v1915 = vpop.f32.mrb[0].mxu0
      %1916 = vmatprep.mubr.bf16.mxu0 0
      %1917 = vmatmul.mubr.bf16.gmra.mrb[0].mxu0 %v716
      %v1918 = vpop.f32.mrb[0].mxu0
      %v1919 = vadd.f32 0.0, %v1918
      %v1920 = vpop.f32.mrb[0].mxu0
      %v1921 = vpop.f32.mrb[0].mxu0
      %v1922 = vadd.f32 0.0, %v1921
      %v1923 = vpop.f32.mrb[0].mxu0
      %1924 = vmatprep.mubr.bf16.mxu0 0
      %1925 = vmatmul.mubr.bf16.gmra.mrb[0].mxu0 %v718
      %v1926 = vpop.f32.mrb[0].mxu0
      %v1927 = vadd.f32 0.0, %v1926
      %v1928 = vpop.f32.mrb[0].mxu0
      %v1929 = vpop.f32.mrb[0].mxu0
      %v1930 = vadd.f32 0.0, %v1929
      %v1931 = vpop.f32.mrb[0].mxu0
      %1932 = vmatprep.mubr.bf16.mxu0 0
      %1933 = vmatmul.mubr.bf16.gmra.mrb[0].mxu0 %v720
      %v1934 = vpop.f32.mrb[0].mxu0
      %v1935 = vadd.f32 0.0, %v1934
      %v1936 = vpop.f32.mrb[0].mxu0
      %v1937 = vpop.f32.mrb[0].mxu0
      %v1938 = vadd.f32 0.0, %v1937
      %v1939 = vpop.f32.mrb[0].mxu0
      %1940 = vmatprep.mubr.bf16.mxu0 0
      %1941 = vmatmul.mubr.bf16.gmra.mrb[0].mxu0 %v722
      %v1942 = vpop.f32.mrb[0].mxu0
      %v1943 = vadd.f32 0.0, %v1942
      %v1944 = vpop.f32.mrb[0].mxu0
      %v1945 = vpop.f32.mrb[0].mxu0
      %v1946 = vadd.f32 0.0, %v1945
      %v1947 = vpop.f32.mrb[0].mxu0
      %1948 = vmatprep.mubr.bf16.mxu0 0
      %1949 = vmatmul.mubr.bf16.gmra.mrb[0].mxu0 %v724
      %v1950 = vpop.f32.mrb[0].mxu0
      %v1951 = vadd.f32 0.0, %v1950
      %v1952 = vpop.f32.mrb[0].mxu0
      %v1953 = vpop.f32.mrb[0].mxu0
      %v1954 = vadd.f32 0.0, %v1953
      %v1955 = vpop.f32.mrb[0].mxu0
      %1956 = vmatprep.mubr.bf16.mxu0 0
      %1957 = vmatmul.mubr.bf16.gmra.mrb[0].mxu0 %v726
      %v1958 = vpop.f32.mrb[0].mxu0
      %v1959 = vadd.f32 0.0, %v1958
      %v1960 = vpop.f32.mrb[0].mxu0
      %v1961 = vpop.f32.mrb[0].mxu0
      %v1962 = vadd.f32 0.0, %v1961
      %v1963 = vpop.f32.mrb[0].mxu0
      %1964 = vmatprep.mubr.bf16.mxu0 0
      %1965 = vmatmul.mubr.bf16.gmra.mrb[0].mxu0 %v728
      %v1966 = vpop.f32.mrb[0].mxu0
      %v1967 = vadd.f32 0.0, %v1966
      %v1968 = vpop.f32.mrb[0].mxu0
      %v1969 = vpop.f32.mrb[0].mxu0
      %v1970 = vadd.f32 0.0, %v1969
      %v1971 = vpop.f32.mrb[0].mxu0
      %1972 = vdwg.mxu0
      %v1973 = vadd.f32 %v1715, %v1847
      %v1974 = vadd.f32 %v1716, %v1850
      %v1975 = vadd.f32 %v1717, %v1855
      %v1976 = vadd.f32 %v1718, %v1858
      %v1977 = vadd.f32 %v1719, %v1863
      %v1978 = vadd.f32 %v1720, %v1866
      %v1979 = vadd.f32 %v1721, %v1871
      %v1980 = vadd.f32 %v1722, %v1874
      %v1981 = vadd.f32 %v1723, %v1879
      %v1982 = vadd.f32 %v1724, %v1882
      %v1983 = vadd.f32 %v1725, %v1887
      %v1984 = vadd.f32 %v1726, %v1890
      %v1985 = vadd.f32 %v1727, %v1895
      %v1986 = vadd.f32 %v1728, %v1898
      %v1987 = vadd.f32 %v1729, %v1903
      %v1988 = vadd.f32 %v1730, %v1906
      %v1989 = vadd.f32 %v1731, %v1911
      %v1990 = vadd.f32 %v1732, %v1914
      %v1991 = vadd.f32 %v1733, %v1919
      %v1992 = vadd.f32 %v1734, %v1922
      %v1993 = vadd.f32 %v1735, %v1927
      %v1994 = vadd.f32 %v1736, %v1930
      %v1995 = vadd.f32 %v1737, %v1935
      %v1996 = vadd.f32 %v1738, %v1938
      %v1997 = vadd.f32 %v1739, %v1943
      %v1998 = vadd.f32 %v1740, %v1946
      %v1999 = vadd.f32 %v1741, %v1951
      %v2000 = vadd.f32 %v1742, %v1954
      %v2001 = vadd.f32 %v1743, %v1959
      %v2002 = vadd.f32 %v1744, %v1962
      %v2003 = vadd.f32 %v1745, %v1967
      %v2004 = vadd.f32 %v1746, %v1970
      %v2006 = vshrl.u32 %v728, 16
      %v2008 = vshll.u32 %v728, 16
      %v2010 = vrot.slane %v2008, 1
      %v2011 = vor.u32 %v2006, %v2010
      %v2013 = vshll.u32 %v729, 16
      %v2015 = vrot.slane %v2013, 1
      %v2016 = vsel %vm748, %v2011, %v2015
      %s2018 = scalar_lea.vmem %s3, 256
      %v2019 = vld [vmem:[%s2018] sm:$0xf]
      %v2020 = vld [vmem:[%s2018 + $0x4] sm:$0xf]
      %v2021 = vld [vmem:[%s2018 + $0x8] sm:$0xf]
      %v2022 = vld [vmem:[%s2018 + $0xc] sm:$0xf]
      %v2023 = vld [vmem:[%s2018 + $0x10] sm:$0xf]
      %v2024 = vld [vmem:[%s2018 + $0x14] sm:$0xf]
      %v2025 = vld [vmem:[%s2018 + $0x18] sm:$0xf]
      %v2026 = vld [vmem:[%s2018 + $0x1c] sm:$0xf]
      %v2027 = vld [vmem:[%s2018 + $0x20] sm:$0xf]
      %v2028 = vld [vmem:[%s2018 + $0x24] sm:$0xf]
      %v2029 = vld [vmem:[%s2018 + $0x28] sm:$0xf]
      %v2030 = vld [vmem:[%s2018 + $0x2c] sm:$0xf]
      %v2031 = vld [vmem:[%s2018 + $0x30] sm:$0xf]
      %v2032 = vld [vmem:[%s2018 + $0x34] sm:$0xf]
      %v2033 = vld [vmem:[%s2018 + $0x38] sm:$0xf]
      %v2034 = vld [vmem:[%s2018 + $0x3c] sm:$0xf]
      %v2051 = vunpack.c.l.b16 %v2019
      %v2052 = vunpack.c.l.b16 %v2020
      %v2053 = vunpack.c.l.b16 %v2021
      %v2054 = vunpack.c.l.b16 %v2022
      %v2055 = vunpack.c.l.b16 %v2023
      %v2056 = vunpack.c.l.b16 %v2024
      %v2057 = vunpack.c.l.b16 %v2025
      %v2058 = vunpack.c.l.b16 %v2026
      %v2059 = vunpack.c.l.b16 %v2027
      %v2060 = vunpack.c.l.b16 %v2028
      %v2061 = vunpack.c.l.b16 %v2029
      %v2062 = vunpack.c.l.b16 %v2030
      %v2063 = vunpack.c.l.b16 %v2031
      %v2064 = vunpack.c.l.b16 %v2032
      %v2065 = vunpack.c.l.b16 %v2033
      %v2066 = vunpack.c.l.b16 %v2034
      %v2067 = vpack.c.b16 %v2052, %v2051
      %v2068 = vpack.c.b16 %v2054, %v2053
      %v2069 = vpack.c.b16 %v2056, %v2055
      %v2070 = vpack.c.b16 %v2058, %v2057
      %v2071 = vpack.c.b16 %v2060, %v2059
      %v2072 = vpack.c.b16 %v2062, %v2061
      %v2073 = vpack.c.b16 %v2064, %v2063
      %v2074 = vpack.c.b16 %v2066, %v2065
      %2083 = vmatprep.subr.bf16.mxu0 0
      %2084 = vmatpush1.bf16.msra.mxu0 %v2067
      %2085 = vmatprep.subr.bf16.mxu0 0
      %2086 = vmatpush1.bf16.msra.mxu0 %v2068
      %2087 = vmatprep.subr.bf16.mxu0 0
      %2088 = vmatpush1.bf16.msra.mxu0 %v2069
      %2089 = vmatprep.subr.bf16.mxu0 0
      %2090 = vmatpush1.bf16.msra.mxu0 %v2070
      %2091 = vmatprep.subr.bf16.mxu0 0
      %2092 = vmatpush1.bf16.msra.mxu0 %v2071
      %2093 = vmatprep.subr.bf16.mxu0 0
      %2094 = vmatpush1.bf16.msra.mxu0 %v2072
      %2095 = vmatprep.subr.bf16.mxu0 0
      %2096 = vmatpush1.bf16.msra.mxu0 %v2073
      %2097 = vmatprep.subr.bf16.mxu0 0
      %2098 = vmatpush1.bf16.msra.mxu0 %v2074
      %2099 = vmatprep.subr.bf16.mxu0 0
      %2100 = vmatpush1.bf16.msra.mxu0 0
      %2101 = vmatprep.subr.bf16.mxu0 0
      %2102 = vmatpush1.bf16.msra.mxu0 0
      %2103 = vmatprep.subr.bf16.mxu0 0
      %2104 = vmatpush1.bf16.msra.mxu0 0
      %2105 = vmatprep.subr.bf16.mxu0 0
      %2106 = vmatpush1.bf16.msra.mxu0 0
      %2107 = vmatprep.subr.bf16.mxu0 0
      %2108 = vmatpush1.bf16.msra.mxu0 0
      %2109 = vmatprep.subr.bf16.mxu0 0
      %2110 = vmatpush1.bf16.msra.mxu0 0
      %2111 = vmatprep.subr.bf16.mxu0 0
      %2112 = vmatpush1.bf16.msra.mxu0 0
      %2113 = vmatprep.subr.bf16.mxu0 0
      %2114 = vmatpush1.bf16.msra.mxu0 0
      %2115 = vmatprep.mubr.bf16.mxu0 0
      %2116 = vmatmul.mubr.bf16.gmra.mrb[0].mxu0 %v772
      %v2117 = vpop.f32.mrb[0].mxu0
      %v2118 = vadd.f32 0.0, %v2117
      %v2119 = vpop.f32.mrb[0].mxu0
      %v2120 = vpop.f32.mrb[0].mxu0
      %v2121 = vadd.f32 0.0, %v2120
      %v2122 = vpop.f32.mrb[0].mxu0
      %2123 = vmatprep.mubr.bf16.mxu0 0
      %2124 = vmatmul.mubr.bf16.gmra.mrb[0].mxu0 %v784
      %v2125 = vpop.f32.mrb[0].mxu0
      %v2126 = vadd.f32 0.0, %v2125
      %v2127 = vpop.f32.mrb[0].mxu0
      %v2128 = vpop.f32.mrb[0].mxu0
      %v2129 = vadd.f32 0.0, %v2128
      %v2130 = vpop.f32.mrb[0].mxu0
      %2131 = vmatprep.mubr.bf16.mxu0 0
      %2132 = vmatmul.mubr.bf16.gmra.mrb[0].mxu0 %v796
      %v2133 = vpop.f32.mrb[0].mxu0
      %v2134 = vadd.f32 0.0, %v2133
      %v2135 = vpop.f32.mrb[0].mxu0
      %v2136 = vpop.f32.mrb[0].mxu0
      %v2137 = vadd.f32 0.0, %v2136
      %v2138 = vpop.f32.mrb[0].mxu0
      %2139 = vmatprep.mubr.bf16.mxu0 0
      %2140 = vmatmul.mubr.bf16.gmra.mrb[0].mxu0 %v808
      %v2141 = vpop.f32.mrb[0].mxu0
      %v2142 = vadd.f32 0.0, %v2141
      %v2143 = vpop.f32.mrb[0].mxu0
      %v2144 = vpop.f32.mrb[0].mxu0
      %v2145 = vadd.f32 0.0, %v2144
      %v2146 = vpop.f32.mrb[0].mxu0
      %2147 = vmatprep.mubr.bf16.mxu0 0
      %2148 = vmatmul.mubr.bf16.gmra.mrb[0].mxu0 %v820
      %v2149 = vpop.f32.mrb[0].mxu0
      %v2150 = vadd.f32 0.0, %v2149
      %v2151 = vpop.f32.mrb[0].mxu0
      %v2152 = vpop.f32.mrb[0].mxu0
      %v2153 = vadd.f32 0.0, %v2152
      %v2154 = vpop.f32.mrb[0].mxu0
      %2155 = vmatprep.mubr.bf16.mxu0 0
      %2156 = vmatmul.mubr.bf16.gmra.mrb[0].mxu0 %v832
      %v2157 = vpop.f32.mrb[0].mxu0
      %v2158 = vadd.f32 0.0, %v2157
      %v2159 = vpop.f32.mrb[0].mxu0
      %v2160 = vpop.f32.mrb[0].mxu0
      %v2161 = vadd.f32 0.0, %v2160
      %v2162 = vpop.f32.mrb[0].mxu0
      %2163 = vmatprep.mubr.bf16.mxu0 0
      %2164 = vmatmul.mubr.bf16.gmra.mrb[0].mxu0 %v844
      %v2165 = vpop.f32.mrb[0].mxu0
      %v2166 = vadd.f32 0.0, %v2165
      %v2167 = vpop.f32.mrb[0].mxu0
      %v2168 = vpop.f32.mrb[0].mxu0
      %v2169 = vadd.f32 0.0, %v2168
      %v2170 = vpop.f32.mrb[0].mxu0
      %2171 = vmatprep.mubr.bf16.mxu0 0
      %2172 = vmatmul.mubr.bf16.gmra.mrb[0].mxu0 %v856
      %v2173 = vpop.f32.mrb[0].mxu0
      %v2174 = vadd.f32 0.0, %v2173
      %v2175 = vpop.f32.mrb[0].mxu0
      %v2176 = vpop.f32.mrb[0].mxu0
      %v2177 = vadd.f32 0.0, %v2176
      %v2178 = vpop.f32.mrb[0].mxu0
      %2179 = vmatprep.mubr.bf16.mxu0 0
      %2180 = vmatmul.mubr.bf16.gmra.mrb[0].mxu0 %v868
      %v2181 = vpop.f32.mrb[0].mxu0
      %v2182 = vadd.f32 0.0, %v2181
      %v2183 = vpop.f32.mrb[0].mxu0
      %v2184 = vpop.f32.mrb[0].mxu0
      %v2185 = vadd.f32 0.0, %v2184
      %v2186 = vpop.f32.mrb[0].mxu0
      %2187 = vmatprep.mubr.bf16.mxu0 0
      %2188 = vmatmul.mubr.bf16.gmra.mrb[0].mxu0 %v880
      %v2189 = vpop.f32.mrb[0].mxu0
      %v2190 = vadd.f32 0.0, %v2189
      %v2191 = vpop.f32.mrb[0].mxu0
      %v2192 = vpop.f32.mrb[0].mxu0
      %v2193 = vadd.f32 0.0, %v2192
      %v2194 = vpop.f32.mrb[0].mxu0
      %2195 = vmatprep.mubr.bf16.mxu0 0
      %2196 = vmatmul.mubr.bf16.gmra.mrb[0].mxu0 %v892
      %v2197 = vpop.f32.mrb[0].mxu0
      %v2198 = vadd.f32 0.0, %v2197
      %v2199 = vpop.f32.mrb[0].mxu0
      %v2200 = vpop.f32.mrb[0].mxu0
      %v2201 = vadd.f32 0.0, %v2200
      %v2202 = vpop.f32.mrb[0].mxu0
      %2203 = vmatprep.mubr.bf16.mxu0 0
      %2204 = vmatmul.mubr.bf16.gmra.mrb[0].mxu0 %v904
      %v2205 = vpop.f32.mrb[0].mxu0
      %v2206 = vadd.f32 0.0, %v2205
      %v2207 = vpop.f32.mrb[0].mxu0
      %v2208 = vpop.f32.mrb[0].mxu0
      %v2209 = vadd.f32 0.0, %v2208
      %v2210 = vpop.f32.mrb[0].mxu0
      %2211 = vmatprep.mubr.bf16.mxu0 0
      %2212 = vmatmul.mubr.bf16.gmra.mrb[0].mxu0 %v916
      %v2213 = vpop.f32.mrb[0].mxu0
      %v2214 = vadd.f32 0.0, %v2213
      %v2215 = vpop.f32.mrb[0].mxu0
      %v2216 = vpop.f32.mrb[0].mxu0
      %v2217 = vadd.f32 0.0, %v2216
      %v2218 = vpop.f32.mrb[0].mxu0
      %2219 = vmatprep.mubr.bf16.mxu0 0
      %2220 = vmatmul.mubr.bf16.gmra.mrb[0].mxu0 %v928
      %v2221 = vpop.f32.mrb[0].mxu0
      %v2222 = vadd.f32 0.0, %v2221
      %v2223 = vpop.f32.mrb[0].mxu0
      %v2224 = vpop.f32.mrb[0].mxu0
      %v2225 = vadd.f32 0.0, %v2224
      %v2226 = vpop.f32.mrb[0].mxu0
      %2227 = vmatprep.mubr.bf16.mxu0 0
      %2228 = vmatmul.mubr.bf16.gmra.mrb[0].mxu0 %v940
      %v2229 = vpop.f32.mrb[0].mxu0
      %v2230 = vadd.f32 0.0, %v2229
      %v2231 = vpop.f32.mrb[0].mxu0
      %v2232 = vpop.f32.mrb[0].mxu0
      %v2233 = vadd.f32 0.0, %v2232
      %v2234 = vpop.f32.mrb[0].mxu0
      %2235 = vmatprep.mubr.bf16.mxu0 0
      %2236 = vmatmul.mubr.bf16.gmra.mrb[0].mxu0 %v2016
      %v2237 = vpop.f32.mrb[0].mxu0
      %v2238 = vadd.f32 0.0, %v2237
      %v2239 = vpop.f32.mrb[0].mxu0
      %v2240 = vpop.f32.mrb[0].mxu0
      %v2241 = vadd.f32 0.0, %v2240
      %v2242 = vpop.f32.mrb[0].mxu0
      %2243 = vdwg.mxu0
      %v2244 = vadd.f32 %v1973, %v2118
      %v2245 = vadd.f32 %v1974, %v2121
      %v2246 = vadd.f32 %v1975, %v2126
      %v2247 = vadd.f32 %v1976, %v2129
      %v2248 = vadd.f32 %v1977, %v2134
      %v2249 = vadd.f32 %v1978, %v2137
      %v2250 = vadd.f32 %v1979, %v2142
      %v2251 = vadd.f32 %v1980, %v2145
      %v2252 = vadd.f32 %v1981, %v2150
      %v2253 = vadd.f32 %v1982, %v2153
      %v2254 = vadd.f32 %v1983, %v2158
      %v2255 = vadd.f32 %v1984, %v2161
      %v2256 = vadd.f32 %v1985, %v2166
      %v2257 = vadd.f32 %v1986, %v2169
      %v2258 = vadd.f32 %v1987, %v2174
      %v2259 = vadd.f32 %v1988, %v2177
      %v2260 = vadd.f32 %v1989, %v2182
      %v2261 = vadd.f32 %v1990, %v2185
      %v2262 = vadd.f32 %v1991, %v2190
      %v2263 = vadd.f32 %v1992, %v2193
      %v2264 = vadd.f32 %v1993, %v2198
      %v2265 = vadd.f32 %v1994, %v2201
      %v2266 = vadd.f32 %v1995, %v2206
      %v2267 = vadd.f32 %v1996, %v2209
      %v2268 = vadd.f32 %v1997, %v2214
      %v2269 = vadd.f32 %v1998, %v2217
      %v2270 = vadd.f32 %v1999, %v2222
      %v2271 = vadd.f32 %v2000, %v2225
      %v2272 = vadd.f32 %v2001, %v2230
      %v2273 = vadd.f32 %v2002, %v2233
      %v2274 = vadd.f32 %v2003, %v2238
      %v2275 = vadd.f32 %v2004, %v2241
      %v2278 = vrot.slane %v728, 1
      %v2279 = vrot.slane %v729, 1
      %v2280 = vsel %vm1424, %v2278, %v2279
      %s2282 = scalar_lea.vmem %s3, 320
      %v2283 = vld [vmem:[%s2282] sm:$0xf]
      %v2284 = vld [vmem:[%s2282 + $0x4] sm:$0xf]
      %v2285 = vld [vmem:[%s2282 + $0x8] sm:$0xf]
      %v2286 = vld [vmem:[%s2282 + $0xc] sm:$0xf]
      %v2287 = vld [vmem:[%s2282 + $0x10] sm:$0xf]
      %v2288 = vld [vmem:[%s2282 + $0x14] sm:$0xf]
      %v2289 = vld [vmem:[%s2282 + $0x18] sm:$0xf]
      %v2290 = vld [vmem:[%s2282 + $0x1c] sm:$0xf]
      %v2291 = vld [vmem:[%s2282 + $0x20] sm:$0xf]
      %v2292 = vld [vmem:[%s2282 + $0x24] sm:$0xf]
      %v2293 = vld [vmem:[%s2282 + $0x28] sm:$0xf]
      %v2294 = vld [vmem:[%s2282 + $0x2c] sm:$0xf]
      %v2295 = vld [vmem:[%s2282 + $0x30] sm:$0xf]
      %v2296 = vld [vmem:[%s2282 + $0x34] sm:$0xf]
      %v2297 = vld [vmem:[%s2282 + $0x38] sm:$0xf]
      %v2298 = vld [vmem:[%s2282 + $0x3c] sm:$0xf]
      %v2315 = vunpack.c.l.b16 %v2283
      %v2316 = vunpack.c.l.b16 %v2284
      %v2317 = vunpack.c.l.b16 %v2285
      %v2318 = vunpack.c.l.b16 %v2286
      %v2319 = vunpack.c.l.b16 %v2287
      %v2320 = vunpack.c.l.b16 %v2288
      %v2321 = vunpack.c.l.b16 %v2289
      %v2322 = vunpack.c.l.b16 %v2290
      %v2323 = vunpack.c.l.b16 %v2291
      %v2324 = vunpack.c.l.b16 %v2292
      %v2325 = vunpack.c.l.b16 %v2293
      %v2326 = vunpack.c.l.b16 %v2294
      %v2327 = vunpack.c.l.b16 %v2295
      %v2328 = vunpack.c.l.b16 %v2296
      %v2329 = vunpack.c.l.b16 %v2297
      %v2330 = vunpack.c.l.b16 %v2298
      %v2331 = vpack.c.b16 %v2316, %v2315
      %v2332 = vpack.c.b16 %v2318, %v2317
      %v2333 = vpack.c.b16 %v2320, %v2319
      %v2334 = vpack.c.b16 %v2322, %v2321
      %v2335 = vpack.c.b16 %v2324, %v2323
      %v2336 = vpack.c.b16 %v2326, %v2325
      %v2337 = vpack.c.b16 %v2328, %v2327
      %v2338 = vpack.c.b16 %v2330, %v2329
      %2347 = vmatprep.subr.bf16.mxu0 0
      %2348 = vmatpush1.bf16.msra.mxu0 %v2331
      %2349 = vmatprep.subr.bf16.mxu0 0
      %2350 = vmatpush1.bf16.msra.mxu0 %v2332
      %2351 = vmatprep.subr.bf16.mxu0 0
      %2352 = vmatpush1.bf16.msra.mxu0 %v2333
      %2353 = vmatprep.subr.bf16.mxu0 0
      %2354 = vmatpush1.bf16.msra.mxu0 %v2334
      %2355 = vmatprep.subr.bf16.mxu0 0
      %2356 = vmatpush1.bf16.msra.mxu0 %v2335
      %2357 = vmatprep.subr.bf16.mxu0 0
      %2358 = vmatpush1.bf16.msra.mxu0 %v2336
      %2359 = vmatprep.subr.bf16.mxu0 0
      %2360 = vmatpush1.bf16.msra.mxu0 %v2337
      %2361 = vmatprep.subr.bf16.mxu0 0
      %2362 = vmatpush1.bf16.msra.mxu0 %v2338
      %2363 = vmatprep.subr.bf16.mxu0 0
      %2364 = vmatpush1.bf16.msra.mxu0 0
      %2365 = vmatprep.subr.bf16.mxu0 0
      %2366 = vmatpush1.bf16.msra.mxu0 0
      %2367 = vmatprep.subr.bf16.mxu0 0
      %2368 = vmatpush1.bf16.msra.mxu0 0
      %2369 = vmatprep.subr.bf16.mxu0 0
      %2370 = vmatpush1.bf16.msra.mxu0 0
      %2371 = vmatprep.subr.bf16.mxu0 0
      %2372 = vmatpush1.bf16.msra.mxu0 0
      %2373 = vmatprep.subr.bf16.mxu0 0
      %2374 = vmatpush1.bf16.msra.mxu0 0
      %2375 = vmatprep.subr.bf16.mxu0 0
      %2376 = vmatpush1.bf16.msra.mxu0 0
      %2377 = vmatprep.subr.bf16.mxu0 0
      %2378 = vmatpush1.bf16.msra.mxu0 0
      %2379 = vmatprep.mubr.bf16.mxu0 0
      %2380 = vmatmul.mubr.bf16.gmra.mrb[0].mxu0 %v1430
      %v2381 = vpop.f32.mrb[0].mxu0
      %v2382 = vadd.f32 0.0, %v2381
      %v2383 = vpop.f32.mrb[0].mxu0
      %v2384 = vpop.f32.mrb[0].mxu0
      %v2385 = vadd.f32 0.0, %v2384
      %v2386 = vpop.f32.mrb[0].mxu0
      %2387 = vmatprep.mubr.bf16.mxu0 0
      %2388 = vmatmul.mubr.bf16.gmra.mrb[0].mxu0 %v1433
      %v2389 = vpop.f32.mrb[0].mxu0
      %v2390 = vadd.f32 0.0, %v2389
      %v2391 = vpop.f32.mrb[0].mxu0
      %v2392 = vpop.f32.mrb[0].mxu0
      %v2393 = vadd.f32 0.0, %v2392
      %v2394 = vpop.f32.mrb[0].mxu0
      %2395 = vmatprep.mubr.bf16.mxu0 0
      %2396 = vmatmul.mubr.bf16.gmra.mrb[0].mxu0 %v1436
      %v2397 = vpop.f32.mrb[0].mxu0
      %v2398 = vadd.f32 0.0, %v2397
      %v2399 = vpop.f32.mrb[0].mxu0
      %v2400 = vpop.f32.mrb[0].mxu0
      %v2401 = vadd.f32 0.0, %v2400
      %v2402 = vpop.f32.mrb[0].mxu0
      %2403 = vmatprep.mubr.bf16.mxu0 0
      %2404 = vmatmul.mubr.bf16.gmra.mrb[0].mxu0 %v1439
      %v2405 = vpop.f32.mrb[0].mxu0
      %v2406 = vadd.f32 0.0, %v2405
      %v2407 = vpop.f32.mrb[0].mxu0
      %v2408 = vpop.f32.mrb[0].mxu0
      %v2409 = vadd.f32 0.0, %v2408
      %v2410 = vpop.f32.mrb[0].mxu0
      %2411 = vmatprep.mubr.bf16.mxu0 0
      %2412 = vmatmul.mubr.bf16.gmra.mrb[0].mxu0 %v1442
      %v2413 = vpop.f32.mrb[0].mxu0
      %v2414 = vadd.f32 0.0, %v2413
      %v2415 = vpop.f32.mrb[0].mxu0
      %v2416 = vpop.f32.mrb[0].mxu0
      %v2417 = vadd.f32 0.0, %v2416
      %v2418 = vpop.f32.mrb[0].mxu0
      %2419 = vmatprep.mubr.bf16.mxu0 0
      %2420 = vmatmul.mubr.bf16.gmra.mrb[0].mxu0 %v1445
      %v2421 = vpop.f32.mrb[0].mxu0
      %v2422 = vadd.f32 0.0, %v2421
      %v2423 = vpop.f32.mrb[0].mxu0
      %v2424 = vpop.f32.mrb[0].mxu0
      %v2425 = vadd.f32 0.0, %v2424
      %v2426 = vpop.f32.mrb[0].mxu0
      %2427 = vmatprep.mubr.bf16.mxu0 0
      %2428 = vmatmul.mubr.bf16.gmra.mrb[0].mxu0 %v1448
      %v2429 = vpop.f32.mrb[0].mxu0
      %v2430 = vadd.f32 0.0, %v2429
      %v2431 = vpop.f32.mrb[0].mxu0
      %v2432 = vpop.f32.mrb[0].mxu0
      %v2433 = vadd.f32 0.0, %v2432
      %v2434 = vpop.f32.mrb[0].mxu0
      %2435 = vmatprep.mubr.bf16.mxu0 0
      %2436 = vmatmul.mubr.bf16.gmra.mrb[0].mxu0 %v1451
      %v2437 = vpop.f32.mrb[0].mxu0
      %v2438 = vadd.f32 0.0, %v2437
      %v2439 = vpop.f32.mrb[0].mxu0
      %v2440 = vpop.f32.mrb[0].mxu0
      %v2441 = vadd.f32 0.0, %v2440
      %v2442 = vpop.f32.mrb[0].mxu0
      %2443 = vmatprep.mubr.bf16.mxu0 0
      %2444 = vmatmul.mubr.bf16.gmra.mrb[0].mxu0 %v1454
      %v2445 = vpop.f32.mrb[0].mxu0
      %v2446 = vadd.f32 0.0, %v2445
      %v2447 = vpop.f32.mrb[0].mxu0
      %v2448 = vpop.f32.mrb[0].mxu0
      %v2449 = vadd.f32 0.0, %v2448
      %v2450 = vpop.f32.mrb[0].mxu0
      %2451 = vmatprep.mubr.bf16.mxu0 0
      %2452 = vmatmul.mubr.bf16.gmra.mrb[0].mxu0 %v1457
      %v2453 = vpop.f32.mrb[0].mxu0
      %v2454 = vadd.f32 0.0, %v2453
      %v2455 = vpop.f32.mrb[0].mxu0
      %v2456 = vpop.f32.mrb[0].mxu0
      %v2457 = vadd.f32 0.0, %v2456
      %v2458 = vpop.f32.mrb[0].mxu0
      %2459 = vmatprep.mubr.bf16.mxu0 0
      %2460 = vmatmul.mubr.bf16.gmra.mrb[0].mxu0 %v1460
      %v2461 = vpop.f32.mrb[0].mxu0
      %v2462 = vadd.f32 0.0, %v2461
      %v2463 = vpop.f32.mrb[0].mxu0
      %v2464 = vpop.f32.mrb[0].mxu0
      %v2465 = vadd.f32 0.0, %v2464
      %v2466 = vpop.f32.mrb[0].mxu0
      %2467 = vmatprep.mubr.bf16.mxu0 0
      %2468 = vmatmul.mubr.bf16.gmra.mrb[0].mxu0 %v1463
      %v2469 = vpop.f32.mrb[0].mxu0
      %v2470 = vadd.f32 0.0, %v2469
      %v2471 = vpop.f32.mrb[0].mxu0
      %v2472 = vpop.f32.mrb[0].mxu0
      %v2473 = vadd.f32 0.0, %v2472
      %v2474 = vpop.f32.mrb[0].mxu0
      %2475 = vmatprep.mubr.bf16.mxu0 0
      %2476 = vmatmul.mubr.bf16.gmra.mrb[0].mxu0 %v1466
      %v2477 = vpop.f32.mrb[0].mxu0
      %v2478 = vadd.f32 0.0, %v2477
      %v2479 = vpop.f32.mrb[0].mxu0
      %v2480 = vpop.f32.mrb[0].mxu0
      %v2481 = vadd.f32 0.0, %v2480
      %v2482 = vpop.f32.mrb[0].mxu0
      %2483 = vmatprep.mubr.bf16.mxu0 0
      %2484 = vmatmul.mubr.bf16.gmra.mrb[0].mxu0 %v1469
      %v2485 = vpop.f32.mrb[0].mxu0
      %v2486 = vadd.f32 0.0, %v2485
      %v2487 = vpop.f32.mrb[0].mxu0
      %v2488 = vpop.f32.mrb[0].mxu0
      %v2489 = vadd.f32 0.0, %v2488
      %v2490 = vpop.f32.mrb[0].mxu0
      %2491 = vmatprep.mubr.bf16.mxu0 0
      %2492 = vmatmul.mubr.bf16.gmra.mrb[0].mxu0 %v1472
      %v2493 = vpop.f32.mrb[0].mxu0
      %v2494 = vadd.f32 0.0, %v2493
      %v2495 = vpop.f32.mrb[0].mxu0
      %v2496 = vpop.f32.mrb[0].mxu0
      %v2497 = vadd.f32 0.0, %v2496
      %v2498 = vpop.f32.mrb[0].mxu0
      %2499 = vmatprep.mubr.bf16.mxu0 0
      %2500 = vmatmul.mubr.bf16.gmra.mrb[0].mxu0 %v2280
      %v2501 = vpop.f32.mrb[0].mxu0
      %v2502 = vadd.f32 0.0, %v2501
      %v2503 = vpop.f32.mrb[0].mxu0
      %v2504 = vpop.f32.mrb[0].mxu0
      %v2505 = vadd.f32 0.0, %v2504
      %v2506 = vpop.f32.mrb[0].mxu0
      %2507 = vdwg.mxu0
      %v2508 = vadd.f32 %v2244, %v2382
      %v2509 = vadd.f32 %v2245, %v2385
      %v2510 = vadd.f32 %v2246, %v2390
      %v2511 = vadd.f32 %v2247, %v2393
      %v2512 = vadd.f32 %v2248, %v2398
      %v2513 = vadd.f32 %v2249, %v2401
      %v2514 = vadd.f32 %v2250, %v2406
      %v2515 = vadd.f32 %v2251, %v2409
      %v2516 = vadd.f32 %v2252, %v2414
      %v2517 = vadd.f32 %v2253, %v2417
      %v2518 = vadd.f32 %v2254, %v2422
      %v2519 = vadd.f32 %v2255, %v2425
      %v2520 = vadd.f32 %v2256, %v2430
      %v2521 = vadd.f32 %v2257, %v2433
      %v2522 = vadd.f32 %v2258, %v2438
      %v2523 = vadd.f32 %v2259, %v2441
      %v2524 = vadd.f32 %v2260, %v2446
      %v2525 = vadd.f32 %v2261, %v2449
      %v2526 = vadd.f32 %v2262, %v2454
      %v2527 = vadd.f32 %v2263, %v2457
      %v2528 = vadd.f32 %v2264, %v2462
      %v2529 = vadd.f32 %v2265, %v2465
      %v2530 = vadd.f32 %v2266, %v2470
      %v2531 = vadd.f32 %v2267, %v2473
      %v2532 = vadd.f32 %v2268, %v2478
      %v2533 = vadd.f32 %v2269, %v2481
      %v2534 = vadd.f32 %v2270, %v2486
      %v2535 = vadd.f32 %v2271, %v2489
      %v2536 = vadd.f32 %v2272, %v2494
      %v2537 = vadd.f32 %v2273, %v2497
      %v2538 = vadd.f32 %v2274, %v2502
      %v2539 = vadd.f32 %v2275, %v2505
      %s2540 = scalar_lea.vmem %s3, 384
      %v2541 = vld [vmem:[%s2540] sm:$0xf]
      %v2542 = vld [vmem:[%s2540 + $0x4] sm:$0xf]
      %v2543 = vld [vmem:[%s2540 + $0x8] sm:$0xf]
      %v2544 = vld [vmem:[%s2540 + $0xc] sm:$0xf]
      %v2545 = vld [vmem:[%s2540 + $0x10] sm:$0xf]
      %v2546 = vld [vmem:[%s2540 + $0x14] sm:$0xf]
      %v2547 = vld [vmem:[%s2540 + $0x18] sm:$0xf]
      %v2548 = vld [vmem:[%s2540 + $0x1c] sm:$0xf]
      %v2549 = vld [vmem:[%s2540 + $0x20] sm:$0xf]
      %v2550 = vld [vmem:[%s2540 + $0x24] sm:$0xf]
      %v2551 = vld [vmem:[%s2540 + $0x28] sm:$0xf]
      %v2552 = vld [vmem:[%s2540 + $0x2c] sm:$0xf]
      %v2553 = vld [vmem:[%s2540 + $0x30] sm:$0xf]
      %v2554 = vld [vmem:[%s2540 + $0x34] sm:$0xf]
      %v2555 = vld [vmem:[%s2540 + $0x38] sm:$0xf]
      %v2556 = vld [vmem:[%s2540 + $0x3c] sm:$0xf]
      %v2573 = vunpack.c.l.b16 %v2541
      %v2574 = vunpack.c.l.b16 %v2542
      %v2575 = vunpack.c.l.b16 %v2543
      %v2576 = vunpack.c.l.b16 %v2544
      %v2577 = vunpack.c.l.b16 %v2545
      %v2578 = vunpack.c.l.b16 %v2546
      %v2579 = vunpack.c.l.b16 %v2547
      %v2580 = vunpack.c.l.b16 %v2548
      %v2581 = vunpack.c.l.b16 %v2549
      %v2582 = vunpack.c.l.b16 %v2550
      %v2583 = vunpack.c.l.b16 %v2551
      %v2584 = vunpack.c.l.b16 %v2552
      %v2585 = vunpack.c.l.b16 %v2553
      %v2586 = vunpack.c.l.b16 %v2554
      %v2587 = vunpack.c.l.b16 %v2555
      %v2588 = vunpack.c.l.b16 %v2556
      %v2589 = vpack.c.b16 %v2574, %v2573
      %v2590 = vpack.c.b16 %v2576, %v2575
      %v2591 = vpack.c.b16 %v2578, %v2577
      %v2592 = vpack.c.b16 %v2580, %v2579
      %v2593 = vpack.c.b16 %v2582, %v2581
      %v2594 = vpack.c.b16 %v2584, %v2583
      %v2595 = vpack.c.b16 %v2586, %v2585
      %v2596 = vpack.c.b16 %v2588, %v2587
      %2605 = vmatprep.subr.bf16.mxu0 0
      %2606 = vmatpush1.bf16.msra.mxu0 %v2589
      %2607 = vmatprep.subr.bf16.mxu0 0
      %2608 = vmatpush1.bf16.msra.mxu0 %v2590
      %2609 = vmatprep.subr.bf16.mxu0 0
      %2610 = vmatpush1.bf16.msra.mxu0 %v2591
      %2611 = vmatprep.subr.bf16.mxu0 0
      %2612 = vmatpush1.bf16.msra.mxu0 %v2592
      %2613 = vmatprep.subr.bf16.mxu0 0
      %2614 = vmatpush1.bf16.msra.mxu0 %v2593
      %2615 = vmatprep.subr.bf16.mxu0 0
      %2616 = vmatpush1.bf16.msra.mxu0 %v2594
      %2617 = vmatprep.subr.bf16.mxu0 0
      %2618 = vmatpush1.bf16.msra.mxu0 %v2595
      %2619 = vmatprep.subr.bf16.mxu0 0
      %2620 = vmatpush1.bf16.msra.mxu0 %v2596
      %2621 = vmatprep.subr.bf16.mxu0 0
      %2622 = vmatpush1.bf16.msra.mxu0 0
      %2623 = vmatprep.subr.bf16.mxu0 0
      %2624 = vmatpush1.bf16.msra.mxu0 0
      %2625 = vmatprep.subr.bf16.mxu0 0
      %2626 = vmatpush1.bf16.msra.mxu0 0
      %2627 = vmatprep.subr.bf16.mxu0 0
      %2628 = vmatpush1.bf16.msra.mxu0 0
      %2629 = vmatprep.subr.bf16.mxu0 0
      %2630 = vmatpush1.bf16.msra.mxu0 0
      %2631 = vmatprep.subr.bf16.mxu0 0
      %2632 = vmatpush1.bf16.msra.mxu0 0
      %2633 = vmatprep.subr.bf16.mxu0 0
      %2634 = vmatpush1.bf16.msra.mxu0 0
      %2635 = vmatprep.subr.bf16.mxu0 0
      %2636 = vmatpush1.bf16.msra.mxu0 0
      %2637 = vmatprep.mubr.bf16.mxu0 0
      %2638 = vmatmul.mubr.bf16.gmra.mrb[0].mxu0 %v700
      %v2639 = vpop.f32.mrb[0].mxu0
      %v2640 = vadd.f32 0.0, %v2639
      %v2641 = vpop.f32.mrb[0].mxu0
      %v2642 = vpop.f32.mrb[0].mxu0
      %v2643 = vadd.f32 0.0, %v2642
      %v2644 = vpop.f32.mrb[0].mxu0
      %2645 = vmatprep.mubr.bf16.mxu0 0
      %2646 = vmatmul.mubr.bf16.gmra.mrb[0].mxu0 %v702
      %v2647 = vpop.f32.mrb[0].mxu0
      %v2648 = vadd.f32 0.0, %v2647
      %v2649 = vpop.f32.mrb[0].mxu0
      %v2650 = vpop.f32.mrb[0].mxu0
      %v2651 = vadd.f32 0.0, %v2650
      %v2652 = vpop.f32.mrb[0].mxu0
      %2653 = vmatprep.mubr.bf16.mxu0 0
      %2654 = vmatmul.mubr.bf16.gmra.mrb[0].mxu0 %v704
      %v2655 = vpop.f32.mrb[0].mxu0
      %v2656 = vadd.f32 0.0, %v2655
      %v2657 = vpop.f32.mrb[0].mxu0
      %v2658 = vpop.f32.mrb[0].mxu0
      %v2659 = vadd.f32 0.0, %v2658
      %v2660 = vpop.f32.mrb[0].mxu0
      %2661 = vmatprep.mubr.bf16.mxu0 0
      %2662 = vmatmul.mubr.bf16.gmra.mrb[0].mxu0 %v706
      %v2663 = vpop.f32.mrb[0].mxu0
      %v2664 = vadd.f32 0.0, %v2663
      %v2665 = vpop.f32.mrb[0].mxu0
      %v2666 = vpop.f32.mrb[0].mxu0
      %v2667 = vadd.f32 0.0, %v2666
      %v2668 = vpop.f32.mrb[0].mxu0
      %2669 = vmatprep.mubr.bf16.mxu0 0
      %2670 = vmatmul.mubr.bf16.gmra.mrb[0].mxu0 %v708
      %v2671 = vpop.f32.mrb[0].mxu0
      %v2672 = vadd.f32 0.0, %v2671
      %v2673 = vpop.f32.mrb[0].mxu0
      %v2674 = vpop.f32.mrb[0].mxu0
      %v2675 = vadd.f32 0.0, %v2674
      %v2676 = vpop.f32.mrb[0].mxu0
      %2677 = vmatprep.mubr.bf16.mxu0 0
      %2678 = vmatmul.mubr.bf16.gmra.mrb[0].mxu0 %v710
      %v2679 = vpop.f32.mrb[0].mxu0
      %v2680 = vadd.f32 0.0, %v2679
      %v2681 = vpop.f32.mrb[0].mxu0
      %v2682 = vpop.f32.mrb[0].mxu0
      %v2683 = vadd.f32 0.0, %v2682
      %v2684 = vpop.f32.mrb[0].mxu0
      %2685 = vmatprep.mubr.bf16.mxu0 0
      %2686 = vmatmul.mubr.bf16.gmra.mrb[0].mxu0 %v712
      %v2687 = vpop.f32.mrb[0].mxu0
      %v2688 = vadd.f32 0.0, %v2687
      %v2689 = vpop.f32.mrb[0].mxu0
      %v2690 = vpop.f32.mrb[0].mxu0
      %v2691 = vadd.f32 0.0, %v2690
      %v2692 = vpop.f32.mrb[0].mxu0
      %2693 = vmatprep.mubr.bf16.mxu0 0
      %2694 = vmatmul.mubr.bf16.gmra.mrb[0].mxu0 %v714
      %v2695 = vpop.f32.mrb[0].mxu0
      %v2696 = vadd.f32 0.0, %v2695
      %v2697 = vpop.f32.mrb[0].mxu0
      %v2698 = vpop.f32.mrb[0].mxu0
      %v2699 = vadd.f32 0.0, %v2698
      %v2700 = vpop.f32.mrb[0].mxu0
      %2701 = vmatprep.mubr.bf16.mxu0 0
      %2702 = vmatmul.mubr.bf16.gmra.mrb[0].mxu0 %v716
      %v2703 = vpop.f32.mrb[0].mxu0
      %v2704 = vadd.f32 0.0, %v2703
      %v2705 = vpop.f32.mrb[0].mxu0
      %v2706 = vpop.f32.mrb[0].mxu0
      %v2707 = vadd.f32 0.0, %v2706
      %v2708 = vpop.f32.mrb[0].mxu0
      %2709 = vmatprep.mubr.bf16.mxu0 0
      %2710 = vmatmul.mubr.bf16.gmra.mrb[0].mxu0 %v718
      %v2711 = vpop.f32.mrb[0].mxu0
      %v2712 = vadd.f32 0.0, %v2711
      %v2713 = vpop.f32.mrb[0].mxu0
      %v2714 = vpop.f32.mrb[0].mxu0
      %v2715 = vadd.f32 0.0, %v2714
      %v2716 = vpop.f32.mrb[0].mxu0
      %2717 = vmatprep.mubr.bf16.mxu0 0
      %2718 = vmatmul.mubr.bf16.gmra.mrb[0].mxu0 %v720
      %v2719 = vpop.f32.mrb[0].mxu0
      %v2720 = vadd.f32 0.0, %v2719
      %v2721 = vpop.f32.mrb[0].mxu0
      %v2722 = vpop.f32.mrb[0].mxu0
      %v2723 = vadd.f32 0.0, %v2722
      %v2724 = vpop.f32.mrb[0].mxu0
      %2725 = vmatprep.mubr.bf16.mxu0 0
      %2726 = vmatmul.mubr.bf16.gmra.mrb[0].mxu0 %v722
      %v2727 = vpop.f32.mrb[0].mxu0
      %v2728 = vadd.f32 0.0, %v2727
      %v2729 = vpop.f32.mrb[0].mxu0
      %v2730 = vpop.f32.mrb[0].mxu0
      %v2731 = vadd.f32 0.0, %v2730
      %v2732 = vpop.f32.mrb[0].mxu0
      %2733 = vmatprep.mubr.bf16.mxu0 0
      %2734 = vmatmul.mubr.bf16.gmra.mrb[0].mxu0 %v724
      %v2735 = vpop.f32.mrb[0].mxu0
      %v2736 = vadd.f32 0.0, %v2735
      %v2737 = vpop.f32.mrb[0].mxu0
      %v2738 = vpop.f32.mrb[0].mxu0
      %v2739 = vadd.f32 0.0, %v2738
      %v2740 = vpop.f32.mrb[0].mxu0
      %2741 = vmatprep.mubr.bf16.mxu0 0
      %2742 = vmatmul.mubr.bf16.gmra.mrb[0].mxu0 %v726
      %v2743 = vpop.f32.mrb[0].mxu0
      %v2744 = vadd.f32 0.0, %v2743
      %v2745 = vpop.f32.mrb[0].mxu0
      %v2746 = vpop.f32.mrb[0].mxu0
      %v2747 = vadd.f32 0.0, %v2746
      %v2748 = vpop.f32.mrb[0].mxu0
      %2749 = vmatprep.mubr.bf16.mxu0 0
      %2750 = vmatmul.mubr.bf16.gmra.mrb[0].mxu0 %v728
      %v2751 = vpop.f32.mrb[0].mxu0
      %v2752 = vadd.f32 0.0, %v2751
      %v2753 = vpop.f32.mrb[0].mxu0
      %v2754 = vpop.f32.mrb[0].mxu0
      %v2755 = vadd.f32 0.0, %v2754
      %v2756 = vpop.f32.mrb[0].mxu0
      %2757 = vmatprep.mubr.bf16.mxu0 0
      %2758 = vmatmul.mubr.bf16.gmra.mrb[0].mxu0 %v730
      %v2759 = vpop.f32.mrb[0].mxu0
      %v2760 = vadd.f32 0.0, %v2759
      %v2761 = vpop.f32.mrb[0].mxu0
      %v2762 = vpop.f32.mrb[0].mxu0
      %v2763 = vadd.f32 0.0, %v2762
      %v2764 = vpop.f32.mrb[0].mxu0
      %2765 = vdwg.mxu0
      %v2766 = vadd.f32 %v2508, %v2640
      %v2767 = vadd.f32 %v2509, %v2643
      %v2768 = vadd.f32 %v2510, %v2648
      %v2769 = vadd.f32 %v2511, %v2651
      %v2770 = vadd.f32 %v2512, %v2656
      %v2771 = vadd.f32 %v2513, %v2659
      %v2772 = vadd.f32 %v2514, %v2664
      %v2773 = vadd.f32 %v2515, %v2667
      %v2774 = vadd.f32 %v2516, %v2672
      %v2775 = vadd.f32 %v2517, %v2675
      %v2776 = vadd.f32 %v2518, %v2680
      %v2777 = vadd.f32 %v2519, %v2683
      %v2778 = vadd.f32 %v2520, %v2688
      %v2779 = vadd.f32 %v2521, %v2691
      %v2780 = vadd.f32 %v2522, %v2696
      %v2781 = vadd.f32 %v2523, %v2699
      %v2782 = vadd.f32 %v2524, %v2704
      %v2783 = vadd.f32 %v2525, %v2707
      %v2784 = vadd.f32 %v2526, %v2712
      %v2785 = vadd.f32 %v2527, %v2715
      %v2786 = vadd.f32 %v2528, %v2720
      %v2787 = vadd.f32 %v2529, %v2723
      %v2788 = vadd.f32 %v2530, %v2728
      %v2789 = vadd.f32 %v2531, %v2731
      %v2790 = vadd.f32 %v2532, %v2736
      %v2791 = vadd.f32 %v2533, %v2739
      %v2792 = vadd.f32 %v2534, %v2744
      %v2793 = vadd.f32 %v2535, %v2747
      %v2794 = vadd.f32 %v2536, %v2752
      %v2795 = vadd.f32 %v2537, %v2755
      %v2796 = vadd.f32 %v2538, %v2760
      %v2797 = vadd.f32 %v2539, %v2763
      %v2799 = vshrl.u32 %v730, 16
      %v2801 = vshll.u32 %v730, 16
      %v2803 = vrot.slane %v2801, 1
      %v2804 = vor.u32 %v2799, %v2803
      %v2806 = vshll.u32 %v731, 16
      %v2808 = vrot.slane %v2806, 1
      %v2809 = vsel %vm748, %v2804, %v2808
      %s2811 = scalar_lea.vmem %s3, 448
      %v2812 = vld [vmem:[%s2811] sm:$0xf]
      %v2813 = vld [vmem:[%s2811 + $0x4] sm:$0xf]
      %v2814 = vld [vmem:[%s2811 + $0x8] sm:$0xf]
      %v2815 = vld [vmem:[%s2811 + $0xc] sm:$0xf]
      %v2816 = vld [vmem:[%s2811 + $0x10] sm:$0xf]
      %v2817 = vld [vmem:[%s2811 + $0x14] sm:$0xf]
      %v2818 = vld [vmem:[%s2811 + $0x18] sm:$0xf]
      %v2819 = vld [vmem:[%s2811 + $0x1c] sm:$0xf]
      %v2820 = vld [vmem:[%s2811 + $0x20] sm:$0xf]
      %v2821 = vld [vmem:[%s2811 + $0x24] sm:$0xf]
      %v2822 = vld [vmem:[%s2811 + $0x28] sm:$0xf]
      %v2823 = vld [vmem:[%s2811 + $0x2c] sm:$0xf]
      %v2824 = vld [vmem:[%s2811 + $0x30] sm:$0xf]
      %v2825 = vld [vmem:[%s2811 + $0x34] sm:$0xf]
      %v2826 = vld [vmem:[%s2811 + $0x38] sm:$0xf]
      %v2827 = vld [vmem:[%s2811 + $0x3c] sm:$0xf]
      %v2844 = vunpack.c.l.b16 %v2812
      %v2845 = vunpack.c.l.b16 %v2813
      %v2846 = vunpack.c.l.b16 %v2814
      %v2847 = vunpack.c.l.b16 %v2815
      %v2848 = vunpack.c.l.b16 %v2816
      %v2849 = vunpack.c.l.b16 %v2817
      %v2850 = vunpack.c.l.b16 %v2818
      %v2851 = vunpack.c.l.b16 %v2819
      %v2852 = vunpack.c.l.b16 %v2820
      %v2853 = vunpack.c.l.b16 %v2821
      %v2854 = vunpack.c.l.b16 %v2822
      %v2855 = vunpack.c.l.b16 %v2823
      %v2856 = vunpack.c.l.b16 %v2824
      %v2857 = vunpack.c.l.b16 %v2825
      %v2858 = vunpack.c.l.b16 %v2826
      %v2859 = vunpack.c.l.b16 %v2827
      %v2860 = vpack.c.b16 %v2845, %v2844
      %v2861 = vpack.c.b16 %v2847, %v2846
      %v2862 = vpack.c.b16 %v2849, %v2848
      %v2863 = vpack.c.b16 %v2851, %v2850
      %v2864 = vpack.c.b16 %v2853, %v2852
      %v2865 = vpack.c.b16 %v2855, %v2854
      %v2866 = vpack.c.b16 %v2857, %v2856
      %v2867 = vpack.c.b16 %v2859, %v2858
      %2876 = vmatprep.subr.bf16.mxu0 0
      %2877 = vmatpush1.bf16.msra.mxu0 %v2860
      %2878 = vmatprep.subr.bf16.mxu0 0
      %2879 = vmatpush1.bf16.msra.mxu0 %v2861
      %2880 = vmatprep.subr.bf16.mxu0 0
      %2881 = vmatpush1.bf16.msra.mxu0 %v2862
      %2882 = vmatprep.subr.bf16.mxu0 0
      %2883 = vmatpush1.bf16.msra.mxu0 %v2863
      %2884 = vmatprep.subr.bf16.mxu0 0
      %2885 = vmatpush1.bf16.msra.mxu0 %v2864
      %2886 = vmatprep.subr.bf16.mxu0 0
      %2887 = vmatpush1.bf16.msra.mxu0 %v2865
      %2888 = vmatprep.subr.bf16.mxu0 0
      %2889 = vmatpush1.bf16.msra.mxu0 %v2866
      %2890 = vmatprep.subr.bf16.mxu0 0
      %2891 = vmatpush1.bf16.msra.mxu0 %v2867
      %2892 = vmatprep.subr.bf16.mxu0 0
      %2893 = vmatpush1.bf16.msra.mxu0 0
      %2894 = vmatprep.subr.bf16.mxu0 0
      %2895 = vmatpush1.bf16.msra.mxu0 0
      %2896 = vmatprep.subr.bf16.mxu0 0
      %2897 = vmatpush1.bf16.msra.mxu0 0
      %2898 = vmatprep.subr.bf16.mxu0 0
      %2899 = vmatpush1.bf16.msra.mxu0 0
      %2900 = vmatprep.subr.bf16.mxu0 0
      %2901 = vmatpush1.bf16.msra.mxu0 0
      %2902 = vmatprep.subr.bf16.mxu0 0
      %2903 = vmatpush1.bf16.msra.mxu0 0
      %2904 = vmatprep.subr.bf16.mxu0 0
      %2905 = vmatpush1.bf16.msra.mxu0 0
      %2906 = vmatprep.subr.bf16.mxu0 0
      %2907 = vmatpush1.bf16.msra.mxu0 0
      %2908 = vmatprep.mubr.bf16.mxu0 0
      %2909 = vmatmul.mubr.bf16.gmra.mrb[0].mxu0 %v784
      %v2910 = vpop.f32.mrb[0].mxu0
      %v2911 = vadd.f32 0.0, %v2910
      %v2912 = vpop.f32.mrb[0].mxu0
      %v2913 = vpop.f32.mrb[0].mxu0
      %v2914 = vadd.f32 0.0, %v2913
      %v2915 = vpop.f32.mrb[0].mxu0
      %2916 = vmatprep.mubr.bf16.mxu0 0
      %2917 = vmatmul.mubr.bf16.gmra.mrb[0].mxu0 %v796
      %v2918 = vpop.f32.mrb[0].mxu0
      %v2919 = vadd.f32 0.0, %v2918
      %v2920 = vpop.f32.mrb[0].mxu0
      %v2921 = vpop.f32.mrb[0].mxu0
      %v2922 = vadd.f32 0.0, %v2921
      %v2923 = vpop.f32.mrb[0].mxu0
      %2924 = vmatprep.mubr.bf16.mxu0 0
      %2925 = vmatmul.mubr.bf16.gmra.mrb[0].mxu0 %v808
      %v2926 = vpop.f32.mrb[0].mxu0
      %v2927 = vadd.f32 0.0, %v2926
      %v2928 = vpop.f32.mrb[0].mxu0
      %v2929 = vpop.f32.mrb[0].mxu0
      %v2930 = vadd.f32 0.0, %v2929
      %v2931 = vpop.f32.mrb[0].mxu0
      %2932 = vmatprep.mubr.bf16.mxu0 0
      %2933 = vmatmul.mubr.bf16.gmra.mrb[0].mxu0 %v820
      %v2934 = vpop.f32.mrb[0].mxu0
      %v2935 = vadd.f32 0.0, %v2934
      %v2936 = vpop.f32.mrb[0].mxu0
      %v2937 = vpop.f32.mrb[0].mxu0
      %v2938 = vadd.f32 0.0, %v2937
      %v2939 = vpop.f32.mrb[0].mxu0
      %2940 = vmatprep.mubr.bf16.mxu0 0
      %2941 = vmatmul.mubr.bf16.gmra.mrb[0].mxu0 %v832
      %v2942 = vpop.f32.mrb[0].mxu0
      %v2943 = vadd.f32 0.0, %v2942
      %v2944 = vpop.f32.mrb[0].mxu0
      %v2945 = vpop.f32.mrb[0].mxu0
      %v2946 = vadd.f32 0.0, %v2945
      %v2947 = vpop.f32.mrb[0].mxu0
      %2948 = vmatprep.mubr.bf16.mxu0 0
      %2949 = vmatmul.mubr.bf16.gmra.mrb[0].mxu0 %v844
      %v2950 = vpop.f32.mrb[0].mxu0
      %v2951 = vadd.f32 0.0, %v2950
      %v2952 = vpop.f32.mrb[0].mxu0
      %v2953 = vpop.f32.mrb[0].mxu0
      %v2954 = vadd.f32 0.0, %v2953
      %v2955 = vpop.f32.mrb[0].mxu0
      %2956 = vmatprep.mubr.bf16.mxu0 0
      %2957 = vmatmul.mubr.bf16.gmra.mrb[0].mxu0 %v856
      %v2958 = vpop.f32.mrb[0].mxu0
      %v2959 = vadd.f32 0.0, %v2958
      %v2960 = vpop.f32.mrb[0].mxu0
      %v2961 = vpop.f32.mrb[0].mxu0
      %v2962 = vadd.f32 0.0, %v2961
      %v2963 = vpop.f32.mrb[0].mxu0
      %2964 = vmatprep.mubr.bf16.mxu0 0
      %2965 = vmatmul.mubr.bf16.gmra.mrb[0].mxu0 %v868
      %v2966 = vpop.f32.mrb[0].mxu0
      %v2967 = vadd.f32 0.0, %v2966
      %v2968 = vpop.f32.mrb[0].mxu0
      %v2969 = vpop.f32.mrb[0].mxu0
      %v2970 = vadd.f32 0.0, %v2969
      %v2971 = vpop.f32.mrb[0].mxu0
      %2972 = vmatprep.mubr.bf16.mxu0 0
      %2973 = vmatmul.mubr.bf16.gmra.mrb[0].mxu0 %v880
      %v2974 = vpop.f32.mrb[0].mxu0
      %v2975 = vadd.f32 0.0, %v2974
      %v2976 = vpop.f32.mrb[0].mxu0
      %v2977 = vpop.f32.mrb[0].mxu0
      %v2978 = vadd.f32 0.0, %v2977
      %v2979 = vpop.f32.mrb[0].mxu0
      %2980 = vmatprep.mubr.bf16.mxu0 0
      %2981 = vmatmul.mubr.bf16.gmra.mrb[0].mxu0 %v892
      %v2982 = vpop.f32.mrb[0].mxu0
      %v2983 = vadd.f32 0.0, %v2982
      %v2984 = vpop.f32.mrb[0].mxu0
      %v2985 = vpop.f32.mrb[0].mxu0
      %v2986 = vadd.f32 0.0, %v2985
      %v2987 = vpop.f32.mrb[0].mxu0
      %2988 = vmatprep.mubr.bf16.mxu0 0
      %2989 = vmatmul.mubr.bf16.gmra.mrb[0].mxu0 %v904
      %v2990 = vpop.f32.mrb[0].mxu0
      %v2991 = vadd.f32 0.0, %v2990
      %v2992 = vpop.f32.mrb[0].mxu0
      %v2993 = vpop.f32.mrb[0].mxu0
      %v2994 = vadd.f32 0.0, %v2993
      %v2995 = vpop.f32.mrb[0].mxu0
      %2996 = vmatprep.mubr.bf16.mxu0 0
      %2997 = vmatmul.mubr.bf16.gmra.mrb[0].mxu0 %v916
      %v2998 = vpop.f32.mrb[0].mxu0
      %v2999 = vadd.f32 0.0, %v2998
      %v3000 = vpop.f32.mrb[0].mxu0
      %v3001 = vpop.f32.mrb[0].mxu0
      %v3002 = vadd.f32 0.0, %v3001
      %v3003 = vpop.f32.mrb[0].mxu0
      %3004 = vmatprep.mubr.bf16.mxu0 0
      %3005 = vmatmul.mubr.bf16.gmra.mrb[0].mxu0 %v928
      %v3006 = vpop.f32.mrb[0].mxu0
      %v3007 = vadd.f32 0.0, %v3006
      %v3008 = vpop.f32.mrb[0].mxu0
      %v3009 = vpop.f32.mrb[0].mxu0
      %v3010 = vadd.f32 0.0, %v3009
      %v3011 = vpop.f32.mrb[0].mxu0
      %3012 = vmatprep.mubr.bf16.mxu0 0
      %3013 = vmatmul.mubr.bf16.gmra.mrb[0].mxu0 %v940
      %v3014 = vpop.f32.mrb[0].mxu0
      %v3015 = vadd.f32 0.0, %v3014
      %v3016 = vpop.f32.mrb[0].mxu0
      %v3017 = vpop.f32.mrb[0].mxu0
      %v3018 = vadd.f32 0.0, %v3017
      %v3019 = vpop.f32.mrb[0].mxu0
      %3020 = vmatprep.mubr.bf16.mxu0 0
      %3021 = vmatmul.mubr.bf16.gmra.mrb[0].mxu0 %v2016
      %v3022 = vpop.f32.mrb[0].mxu0
      %v3023 = vadd.f32 0.0, %v3022
      %v3024 = vpop.f32.mrb[0].mxu0
      %v3025 = vpop.f32.mrb[0].mxu0
      %v3026 = vadd.f32 0.0, %v3025
      %v3027 = vpop.f32.mrb[0].mxu0
      %3028 = vmatprep.mubr.bf16.mxu0 0
      %3029 = vmatmul.mubr.bf16.gmra.mrb[0].mxu0 %v2809
      %v3030 = vpop.f32.mrb[0].mxu0
      %v3031 = vadd.f32 0.0, %v3030
      %v3032 = vpop.f32.mrb[0].mxu0
      %v3033 = vpop.f32.mrb[0].mxu0
      %v3034 = vadd.f32 0.0, %v3033
      %v3035 = vpop.f32.mrb[0].mxu0
      %3036 = vdwg.mxu0
      %v3037 = vadd.f32 %v2766, %v2911
      %v3038 = vadd.f32 %v2767, %v2914
      %v3039 = vadd.f32 %v2768, %v2919
      %v3040 = vadd.f32 %v2769, %v2922
      %v3041 = vadd.f32 %v2770, %v2927
      %v3042 = vadd.f32 %v2771, %v2930
      %v3043 = vadd.f32 %v2772, %v2935
      %v3044 = vadd.f32 %v2773, %v2938
      %v3045 = vadd.f32 %v2774, %v2943
      %v3046 = vadd.f32 %v2775, %v2946
      %v3047 = vadd.f32 %v2776, %v2951
      %v3048 = vadd.f32 %v2777, %v2954
      %v3049 = vadd.f32 %v2778, %v2959
      %v3050 = vadd.f32 %v2779, %v2962
      %v3051 = vadd.f32 %v2780, %v2967
      %v3052 = vadd.f32 %v2781, %v2970
      %v3053 = vadd.f32 %v2782, %v2975
      %v3054 = vadd.f32 %v2783, %v2978
      %v3055 = vadd.f32 %v2784, %v2983
      %v3056 = vadd.f32 %v2785, %v2986
      %v3057 = vadd.f32 %v2786, %v2991
      %v3058 = vadd.f32 %v2787, %v2994
      %v3059 = vadd.f32 %v2788, %v2999
      %v3060 = vadd.f32 %v2789, %v3002
      %v3061 = vadd.f32 %v2790, %v3007
      %v3062 = vadd.f32 %v2791, %v3010
      %v3063 = vadd.f32 %v2792, %v3015
      %v3064 = vadd.f32 %v2793, %v3018
      %v3065 = vadd.f32 %v2794, %v3023
      %v3066 = vadd.f32 %v2795, %v3026
      %v3067 = vadd.f32 %v2796, %v3031
      %v3068 = vadd.f32 %v2797, %v3034
      %v3071 = vrot.slane %v730, 1
      %v3072 = vrot.slane %v731, 1
      %v3073 = vsel %vm1424, %v3071, %v3072
      %s3075 = scalar_lea.vmem %s3, 512
      %v3076 = vld [vmem:[%s3075] sm:$0xf]
      %v3077 = vld [vmem:[%s3075 + $0x4] sm:$0xf]
      %v3078 = vld [vmem:[%s3075 + $0x8] sm:$0xf]
      %v3079 = vld [vmem:[%s3075 + $0xc] sm:$0xf]
      %v3080 = vld [vmem:[%s3075 + $0x10] sm:$0xf]
      %v3081 = vld [vmem:[%s3075 + $0x14] sm:$0xf]
      %v3082 = vld [vmem:[%s3075 + $0x18] sm:$0xf]
      %v3083 = vld [vmem:[%s3075 + $0x1c] sm:$0xf]
      %v3084 = vld [vmem:[%s3075 + $0x20] sm:$0xf]
      %v3085 = vld [vmem:[%s3075 + $0x24] sm:$0xf]
      %v3086 = vld [vmem:[%s3075 + $0x28] sm:$0xf]
      %v3087 = vld [vmem:[%s3075 + $0x2c] sm:$0xf]
      %v3088 = vld [vmem:[%s3075 + $0x30] sm:$0xf]
      %v3089 = vld [vmem:[%s3075 + $0x34] sm:$0xf]
      %v3090 = vld [vmem:[%s3075 + $0x38] sm:$0xf]
      %v3091 = vld [vmem:[%s3075 + $0x3c] sm:$0xf]
      %v3108 = vunpack.c.l.b16 %v3076
      %v3109 = vunpack.c.l.b16 %v3077
      %v3110 = vunpack.c.l.b16 %v3078
      %v3111 = vunpack.c.l.b16 %v3079
      %v3112 = vunpack.c.l.b16 %v3080
      %v3113 = vunpack.c.l.b16 %v3081
      %v3114 = vunpack.c.l.b16 %v3082
      %v3115 = vunpack.c.l.b16 %v3083
      %v3116 = vunpack.c.l.b16 %v3084
      %v3117 = vunpack.c.l.b16 %v3085
      %v3118 = vunpack.c.l.b16 %v3086
      %v3119 = vunpack.c.l.b16 %v3087
      %v3120 = vunpack.c.l.b16 %v3088
      %v3121 = vunpack.c.l.b16 %v3089
      %v3122 = vunpack.c.l.b16 %v3090
      %v3123 = vunpack.c.l.b16 %v3091
      %v3124 = vpack.c.b16 %v3109, %v3108
      %v3125 = vpack.c.b16 %v3111, %v3110
      %v3126 = vpack.c.b16 %v3113, %v3112
      %v3127 = vpack.c.b16 %v3115, %v3114
      %v3128 = vpack.c.b16 %v3117, %v3116
      %v3129 = vpack.c.b16 %v3119, %v3118
      %v3130 = vpack.c.b16 %v3121, %v3120
      %v3131 = vpack.c.b16 %v3123, %v3122
      %3140 = vmatprep.subr.bf16.mxu0 0
      %3141 = vmatpush1.bf16.msra.mxu0 %v3124
      %3142 = vmatprep.subr.bf16.mxu0 0
      %3143 = vmatpush1.bf16.msra.mxu0 %v3125
      %3144 = vmatprep.subr.bf16.mxu0 0
      %3145 = vmatpush1.bf16.msra.mxu0 %v3126
      %3146 = vmatprep.subr.bf16.mxu0 0
      %3147 = vmatpush1.bf16.msra.mxu0 %v3127
      %3148 = vmatprep.subr.bf16.mxu0 0
      %3149 = vmatpush1.bf16.msra.mxu0 %v3128
      %3150 = vmatprep.subr.bf16.mxu0 0
      %3151 = vmatpush1.bf16.msra.mxu0 %v3129
      %3152 = vmatprep.subr.bf16.mxu0 0
      %3153 = vmatpush1.bf16.msra.mxu0 %v3130
      %3154 = vmatprep.subr.bf16.mxu0 0
      %3155 = vmatpush1.bf16.msra.mxu0 %v3131
      %3156 = vmatprep.subr.bf16.mxu0 0
      %3157 = vmatpush1.bf16.msra.mxu0 0
      %3158 = vmatprep.subr.bf16.mxu0 0
      %3159 = vmatpush1.bf16.msra.mxu0 0
      %3160 = vmatprep.subr.bf16.mxu0 0
      %3161 = vmatpush1.bf16.msra.mxu0 0
      %3162 = vmatprep.subr.bf16.mxu0 0
      %3163 = vmatpush1.bf16.msra.mxu0 0
      %3164 = vmatprep.subr.bf16.mxu0 0
      %3165 = vmatpush1.bf16.msra.mxu0 0
      %3166 = vmatprep.subr.bf16.mxu0 0
      %3167 = vmatpush1.bf16.msra.mxu0 0
      %3168 = vmatprep.subr.bf16.mxu0 0
      %3169 = vmatpush1.bf16.msra.mxu0 0
      %3170 = vmatprep.subr.bf16.mxu0 0
      %3171 = vmatpush1.bf16.msra.mxu0 0
      %3172 = vmatprep.mubr.bf16.mxu0 0
      %3173 = vmatmul.mubr.bf16.gmra.mrb[0].mxu0 %v1433
      %v3174 = vpop.f32.mrb[0].mxu0
      %v3175 = vadd.f32 0.0, %v3174
      %v3176 = vpop.f32.mrb[0].mxu0
      %v3177 = vpop.f32.mrb[0].mxu0
      %v3178 = vadd.f32 0.0, %v3177
      %v3179 = vpop.f32.mrb[0].mxu0
      %3180 = vmatprep.mubr.bf16.mxu0 0
      %3181 = vmatmul.mubr.bf16.gmra.mrb[0].mxu0 %v1436
      %v3182 = vpop.f32.mrb[0].mxu0
      %v3183 = vadd.f32 0.0, %v3182
      %v3184 = vpop.f32.mrb[0].mxu0
      %v3185 = vpop.f32.mrb[0].mxu0
      %v3186 = vadd.f32 0.0, %v3185
      %v3187 = vpop.f32.mrb[0].mxu0
      %3188 = vmatprep.mubr.bf16.mxu0 0
      %3189 = vmatmul.mubr.bf16.gmra.mrb[0].mxu0 %v1439
      %v3190 = vpop.f32.mrb[0].mxu0
      %v3191 = vadd.f32 0.0, %v3190
      %v3192 = vpop.f32.mrb[0].mxu0
      %v3193 = vpop.f32.mrb[0].mxu0
      %v3194 = vadd.f32 0.0, %v3193
      %v3195 = vpop.f32.mrb[0].mxu0
      %3196 = vmatprep.mubr.bf16.mxu0 0
      %3197 = vmatmul.mubr.bf16.gmra.mrb[0].mxu0 %v1442
      %v3198 = vpop.f32.mrb[0].mxu0
      %v3199 = vadd.f32 0.0, %v3198
      %v3200 = vpop.f32.mrb[0].mxu0
      %v3201 = vpop.f32.mrb[0].mxu0
      %v3202 = vadd.f32 0.0, %v3201
      %v3203 = vpop.f32.mrb[0].mxu0
      %3204 = vmatprep.mubr.bf16.mxu0 0
      %3205 = vmatmul.mubr.bf16.gmra.mrb[0].mxu0 %v1445
      %v3206 = vpop.f32.mrb[0].mxu0
      %v3207 = vadd.f32 0.0, %v3206
      %v3208 = vpop.f32.mrb[0].mxu0
      %v3209 = vpop.f32.mrb[0].mxu0
      %v3210 = vadd.f32 0.0, %v3209
      %v3211 = vpop.f32.mrb[0].mxu0
      %3212 = vmatprep.mubr.bf16.mxu0 0
      %3213 = vmatmul.mubr.bf16.gmra.mrb[0].mxu0 %v1448
      %v3214 = vpop.f32.mrb[0].mxu0
      %v3215 = vadd.f32 0.0, %v3214
      %v3216 = vpop.f32.mrb[0].mxu0
      %v3217 = vpop.f32.mrb[0].mxu0
      %v3218 = vadd.f32 0.0, %v3217
      %v3219 = vpop.f32.mrb[0].mxu0
      %3220 = vmatprep.mubr.bf16.mxu0 0
      %3221 = vmatmul.mubr.bf16.gmra.mrb[0].mxu0 %v1451
      %v3222 = vpop.f32.mrb[0].mxu0
      %v3223 = vadd.f32 0.0, %v3222
      %v3224 = vpop.f32.mrb[0].mxu0
      %v3225 = vpop.f32.mrb[0].mxu0
      %v3226 = vadd.f32 0.0, %v3225
      %v3227 = vpop.f32.mrb[0].mxu0
      %3228 = vmatprep.mubr.bf16.mxu0 0
      %3229 = vmatmul.mubr.bf16.gmra.mrb[0].mxu0 %v1454
      %v3230 = vpop.f32.mrb[0].mxu0
      %v3231 = vadd.f32 0.0, %v3230
      %v3232 = vpop.f32.mrb[0].mxu0
      %v3233 = vpop.f32.mrb[0].mxu0
      %v3234 = vadd.f32 0.0, %v3233
      %v3235 = vpop.f32.mrb[0].mxu0
      %3236 = vmatprep.mubr.bf16.mxu0 0
      %3237 = vmatmul.mubr.bf16.gmra.mrb[0].mxu0 %v1457
      %v3238 = vpop.f32.mrb[0].mxu0
      %v3239 = vadd.f32 0.0, %v3238
      %v3240 = vpop.f32.mrb[0].mxu0
      %v3241 = vpop.f32.mrb[0].mxu0
      %v3242 = vadd.f32 0.0, %v3241
      %v3243 = vpop.f32.mrb[0].mxu0
      %3244 = vmatprep.mubr.bf16.mxu0 0
      %3245 = vmatmul.mubr.bf16.gmra.mrb[0].mxu0 %v1460
      %v3246 = vpop.f32.mrb[0].mxu0
      %v3247 = vadd.f32 0.0, %v3246
      %v3248 = vpop.f32.mrb[0].mxu0
      %v3249 = vpop.f32.mrb[0].mxu0
      %v3250 = vadd.f32 0.0, %v3249
      %v3251 = vpop.f32.mrb[0].mxu0
      %3252 = vmatprep.mubr.bf16.mxu0 0
      %3253 = vmatmul.mubr.bf16.gmra.mrb[0].mxu0 %v1463
      %v3254 = vpop.f32.mrb[0].mxu0
      %v3255 = vadd.f32 0.0, %v3254
      %v3256 = vpop.f32.mrb[0].mxu0
      %v3257 = vpop.f32.mrb[0].mxu0
      %v3258 = vadd.f32 0.0, %v3257
      %v3259 = vpop.f32.mrb[0].mxu0
      %3260 = vmatprep.mubr.bf16.mxu0 0
      %3261 = vmatmul.mubr.bf16.gmra.mrb[0].mxu0 %v1466
      %v3262 = vpop.f32.mrb[0].mxu0
      %v3263 = vadd.f32 0.0, %v3262
      %v3264 = vpop.f32.mrb[0].mxu0
      %v3265 = vpop.f32.mrb[0].mxu0
      %v3266 = vadd.f32 0.0, %v3265
      %v3267 = vpop.f32.mrb[0].mxu0
      %3268 = vmatprep.mubr.bf16.mxu0 0
      %3269 = vmatmul.mubr.bf16.gmra.mrb[0].mxu0 %v1469
      %v3270 = vpop.f32.mrb[0].mxu0
      %v3271 = vadd.f32 0.0, %v3270
      %v3272 = vpop.f32.mrb[0].mxu0
      %v3273 = vpop.f32.mrb[0].mxu0
      %v3274 = vadd.f32 0.0, %v3273
      %v3275 = vpop.f32.mrb[0].mxu0
      %3276 = vmatprep.mubr.bf16.mxu0 0
      %3277 = vmatmul.mubr.bf16.gmra.mrb[0].mxu0 %v1472
      %v3278 = vpop.f32.mrb[0].mxu0
      %v3279 = vadd.f32 0.0, %v3278
      %v3280 = vpop.f32.mrb[0].mxu0
      %v3281 = vpop.f32.mrb[0].mxu0
      %v3282 = vadd.f32 0.0, %v3281
      %v3283 = vpop.f32.mrb[0].mxu0
      %3284 = vmatprep.mubr.bf16.mxu0 0
      %3285 = vmatmul.mubr.bf16.gmra.mrb[0].mxu0 %v2280
      %v3286 = vpop.f32.mrb[0].mxu0
      %v3287 = vadd.f32 0.0, %v3286
      %v3288 = vpop.f32.mrb[0].mxu0
      %v3289 = vpop.f32.mrb[0].mxu0
      %v3290 = vadd.f32 0.0, %v3289
      %v3291 = vpop.f32.mrb[0].mxu0
      %3292 = vmatprep.mubr.bf16.mxu0 0
      %3293 = vmatmul.mubr.bf16.gmra.mrb[0].mxu0 %v3073
      %v3294 = vpop.f32.mrb[0].mxu0
      %v3295 = vadd.f32 0.0, %v3294
      %v3296 = vpop.f32.mrb[0].mxu0
      %v3297 = vpop.f32.mrb[0].mxu0
      %v3298 = vadd.f32 0.0, %v3297
      %v3299 = vpop.f32.mrb[0].mxu0
      %3300 = vdwg.mxu0
      %v3301 = vadd.f32 %v3037, %v3175
      %v3302 = vadd.f32 %v3038, %v3178
      %v3303 = vadd.f32 %v3039, %v3183
      %v3304 = vadd.f32 %v3040, %v3186
      %v3305 = vadd.f32 %v3041, %v3191
      %v3306 = vadd.f32 %v3042, %v3194
      %v3307 = vadd.f32 %v3043, %v3199
      %v3308 = vadd.f32 %v3044, %v3202
      %v3309 = vadd.f32 %v3045, %v3207
      %v3310 = vadd.f32 %v3046, %v3210
      %v3311 = vadd.f32 %v3047, %v3215
      %v3312 = vadd.f32 %v3048, %v3218
      %v3313 = vadd.f32 %v3049, %v3223
      %v3314 = vadd.f32 %v3050, %v3226
      %v3315 = vadd.f32 %v3051, %v3231
      %v3316 = vadd.f32 %v3052, %v3234
      %v3317 = vadd.f32 %v3053, %v3239
      %v3318 = vadd.f32 %v3054, %v3242
      %v3319 = vadd.f32 %v3055, %v3247
      %v3320 = vadd.f32 %v3056, %v3250
      %v3321 = vadd.f32 %v3057, %v3255
      %v3322 = vadd.f32 %v3058, %v3258
      %v3323 = vadd.f32 %v3059, %v3263
      %v3324 = vadd.f32 %v3060, %v3266
      %v3325 = vadd.f32 %v3061, %v3271
      %v3326 = vadd.f32 %v3062, %v3274
      %v3327 = vadd.f32 %v3063, %v3279
      %v3328 = vadd.f32 %v3064, %v3282
      %v3329 = vadd.f32 %v3065, %v3287
      %v3330 = vadd.f32 %v3066, %v3290
      %v3331 = vadd.f32 %v3067, %v3295
      %v3332 = vadd.f32 %v3068, %v3298
      %v3333 = vpack.c.bf16 %v3302, %v3301
      %v3334 = vpack.c.bf16 %v3304, %v3303
      %v3335 = vpack.c.bf16 %v3306, %v3305
      %v3336 = vpack.c.bf16 %v3308, %v3307
      %v3337 = vpack.c.bf16 %v3310, %v3309
      %v3338 = vpack.c.bf16 %v3312, %v3311
      %v3339 = vpack.c.bf16 %v3314, %v3313
      %v3340 = vpack.c.bf16 %v3316, %v3315
      %v3341 = vpack.c.bf16 %v3318, %v3317
      %v3342 = vpack.c.bf16 %v3320, %v3319
      %v3343 = vpack.c.bf16 %v3322, %v3321
      %v3344 = vpack.c.bf16 %v3324, %v3323
      %v3345 = vpack.c.bf16 %v3326, %v3325
      %v3346 = vpack.c.bf16 %v3328, %v3327
      %v3347 = vpack.c.bf16 %v3330, %v3329
      %v3348 = vpack.c.bf16 %v3332, %v3331
      %v3365 = vunpack.c.l.b16 %v3333
      %v3366 = vunpack.c.h.b16 %v3333
      %v3367 = vunpack.c.l.b16 %v3334
      %v3368 = vunpack.c.h.b16 %v3334
      %v3369 = vunpack.c.l.b16 %v3335
      %v3370 = vunpack.c.h.b16 %v3335
      %v3371 = vunpack.c.l.b16 %v3336
      %v3372 = vunpack.c.h.b16 %v3336
      %v3373 = vunpack.c.l.b16 %v3337
      %v3374 = vunpack.c.h.b16 %v3337
      %v3375 = vunpack.c.l.b16 %v3338
      %v3376 = vunpack.c.h.b16 %v3338
      %v3377 = vunpack.c.l.b16 %v3339
      %v3378 = vunpack.c.h.b16 %v3339
      %v3379 = vunpack.c.l.b16 %v3340
      %v3380 = vunpack.c.h.b16 %v3340
      %v3381 = vunpack.c.l.b16 %v3341
      %v3382 = vunpack.c.h.b16 %v3341
      %v3383 = vunpack.c.l.b16 %v3342
      %v3384 = vunpack.c.h.b16 %v3342
      %v3385 = vunpack.c.l.b16 %v3343
      %v3386 = vunpack.c.h.b16 %v3343
      %v3387 = vunpack.c.l.b16 %v3344
      %v3388 = vunpack.c.h.b16 %v3344
      %v3389 = vunpack.c.l.b16 %v3345
      %v3390 = vunpack.c.h.b16 %v3345
      %v3391 = vunpack.c.l.b16 %v3346
      %v3392 = vunpack.c.h.b16 %v3346
      %v3393 = vunpack.c.l.b16 %v3347
      %v3394 = vunpack.c.h.b16 %v3347
      %v3395 = vunpack.c.l.b16 %v3348
      %v3396 = vunpack.c.h.b16 %v3348
      %v3397 = vpack.c.b16 %v3365, %v3365
      %v3398 = vpack.c.b16 %v3366, %v3366
      %v3399 = vpack.c.b16 %v3367, %v3367
      %v3400 = vpack.c.b16 %v3368, %v3368
      %v3401 = vpack.c.b16 %v3369, %v3369
      %v3402 = vpack.c.b16 %v3370, %v3370
      %v3403 = vpack.c.b16 %v3371, %v3371
      %v3404 = vpack.c.b16 %v3372, %v3372
      %v3405 = vpack.c.b16 %v3373, %v3373
      %v3406 = vpack.c.b16 %v3374, %v3374
      %v3407 = vpack.c.b16 %v3375, %v3375
      %v3408 = vpack.c.b16 %v3376, %v3376
      %v3409 = vpack.c.b16 %v3377, %v3377
      %v3410 = vpack.c.b16 %v3378, %v3378
      %v3411 = vpack.c.b16 %v3379, %v3379
      %v3412 = vpack.c.b16 %v3380, %v3380
      %v3413 = vpack.c.b16 %v3381, %v3381
      %v3414 = vpack.c.b16 %v3382, %v3382
      %v3415 = vpack.c.b16 %v3383, %v3383
      %v3416 = vpack.c.b16 %v3384, %v3384
      %v3417 = vpack.c.b16 %v3385, %v3385
      %v3418 = vpack.c.b16 %v3386, %v3386
      %v3419 = vpack.c.b16 %v3387, %v3387
      %v3420 = vpack.c.b16 %v3388, %v3388
      %v3421 = vpack.c.b16 %v3389, %v3389
      %v3422 = vpack.c.b16 %v3390, %v3390
      %v3423 = vpack.c.b16 %v3391, %v3391
      %v3424 = vpack.c.b16 %v3392, %v3392
      %v3425 = vpack.c.b16 %v3393, %v3393
      %v3426 = vpack.c.b16 %v3394, %v3394
      %v3427 = vpack.c.b16 %v3395, %v3395
      %v3428 = vpack.c.b16 %v3396, %v3396
      %3461 = vst [vmem:[%s262] sm:$0xf] %v3397
      %3462 = vst [vmem:[%s262 + $0x4] sm:$0xf] %v3398
      %3463 = vst [vmem:[%s262 + $0x8] sm:$0xf] %v3399
      %3464 = vst [vmem:[%s262 + $0xc] sm:$0xf] %v3400
      %3465 = vst [vmem:[%s262 + $0x10] sm:$0xf] %v3401
      %3466 = vst [vmem:[%s262 + $0x14] sm:$0xf] %v3402
      %3467 = vst [vmem:[%s262 + $0x18] sm:$0xf] %v3403
      %3468 = vst [vmem:[%s262 + $0x1c] sm:$0xf] %v3404
      %3469 = vst [vmem:[%s262 + $0x20] sm:$0xf] %v3405
      %3470 = vst [vmem:[%s262 + $0x24] sm:$0xf] %v3406
      %3471 = vst [vmem:[%s262 + $0x28] sm:$0xf] %v3407
      %3472 = vst [vmem:[%s262 + $0x2c] sm:$0xf] %v3408
      %3473 = vst [vmem:[%s262 + $0x30] sm:$0xf] %v3409
      %3474 = vst [vmem:[%s262 + $0x34] sm:$0xf] %v3410
      %3475 = vst [vmem:[%s262 + $0x38] sm:$0xf] %v3411
      %3476 = vst [vmem:[%s262 + $0x3c] sm:$0xf] %v3412
      %3477 = vst [vmem:[%s262 + $0x40] sm:$0xf] %v3413
      %3478 = vst [vmem:[%s262 + $0x44] sm:$0xf] %v3414
      %3479 = vst [vmem:[%s262 + $0x48] sm:$0xf] %v3415
      %3480 = vst [vmem:[%s262 + $0x4c] sm:$0xf] %v3416
      %3481 = vst [vmem:[%s262 + $0x50] sm:$0xf] %v3417
      %3482 = vst [vmem:[%s262 + $0x54] sm:$0xf] %v3418
      %3483 = vst [vmem:[%s262 + $0x58] sm:$0xf] %v3419
      %3484 = vst [vmem:[%s262 + $0x5c] sm:$0xf] %v3420
      %3485 = vst [vmem:[%s262 + $0x60] sm:$0xf] %v3421
      %3486 = vst [vmem:[%s262 + $0x64] sm:$0xf] %v3422
      %3487 = vst [vmem:[%s262 + $0x68] sm:$0xf] %v3423
      %3488 = vst [vmem:[%s262 + $0x6c] sm:$0xf] %v3424
      %3489 = vst [vmem:[%s262 + $0x70] sm:$0xf] %v3425
      %3490 = vst [vmem:[%s262 + $0x74] sm:$0xf] %v3426
      %3491 = vst [vmem:[%s262 + $0x78] sm:$0xf] %v3427
      %3492 = vst [vmem:[%s262 + $0x7c] sm:$0xf] %v3428
      %v3493 = vadd.f32 %v3301, %v3302
      %v3494 = vadd.f32 %v3493, %v3303
      %v3495 = vadd.f32 %v3494, %v3304
      %v3496 = vadd.f32 %v3495, %v3305
      %v3497 = vadd.f32 %v3496, %v3306
      %v3498 = vadd.f32 %v3497, %v3307
      %v3499 = vadd.f32 %v3498, %v3308
      %v3500 = vadd.f32 %v3499, %v3309
      %v3501 = vadd.f32 %v3500, %v3310
      %v3502 = vadd.f32 %v3501, %v3311
      %v3503 = vadd.f32 %v3502, %v3312
      %v3504 = vadd.f32 %v3503, %v3313
      %v3505 = vadd.f32 %v3504, %v3314
      %v3506 = vadd.f32 %v3505, %v3315
      %v3507 = vadd.f32 %v3506, %v3316
      %v3508 = vadd.f32 %v3507, %v3317
      %v3509 = vadd.f32 %v3508, %v3318
      %v3510 = vadd.f32 %v3509, %v3319
      %v3511 = vadd.f32 %v3510, %v3320
      %v3512 = vadd.f32 %v3511, %v3321
      %v3513 = vadd.f32 %v3512, %v3322
      %v3514 = vadd.f32 %v3513, %v3323
      %v3515 = vadd.f32 %v3514, %v3324
      %v3516 = vadd.f32 %v3515, %v3325
      %v3517 = vadd.f32 %v3516, %v3326
      %v3518 = vadd.f32 %v3517, %v3327
      %v3519 = vadd.f32 %v3518, %v3328
      %v3520 = vadd.f32 %v3519, %v3329
      %v3521 = vadd.f32 %v3520, %v3330
      %v3522 = vadd.f32 %v3521, %v3331
      %v3523 = vadd.f32 %v3522, %v3332
      %v3524 = vrot.slane %v3523, 4
      %v3525 = vadd.f32 %v3523, %v3524
      %v3526 = vrot.slane %v3525, 2
      %v3527 = vadd.f32 %v3525, %v3526
      %v3528 = vrot.slane %v3527, 1
      %v3529 = vadd.f32 %v3527, %v3528
      %3530 = vst [vmem:[%s265] sm:$0x1] %v3529
      %v3531 = vmul.f32 %v3301, %v3301
      %v3532 = vmul.f32 %v3302, %v3302
      %v3533 = vmul.f32 %v3303, %v3303
      %v3534 = vmul.f32 %v3304, %v3304
      %v3535 = vmul.f32 %v3305, %v3305
      %v3536 = vmul.f32 %v3306, %v3306
      %v3537 = vmul.f32 %v3307, %v3307
      %v3538 = vmul.f32 %v3308, %v3308
      %v3539 = vmul.f32 %v3309, %v3309
      %v3540 = vmul.f32 %v3310, %v3310
      %v3541 = vmul.f32 %v3311, %v3311
      %v3542 = vmul.f32 %v3312, %v3312
      %v3543 = vmul.f32 %v3313, %v3313
      %v3544 = vmul.f32 %v3314, %v3314
      %v3545 = vmul.f32 %v3315, %v3315
      %v3546 = vmul.f32 %v3316, %v3316
      %v3547 = vmul.f32 %v3317, %v3317
      %v3548 = vmul.f32 %v3318, %v3318
      %v3549 = vmul.f32 %v3319, %v3319
      %v3550 = vmul.f32 %v3320, %v3320
      %v3551 = vmul.f32 %v3321, %v3321
      %v3552 = vmul.f32 %v3322, %v3322
      %v3553 = vmul.f32 %v3323, %v3323
      %v3554 = vmul.f32 %v3324, %v3324
      %v3555 = vmul.f32 %v3325, %v3325
      %v3556 = vmul.f32 %v3326, %v3326
      %v3557 = vmul.f32 %v3327, %v3327
      %v3558 = vmul.f32 %v3328, %v3328
      %v3559 = vmul.f32 %v3329, %v3329
      %v3560 = vmul.f32 %v3330, %v3330
      %v3561 = vmul.f32 %v3331, %v3331
      %v3562 = vmul.f32 %v3332, %v3332
      %v3563 = vadd.f32 %v3531, %v3532
      %v3564 = vadd.f32 %v3563, %v3533
      %v3565 = vadd.f32 %v3564, %v3534
      %v3566 = vadd.f32 %v3565, %v3535
      %v3567 = vadd.f32 %v3566, %v3536
      %v3568 = vadd.f32 %v3567, %v3537
      %v3569 = vadd.f32 %v3568, %v3538
      %v3570 = vadd.f32 %v3569, %v3539
      %v3571 = vadd.f32 %v3570, %v3540
      %v3572 = vadd.f32 %v3571, %v3541
      %v3573 = vadd.f32 %v3572, %v3542
      %v3574 = vadd.f32 %v3573, %v3543
      %v3575 = vadd.f32 %v3574, %v3544
      %v3576 = vadd.f32 %v3575, %v3545
      %v3577 = vadd.f32 %v3576, %v3546
      %v3578 = vadd.f32 %v3577, %v3547
      %v3579 = vadd.f32 %v3578, %v3548
      %v3580 = vadd.f32 %v3579, %v3549
      %v3581 = vadd.f32 %v3580, %v3550
      %v3582 = vadd.f32 %v3581, %v3551
      %v3583 = vadd.f32 %v3582, %v3552
      %v3584 = vadd.f32 %v3583, %v3553
      %v3585 = vadd.f32 %v3584, %v3554
      %v3586 = vadd.f32 %v3585, %v3555
      %v3587 = vadd.f32 %v3586, %v3556
      %v3588 = vadd.f32 %v3587, %v3557
      %v3589 = vadd.f32 %v3588, %v3558
      %v3590 = vadd.f32 %v3589, %v3559
      %v3591 = vadd.f32 %v3590, %v3560
      %v3592 = vadd.f32 %v3591, %v3561
      %v3593 = vadd.f32 %v3592, %v3562
      %v3594 = vrot.slane %v3593, 4
      %v3595 = vadd.f32 %v3593, %v3594
      %v3596 = vrot.slane %v3595, 2
      %v3597 = vadd.f32 %v3595, %v3596
      %v3598 = vrot.slane %v3597, 1
      %v3599 = vadd.f32 %v3597, %v3598
      %3600 = vst [vmem:[%s268] sm:$0x1] %v3599
      %p3601 = scmp.lt.s32.totalorder %s18, 1
      %s3602 = scalar_select %p3601, %s18, 1
      %s3603 = smul.addr %s3602, 32
      %s3604 = smul.addr %s3603, 4
      %s3605 = scalar_lea.vmem %s4, %s3604
      %p3606 = scmp.lt.s32.totalorder %s18, 1
      %s3607 = scalar_select %p3606, %s18, 1
      %s3608 = scalar_lea.vmem %s5, %s3607
      %p3609 = scmp.lt.s32.totalorder %s18, 1
      %s3610 = scalar_select %p3609, %s18, 1
      %s3611 = scalar_lea.vmem %s6, %s3610
      // Predicated region
      $region37: #{basic_block_forward.5} parent=35 // pred_check
        %p3612 = pneg %p125
      $region38: #{basic_block_forward.5} parent=35 // pred_check_branch
        %3614 = sbr.rel (%p3612) target = $region40
      $region39: #{basic_block_forward.5} parent=35 // pred_region
        _
      $region40: #{basic_block_forward.5} parent=35 // pred_fallthru
        _
      // Predicated region
      $region41: #{basic_block_forward.5} parent=35 // pred_check
        %p3615 = pneg %p151
      $region42: #{basic_block_forward.5} parent=35 // pred_check_branch
        %3617 = sbr.rel (%p3615) target = $region44
      $region43: #{basic_block_forward.5} parent=35 // pred_region
        _
      $region44: #{basic_block_forward.5} parent=35 // pred_fallthru
        _
      // Predicated region
      $region45: #{basic_block_forward.5} parent=35 // pred_check
        %p3618 = pneg %p177
      $region46: #{basic_block_forward.5} parent=35 // pred_check_branch
        %3620 = sbr.rel (%p3618) target = $region48
      $region47: #{basic_block_forward.5} parent=35 // pred_region
        _
      $region48: #{basic_block_forward.5} parent=35 // pred_fallthru
        _
    $region36: #{basic_block_forward.5} parent=5 // pred_fallthru
      _
    %p3621 = scmp.le.s32.totalorder 2, %s13
    // Predicated region
    $region49: #{basic_block_forward.5} parent=5 // pred_check
      %p3622 = pneg %p3621
    $region50: #{basic_block_forward.5} parent=5 // pred_check_branch
      %3624 = sbr.rel (%p3622) target = $region52
    $region51: #{basic_block_forward.5} parent=5 // pred_region
      %s3625 = ssub.s32 %s13, 2
      // Predicated region
      $region53: #{basic_block_forward.5} parent=51 // pred_check
        %p3626 = pneg %p131
      $region54: #{basic_block_forward.5} parent=51 // pred_check_branch
        %3628 = sbr.rel (%p3626) target = $region56
      $region55: #{basic_block_forward.5} parent=51 // pred_region
        %p3629 = scmp.lt.s32.totalorder %s19, 1
        %s3630 = scalar_select %p3629, %s19, 1
        %s3631 = smul.addr %s3630, 32
        %s3632 = smul.addr %s3631, 4
        %s3633 = scalar_lea.vmem %s4, %s3632
      $region56: #{basic_block_forward.5} parent=51 // pred_fallthru
        _
      // Predicated region
      $region57: #{basic_block_forward.5} parent=51 // pred_check
        %p3634 = pneg %p157
      $region58: #{basic_block_forward.5} parent=51 // pred_check_branch
        %3636 = sbr.rel (%p3634) target = $region60
      $region59: #{basic_block_forward.5} parent=51 // pred_region
        %p3637 = scmp.lt.s32.totalorder %s19, 1
        %s3638 = scalar_select %p3637, %s19, 1
        %s3639 = scalar_lea.vmem %s5, %s3638
      $region60: #{basic_block_forward.5} parent=51 // pred_fallthru
        _
      // Predicated region
      $region61: #{basic_block_forward.5} parent=51 // pred_check
        %p3640 = pneg %p183
      $region62: #{basic_block_forward.5} parent=51 // pred_check_branch
        %3642 = sbr.rel (%p3640) target = $region64
      $region63: #{basic_block_forward.5} parent=51 // pred_region
        %p3643 = scmp.lt.s32.totalorder %s19, 1
        %s3644 = scalar_select %p3643, %s19, 1
        %s3645 = scalar_lea.vmem %s6, %s3644
      $region64: #{basic_block_forward.5} parent=51 // pred_fallthru
        _
    $region52: #{basic_block_forward.5} parent=5 // pred_fallthru
      _
  $region6: #{basic_block_forward.5} parent=0 // loop_footer
    %s17 = sadd.s32 1, %s13
  $region7: #{basic_block_forward.5} parent=0 // loop_footer_branch
    %12 = sbr.rel target = $region3
  $region8: #{basic_block_forward.5} parent=0 // loop_exit
    _

</llo_original>
